<compile_context>
chip_gen: v5e
topology: v5e:2x2
jax: 0.10.0
libtpu: 0.0.40
codegen_flags: <defaults>
</compile_context>

<pallas_src>
import functools
import math

import jax
import jax.numpy as jnp
from jax.experimental import pallas as pl
from jax.experimental.pallas import tpu as pltpu

VMEM_LIMIT = 32 * 1024 * 1024  # fits every generation's scoped-VMEM budget


# ----------------------------------------------------------------------------
# helpers
# ----------------------------------------------------------------------------
def _pick_tile(dim, target, align):
    """Largest tile <= target that is a multiple of `align` and divides `dim`.

    Falls back to the full dim (a full-extent block is always legal)."""
    if dim <= target:
        return dim
    for t in range(target, align - 1, -align):
        if dim % t == 0:
            return t
    return dim


def _erf_f32(x):
    # Abramowitz & Stegun 7.1.26 polynomial erf (|err| < 1.5e-7, ~f32 eps).
    # Used for torch nn.GELU()'s exact-erf GELU without relying on a native
    # erf lowering in Mosaic.
    a1, a2, a3, a4, a5 = 0.254829592, -0.284496736, 1.421413741, -1.453152027, 1.061405429
    p = 0.3275911
    sgn = jnp.where(x >= 0.0, 1.0, -1.0)
    ax = jnp.abs(x)
    t = 1.0 / (1.0 + p * ax)
    poly = ((((a5 * t + a4) * t + a3) * t + a2) * t + a1) * t
    return sgn * (1.0 - poly * jnp.exp(-ax * ax))


def _gelu_exact(x):
    return 0.5 * x * (1.0 + _erf_f32(x * (1.0 / math.sqrt(2.0))))


# ----------------------------------------------------------------------------
# fused (LayerNorm?) -> matmul -> bias -> (GELU?) -> (+residual?) kernel
# ----------------------------------------------------------------------------
def _fused_linear_kernel(x_ref, *rest, act, fuse_ln, fuse_res, eps):
    idx = 0
    if fuse_ln:
        g_ref, bln_ref = rest[0], rest[1]
        idx = 2
    w_ref, b_ref = rest[idx], rest[idx + 1]
    idx += 2
    if fuse_res:
        res_ref = rest[idx]
        idx += 1
    o_ref = rest[idx]

    if fuse_ln:
        xf = x_ref[...].astype(jnp.float32)           # LN stats in f32
        mu = jnp.mean(xf, axis=-1, keepdims=True)
        xc = xf - mu
        var = jnp.mean(xc * xc, axis=-1, keepdims=True)
        xn = xc * jax.lax.rsqrt(var + eps)
        xn = xn * g_ref[...] + bln_ref[...]
        x = xn.astype(w_ref.dtype)                     # bf16 into the MXU
    else:
        x = x_ref[...]

    y = jnp.dot(x, w_ref[...], preferred_element_type=jnp.float32)
    y = y + b_ref[...]
    if act == "gelu":
        y = _gelu_exact(y)
    if fuse_res:
        y = y + res_ref[...].astype(jnp.float32)
    o_ref[...] = y.astype(o_ref.dtype)


def fused_linear_pallas(x, w_t, b, *, ln=None, res=None, act="none",
                        out_dtype=jnp.bfloat16, tm_target=256, tn_target=512):
    """y = act(LN?(x) @ w_t + b) (+ res).

    x: (M, K) bf16, w_t: (K, N) bf16, b: (N,) f32.  Weight-stationary tiling:
    grid = (N/tn outer, M/tm inner) so the (K, tn) weight slab stays resident
    while the row tiles stream past it; full K per block so the fused
    LayerNorm sees whole feature rows.
    """
    M, K = x.shape
    N = w_t.shape[1]
    tm = _pick_tile(M, tm_target, 8)
    tn = _pick_tile(N, tn_target, 128)
    grid = (N // tn, M // tm)

    in_specs = [pl.BlockSpec((tm, K), lambda j, i: (i, 0))]
    inputs = [x]
    if ln is not None:
        g, bln = ln
        in_specs += [pl.BlockSpec((1, K), lambda j, i: (0, 0)),
                     pl.BlockSpec((1, K), lambda j, i: (0, 0))]
        inputs += [g.reshape(1, K).astype(jnp.float32),
                   bln.reshape(1, K).astype(jnp.float32)]
    in_specs += [pl.BlockSpec((K, tn), lambda j, i: (0, j)),
                 pl.BlockSpec((1, tn), lambda j, i: (0, j))]
    inputs += [w_t, b.reshape(1, N).astype(jnp.float32)]
    if res is not None:
        in_specs.append(pl.BlockSpec((tm, tn), lambda j, i: (i, j)))
        inputs.append(res)

    return pl.pallas_call(
        functools.partial(_fused_linear_kernel, act=act,
                          fuse_ln=ln is not None, fuse_res=res is not None,
                          eps=1e-6),
        out_shape=jax.ShapeDtypeStruct((M, N), out_dtype),
        grid=grid,
        in_specs=in_specs,
        out_specs=pl.BlockSpec((tm, tn), lambda j, i: (i, j)),
        compiler_params=pltpu.CompilerParams(
            dimension_semantics=("parallel", "parallel"),
            vmem_limit_bytes=VMEM_LIMIT),
    )(*inputs)


# ----------------------------------------------------------------------------
# multi-head self-attention (reads column slabs of the fused qkv tensor)
# ----------------------------------------------------------------------------
def _sdpa(q, k, v, scale, out_dtype):
    s = jax.lax.dot_general(q, k, (((1,), (1,)), ((), ())),
                            preferred_element_type=jnp.float32) * scale
    s = s - jnp.max(s, axis=-1, keepdims=True)
    p = jnp.exp(s)
    p = p * pl.reciprocal(jnp.sum(p, axis=-1, keepdims=True), approx=True)
    return jnp.dot(p.astype(v.dtype), v,
                   preferred_element_type=jnp.float32).astype(out_dtype)


def _mhsa_kernel(q_ref, k_ref, v_ref, o_ref, *, nh, hd, scale):
    # q/k/v refs are (1, N, nh*hd) column slabs of the same qkv array.
    for h in range(nh):
        lo, hi = h * hd, (h + 1) * hd
        o_ref[0, :, lo:hi] = _sdpa(q_ref[0, :, lo:hi], k_ref[0, :, lo:hi],
                                   v_ref[0, :, lo:hi], scale, o_ref.dtype)


def _mhsa_fallback_kernel(qkv_ref, o_ref, *, heads, hd, scale):
    # Fallback: whole (1, N, 3D) row block per batch element (always legal).
    D = heads * hd
    for h in range(heads):
        lo = h * hd
        q = qkv_ref[0, :, lo:lo + hd]
        k = qkv_ref[0, :, D + lo:D + lo + hd]
        v = qkv_ref[0, :, 2 * D + lo:2 * D + lo + hd]
        o_ref[0, :, lo:lo + hd] = _sdpa(q, k, v, scale, o_ref.dtype)


def attention_pallas(qkv, heads, scale, out_dtype=jnp.bfloat16):
    """Softmax attention; qkv: (B, N, 3D) with timm column layout
    [q_h0..q_hH | k_h0..k_hH | v_h0..v_hH]."""
    B, N, threeD = qkv.shape
    D = threeD // 3
    hd = D // heads

    # Smallest head group whose column slab is 128-lane aligned.
    hb = None
    for c in range(1, heads + 1):
        if heads % c == 0 and (c * hd) % 128 == 0:
            hb = c
            break

    if hb is not None:
        G = heads // hb
        w = hb * hd

        def slab(off):
            return pl.BlockSpec((1, N, w), lambda b, g: (b, 0, off + g))

        return pl.pallas_call(
            functools.partial(_mhsa_kernel, nh=hb, hd=hd, scale=scale),
            out_shape=jax.ShapeDtypeStruct((B, N, D), out_dtype),
            grid=(B, G),
            in_specs=[slab(0), slab(G), slab(2 * G)],   # q / k / v column offsets
            out_specs=pl.BlockSpec((1, N, w), lambda b, g: (b, 0, g)),
            compiler_params=pltpu.CompilerParams(
                dimension_semantics=("parallel", "parallel"),
                vmem_limit_bytes=VMEM_LIMIT),
        )(qkv, qkv, qkv)

    # Unaligned head_dim: read the full qkv row block per batch element.
    return pl.pallas_call(
        functools.partial(_mhsa_fallback_kernel, heads=heads, hd=hd, scale=scale),
        out_shape=jax.ShapeDtypeStruct((B, N, D), out_dtype),
        grid=(B,),
        in_specs=[pl.BlockSpec((1, N, threeD), lambda b: (b, 0, 0))],
        out_specs=pl.BlockSpec((1, N, D), lambda b: (b, 0, 0)),
        compiler_params=pltpu.CompilerParams(
            dimension_semantics=("parallel",), vmem_limit_bytes=VMEM_LIMIT),
    )(qkv)


# ----------------------------------------------------------------------------
# final LayerNorm (row-tiled) and fused DINO head
# ----------------------------------------------------------------------------
def _layernorm_kernel(x_ref, g_ref, b_ref, o_ref, *, eps):
    x = x_ref[...].astype(jnp.float32)
    mu = jnp.mean(x, axis=-1, keepdims=True)
    xc = x - mu
    var = jnp.mean(xc * xc, axis=-1, keepdims=True)
    y = xc * jax.lax.rsqrt(var + eps)
    o_ref[...] = (y * g_ref[...] + b_ref[...]).astype(o_ref.dtype)


def layernorm_pallas(x, g, b, eps=1e-6, out_dtype=jnp.bfloat16):
    M, D = x.shape
    tm = _pick_tile(M, 256, 8)
    return pl.pallas_call(
        functools.partial(_layernorm_kernel, eps=eps),
        out_shape=jax.ShapeDtypeStruct((M, D), out_dtype),
        grid=(M // tm,),
        in_specs=[pl.BlockSpec((tm, D), lambda i: (i, 0)),
                  pl.BlockSpec((1, D), lambda i: (0, 0)),
                  pl.BlockSpec((1, D), lambda i: (0, 0))],
        out_specs=pl.BlockSpec((tm, D), lambda i: (i, 0)),
        compiler_params=pltpu.CompilerParams(
            dimension_semantics=("parallel",), vmem_limit_bytes=VMEM_LIMIT),
    )(x, g.reshape(1, D).astype(jnp.float32), b.reshape(1, D).astype(jnp.float32))


def _dino_head_kernel(x_ref, wc_ref, wa_ref, b_ref, o_ref, *, n_patch):
    x = x_ref[...].astype(jnp.float32)                   # (B, N, D)
    cls = x[:, 0, :]                                     # (B, D)
    avg = (jnp.sum(x, axis=1) - cls) * (1.0 / n_patch)   # mean over patch tokens
    logits = (jnp.dot(cls.astype(wc_ref.dtype), wc_ref[...],
                      preferred_element_type=jnp.float32)
              + jnp.dot(avg.astype(wa_ref.dtype), wa_ref[...],
                        preferred_element_type=jnp.float32)
              + b_ref[...])
    o_ref[...] = logits.astype(o_ref.dtype)


def dino_head_pallas(x, wc_t, wa_t, b, n_patch):
    """cls/avg pooling + interleaved LinearClassifier (label dim pre-padded to 128)."""
    B, N, D = x.shape
    Lp = wc_t.shape[1]
    return pl.pallas_call(
        functools.partial(_dino_head_kernel, n_patch=float(n_patch)),
        out_shape=jax.ShapeDtypeStruct((B, Lp), jnp.float32),
        grid=(1,),
        in_specs=[pl.BlockSpec((B, N, D), lambda i: (0, 0, 0)),
                  pl.BlockSpec((D, Lp), lambda i: (0, 0)),
                  pl.BlockSpec((D, Lp), lambda i: (0, 0)),
                  pl.BlockSpec((1, Lp), lambda i: (0, 0))],
        out_specs=pl.BlockSpec((B, Lp), lambda i: (0, 0)),
        compiler_params=pltpu.CompilerParams(
            dimension_semantics=("arbitrary",), vmem_limit_bytes=VMEM_LIMIT),
    )(x, wc_t, wa_t, b.reshape(1, Lp).astype(jnp.float32))


# ----------------------------------------------------------------------------
# Parameters (synthetic, deterministic) & forward pass
# ----------------------------------------------------------------------------
def init_params(key, cfg):
    C, p, D = cfg["C"], cfg["patch"], cfg["dim"]
    hid = D * cfg["mlp_ratio"]
    L = cfg["num_labels"]
    n_tok = (cfg["img"] // p) ** 2 + 1
    keys = iter(jax.random.split(key, 4 + 4 * cfg["depth"]))
    nrm = lambda shape, std: std * jax.random.normal(next(keys), shape, jnp.float32)

    params = {
        # PatchEmbed Conv2d(C, D, kernel=stride=patch): weight stored flattened (D, C*p*p).
        "patch_w": nrm((D, C * p * p), 0.02),
        "patch_b": jnp.zeros((D,), jnp.float32),
        "cls_token": nrm((1, 1, D), 0.02),
        "pos_embed": nrm((1, n_tok, D), 0.02),
        "norm_g": jnp.ones((D,), jnp.float32),
        "norm_b": jnp.zeros((D,), jnp.float32),
        # LinearClassifier: weight ~ N(0, 0.01), bias = 0 (as in the PyTorch module).
        "lc_w": nrm((L, 2 * D), 0.01),
        "lc_b": jnp.zeros((L,), jnp.float32),
        "blocks": [],
    }
    for _ in range(cfg["depth"]):
        params["blocks"].append({
            "ln1_g": jnp.ones((D,), jnp.float32), "ln1_b": jnp.zeros((D,), jnp.float32),
            "qkv_w": nrm((3 * D, D), 0.02), "qkv_b": jnp.zeros((3 * D,), jnp.float32),
            "proj_w": nrm((D, D), 0.02), "proj_b": jnp.zeros((D,), jnp.float32),
            "ln2_g": jnp.ones((D,), jnp.float32), "ln2_b": jnp.zeros((D,), jnp.float32),
            "fc1_w": nrm((hid, D), 0.02), "fc1_b": jnp.zeros((hid,), jnp.float32),
            "fc2_w": nrm((D, hid), 0.02), "fc2_b": jnp.zeros((D,), jnp.float32),
        })
    return params


def dinov1_forward(x_img, params, cfg):
    """DINOv1.forward for the vit_base config (n_last_blocks=1, avgpool=True, lc=True)."""
    B, C, H, W = x_img.shape
    p, D, heads = cfg["patch"], cfg["dim"], cfg["heads"]
    hd = D // heads
    Hp, Wp = H // p, W // p
    bf16 = jnp.bfloat16

    # --- patch embedding: Conv2d(kernel=stride=p) == matmul over flattened (c,i,j) patches
    patches = x_img.reshape(B, C, Hp, p, Wp, p).transpose(0, 2, 4, 1, 3, 5)
    patches = patches.reshape(B * Hp * Wp, C * p * p).astype(bf16)
    tok = fused_linear_pallas(patches, params["patch_w"].T.astype(bf16), params["patch_b"])
    tok = tok.reshape(B, Hp * Wp, D)

    # --- prepare_tokens: prepend CLS, add positional embedding (bf16 residual stream)
    cls = jnp.broadcast_to(params["cls_token"].astype(bf16), (B, 1, D))
    x = jnp.concatenate([cls, tok], axis=1) + params["pos_embed"].astype(bf16)
    N = x.shape[1]
    scale = hd ** -0.5
    xf = x.reshape(B * N, D)

    # --- transformer blocks (pre-norm MHSA + GELU MLP), all epilogues fused
    for blk in params["blocks"]:
        qkv = fused_linear_pallas(xf, blk["qkv_w"].T.astype(bf16), blk["qkv_b"],
                                  ln=(blk["ln1_g"], blk["ln1_b"]))          # (B*N, 3D)
        attn = attention_pallas(qkv.reshape(B, N, 3 * D), heads, scale)      # (B, N, D)
        xf = fused_linear_pallas(attn.reshape(B * N, D),
                                 blk["proj_w"].T.astype(bf16), blk["proj_b"],
                                 res=xf)                                     # + residual
        h = fused_linear_pallas(xf, blk["fc1_w"].T.astype(bf16), blk["fc1_b"],
                                ln=(blk["ln2_g"], blk["ln2_b"]), act="gelu")
        xf = fused_linear_pallas(h, blk["fc2_w"].T.astype(bf16), blk["fc2_b"],
                                 res=xf)                                     # + residual

    # --- get_intermediate_layers(n=1): final LayerNorm on the last block output
    x_norm = layernorm_pallas(xf, params["norm_g"], params["norm_b"]).reshape(B, N, D)

    # --- DINO head + LinearClassifier (interleaved [cls, avg] feature, see header comment)
    L = cfg["num_labels"]
    Lp = ((L + 127) // 128) * 128                      # lane-dense classifier output
    wc_t = jnp.pad(params["lc_w"][:, 0::2].T, ((0, 0), (0, Lp - L))).astype(bf16)
    wa_t = jnp.pad(params["lc_w"][:, 1::2].T, ((0, 0), (0, Lp - L))).astype(bf16)
    lc_b = jnp.pad(params["lc_b"], (0, Lp - L))
    logits = dino_head_pallas(x_norm, wc_t, wa_t, lc_b, n_patch=N - 1)
    return logits[:, :L]


if __name__ == "__main__":
    # Small but tiling-representative config: D=256 (2 x 128 lanes), head_dim=128,
    # 17 tokens, hidden=1024.  Real vit_base (D=768, heads=12 -> hd=64, N=197,
    # hid=3072) maps onto the same kernels (hd=64 uses 2-head column slabs).
    cfg = dict(C=3, img=32, patch=8, dim=256, depth=2, heads=2, mlp_ratio=4,
               num_labels=1000)
    key = jax.random.PRNGKey(0)
    k_params, k_x = jax.random.split(key)
    params = init_params(k_params, cfg)
    x = jax.random.normal(k_x, (2, cfg["C"], cfg["img"], cfg["img"]), jnp.float32)

    fwd = jax.jit(lambda inp: dinov1_forward(inp, params, cfg))
    out = fwd(x)
    out = jax.block_until_ready(out)
    assert out.shape == (2, cfg["num_labels"]), out.shape
    assert out.dtype == jnp.float32
    print("KERNEL_OK")
</pallas_src>

<mosaic_0001>
module attributes {stable_mosaic.version = 11 : i64} {
  func.func @_fused_linear_kernel(%arg0: i32, %arg1: i32, %arg2: memref<32x192xbf16, #tpu.memory_space<vmem>>, %arg3: memref<192x256xbf16, #tpu.memory_space<vmem>>, %arg4: memref<1x256xf32, #tpu.memory_space<vmem>>, %arg5: memref<32x256xbf16, #tpu.memory_space<vmem>>) attributes {dimension_semantics = [#tpu.dimension_semantics<parallel>, #tpu.dimension_semantics<parallel>], iteration_bounds = array<i64: 1, 1>, scalar_prefetch = 0 : i64, scratch_operands = 0 : i64, tpu.core_type = #tpu.core_type<tc>, window_params = [{transform_indices = @transform_0, window_bounds = array<i64: 32, 192>}, {transform_indices = @transform_1, window_bounds = array<i64: 192, 256>}, {transform_indices = @transform_2, window_bounds = array<i64: 1, 256>}, {transform_indices = @transform_3, window_bounds = array<i64: 32, 256>}]} {
    %c0 = arith.constant 0 : index
    %c0_0 = arith.constant 0 : index
    %0 = vector.load %arg2[%c0, %c0_0] : memref<32x192xbf16, #tpu.memory_space<vmem>>, vector<32x192xbf16>
    %c0_1 = arith.constant 0 : index
    %c0_2 = arith.constant 0 : index
    %1 = vector.load %arg3[%c0_1, %c0_2] : memref<192x256xbf16, #tpu.memory_space<vmem>>, vector<192x256xbf16>
    %cst = arith.constant dense<0.000000e+00> : vector<32x256xf32>
    %2 = tpu.matmul %0, %1, %cst {dimension_numbers = #tpu.dot_dimension_numbers<[1], [0], [0], [1], [0, 0, 1, 1], [], []>} : vector<32x192xbf16>, vector<192x256xbf16>, vector<32x256xf32> -> vector<32x256xf32>
    %c0_3 = arith.constant 0 : index
    %c0_4 = arith.constant 0 : index
    %3 = vector.load %arg4[%c0_3, %c0_4] : memref<1x256xf32, #tpu.memory_space<vmem>>, vector<1x256xf32>
    %4 = vector.broadcast %3 : vector<1x256xf32> to vector<32x256xf32>
    %5 = arith.addf %2, %4 : vector<32x256xf32>
    %6 = arith.truncf %5 : vector<32x256xf32> to vector<32x256xbf16>
    %c0_5 = arith.constant 0 : index
    %c0_6 = arith.constant 0 : index
    %7 = vector.load %arg5[%c0_5, %c0_6] : memref<32x256xbf16, #tpu.memory_space<vmem>>, vector<32x256xbf16>
    tpu.vector_store %arg5[%c0_5, %c0_6], %6 {strides = array<i32>} : memref<32x256xbf16, #tpu.memory_space<vmem>>, vector<32x256xbf16>,
    return
  }
  func.func @transform_0(%arg0: i32, %arg1: i32) -> (i32, i32) {
    %c0_i32 = arith.constant 0 : i32
    %c0_i32_0 = arith.constant 0 : i32
    return %arg1, %c0_i32 : i32, i32
  }
  func.func @transform_1(%arg0: i32, %arg1: i32) -> (i32, i32) {
    %c0_i32 = arith.constant 0 : i32
    %c0_i32_0 = arith.constant 0 : i32
    return %c0_i32, %arg0 : i32, i32
  }
  func.func @transform_2(%arg0: i32, %arg1: i32) -> (i32, i32) {
    %c0_i32 = arith.constant 0 : i32
    %c0_i32_0 = arith.constant 0 : i32
    return %c0_i32, %arg0 : i32, i32
  }
  func.func @transform_3(%arg0: i32, %arg1: i32) -> (i32, i32) {
    %c0_i32 = arith.constant 0 : i32
    return %arg1, %arg0 : i32, i32
  }
}

module attributes {stable_mosaic.version = 11 : i64} {
  func.func @_fused_linear_kernel(%arg0: i32, %arg1: i32, %arg2: memref<34x256xbf16, #tpu.memory_space<vmem>>, %arg3: memref<1x256xf32, #tpu.memory_space<vmem>>, %arg4: memref<1x256xf32, #tpu.memory_space<vmem>>, %arg5: memref<256x384xbf16, #tpu.memory_space<vmem>>, %arg6: memref<1x384xf32, #tpu.memory_space<vmem>>, %arg7: memref<34x384xbf16, #tpu.memory_space<vmem>>) attributes {dimension_semantics = [#tpu.dimension_semantics<parallel>, #tpu.dimension_semantics<parallel>], iteration_bounds = array<i64: 2, 1>, scalar_prefetch = 0 : i64, scratch_operands = 0 : i64, tpu.core_type = #tpu.core_type<tc>, window_params = [{transform_indices = @transform_0, window_bounds = array<i64: 34, 256>}, {pipeline_mode = #tpu.pipeline_mode<synchronous>, transform_indices = @transform_1, window_bounds = array<i64: 1, 256>}, {pipeline_mode = #tpu.pipeline_mode<synchronous>, transform_indices = @transform_2, window_bounds = array<i64: 1, 256>}, {transform_indices = @transform_3, window_bounds = array<i64: 256, 384>}, {transform_indices = @transform_4, window_bounds = array<i64: 1, 384>}, {transform_indices = @transform_5, window_bounds = array<i64: 34, 384>}]} {
    %c0 = arith.constant 0 : index
    %c0_0 = arith.constant 0 : index
    %0 = vector.load %arg2[%c0, %c0_0] : memref<34x256xbf16, #tpu.memory_space<vmem>>, vector<34x256xbf16>
    %1 = arith.extf %0 : vector<34x256xbf16> to vector<34x256xf32>
    %cst = arith.constant dense<0.000000e+00> : vector<34xf32>
    %2 = vector.multi_reduction <add>, %1, %cst [1] : vector<34x256xf32> to vector<34xf32>
    %3 = vector.shape_cast %2 : vector<34xf32> to vector<34x1xf32>
    %cst_1 = arith.constant 2.560000e+02 : f32
    %4 = vector.broadcast %cst_1 : f32 to vector<34x1xf32>
    %5 = arith.divf %3, %4 : vector<34x1xf32>
    %6 = vector.broadcast %5 : vector<34x1xf32> to vector<34x256xf32>
    %7 = arith.subf %1, %6 : vector<34x256xf32>
    %8 = arith.mulf %7, %7 : vector<34x256xf32>
    %cst_2 = arith.constant dense<0.000000e+00> : vector<34xf32>
    %9 = vector.multi_reduction <add>, %8, %cst_2 [1] : vector<34x256xf32> to vector<34xf32>
    %10 = vector.shape_cast %9 : vector<34xf32> to vector<34x1xf32>
    %cst_3 = arith.constant 2.560000e+02 : f32
    %11 = vector.broadcast %cst_3 : f32 to vector<34x1xf32>
    %12 = arith.divf %10, %11 : vector<34x1xf32>
    %cst_4 = arith.constant 9.99999997E-7 : f32
    %13 = vector.broadcast %cst_4 : f32 to vector<34x1xf32>
    %14 = arith.addf %12, %13 : vector<34x1xf32>
    %15 = math.rsqrt %14 : vector<34x1xf32>
    %16 = vector.broadcast %15 : vector<34x1xf32> to vector<34x256xf32>
    %17 = arith.mulf %7, %16 : vector<34x256xf32>
    %c0_5 = arith.constant 0 : index
    %c0_6 = arith.constant 0 : index
    %18 = vector.load %arg3[%c0_5, %c0_6] : memref<1x256xf32, #tpu.memory_space<vmem>>, vector<1x256xf32>
    %19 = vector.broadcast %18 : vector<1x256xf32> to vector<34x256xf32>
    %20 = arith.mulf %17, %19 : vector<34x256xf32>
    %c0_7 = arith.constant 0 : index
    %c0_8 = arith.constant 0 : index
    %21 = vector.load %arg4[%c0_7, %c0_8] : memref<1x256xf32, #tpu.memory_space<vmem>>, vector<1x256xf32>
    %22 = vector.broadcast %21 : vector<1x256xf32> to vector<34x256xf32>
    %23 = arith.addf %20, %22 : vector<34x256xf32>
    %24 = arith.truncf %23 : vector<34x256xf32> to vector<34x256xbf16>
    %c0_9 = arith.constant 0 : index
    %c0_10 = arith.constant 0 : index
    %25 = vector.load %arg5[%c0_9, %c0_10] : memref<256x384xbf16, #tpu.memory_space<vmem>>, vector<256x384xbf16>
    %cst_11 = arith.constant dense<0.000000e+00> : vector<34x384xf32>
    %26 = tpu.matmul %24, %25, %cst_11 {dimension_numbers = #tpu.dot_dimension_numbers<[1], [0], [0], [1], [0, 0, 1, 1], [], []>} : vector<34x256xbf16>, vector<256x384xbf16>, vector<34x384xf32> -> vector<34x384xf32>
    %c0_12 = arith.constant 0 : index
    %c0_13 = arith.constant 0 : index
    %27 = vector.load %arg6[%c0_12, %c0_13] : memref<1x384xf32, #tpu.memory_space<vmem>>, vector<1x384xf32>
    %28 = vector.broadcast %27 : vector<1x384xf32> to vector<34x384xf32>
    %29 = arith.addf %26, %28 : vector<34x384xf32>
    %30 = arith.truncf %29 : vector<34x384xf32> to vector<34x384xbf16>
    %c0_14 = arith.constant 0 : index
    %c0_15 = arith.constant 0 : index
    %31 = vector.load %arg7[%c0_14, %c0_15] : memref<34x384xbf16, #tpu.memory_space<vmem>>, vector<34x384xbf16>
    tpu.vector_store %arg7[%c0_14, %c0_15], %30 {strides = array<i32>} : memref<34x384xbf16, #tpu.memory_space<vmem>>, vector<34x384xbf16>,
    return
  }
  func.func @transform_0(%arg0: i32, %arg1: i32) -> (i32, i32) {
    %c0_i32 = arith.constant 0 : i32
    %c0_i32_0 = arith.constant 0 : i32
    return %arg1, %c0_i32 : i32, i32
  }
  func.func @transform_1(%arg0: i32, %arg1: i32) -> (i32, i32) {
    %c0_i32 = arith.constant 0 : i32
    %c0_i32_0 = arith.constant 0 : i32
    %c0_i32_1 = arith.constant 0 : i32
    return %c0_i32, %c0_i32_0 : i32, i32
  }
  func.func @transform_2(%arg0: i32, %arg1: i32) -> (i32, i32) {
    %c0_i32 = arith.constant 0 : i32
    %c0_i32_0 = arith.constant 0 : i32
    %c0_i32_1 = arith.constant 0 : i32
    return %c0_i32, %c0_i32_0 : i32, i32
  }
  func.func @transform_3(%arg0: i32, %arg1: i32) -> (i32, i32) {
    %c0_i32 = arith.constant 0 : i32
    %c0_i32_0 = arith.constant 0 : i32
    return %c0_i32, %arg0 : i32, i32
  }
  func.func @transform_4(%arg0: i32, %arg1: i32) -> (i32, i32) {
    %c0_i32 = arith.constant 0 : i32
    %c0_i32_0 = arith.constant 0 : i32
    return %c0_i32, %arg0 : i32, i32
  }
  func.func @transform_5(%arg0: i32, %arg1: i32) -> (i32, i32) {
    %c0_i32 = arith.constant 0 : i32
    return %arg1, %arg0 : i32, i32
  }
}

module attributes {stable_mosaic.version = 11 : i64} {
  func.func @_mhsa_kernel(%arg0: i32, %arg1: i32, %arg2: memref<1x17x128xbf16, #tpu.memory_space<vmem>>, %arg3: memref<1x17x128xbf16, #tpu.memory_space<vmem>>, %arg4: memref<1x17x128xbf16, #tpu.memory_space<vmem>>, %arg5: memref<1x17x128xbf16, #tpu.memory_space<vmem>>) attributes {dimension_semantics = [#tpu.dimension_semantics<parallel>, #tpu.dimension_semantics<parallel>], iteration_bounds = array<i64: 2, 2>, scalar_prefetch = 0 : i64, scratch_operands = 0 : i64, tpu.core_type = #tpu.core_type<tc>, window_params = [{transform_indices = @transform_0, window_bounds = array<i64: 1, 17, 128>}, {transform_indices = @transform_1, window_bounds = array<i64: 1, 17, 128>}, {transform_indices = @transform_2, window_bounds = array<i64: 1, 17, 128>}, {transform_indices = @transform_3, window_bounds = array<i64: 1, 17, 128>}]} {
    %c0 = arith.constant 0 : index
    %c0_0 = arith.constant 0 : index
    %c0_1 = arith.constant 0 : index
    %0 = vector.load %arg2[%c0, %c0_0, %c0_1] : memref<1x17x128xbf16, #tpu.memory_space<vmem>>, vector<1x17x128xbf16>
    %1 = vector.shape_cast %0 : vector<1x17x128xbf16> to vector<17x128xbf16>
    %c0_2 = arith.constant 0 : index
    %c0_3 = arith.constant 0 : index
    %c0_4 = arith.constant 0 : index
    %2 = vector.load %arg3[%c0_2, %c0_3, %c0_4] : memref<1x17x128xbf16, #tpu.memory_space<vmem>>, vector<1x17x128xbf16>
    %3 = vector.shape_cast %2 : vector<1x17x128xbf16> to vector<17x128xbf16>
    %c0_5 = arith.constant 0 : index
    %c0_6 = arith.constant 0 : index
    %c0_7 = arith.constant 0 : index
    %4 = vector.load %arg4[%c0_5, %c0_6, %c0_7] : memref<1x17x128xbf16, #tpu.memory_space<vmem>>, vector<1x17x128xbf16>
    %5 = vector.shape_cast %4 : vector<1x17x128xbf16> to vector<17x128xbf16>
    %cst = arith.constant dense<0.000000e+00> : vector<17x17xf32>
    %6 = tpu.matmul %1, %3, %cst {dimension_numbers = #tpu.dot_dimension_numbers<[1], [1], [0], [0], [0, 0, 1, 0], [], []>} : vector<17x128xbf16>, vector<17x128xbf16>, vector<17x17xf32> -> vector<17x17xf32>
    %cst_8 = arith.constant 0.0883883461 : f32
    %7 = vector.broadcast %cst_8 : f32 to vector<17x17xf32>
    %8 = arith.mulf %6, %7 : vector<17x17xf32>
    %cst_9 = arith.constant dense<0xFF800000> : vector<17xf32>
    %9 = vector.multi_reduction <maximumf>, %8, %cst_9 [1] : vector<17x17xf32> to vector<17xf32>
    %10 = vector.shape_cast %9 : vector<17xf32> to vector<17x1xf32>
    %11 = vector.broadcast %10 : vector<17x1xf32> to vector<17x17xf32>
    %12 = arith.subf %8, %11 : vector<17x17xf32>
    %13 = math.exp %12 : vector<17x17xf32>
    %cst_10 = arith.constant dense<0.000000e+00> : vector<17xf32>
    %14 = vector.multi_reduction <add>, %13, %cst_10 [1] : vector<17x17xf32> to vector<17xf32>
    %15 = vector.shape_cast %14 : vector<17xf32> to vector<17x1xf32>
    %16 = tpu.reciprocal %15 {approx = true} : vector<17x1xf32> -> vector<17x1xf32>
    %17 = vector.broadcast %16 : vector<17x1xf32> to vector<17x17xf32>
    %18 = arith.mulf %13, %17 : vector<17x17xf32>
    %19 = arith.truncf %18 : vector<17x17xf32> to vector<17x17xbf16>
    %cst_11 = arith.constant dense<0.000000e+00> : vector<17x128xf32>
    %20 = tpu.matmul %19, %5, %cst_11 {dimension_numbers = #tpu.dot_dimension_numbers<[1], [0], [0], [1], [0, 0, 1, 1], [], []>} : vector<17x17xbf16>, vector<17x128xbf16>, vector<17x128xf32> -> vector<17x128xf32>
    %21 = arith.truncf %20 : vector<17x128xf32> to vector<17x128xbf16>
    %c0_12 = arith.constant 0 : index
    %c0_13 = arith.constant 0 : index
    %c0_14 = arith.constant 0 : index
    %22 = vector.load %arg5[%c0_12, %c0_13, %c0_14] : memref<1x17x128xbf16, #tpu.memory_space<vmem>>, vector<1x17x128xbf16>
    %23 = vector.shape_cast %22 : vector<1x17x128xbf16> to vector<17x128xbf16>
    %24 = vector.shape_cast %21 : vector<17x128xbf16> to vector<1x17x128xbf16>
    tpu.vector_store %arg5[%c0_12, %c0_13, %c0_14], %24 {strides = array<i32>} : memref<1x17x128xbf16, #tpu.memory_space<vmem>>, vector<1x17x128xbf16>,
    return
  }
  func.func @transform_0(%arg0: i32, %arg1: i32) -> (i32, i32, i32) {
    %c0_i32 = arith.constant 0 : i32
    %0 = arith.addi %c0_i32, %arg1 : i32
    %c0_i32_0 = arith.constant 0 : i32
    %c0_i32_1 = arith.constant 0 : i32
    return %arg0, %c0_i32_0, %0 : i32, i32, i32
  }
  func.func @transform_1(%arg0: i32, %arg1: i32) -> (i32, i32, i32) {
    %c2_i32 = arith.constant 2 : i32
    %0 = arith.addi %c2_i32, %arg1 : i32
    %c0_i32 = arith.constant 0 : i32
    %c0_i32_0 = arith.constant 0 : i32
    return %arg0, %c0_i32, %0 : i32, i32, i32
  }
  func.func @transform_2(%arg0: i32, %arg1: i32) -> (i32, i32, i32) {
    %c4_i32 = arith.constant 4 : i32
    %0 = arith.addi %c4_i32, %arg1 : i32
    %c0_i32 = arith.constant 0 : i32
    %c0_i32_0 = arith.constant 0 : i32
    return %arg0, %c0_i32, %0 : i32, i32, i32
  }
  func.func @transform_3(%arg0: i32, %arg1: i32) -> (i32, i32, i32) {
    %c0_i32 = arith.constant 0 : i32
    %c0_i32_0 = arith.constant 0 : i32
    return %arg0, %c0_i32, %arg1 : i32, i32, i32
  }
}

module attributes {stable_mosaic.version = 11 : i64} {
  func.func @_fused_linear_kernel(%arg0: i32, %arg1: i32, %arg2: memref<34x256xbf16, #tpu.memory_space<vmem>>, %arg3: memref<256x256xbf16, #tpu.memory_space<vmem>>, %arg4: memref<1x256xf32, #tpu.memory_space<vmem>>, %arg5: memref<34x256xbf16, #tpu.memory_space<vmem>>, %arg6: memref<34x256xbf16, #tpu.memory_space<vmem>>) attributes {dimension_semantics = [#tpu.dimension_semantics<parallel>, #tpu.dimension_semantics<parallel>], iteration_bounds = array<i64: 1, 1>, scalar_prefetch = 0 : i64, scratch_operands = 0 : i64, tpu.core_type = #tpu.core_type<tc>, window_params = [{transform_indices = @transform_0, window_bounds = array<i64: 34, 256>}, {transform_indices = @transform_1, window_bounds = array<i64: 256, 256>}, {transform_indices = @transform_2, window_bounds = array<i64: 1, 256>}, {transform_indices = @transform_3, window_bounds = array<i64: 34, 256>}, {transform_indices = @transform_4, window_bounds = array<i64: 34, 256>}]} {
    %c0 = arith.constant 0 : index
    %c0_0 = arith.constant 0 : index
    %0 = vector.load %arg2[%c0, %c0_0] : memref<34x256xbf16, #tpu.memory_space<vmem>>, vector<34x256xbf16>
    %c0_1 = arith.constant 0 : index
    %c0_2 = arith.constant 0 : index
    %1 = vector.load %arg3[%c0_1, %c0_2] : memref<256x256xbf16, #tpu.memory_space<vmem>>, vector<256x256xbf16>
    %cst = arith.constant dense<0.000000e+00> : vector<34x256xf32>
    %2 = tpu.matmul %0, %1, %cst {dimension_numbers = #tpu.dot_dimension_numbers<[1], [0], [0], [1], [0, 0, 1, 1], [], []>} : vector<34x256xbf16>, vector<256x256xbf16>, vector<34x256xf32> -> vector<34x256xf32>
    %c0_3 = arith.constant 0 : index
    %c0_4 = arith.constant 0 : index
    %3 = vector.load %arg4[%c0_3, %c0_4] : memref<1x256xf32, #tpu.memory_space<vmem>>, vector<1x256xf32>
    %4 = vector.broadcast %3 : vector<1x256xf32> to vector<34x256xf32>
    %5 = arith.addf %2, %4 : vector<34x256xf32>
    %c0_5 = arith.constant 0 : index
    %c0_6 = arith.constant 0 : index
    %6 = vector.load %arg5[%c0_5, %c0_6] : memref<34x256xbf16, #tpu.memory_space<vmem>>, vector<34x256xbf16>
    %7 = arith.extf %6 : vector<34x256xbf16> to vector<34x256xf32>
    %8 = arith.addf %5, %7 : vector<34x256xf32>
    %9 = arith.truncf %8 : vector<34x256xf32> to vector<34x256xbf16>
    %c0_7 = arith.constant 0 : index
    %c0_8 = arith.constant 0 : index
    %10 = vector.load %arg6[%c0_7, %c0_8] : memref<34x256xbf16, #tpu.memory_space<vmem>>, vector<34x256xbf16>
    tpu.vector_store %arg6[%c0_7, %c0_8], %9 {strides = array<i32>} : memref<34x256xbf16, #tpu.memory_space<vmem>>, vector<34x256xbf16>,
    return
  }
  func.func @transform_0(%arg0: i32, %arg1: i32) -> (i32, i32) {
    %c0_i32 = arith.constant 0 : i32
    %c0_i32_0 = arith.constant 0 : i32
    return %arg1, %c0_i32 : i32, i32
  }
  func.func @transform_1(%arg0: i32, %arg1: i32) -> (i32, i32) {
    %c0_i32 = arith.constant 0 : i32
    %c0_i32_0 = arith.constant 0 : i32
    return %c0_i32, %arg0 : i32, i32
  }
  func.func @transform_2(%arg0: i32, %arg1: i32) -> (i32, i32) {
    %c0_i32 = arith.constant 0 : i32
    %c0_i32_0 = arith.constant 0 : i32
    return %c0_i32, %arg0 : i32, i32
  }
  func.func @transform_3(%arg0: i32, %arg1: i32) -> (i32, i32) {
    %c0_i32 = arith.constant 0 : i32
    return %arg1, %arg0 : i32, i32
  }
  func.func @transform_4(%arg0: i32, %arg1: i32) -> (i32, i32) {
    %c0_i32 = arith.constant 0 : i32
    return %arg1, %arg0 : i32, i32
  }
}

module attributes {stable_mosaic.version = 11 : i64} {
  func.func @_fused_linear_kernel(%arg0: i32, %arg1: i32, %arg2: memref<34x256xbf16, #tpu.memory_space<vmem>>, %arg3: memref<1x256xf32, #tpu.memory_space<vmem>>, %arg4: memref<1x256xf32, #tpu.memory_space<vmem>>, %arg5: memref<256x512xbf16, #tpu.memory_space<vmem>>, %arg6: memref<1x512xf32, #tpu.memory_space<vmem>>, %arg7: memref<34x512xbf16, #tpu.memory_space<vmem>>) attributes {dimension_semantics = [#tpu.dimension_semantics<parallel>, #tpu.dimension_semantics<parallel>], iteration_bounds = array<i64: 2, 1>, scalar_prefetch = 0 : i64, scratch_operands = 0 : i64, tpu.core_type = #tpu.core_type<tc>, window_params = [{transform_indices = @transform_0, window_bounds = array<i64: 34, 256>}, {pipeline_mode = #tpu.pipeline_mode<synchronous>, transform_indices = @transform_1, window_bounds = array<i64: 1, 256>}, {pipeline_mode = #tpu.pipeline_mode<synchronous>, transform_indices = @transform_2, window_bounds = array<i64: 1, 256>}, {transform_indices = @transform_3, window_bounds = array<i64: 256, 512>}, {transform_indices = @transform_4, window_bounds = array<i64: 1, 512>}, {transform_indices = @transform_5, window_bounds = array<i64: 34, 512>}]} {
    %c0 = arith.constant 0 : index
    %c0_0 = arith.constant 0 : index
    %0 = vector.load %arg2[%c0, %c0_0] : memref<34x256xbf16, #tpu.memory_space<vmem>>, vector<34x256xbf16>
    %1 = arith.extf %0 : vector<34x256xbf16> to vector<34x256xf32>
    %cst = arith.constant dense<0.000000e+00> : vector<34xf32>
    %2 = vector.multi_reduction <add>, %1, %cst [1] : vector<34x256xf32> to vector<34xf32>
    %3 = vector.shape_cast %2 : vector<34xf32> to vector<34x1xf32>
    %cst_1 = arith.constant 2.560000e+02 : f32
    %4 = vector.broadcast %cst_1 : f32 to vector<34x1xf32>
    %5 = arith.divf %3, %4 : vector<34x1xf32>
    %6 = vector.broadcast %5 : vector<34x1xf32> to vector<34x256xf32>
    %7 = arith.subf %1, %6 : vector<34x256xf32>
    %8 = arith.mulf %7, %7 : vector<34x256xf32>
    %cst_2 = arith.constant dense<0.000000e+00> : vector<34xf32>
    %9 = vector.multi_reduction <add>, %8, %cst_2 [1] : vector<34x256xf32> to vector<34xf32>
    %10 = vector.shape_cast %9 : vector<34xf32> to vector<34x1xf32>
    %cst_3 = arith.constant 2.560000e+02 : f32
    %11 = vector.broadcast %cst_3 : f32 to vector<34x1xf32>
    %12 = arith.divf %10, %11 : vector<34x1xf32>
    %cst_4 = arith.constant 9.99999997E-7 : f32
    %13 = vector.broadcast %cst_4 : f32 to vector<34x1xf32>
    %14 = arith.addf %12, %13 : vector<34x1xf32>
    %15 = math.rsqrt %14 : vector<34x1xf32>
    %16 = vector.broadcast %15 : vector<34x1xf32> to vector<34x256xf32>
    %17 = arith.mulf %7, %16 : vector<34x256xf32>
    %c0_5 = arith.constant 0 : index
    %c0_6 = arith.constant 0 : index
    %18 = vector.load %arg3[%c0_5, %c0_6] : memref<1x256xf32, #tpu.memory_space<vmem>>, vector<1x256xf32>
    %19 = vector.broadcast %18 : vector<1x256xf32> to vector<34x256xf32>
    %20 = arith.mulf %17, %19 : vector<34x256xf32>
    %c0_7 = arith.constant 0 : index
    %c0_8 = arith.constant 0 : index
    %21 = vector.load %arg4[%c0_7, %c0_8] : memref<1x256xf32, #tpu.memory_space<vmem>>, vector<1x256xf32>
    %22 = vector.broadcast %21 : vector<1x256xf32> to vector<34x256xf32>
    %23 = arith.addf %20, %22 : vector<34x256xf32>
    %24 = arith.truncf %23 : vector<34x256xf32> to vector<34x256xbf16>
    %c0_9 = arith.constant 0 : index
    %c0_10 = arith.constant 0 : index
    %25 = vector.load %arg5[%c0_9, %c0_10] : memref<256x512xbf16, #tpu.memory_space<vmem>>, vector<256x512xbf16>
    %cst_11 = arith.constant dense<0.000000e+00> : vector<34x512xf32>
    %26 = tpu.matmul %24, %25, %cst_11 {dimension_numbers = #tpu.dot_dimension_numbers<[1], [0], [0], [1], [0, 0, 1, 1], [], []>} : vector<34x256xbf16>, vector<256x512xbf16>, vector<34x512xf32> -> vector<34x512xf32>
    %c0_12 = arith.constant 0 : index
    %c0_13 = arith.constant 0 : index
    %27 = vector.load %arg6[%c0_12, %c0_13] : memref<1x512xf32, #tpu.memory_space<vmem>>, vector<1x512xf32>
    %28 = vector.broadcast %27 : vector<1x512xf32> to vector<34x512xf32>
    %29 = arith.addf %26, %28 : vector<34x512xf32>
    %cst_14 = arith.constant 5.000000e-01 : f32
    %30 = vector.broadcast %cst_14 : f32 to vector<34x512xf32>
    %31 = arith.mulf %30, %29 : vector<34x512xf32>
    %cst_15 = arith.constant 0.707106769 : f32
    %32 = vector.broadcast %cst_15 : f32 to vector<34x512xf32>
    %33 = arith.mulf %29, %32 : vector<34x512xf32>
    %cst_16 = arith.constant 0.000000e+00 : f32
    %34 = vector.broadcast %cst_16 : f32 to vector<34x512xf32>
    %35 = arith.cmpf oge, %33, %34 : vector<34x512xf32>
    %cst_17 = arith.constant 1.000000e+00 : f32
    %cst_18 = arith.constant -1.000000e+00 : f32
    %36 = vector.broadcast %cst_17 : f32 to vector<34x512xf32>
    %37 = vector.broadcast %cst_18 : f32 to vector<34x512xf32>
    %38 = arith.select %35, %36, %37 : vector<34x512xi1>, vector<34x512xf32>
    %39 = math.absf %33 : vector<34x512xf32>
    %cst_19 = arith.constant 0.327591091 : f32
    %40 = vector.broadcast %cst_19 : f32 to vector<34x512xf32>
    %41 = arith.mulf %40, %39 : vector<34x512xf32>
    %cst_20 = arith.constant 1.000000e+00 : f32
    %42 = vector.broadcast %cst_20 : f32 to vector<34x512xf32>
    %43 = arith.addf %42, %41 : vector<34x512xf32>
    %cst_21 = arith.constant 1.000000e+00 : f32
    %44 = vector.broadcast %cst_21 : f32 to vector<34x512xf32>
    %45 = arith.divf %44, %43 : vector<34x512xf32>
    %cst_22 = arith.constant 1.06140542 : f32
    %46 = vector.broadcast %cst_22 : f32 to vector<34x512xf32>
    %47 = arith.mulf %46, %45 : vector<34x512xf32>
    %cst_23 = arith.constant -1.45315206 : f32
    %48 = vector.broadcast %cst_23 : f32 to vector<34x512xf32>
    %49 = arith.addf %47, %48 : vector<34x512xf32>
    %50 = arith.mulf %49, %45 : vector<34x512xf32>
    %cst_24 = arith.constant 1.42141378 : f32
    %51 = vector.broadcast %cst_24 : f32 to vector<34x512xf32>
    %52 = arith.addf %50, %51 : vector<34x512xf32>
    %53 = arith.mulf %52, %45 : vector<34x512xf32>
    %cst_25 = arith.constant -0.284496725 : f32
    %54 = vector.broadcast %cst_25 : f32 to vector<34x512xf32>
    %55 = arith.addf %53, %54 : vector<34x512xf32>
    %56 = arith.mulf %55, %45 : vector<34x512xf32>
    %cst_26 = arith.constant 0.254829586 : f32
    %57 = vector.broadcast %cst_26 : f32 to vector<34x512xf32>
    %58 = arith.addf %56, %57 : vector<34x512xf32>
    %59 = arith.mulf %58, %45 : vector<34x512xf32>
    %cst_27 = arith.constant 0.000000e+00 : f32
    %60 = vector.broadcast %cst_27 : f32 to vector<34x512xf32>
    %61 = arith.subf %60, %39 : vector<34x512xf32>
    %62 = arith.mulf %61, %39 : vector<34x512xf32>
    %63 = math.exp %62 : vector<34x512xf32>
    %64 = arith.mulf %59, %63 : vector<34x512xf32>
    %cst_28 = arith.constant 1.000000e+00 : f32
    %65 = vector.broadcast %cst_28 : f32 to vector<34x512xf32>
    %66 = arith.subf %65, %64 : vector<34x512xf32>
    %67 = arith.mulf %38, %66 : vector<34x512xf32>
    %cst_29 = arith.constant 1.000000e+00 : f32
    %68 = vector.broadcast %cst_29 : f32 to vector<34x512xf32>
    %69 = arith.addf %68, %67 : vector<34x512xf32>
    %70 = arith.mulf %31, %69 : vector<34x512xf32>
    %71 = arith.truncf %70 : vector<34x512xf32> to vector<34x512xbf16>
    %c0_30 = arith.constant 0 : index
    %c0_31 = arith.constant 0 : index
    %72 = vector.load %arg7[%c0_30, %c0_31] : memref<34x512xbf16, #tpu.memory_space<vmem>>, vector<34x512xbf16>
    tpu.vector_store %arg7[%c0_30, %c0_31], %71 {strides = array<i32>} : memref<34x512xbf16, #tpu.memory_space<vmem>>, vector<34x512xbf16>,
    return
  }
  func.func @transform_0(%arg0: i32, %arg1: i32) -> (i32, i32) {
    %c0_i32 = arith.constant 0 : i32
    %c0_i32_0 = arith.constant 0 : i32
    return %arg1, %c0_i32 : i32, i32
  }
  func.func @transform_1(%arg0: i32, %arg1: i32) -> (i32, i32) {
    %c0_i32 = arith.constant 0 : i32
    %c0_i32_0 = arith.constant 0 : i32
    %c0_i32_1 = arith.constant 0 : i32
    return %c0_i32, %c0_i32_0 : i32, i32
  }
  func.func @transform_2(%arg0: i32, %arg1: i32) -> (i32, i32) {
    %c0_i32 = arith.constant 0 : i32
    %c0_i32_0 = arith.constant 0 : i32
    %c0_i32_1 = arith.constant 0 : i32
    return %c0_i32, %c0_i32_0 : i32, i32
  }
  func.func @transform_3(%arg0: i32, %arg1: i32) -> (i32, i32) {
    %c0_i32 = arith.constant 0 : i32
    %c0_i32_0 = arith.constant 0 : i32
    return %c0_i32, %arg0 : i32, i32
  }
  func.func @transform_4(%arg0: i32, %arg1: i32) -> (i32, i32) {
    %c0_i32 = arith.constant 0 : i32
    %c0_i32_0 = arith.constant 0 : i32
    return %c0_i32, %arg0 : i32, i32
  }
  func.func @transform_5(%arg0: i32, %arg1: i32) -> (i32, i32) {
    %c0_i32 = arith.constant 0 : i32
    return %arg1, %arg0 : i32, i32
  }
}

module attributes {stable_mosaic.version = 11 : i64} {
  func.func @_fused_linear_kernel(%arg0: i32, %arg1: i32, %arg2: memref<34x1024xbf16, #tpu.memory_space<vmem>>, %arg3: memref<1024x256xbf16, #tpu.memory_space<vmem>>, %arg4: memref<1x256xf32, #tpu.memory_space<vmem>>, %arg5: memref<34x256xbf16, #tpu.memory_space<vmem>>, %arg6: memref<34x256xbf16, #tpu.memory_space<vmem>>) attributes {dimension_semantics = [#tpu.dimension_semantics<parallel>, #tpu.dimension_semantics<parallel>], iteration_bounds = array<i64: 1, 1>, scalar_prefetch = 0 : i64, scratch_operands = 0 : i64, tpu.core_type = #tpu.core_type<tc>, window_params = [{transform_indices = @transform_0, window_bounds = array<i64: 34, 1024>}, {transform_indices = @transform_1, window_bounds = array<i64: 1024, 256>}, {transform_indices = @transform_2, window_bounds = array<i64: 1, 256>}, {transform_indices = @transform_3, window_bounds = array<i64: 34, 256>}, {transform_indices = @transform_4, window_bounds = array<i64: 34, 256>}]} {
    %c0 = arith.constant 0 : index
    %c0_0 = arith.constant 0 : index
    %0 = vector.load %arg2[%c0, %c0_0] : memref<34x1024xbf16, #tpu.memory_space<vmem>>, vector<34x1024xbf16>
    %c0_1 = arith.constant 0 : index
    %c0_2 = arith.constant 0 : index
    %1 = vector.load %arg3[%c0_1, %c0_2] : memref<1024x256xbf16, #tpu.memory_space<vmem>>, vector<1024x256xbf16>
    %cst = arith.constant dense<0.000000e+00> : vector<34x256xf32>
    %2 = tpu.matmul %0, %1, %cst {dimension_numbers = #tpu.dot_dimension_numbers<[1], [0], [0], [1], [0, 0, 1, 1], [], []>} : vector<34x1024xbf16>, vector<1024x256xbf16>, vector<34x256xf32> -> vector<34x256xf32>
    %c0_3 = arith.constant 0 : index
    %c0_4 = arith.constant 0 : index
    %3 = vector.load %arg4[%c0_3, %c0_4] : memref<1x256xf32, #tpu.memory_space<vmem>>, vector<1x256xf32>
    %4 = vector.broadcast %3 : vector<1x256xf32> to vector<34x256xf32>
    %5 = arith.addf %2, %4 : vector<34x256xf32>
    %c0_5 = arith.constant 0 : index
    %c0_6 = arith.constant 0 : index
    %6 = vector.load %arg5[%c0_5, %c0_6] : memref<34x256xbf16, #tpu.memory_space<vmem>>, vector<34x256xbf16>
    %7 = arith.extf %6 : vector<34x256xbf16> to vector<34x256xf32>
    %8 = arith.addf %5, %7 : vector<34x256xf32>
    %9 = arith.truncf %8 : vector<34x256xf32> to vector<34x256xbf16>
    %c0_7 = arith.constant 0 : index
    %c0_8 = arith.constant 0 : index
    %10 = vector.load %arg6[%c0_7, %c0_8] : memref<34x256xbf16, #tpu.memory_space<vmem>>, vector<34x256xbf16>
    tpu.vector_store %arg6[%c0_7, %c0_8], %9 {strides = array<i32>} : memref<34x256xbf16, #tpu.memory_space<vmem>>, vector<34x256xbf16>,
    return
  }
  func.func @transform_0(%arg0: i32, %arg1: i32) -> (i32, i32) {
    %c0_i32 = arith.constant 0 : i32
    %c0_i32_0 = arith.constant 0 : i32
    return %arg1, %c0_i32 : i32, i32
  }
  func.func @transform_1(%arg0: i32, %arg1: i32) -> (i32, i32) {
    %c0_i32 = arith.constant 0 : i32
    %c0_i32_0 = arith.constant 0 : i32
    return %c0_i32, %arg0 : i32, i32
  }
  func.func @transform_2(%arg0: i32, %arg1: i32) -> (i32, i32) {
    %c0_i32 = arith.constant 0 : i32
    %c0_i32_0 = arith.constant 0 : i32
    return %c0_i32, %arg0 : i32, i32
  }
  func.func @transform_3(%arg0: i32, %arg1: i32) -> (i32, i32) {
    %c0_i32 = arith.constant 0 : i32
    return %arg1, %arg0 : i32, i32
  }
  func.func @transform_4(%arg0: i32, %arg1: i32) -> (i32, i32) {
    %c0_i32 = arith.constant 0 : i32
    return %arg1, %arg0 : i32, i32
  }
}

module attributes {stable_mosaic.version = 11 : i64} {
  func.func @_fused_linear_kernel(%arg0: i32, %arg1: i32, %arg2: memref<34x256xbf16, #tpu.memory_space<vmem>>, %arg3: memref<1x256xf32, #tpu.memory_space<vmem>>, %arg4: memref<1x256xf32, #tpu.memory_space<vmem>>, %arg5: memref<256x384xbf16, #tpu.memory_space<vmem>>, %arg6: memref<1x384xf32, #tpu.memory_space<vmem>>, %arg7: memref<34x384xbf16, #tpu.memory_space<vmem>>) attributes {dimension_semantics = [#tpu.dimension_semantics<parallel>, #tpu.dimension_semantics<parallel>], iteration_bounds = array<i64: 2, 1>, scalar_prefetch = 0 : i64, scratch_operands = 0 : i64, tpu.core_type = #tpu.core_type<tc>, window_params = [{transform_indices = @transform_0, window_bounds = array<i64: 34, 256>}, {pipeline_mode = #tpu.pipeline_mode<synchronous>, transform_indices = @transform_1, window_bounds = array<i64: 1, 256>}, {pipeline_mode = #tpu.pipeline_mode<synchronous>, transform_indices = @transform_2, window_bounds = array<i64: 1, 256>}, {transform_indices = @transform_3, window_bounds = array<i64: 256, 384>}, {transform_indices = @transform_4, window_bounds = array<i64: 1, 384>}, {transform_indices = @transform_5, window_bounds = array<i64: 34, 384>}]} {
    %c0 = arith.constant 0 : index
    %c0_0 = arith.constant 0 : index
    %0 = vector.load %arg2[%c0, %c0_0] : memref<34x256xbf16, #tpu.memory_space<vmem>>, vector<34x256xbf16>
    %1 = arith.extf %0 : vector<34x256xbf16> to vector<34x256xf32>
    %cst = arith.constant dense<0.000000e+00> : vector<34xf32>
    %2 = vector.multi_reduction <add>, %1, %cst [1] : vector<34x256xf32> to vector<34xf32>
    %3 = vector.shape_cast %2 : vector<34xf32> to vector<34x1xf32>
    %cst_1 = arith.constant 2.560000e+02 : f32
    %4 = vector.broadcast %cst_1 : f32 to vector<34x1xf32>
    %5 = arith.divf %3, %4 : vector<34x1xf32>
    %6 = vector.broadcast %5 : vector<34x1xf32> to vector<34x256xf32>
    %7 = arith.subf %1, %6 : vector<34x256xf32>
    %8 = arith.mulf %7, %7 : vector<34x256xf32>
    %cst_2 = arith.constant dense<0.000000e+00> : vector<34xf32>
    %9 = vector.multi_reduction <add>, %8, %cst_2 [1] : vector<34x256xf32> to vector<34xf32>
    %10 = vector.shape_cast %9 : vector<34xf32> to vector<34x1xf32>
    %cst_3 = arith.constant 2.560000e+02 : f32
    %11 = vector.broadcast %cst_3 : f32 to vector<34x1xf32>
    %12 = arith.divf %10, %11 : vector<34x1xf32>
    %cst_4 = arith.constant 9.99999997E-7 : f32
    %13 = vector.broadcast %cst_4 : f32 to vector<34x1xf32>
    %14 = arith.addf %12, %13 : vector<34x1xf32>
    %15 = math.rsqrt %14 : vector<34x1xf32>
    %16 = vector.broadcast %15 : vector<34x1xf32> to vector<34x256xf32>
    %17 = arith.mulf %7, %16 : vector<34x256xf32>
    %c0_5 = arith.constant 0 : index
    %c0_6 = arith.constant 0 : index
    %18 = vector.load %arg3[%c0_5, %c0_6] : memref<1x256xf32, #tpu.memory_space<vmem>>, vector<1x256xf32>
    %19 = vector.broadcast %18 : vector<1x256xf32> to vector<34x256xf32>
    %20 = arith.mulf %17, %19 : vector<34x256xf32>
    %c0_7 = arith.constant 0 : index
    %c0_8 = arith.constant 0 : index
    %21 = vector.load %arg4[%c0_7, %c0_8] : memref<1x256xf32, #tpu.memory_space<vmem>>, vector<1x256xf32>
    %22 = vector.broadcast %21 : vector<1x256xf32> to vector<34x256xf32>
    %23 = arith.addf %20, %22 : vector<34x256xf32>
    %24 = arith.truncf %23 : vector<34x256xf32> to vector<34x256xbf16>
    %c0_9 = arith.constant 0 : index
    %c0_10 = arith.constant 0 : index
    %25 = vector.load %arg5[%c0_9, %c0_10] : memref<256x384xbf16, #tpu.memory_space<vmem>>, vector<256x384xbf16>
    %cst_11 = arith.constant dense<0.000000e+00> : vector<34x384xf32>
    %26 = tpu.matmul %24, %25, %cst_11 {dimension_numbers = #tpu.dot_dimension_numbers<[1], [0], [0], [1], [0, 0, 1, 1], [], []>} : vector<34x256xbf16>, vector<256x384xbf16>, vector<34x384xf32> -> vector<34x384xf32>
    %c0_12 = arith.constant 0 : index
    %c0_13 = arith.constant 0 : index
    %27 = vector.load %arg6[%c0_12, %c0_13] : memref<1x384xf32, #tpu.memory_space<vmem>>, vector<1x384xf32>
    %28 = vector.broadcast %27 : vector<1x384xf32> to vector<34x384xf32>
    %29 = arith.addf %26, %28 : vector<34x384xf32>
    %30 = arith.truncf %29 : vector<34x384xf32> to vector<34x384xbf16>
    %c0_14 = arith.constant 0 : index
    %c0_15 = arith.constant 0 : index
    %31 = vector.load %arg7[%c0_14, %c0_15] : memref<34x384xbf16, #tpu.memory_space<vmem>>, vector<34x384xbf16>
    tpu.vector_store %arg7[%c0_14, %c0_15], %30 {strides = array<i32>} : memref<34x384xbf16, #tpu.memory_space<vmem>>, vector<34x384xbf16>,
    return
  }
  func.func @transform_0(%arg0: i32, %arg1: i32) -> (i32, i32) {
    %c0_i32 = arith.constant 0 : i32
    %c0_i32_0 = arith.constant 0 : i32
    return %arg1, %c0_i32 : i32, i32
  }
  func.func @transform_1(%arg0: i32, %arg1: i32) -> (i32, i32) {
    %c0_i32 = arith.constant 0 : i32
    %c0_i32_0 = arith.constant 0 : i32
    %c0_i32_1 = arith.constant 0 : i32
    return %c0_i32, %c0_i32_0 : i32, i32
  }
  func.func @transform_2(%arg0: i32, %arg1: i32) -> (i32, i32) {
    %c0_i32 = arith.constant 0 : i32
    %c0_i32_0 = arith.constant 0 : i32
    %c0_i32_1 = arith.constant 0 : i32
    return %c0_i32, %c0_i32_0 : i32, i32
  }
  func.func @transform_3(%arg0: i32, %arg1: i32) -> (i32, i32) {
    %c0_i32 = arith.constant 0 : i32
    %c0_i32_0 = arith.constant 0 : i32
    return %c0_i32, %arg0 : i32, i32
  }
  func.func @transform_4(%arg0: i32, %arg1: i32) -> (i32, i32) {
    %c0_i32 = arith.constant 0 : i32
    %c0_i32_0 = arith.constant 0 : i32
    return %c0_i32, %arg0 : i32, i32
  }
  func.func @transform_5(%arg0: i32, %arg1: i32) -> (i32, i32) {
    %c0_i32 = arith.constant 0 : i32
    return %arg1, %arg0 : i32, i32
  }
}

module attributes {stable_mosaic.version = 11 : i64} {
  func.func @_layernorm_kernel(%arg0: i32, %arg1: memref<34x256xbf16, #tpu.memory_space<vmem>>, %arg2: memref<1x256xf32, #tpu.memory_space<vmem>>, %arg3: memref<1x256xf32, #tpu.memory_space<vmem>>, %arg4: memref<34x256xbf16, #tpu.memory_space<vmem>>) attributes {dimension_semantics = [#tpu.dimension_semantics<parallel>], iteration_bounds = array<i64: 1>, scalar_prefetch = 0 : i64, scratch_operands = 0 : i64, tpu.core_type = #tpu.core_type<tc>, window_params = [{transform_indices = @transform_0, window_bounds = array<i64: 34, 256>}, {pipeline_mode = #tpu.pipeline_mode<synchronous>, transform_indices = @transform_1, window_bounds = array<i64: 1, 256>}, {pipeline_mode = #tpu.pipeline_mode<synchronous>, transform_indices = @transform_2, window_bounds = array<i64: 1, 256>}, {transform_indices = @transform_3, window_bounds = array<i64: 34, 256>}]} {
    %c0 = arith.constant 0 : index
    %c0_0 = arith.constant 0 : index
    %0 = vector.load %arg1[%c0, %c0_0] : memref<34x256xbf16, #tpu.memory_space<vmem>>, vector<34x256xbf16>
    %1 = arith.extf %0 : vector<34x256xbf16> to vector<34x256xf32>
    %cst = arith.constant dense<0.000000e+00> : vector<34xf32>
    %2 = vector.multi_reduction <add>, %1, %cst [1] : vector<34x256xf32> to vector<34xf32>
    %3 = vector.shape_cast %2 : vector<34xf32> to vector<34x1xf32>
    %cst_1 = arith.constant 2.560000e+02 : f32
    %4 = vector.broadcast %cst_1 : f32 to vector<34x1xf32>
    %5 = arith.divf %3, %4 : vector<34x1xf32>
    %6 = vector.broadcast %5 : vector<34x1xf32> to vector<34x256xf32>
    %7 = arith.subf %1, %6 : vector<34x256xf32>
    %8 = arith.mulf %7, %7 : vector<34x256xf32>
    %cst_2 = arith.constant dense<0.000000e+00> : vector<34xf32>
    %9 = vector.multi_reduction <add>, %8, %cst_2 [1] : vector<34x256xf32> to vector<34xf32>
    %10 = vector.shape_cast %9 : vector<34xf32> to vector<34x1xf32>
    %cst_3 = arith.constant 2.560000e+02 : f32
    %11 = vector.broadcast %cst_3 : f32 to vector<34x1xf32>
    %12 = arith.divf %10, %11 : vector<34x1xf32>
    %cst_4 = arith.constant 9.99999997E-7 : f32
    %13 = vector.broadcast %cst_4 : f32 to vector<34x1xf32>
    %14 = arith.addf %12, %13 : vector<34x1xf32>
    %15 = math.rsqrt %14 : vector<34x1xf32>
    %16 = vector.broadcast %15 : vector<34x1xf32> to vector<34x256xf32>
    %17 = arith.mulf %7, %16 : vector<34x256xf32>
    %c0_5 = arith.constant 0 : index
    %c0_6 = arith.constant 0 : index
    %18 = vector.load %arg2[%c0_5, %c0_6] : memref<1x256xf32, #tpu.memory_space<vmem>>, vector<1x256xf32>
    %19 = vector.broadcast %18 : vector<1x256xf32> to vector<34x256xf32>
    %20 = arith.mulf %17, %19 : vector<34x256xf32>
    %c0_7 = arith.constant 0 : index
    %c0_8 = arith.constant 0 : index
    %21 = vector.load %arg3[%c0_7, %c0_8] : memref<1x256xf32, #tpu.memory_space<vmem>>, vector<1x256xf32>
    %22 = vector.broadcast %21 : vector<1x256xf32> to vector<34x256xf32>
    %23 = arith.addf %20, %22 : vector<34x256xf32>
    %24 = arith.truncf %23 : vector<34x256xf32> to vector<34x256xbf16>
    %c0_9 = arith.constant 0 : index
    %c0_10 = arith.constant 0 : index
    %25 = vector.load %arg4[%c0_9, %c0_10] : memref<34x256xbf16, #tpu.memory_space<vmem>>, vector<34x256xbf16>
    tpu.vector_store %arg4[%c0_9, %c0_10], %24 {strides = array<i32>} : memref<34x256xbf16, #tpu.memory_space<vmem>>, vector<34x256xbf16>,
    return
  }
  func.func @transform_0(%arg0: i32) -> (i32, i32) {
    %c0_i32 = arith.constant 0 : i32
    %c0_i32_0 = arith.constant 0 : i32
    return %arg0, %c0_i32 : i32, i32
  }
  func.func @transform_1(%arg0: i32) -> (i32, i32) {
    %c0_i32 = arith.constant 0 : i32
    %c0_i32_0 = arith.constant 0 : i32
    %c0_i32_1 = arith.constant 0 : i32
    return %c0_i32, %c0_i32_0 : i32, i32
  }
  func.func @transform_2(%arg0: i32) -> (i32, i32) {
    %c0_i32 = arith.constant 0 : i32
    %c0_i32_0 = arith.constant 0 : i32
    %c0_i32_1 = arith.constant 0 : i32
    return %c0_i32, %c0_i32_0 : i32, i32
  }
  func.func @transform_3(%arg0: i32) -> (i32, i32) {
    %c0_i32 = arith.constant 0 : i32
    %c0_i32_0 = arith.constant 0 : i32
    return %arg0, %c0_i32 : i32, i32
  }
}

module attributes {stable_mosaic.version = 11 : i64} {
  func.func @_dino_head_kernel(%arg0: i32, %arg1: memref<2x17x256xbf16, #tpu.memory_space<vmem>>, %arg2: memref<256x1024xbf16, #tpu.memory_space<vmem>>, %arg3: memref<256x1024xbf16, #tpu.memory_space<vmem>>, %arg4: memref<1x1024xf32, #tpu.memory_space<vmem>>, %arg5: memref<2x1024xf32, #tpu.memory_space<vmem>>) attributes {dimension_semantics = [#tpu.dimension_semantics<arbitrary>], iteration_bounds = array<i64: 1>, scalar_prefetch = 0 : i64, scratch_operands = 0 : i64, tpu.core_type = #tpu.core_type<tc>, window_params = [{pipeline_mode = #tpu.pipeline_mode<synchronous>, transform_indices = @transform_0, window_bounds = array<i64: 2, 17, 256>}, {pipeline_mode = #tpu.pipeline_mode<synchronous>, transform_indices = @transform_1, window_bounds = array<i64: 256, 1024>}, {pipeline_mode = #tpu.pipeline_mode<synchronous>, transform_indices = @transform_2, window_bounds = array<i64: 256, 1024>}, {pipeline_mode = #tpu.pipeline_mode<synchronous>, transform_indices = @transform_3, window_bounds = array<i64: 1, 1024>}, {pipeline_mode = #tpu.pipeline_mode<synchronous>, transform_indices = @transform_4, window_bounds = array<i64: 2, 1024>}]} {
    %c0 = arith.constant 0 : index
    %c0_0 = arith.constant 0 : index
    %c0_1 = arith.constant 0 : index
    %0 = vector.load %arg1[%c0, %c0_0, %c0_1] : memref<2x17x256xbf16, #tpu.memory_space<vmem>>, vector<2x17x256xbf16>
    %1 = arith.extf %0 : vector<2x17x256xbf16> to vector<2x17x256xf32>
    %2 = vector.extract_strided_slice %1 {offsets = [0, 0, 0], sizes = [2, 1, 256], strides = [1, 1, 1]} : vector<2x17x256xf32> to vector<2x1x256xf32>
    %3 = vector.shape_cast %2 : vector<2x1x256xf32> to vector<2x256xf32>
    %cst = arith.constant dense<0.000000e+00> : vector<2x256xf32>
    %4 = vector.multi_reduction <add>, %1, %cst [1] : vector<2x17x256xf32> to vector<2x256xf32>
    %5 = arith.subf %4, %3 : vector<2x256xf32>
    %cst_2 = arith.constant 6.250000e-02 : f32
    %6 = vector.broadcast %cst_2 : f32 to vector<2x256xf32>
    %7 = arith.mulf %5, %6 : vector<2x256xf32>
    %8 = arith.truncf %3 : vector<2x256xf32> to vector<2x256xbf16>
    %c0_3 = arith.constant 0 : index
    %c0_4 = arith.constant 0 : index
    %9 = vector.load %arg2[%c0_3, %c0_4] : memref<256x1024xbf16, #tpu.memory_space<vmem>>, vector<256x1024xbf16>
    %cst_5 = arith.constant dense<0.000000e+00> : vector<2x1024xf32>
    %10 = tpu.matmul %8, %9, %cst_5 {dimension_numbers = #tpu.dot_dimension_numbers<[1], [0], [0], [1], [0, 0, 1, 1], [], []>} : vector<2x256xbf16>, vector<256x1024xbf16>, vector<2x1024xf32> -> vector<2x1024xf32>
    %11 = arith.truncf %7 : vector<2x256xf32> to vector<2x256xbf16>
    %c0_6 = arith.constant 0 : index
    %c0_7 = arith.constant 0 : index
    %12 = vector.load %arg3[%c0_6, %c0_7] : memref<256x1024xbf16, #tpu.memory_space<vmem>>, vector<256x1024xbf16>
    %cst_8 = arith.constant dense<0.000000e+00> : vector<2x1024xf32>
    %13 = tpu.matmul %11, %12, %cst_8 {dimension_numbers = #tpu.dot_dimension_numbers<[1], [0], [0], [1], [0, 0, 1, 1], [], []>} : vector<2x256xbf16>, vector<256x1024xbf16>, vector<2x1024xf32> -> vector<2x1024xf32>
    %14 = arith.addf %10, %13 : vector<2x1024xf32>
    %c0_9 = arith.constant 0 : index
    %c0_10 = arith.constant 0 : index
    %15 = vector.load %arg4[%c0_9, %c0_10] : memref<1x1024xf32, #tpu.memory_space<vmem>>, vector<1x1024xf32>
    %16 = vector.broadcast %15 : vector<1x1024xf32> to vector<2x1024xf32>
    %17 = arith.addf %14, %16 : vector<2x1024xf32>
    %c0_11 = arith.constant 0 : index
    %c0_12 = arith.constant 0 : index
    %18 = vector.load %arg5[%c0_11, %c0_12] : memref<2x1024xf32, #tpu.memory_space<vmem>>, vector<2x1024xf32>
    tpu.vector_store %arg5[%c0_11, %c0_12], %17 {strides = array<i32>} : memref<2x1024xf32, #tpu.memory_space<vmem>>, vector<2x1024xf32>,
    return
  }
  func.func @transform_0(%arg0: i32) -> (i32, i32, i32) {
    %c0_i32 = arith.constant 0 : i32
    %c0_i32_0 = arith.constant 0 : i32
    %c0_i32_1 = arith.constant 0 : i32
    %c0_i32_2 = arith.constant 0 : i32
    return %c0_i32, %c0_i32_0, %c0_i32_1 : i32, i32, i32
  }
  func.func @transform_1(%arg0: i32) -> (i32, i32) {
    %c0_i32 = arith.constant 0 : i32
    %c0_i32_0 = arith.constant 0 : i32
    %c0_i32_1 = arith.constant 0 : i32
    return %c0_i32, %c0_i32_0 : i32, i32
  }
  func.func @transform_2(%arg0: i32) -> (i32, i32) {
    %c0_i32 = arith.constant 0 : i32
    %c0_i32_0 = arith.constant 0 : i32
    %c0_i32_1 = arith.constant 0 : i32
    return %c0_i32, %c0_i32_0 : i32, i32
  }
  func.func @transform_3(%arg0: i32) -> (i32, i32) {
    %c0_i32 = arith.constant 0 : i32
    %c0_i32_0 = arith.constant 0 : i32
    %c0_i32_1 = arith.constant 0 : i32
    return %c0_i32, %c0_i32_0 : i32, i32
  }
  func.func @transform_4(%arg0: i32) -> (i32, i32) {
    %c0_i32 = arith.constant 0 : i32
    %c0_i32_0 = arith.constant 0 : i32
    %c0_i32_1 = arith.constant 0 : i32
    return %c0_i32, %c0_i32_0 : i32, i32
  }
}

</mosaic_0001>

<llo_original>
// kernel: _lambda_.13
$region0: #{_lambda_.13}
  #allocation0 [shape = 'u32[]', space=smem, size = 0x4, offset = 0x4, fixed_abs, tag = 'smem constant byte address 0x4 - core index']
  #allocation1 [shape = 'u32[72,128]{1,0:T(1,128)}', space=vmem, size = 0x9000, scoped, tag = 'internal scratch']
  %s0 = inlined_call_operand.vmem [shape: bf16[32,192], index: 0, kind: input, shape index: {}]
  %s1 = inlined_call_operand.hbm [shape: bf16[192,256], index: 1, kind: input, shape index: {}]
  %s2 = inlined_call_operand.vmem [shape: f32[1,256], index: 2, kind: input, shape index: {}]
  %s3 = inlined_call_operand.vmem [shape: bf16[32,256], index: 3, kind: output, shape index: {}]
  %s4 = sld [smem:[#allocation0]]
  $region26: #{_lambda_.13} parent=0
    _
  %s6 = ssub.s32 1, %s4
  %s7 = scalar_select 0, %s6, %s4
  $region1: #{_lambda_.13} parent=0
    #allocation2 [shape = 'u8[98304]{0}', space=vmem, size = 0x18000, scoped, tag = 'input window, operand 1, single buffered']
    #allocation3 [shape = 's32[1]{0}', space=sflag, size = 0x4, scoped, tag = 'scoped memory for _lambda_.13']
    %8 = vsyncpa [#allocation3], 0
    // Predicated region
    $region2: #{_lambda_.13} parent=1 // pred_check
      _
    $region3: #{_lambda_.13} parent=1 // pred_check_branch
      %10 = sbr.rel (0) target = $region5
    $region4: #{_lambda_.13} parent=1 // pred_region
      _
    $region5: #{_lambda_.13} parent=1 // pred_fallthru
      _
    // Predicated region
    $region6: #{_lambda_.13} parent=1 // pred_check
      _
    $region7: #{_lambda_.13} parent=1 // pred_check_branch
      %12 = sbr.rel (0) target = $region9
    $region8: #{_lambda_.13} parent=1 // pred_region
      %14 = vsyncadd [#allocation3], 0
      %s15 = sshll.u32 %s1, 4
      %s16 = int_to_ptr.hbm [resolvable:$true] %s15
      %s17 = sshll.u32 [#allocation2], 4
      %s18 = int_to_ptr.vmem [resolvable:$true] %s17
      %23 = dma.hbm_to_vmem [thread:$0]  %s16, 3072, %s18, [#allocation3], 128, 128, 8
    $region9: #{_lambda_.13} parent=1 // pred_fallthru
      _
    // Predicated region
    $region10: #{_lambda_.13} parent=1 // pred_check
      _
    $region11: #{_lambda_.13} parent=1 // pred_check_branch
      %25 = sbr.rel (0) target = $region13
    $region12: #{_lambda_.13} parent=1 // pred_region
      _
    $region13: #{_lambda_.13} parent=1 // pred_fallthru
      _
    // Predicated region
    $region14: #{_lambda_.13} parent=1 // pred_check
      _
    $region15: #{_lambda_.13} parent=1 // pred_check_branch
      %27 = sbr.rel (0) target = $region17
    $region16: #{_lambda_.13} parent=1 // pred_region
      %29 = dma.done [#allocation3], 3072
    $region17: #{_lambda_.13} parent=1 // pred_fallthru
      _
    %v31 = vld [vmem:[%s0] sm:$0xff]
    %v32 = vld [vmem:[%s0 + $0x8] sm:$0xff]
    %v33 = vld [vmem:[%s0 + $0x10] sm:$0xff]
    %v34 = vld [vmem:[%s0 + $0x18] sm:$0xff]
    %v35 = vld [vmem:[#allocation2] sm:$0xff]
    %v36 = vld [vmem:[#allocation2 + $0x8] sm:$0xff]
    %v37 = vld [vmem:[#allocation2 + $0x10] sm:$0xff]
    %v38 = vld [vmem:[#allocation2 + $0x18] sm:$0xff]
    %v39 = vld [vmem:[#allocation2 + $0x20] sm:$0xff]
    %v40 = vld [vmem:[#allocation2 + $0x28] sm:$0xff]
    %v41 = vld [vmem:[#allocation2 + $0x30] sm:$0xff]
    %v42 = vld [vmem:[#allocation2 + $0x38] sm:$0xff]
    %v43 = vld [vmem:[#allocation2 + $0x40] sm:$0xff]
    %v44 = vld [vmem:[#allocation2 + $0x48] sm:$0xff]
    %v45 = vld [vmem:[#allocation2 + $0x50] sm:$0xff]
    %v46 = vld [vmem:[#allocation2 + $0x58] sm:$0xff]
    %v47 = vld [vmem:[#allocation2 + $0x60] sm:$0xff]
    %v48 = vld [vmem:[#allocation2 + $0x68] sm:$0xff]
    %v49 = vld [vmem:[#allocation2 + $0x70] sm:$0xff]
    %v50 = vld [vmem:[#allocation2 + $0x78] sm:$0xff]
    %v51 = vld [vmem:[#allocation2 + $0x80] sm:$0xff]
    %v52 = vld [vmem:[#allocation2 + $0x88] sm:$0xff]
    %v53 = vld [vmem:[#allocation2 + $0x90] sm:$0xff]
    %v54 = vld [vmem:[#allocation2 + $0x98] sm:$0xff]
    %v55 = vld [vmem:[#allocation2 + $0xa0] sm:$0xff]
    %v56 = vld [vmem:[#allocation2 + $0xa8] sm:$0xff]
    %v57 = vld [vmem:[#allocation2 + $0xb0] sm:$0xff]
    %v58 = vld [vmem:[#allocation2 + $0xb8] sm:$0xff]
    %v59 = vld [vmem:[%s2] sm:$0x3]
    %v61 = vperm.slane %v59, 0
    %v62 = vperm.slane %v59, 1
    %v69 = vunpack.c.l.b16 %v31
    %v70 = vunpack.c.h.b16 %v31
    %v71 = vunpack.c.l.b16 %v32
    %v72 = vunpack.c.h.b16 %v32
    %v73 = vunpack.c.l.b16 %v33
    %v74 = vunpack.c.h.b16 %v33
    %v75 = vunpack.c.l.b16 %v34
    %v76 = vunpack.c.h.b16 %v34
    %v77 = vpack.c.b16 %v71, %v69
    %v78 = vpack.c.b16 %v72, %v70
    %v79 = vpack.c.b16 %v75, %v73
    %v80 = vpack.c.b16 %v76, %v74
    %v107 = vunpack.c.l.b16 %v35
    %v108 = vunpack.c.h.b16 %v35
    %v109 = vunpack.c.l.b16 %v36
    %v110 = vunpack.c.h.b16 %v36
    %v111 = vunpack.c.l.b16 %v37
    %v112 = vunpack.c.h.b16 %v37
    %v113 = vunpack.c.l.b16 %v38
    %v114 = vunpack.c.h.b16 %v38
    %v115 = vunpack.c.l.b16 %v39
    %v116 = vunpack.c.h.b16 %v39
    %v117 = vunpack.c.l.b16 %v40
    %v118 = vunpack.c.h.b16 %v40
    %v119 = vunpack.c.l.b16 %v41
    %v120 = vunpack.c.h.b16 %v41
    %v121 = vunpack.c.l.b16 %v42
    %v122 = vunpack.c.h.b16 %v42
    %v123 = vunpack.c.l.b16 %v43
    %v124 = vunpack.c.h.b16 %v43
    %v125 = vunpack.c.l.b16 %v44
    %v126 = vunpack.c.h.b16 %v44
    %v127 = vunpack.c.l.b16 %v45
    %v128 = vunpack.c.h.b16 %v45
    %v129 = vunpack.c.l.b16 %v46
    %v130 = vunpack.c.h.b16 %v46
    %v131 = vunpack.c.l.b16 %v47
    %v132 = vunpack.c.h.b16 %v47
    %v133 = vunpack.c.l.b16 %v48
    %v134 = vunpack.c.h.b16 %v48
    %v135 = vunpack.c.l.b16 %v49
    %v136 = vunpack.c.h.b16 %v49
    %v137 = vunpack.c.l.b16 %v50
    %v138 = vunpack.c.h.b16 %v50
    %v139 = vunpack.c.l.b16 %v51
    %v140 = vunpack.c.h.b16 %v51
    %v141 = vunpack.c.l.b16 %v52
    %v142 = vunpack.c.h.b16 %v52
    %v143 = vunpack.c.l.b16 %v53
    %v144 = vunpack.c.h.b16 %v53
    %v145 = vunpack.c.l.b16 %v54
    %v146 = vunpack.c.h.b16 %v54
    %v147 = vunpack.c.l.b16 %v55
    %v148 = vunpack.c.h.b16 %v55
    %v149 = vunpack.c.l.b16 %v56
    %v150 = vunpack.c.h.b16 %v56
    %v151 = vunpack.c.l.b16 %v57
    %v152 = vunpack.c.h.b16 %v57
    %v153 = vunpack.c.l.b16 %v58
    %v154 = vunpack.c.h.b16 %v58
    %v155 = vpack.c.b16 %v109, %v107
    %v156 = vpack.c.b16 %v110, %v108
    %v157 = vpack.c.b16 %v113, %v111
    %v158 = vpack.c.b16 %v114, %v112
    %v159 = vpack.c.b16 %v117, %v115
    %v160 = vpack.c.b16 %v118, %v116
    %v161 = vpack.c.b16 %v121, %v119
    %v162 = vpack.c.b16 %v122, %v120
    %v163 = vpack.c.b16 %v125, %v123
    %v164 = vpack.c.b16 %v126, %v124
    %v165 = vpack.c.b16 %v129, %v127
    %v166 = vpack.c.b16 %v130, %v128
    %v167 = vpack.c.b16 %v133, %v131
    %v168 = vpack.c.b16 %v134, %v132
    %v169 = vpack.c.b16 %v137, %v135
    %v170 = vpack.c.b16 %v138, %v136
    %v171 = vpack.c.b16 %v141, %v139
    %v172 = vpack.c.b16 %v142, %v140
    %v173 = vpack.c.b16 %v145, %v143
    %v174 = vpack.c.b16 %v146, %v144
    %v175 = vpack.c.b16 %v149, %v147
    %v176 = vpack.c.b16 %v150, %v148
    %v177 = vpack.c.b16 %v153, %v151
    %v178 = vpack.c.b16 %v154, %v152
    %vm203 = vcmask 523264
    %v205 = vsel %vm203, %v78, 0
    %v208 = vsel %vm203, %v80, 0
    %210 = vmatpush.bf16.msra.mxu0 %v169
    %211 = vmatpush.bf16.msra.mxu0 %v167
    %212 = vmatpush.bf16.msra.mxu0 %v165
    %213 = vmatpush.bf16.msra.mxu0 %v163
    %214 = vmatpush.bf16.msra.mxu0 %v161
    %215 = vmatpush.bf16.msra.mxu0 %v159
    %216 = vmatpush.bf16.msra.mxu0 %v157
    %217 = vmatpush.bf16.msra.mxu0 %v155
    %218 = vmatmul.bf16.gmra.mxu0 %v77
    %v219 = vpop.f32.mrf.mxu0
    %v220 = vadd.f32 %v61, %v219
    %v221 = vpop.f32.mrf.mxu0
    %v222 = vadd.f32 %v61, %v221
    %223 = vmatmul.bf16.gmra.mxu0 %v79
    %v224 = vpop.f32.mrf.mxu0
    %v225 = vadd.f32 %v61, %v224
    %v226 = vpop.f32.mrf.mxu0
    %v227 = vadd.f32 %v61, %v226
    %228 = vdwg.mxu0
    %229 = vmatpush.bf16.msra.mxu0 0
    %230 = vmatpush.bf16.msra.mxu0 0
    %231 = vmatpush.bf16.msra.mxu0 0
    %232 = vmatpush.bf16.msra.mxu0 0
    %233 = vmatpush.bf16.msra.mxu0 %v177
    %234 = vmatpush.bf16.msra.mxu0 %v175
    %235 = vmatpush.bf16.msra.mxu0 %v173
    %236 = vmatpush.bf16.msra.mxu0 %v171
    %237 = vmatmul.bf16.gmra.mxu0 %v205
    %v238 = vpop.f32.mrf.mxu0
    %v239 = vadd.f32 %v220, %v238
    %v240 = vpop.f32.mrf.mxu0
    %v241 = vadd.f32 %v222, %v240
    %242 = vmatmul.bf16.gmra.mxu0 %v208
    %v243 = vpop.f32.mrf.mxu0
    %v244 = vadd.f32 %v225, %v243
    %v245 = vpop.f32.mrf.mxu0
    %v246 = vadd.f32 %v227, %v245
    %247 = vdwg.mxu0
    %248 = vmatpush.bf16.msra.mxu0 %v170
    %249 = vmatpush.bf16.msra.mxu0 %v168
    %250 = vmatpush.bf16.msra.mxu0 %v166
    %251 = vmatpush.bf16.msra.mxu0 %v164
    %252 = vmatpush.bf16.msra.mxu0 %v162
    %253 = vmatpush.bf16.msra.mxu0 %v160
    %254 = vmatpush.bf16.msra.mxu0 %v158
    %255 = vmatpush.bf16.msra.mxu0 %v156
    %256 = vmatmul.bf16.gmra.mxu0 %v77
    %v257 = vpop.f32.mrf.mxu0
    %v258 = vadd.f32 %v62, %v257
    %v259 = vpop.f32.mrf.mxu0
    %v260 = vadd.f32 %v62, %v259
    %261 = vmatmul.bf16.gmra.mxu0 %v79
    %v262 = vpop.f32.mrf.mxu0
    %v263 = vadd.f32 %v62, %v262
    %v264 = vpop.f32.mrf.mxu0
    %v265 = vadd.f32 %v62, %v264
    %266 = vdwg.mxu0
    %267 = vmatpush.bf16.msra.mxu0 0
    %268 = vmatpush.bf16.msra.mxu0 0
    %269 = vmatpush.bf16.msra.mxu0 0
    %270 = vmatpush.bf16.msra.mxu0 0
    %271 = vmatpush.bf16.msra.mxu0 %v178
    %272 = vmatpush.bf16.msra.mxu0 %v176
    %273 = vmatpush.bf16.msra.mxu0 %v174
    %274 = vmatpush.bf16.msra.mxu0 %v172
    %275 = vmatmul.bf16.gmra.mxu0 %v205
    %v276 = vpop.f32.mrf.mxu0
    %v277 = vadd.f32 %v258, %v276
    %v278 = vpop.f32.mrf.mxu0
    %v279 = vadd.f32 %v260, %v278
    %280 = vmatmul.bf16.gmra.mxu0 %v208
    %v281 = vpop.f32.mrf.mxu0
    %v282 = vadd.f32 %v263, %v281
    %v283 = vpop.f32.mrf.mxu0
    %v284 = vadd.f32 %v265, %v283
    %285 = vdwg.mxu0
    %v286 = vpack.c.bf16 %v277, %v239
    %v287 = vpack.c.bf16 %v279, %v241
    %v288 = vpack.c.bf16 %v282, %v244
    %v289 = vpack.c.bf16 %v284, %v246
    %290 = vst [vmem:[%s3] sm:$0xff] %v286
    %291 = vst [vmem:[%s3 + $0x8] sm:$0xff] %v287
    %292 = vst [vmem:[%s3 + $0x10] sm:$0xff] %v288
    %293 = vst [vmem:[%s3 + $0x18] sm:$0xff] %v289
    // Predicated region
    $region18: #{_lambda_.13} parent=1 // pred_check
      _
    $region19: #{_lambda_.13} parent=1 // pred_check_branch
      %295 = sbr.rel (0) target = $region21
    $region20: #{_lambda_.13} parent=1 // pred_region
      _
    $region21: #{_lambda_.13} parent=1 // pred_fallthru
      _
    // Predicated region
    $region22: #{_lambda_.13} parent=1 // pred_check
      _
    $region23: #{_lambda_.13} parent=1 // pred_check_branch
      %297 = sbr.rel (0) target = $region25
    $region24: #{_lambda_.13} parent=1 // pred_region
      _
    $region25: #{_lambda_.13} parent=1 // pred_fallthru
      _
    %298 = vsyncpa [#allocation3], 1

// kernel: _lambda_.15
$region0: #{_lambda_.15}
  #allocation0 [shape = 'u32[]', space=smem, size = 0x4, offset = 0x4, fixed_abs, tag = 'smem constant byte address 0x4 - core index']
  #allocation1 [shape = 'u32[72,128]{1,0:T(1,128)}', space=vmem, size = 0x9000, scoped, tag = 'internal scratch']
  %s0 = inlined_call_operand.vmem [shape: bf16[2,17,768], index: 0, kind: input, shape index: {}, may-alias: {0,1,2}]
  %s1 = inlined_call_operand.vmem [shape: bf16[2,17,768], index: 1, kind: input, shape index: {}, may-alias: {0,1,2}]
  %s2 = inlined_call_operand.vmem [shape: bf16[2,17,768], index: 2, kind: input, shape index: {}, may-alias: {0,1,2}]
  %s3 = inlined_call_operand.vmem [shape: bf16[2,17,256], index: 3, kind: output, shape index: {}]
  %s4 = sld [smem:[#allocation0]]
  $region205: #{_lambda_.15} parent=0
    _
  %s6 = ssub.s32 1, %s4
  %s7 = scalar_select 0, %s6, %s4
  $region1: #{_lambda_.15} parent=0
    #allocation2 [shape = 'u8[12288]{0}', space=vmem, size = 0x3000, scoped, tag = 'input window, operand 0']
    #allocation3 [shape = 'u8[12288]{0}', space=vmem, size = 0x3000, scoped, tag = 'input window, operand 1']
    #allocation4 [shape = 'u8[12288]{0}', space=vmem, size = 0x3000, scoped, tag = 'input window, operand 2']
    #allocation5 [shape = 'u8[12288]{0}', space=vmem, size = 0x3000, scoped, tag = 'output window, operand 0']
    loop: start=0, step=1, limit=6
    $region2: #{_lambda_.15} parent=1 // loop_pre_header
      _
    $region3: #{_lambda_.15} parent=1 // loop_header
      %s9 = sphi 0, %s13
      %p10 = scmp.ge.s32.totalorder %s9, 6
      %s16 = sphi 0, %s28
      %s17 = sphi 0, %s24
      %s18 = sphi 0, %s16
      %s19 = sphi 0, %s17
      %s20 = sphi 0, %s18
      %s21 = sphi 0, %s19
      %s33 = sphi 0, %s35
      %s36 = sphi 0, %s33
      %s37 = sphi 0, %s36
      %s53 = sphi 0, %s37
      %s63 = sphi 0, %s65
      %s66 = sphi 0, %s63
      %s67 = sphi 0, %s66
      %s83 = sphi 0, %s67
      %s93 = sphi 0, %s95
      %s96 = sphi 0, %s93
      %s97 = sphi 0, %s96
      %s113 = sphi 0, %s97
      %s121 = sphi 0, %s123
      %s124 = sphi 0, %s121
      %s125 = sphi 0, %s124
      %s141 = sphi 0, %s125
    $region4: #{_lambda_.15} parent=1 // loop_header_branch
      %12 = sbr.rel (%p10) target = $region8
    $region5: #{_lambda_.15} parent=1 // loop_body
      %s14 = ssub.s32 %s9, 1
      %s15 = ssub.s32 %s9, 2
      %s22 = sadd.s32 1, %s17
      %p23 = scmp.ge.s32.totalorder %s22, 2
      %s24 = scalar_select %p23, 0, %s22
      %s25 = sadd.s32 1, %s16
      %s26 = scalar_select %p23, %s25, %s16
      %p27 = scmp.ge.s32.totalorder %s26, 2
      %s28 = scalar_select %p27, 0, %s26
      %s29 = ssub.s32 %s16, %s28
      %s30 = ssub.s32 %s17, %s24
      %s31 = sor.u32 %s29, %s30
      %p32 = scmp.eq.s32.totalorder %s31, 0
      %s34 = sadd.s32 %s33, 1
      %s35 = scalar_select %p32, %s33, %s34
      %p38 = pneg %p32
      %p39 = scmp.eq.s32.totalorder %s9, 3
      %p40 = por %p38, %p39
      %p41 = scmp.ne.s32.totalorder %s33, %s36
      %p42 = scmp.eq.s32.totalorder %s9, 0
      %p43 = por %p41, %p42
      %p44 = scmp.ne.s32.totalorder %s33, %s36
      %p45 = scmp.eq.s32.totalorder %s14, 3
      %p46 = por %p44, %p45
      %p47 = scmp.ne.s32.totalorder %s36, %s37
      %p48 = scmp.eq.s32.totalorder %s14, 0
      %p49 = por %p47, %p48
      %p50 = scmp.ne.s32.totalorder %s36, %s37
      %p51 = scmp.eq.s32.totalorder %s15, 3
      %p52 = por %p50, %p51
      %p54 = scmp.ne.s32.totalorder %s37, %s53
      %p55 = scmp.eq.s32.totalorder %s15, 0
      %p56 = por %p54, %p55
      %s57 = sadd.s32 %s17, 2
      %s58 = sadd.s32 %s24, 2
      %s59 = ssub.s32 %s16, %s28
      %s60 = ssub.s32 %s57, %s58
      %s61 = sor.u32 %s59, %s60
      %p62 = scmp.eq.s32.totalorder %s61, 0
      %s64 = sadd.s32 %s63, 1
      %s65 = scalar_select %p62, %s63, %s64
      %p68 = pneg %p62
      %p69 = scmp.eq.s32.totalorder %s9, 3
      %p70 = por %p68, %p69
      %p71 = scmp.ne.s32.totalorder %s63, %s66
      %p72 = scmp.eq.s32.totalorder %s9, 0
      %p73 = por %p71, %p72
      %p74 = scmp.ne.s32.totalorder %s63, %s66
      %p75 = scmp.eq.s32.totalorder %s14, 3
      %p76 = por %p74, %p75
      %p77 = scmp.ne.s32.totalorder %s66, %s67
      %p78 = scmp.eq.s32.totalorder %s14, 0
      %p79 = por %p77, %p78
      %p80 = scmp.ne.s32.totalorder %s66, %s67
      %p81 = scmp.eq.s32.totalorder %s15, 3
      %p82 = por %p80, %p81
      %p84 = scmp.ne.s32.totalorder %s67, %s83
      %p85 = scmp.eq.s32.totalorder %s15, 0
      %p86 = por %p84, %p85
      %s87 = sadd.s32 %s17, 4
      %s88 = sadd.s32 %s24, 4
      %s89 = ssub.s32 %s16, %s28
      %s90 = ssub.s32 %s87, %s88
      %s91 = sor.u32 %s89, %s90
      %p92 = scmp.eq.s32.totalorder %s91, 0
      %s94 = sadd.s32 %s93, 1
      %s95 = scalar_select %p92, %s93, %s94
      %p98 = pneg %p92
      %p99 = scmp.eq.s32.totalorder %s9, 3
      %p100 = por %p98, %p99
      %p101 = scmp.ne.s32.totalorder %s93, %s96
      %p102 = scmp.eq.s32.totalorder %s9, 0
      %p103 = por %p101, %p102
      %p104 = scmp.ne.s32.totalorder %s93, %s96
      %p105 = scmp.eq.s32.totalorder %s14, 3
      %p106 = por %p104, %p105
      %p107 = scmp.ne.s32.totalorder %s96, %s97
      %p108 = scmp.eq.s32.totalorder %s14, 0
      %p109 = por %p107, %p108
      %p110 = scmp.ne.s32.totalorder %s96, %s97
      %p111 = scmp.eq.s32.totalorder %s15, 3
      %p112 = por %p110, %p111
      %p114 = scmp.ne.s32.totalorder %s97, %s113
      %p115 = scmp.eq.s32.totalorder %s15, 0
      %p116 = por %p114, %p115
      %s117 = ssub.s32 %s16, %s28
      %s118 = ssub.s32 %s17, %s24
      %s119 = sor.u32 %s117, %s118
      %p120 = scmp.eq.s32.totalorder %s119, 0
      %s122 = sadd.s32 %s121, 1
      %s123 = scalar_select %p120, %s121, %s122
      %p126 = pneg %p120
      %p127 = scmp.eq.s32.totalorder %s9, 3
      %p128 = por %p126, %p127
      %p129 = scmp.ne.s32.totalorder %s121, %s124
      %p130 = scmp.eq.s32.totalorder %s9, 0
      %p131 = por %p129, %p130
      %p132 = scmp.ne.s32.totalorder %s121, %s124
      %p133 = scmp.eq.s32.totalorder %s14, 3
      %p134 = por %p132, %p133
      %p135 = scmp.ne.s32.totalorder %s124, %s125
      %p136 = scmp.eq.s32.totalorder %s14, 0
      %p137 = por %p135, %p136
      %p138 = scmp.ne.s32.totalorder %s124, %s125
      %p139 = scmp.eq.s32.totalorder %s15, 3
      %p140 = por %p138, %p139
      %p142 = scmp.ne.s32.totalorder %s125, %s141
      %p143 = scmp.eq.s32.totalorder %s15, 0
      %p144 = por %p142, %p143
      %p145 = scmp.le.s32.totalorder 1, %s9
      %p146 = scmp.lt.s32.totalorder %s9, 5
      %p147 = pnand %p145, %p146
      %p148 = pneg %p147
      // Predicated region
      $region9: #{_lambda_.15} parent=5 // pred_check
        _
      $region10: #{_lambda_.15} parent=5 // pred_check_branch
        %150 = sbr.rel (%p147) target = $region12
      $region11: #{_lambda_.15} parent=5 // pred_region
        %s151 = ssub.s32 %s9, 1
      $region12: #{_lambda_.15} parent=5 // pred_fallthru
        _
      %p152 = scmp.lt.s32.totalorder %s9, 4
      // Predicated region
      $region13: #{_lambda_.15} parent=5 // pred_check
        %p153 = pneg %p152
      $region14: #{_lambda_.15} parent=5 // pred_check_branch
        %155 = sbr.rel (%p153) target = $region16
      $region15: #{_lambda_.15} parent=5 // pred_region
        // Predicated region
        $region17: #{_lambda_.15} parent=15 // pred_check
          %p156 = pneg %p43
        $region18: #{_lambda_.15} parent=15 // pred_check_branch
          %158 = sbr.rel (%p156) target = $region20
        $region19: #{_lambda_.15} parent=15 // pred_region
          %s159 = sand.u32 %s33, 1
          %s160 = sand.u32 %s33, 1
          %s161 = smul.addr %s160, 12
          %s162 = scalar_lea.vmem [#allocation2], %s161
          %s163 = smul.addr %s16, 18
          %s164 = sadd.s32 %s17, %s163
          %s165 = smul.addr %s164, 4
          %s166 = scalar_lea.vmem %s0, %s165
          // Predicated region
          $region21: #{_lambda_.15} parent=19 // pred_check
            _
          $region22: #{_lambda_.15} parent=19 // pred_check_branch
            %168 = sbr.rel (0) target = $region24
          $region23: #{_lambda_.15} parent=19 // pred_region
            // Predicated region
            $region25: #{_lambda_.15} parent=23 // pred_check
              _
            $region26: #{_lambda_.15} parent=23 // pred_check_branch
              %170 = sbr.rel target = $region28
            $region27: #{_lambda_.15} parent=23 // pred_region
              // Predicated region
              $region40: #{_lambda_.15} parent=27 // pred_check
                _
              $region41: #{_lambda_.15} parent=27 // pred_check_branch
                %190 = sbr.rel (0) target = $region43
              $region42: #{_lambda_.15} parent=27 // pred_region
                loop: start=0, step=1, limit=1
                $region44: #{_lambda_.15} parent=42 // loop_pre_header
                  _
                $region45: #{_lambda_.15} parent=42 // loop_header
                  %s192 = sphi 0, %s196
                  %p193 = scmp.ge.s32.totalorder %s192, 1
                  %s197 = sphi %s166, %s166
                  %s198 = sphi %s162, %s162
                $region46: #{_lambda_.15} parent=42 // loop_header_branch
                  %195 = sbr.rel (%p193) target = $region50
                $region47: #{_lambda_.15} parent=42 // loop_body
                  _
                $region48: #{_lambda_.15} parent=42 // loop_footer
                  %s196 = sadd.s32 1, %s192
                $region49: #{_lambda_.15} parent=42 // loop_footer_branch
                  %191 = sbr.rel target = $region45
                $region50: #{_lambda_.15} parent=42 // loop_exit
                  _
                %s200 = ssub.s32 16, 1
                loop: start=0, step=1, limit=1
                $region51: #{_lambda_.15} parent=42 // loop_pre_header
                  _
                $region52: #{_lambda_.15} parent=42 // loop_header
                  %s202 = sphi 0, %s206
                  %p203 = scmp.ge.s32.totalorder %s202, 1
                  %s207 = sphi %s166, %s166
                  %s208 = sphi %s162, %s162
                $region53: #{_lambda_.15} parent=42 // loop_header_branch
                  %205 = sbr.rel (%p203) target = $region57
                $region54: #{_lambda_.15} parent=42 // loop_body
                  %v209 = vld [vmem:[%s207] sm:%s200]
                  %210 = vst [vmem:[%s208] sm:%s200] %v209
                  %v211 = vld [vmem:[%s207 + $0x18] sm:%s200]
                  %212 = vst [vmem:[%s208 + $0x4] sm:%s200] %v211
                  %v213 = vld [vmem:[%s207 + $0x30] sm:%s200]
                  %214 = vst [vmem:[%s208 + $0x8] sm:%s200] %v213
                $region55: #{_lambda_.15} parent=42 // loop_footer
                  %s206 = sadd.s32 1, %s202
                $region56: #{_lambda_.15} parent=42 // loop_footer_branch
                  %201 = sbr.rel target = $region52
                $region57: #{_lambda_.15} parent=42 // loop_exit
                  _
              $region43: #{_lambda_.15} parent=27 // pred_fallthru
                _
            $region28: #{_lambda_.15} parent=23 // pred_fallthru
              _
            // Predicated region
            $region29: #{_lambda_.15} parent=23 // pred_check
              _
            $region30: #{_lambda_.15} parent=23 // pred_check_branch
              %172 = sbr.rel (0) target = $region32
            $region31: #{_lambda_.15} parent=23 // pred_region
              %s174 = ssub.s32 16, 1
              loop: start=0, step=1, limit=1
              $region33: #{_lambda_.15} parent=31 // loop_pre_header
                _
              $region34: #{_lambda_.15} parent=31 // loop_header
                %s176 = sphi 0, %s180
                %p177 = scmp.ge.s32.totalorder %s176, 1
                %s181 = sphi %s166, %s166
                %s182 = sphi %s162, %s162
              $region35: #{_lambda_.15} parent=31 // loop_header_branch
                %179 = sbr.rel (%p177) target = $region39
              $region36: #{_lambda_.15} parent=31 // loop_body
                %v183 = vld [vmem:[%s181] sm:%s174]
                %184 = vst [vmem:[%s182] sm:%s174] %v183
                %v185 = vld [vmem:[%s181 + $0x18] sm:%s174]
                %186 = vst [vmem:[%s182 + $0x4] sm:%s174] %v185
                %v187 = vld [vmem:[%s181 + $0x30] sm:%s174]
                %188 = vst [vmem:[%s182 + $0x8] sm:%s174] %v187
              $region37: #{_lambda_.15} parent=31 // loop_footer
                %s180 = sadd.s32 1, %s176
              $region38: #{_lambda_.15} parent=31 // loop_footer_branch
                %175 = sbr.rel target = $region34
              $region39: #{_lambda_.15} parent=31 // loop_exit
                _
            $region32: #{_lambda_.15} parent=23 // pred_fallthru
              _
          $region24: #{_lambda_.15} parent=19 // pred_fallthru
            _
          %215 = vnop
        $region20: #{_lambda_.15} parent=15 // pred_fallthru
          _
        // Predicated region
        $region58: #{_lambda_.15} parent=15 // pred_check
          %p216 = pneg %p73
        $region59: #{_lambda_.15} parent=15 // pred_check_branch
          %218 = sbr.rel (%p216) target = $region61
        $region60: #{_lambda_.15} parent=15 // pred_region
          %s219 = sand.u32 %s63, 1
          %s220 = sand.u32 %s63, 1
          %s221 = smul.addr %s220, 12
          %s222 = scalar_lea.vmem [#allocation3], %s221
          %s223 = sadd.s32 %s17, 2
          %s224 = smul.addr %s16, 18
          %s225 = sadd.s32 %s223, %s224
          %s226 = smul.addr %s225, 4
          %s227 = scalar_lea.vmem %s1, %s226
          // Predicated region
          $region62: #{_lambda_.15} parent=60 // pred_check
            _
          $region63: #{_lambda_.15} parent=60 // pred_check_branch
            %229 = sbr.rel (0) target = $region65
          $region64: #{_lambda_.15} parent=60 // pred_region
            // Predicated region
            $region66: #{_lambda_.15} parent=64 // pred_check
              _
            $region67: #{_lambda_.15} parent=64 // pred_check_branch
              %231 = sbr.rel target = $region69
            $region68: #{_lambda_.15} parent=64 // pred_region
              // Predicated region
              $region81: #{_lambda_.15} parent=68 // pred_check
                _
              $region82: #{_lambda_.15} parent=68 // pred_check_branch
                %251 = sbr.rel (0) target = $region84
              $region83: #{_lambda_.15} parent=68 // pred_region
                loop: start=0, step=1, limit=1
                $region85: #{_lambda_.15} parent=83 // loop_pre_header
                  _
                $region86: #{_lambda_.15} parent=83 // loop_header
                  %s253 = sphi 0, %s257
                  %p254 = scmp.ge.s32.totalorder %s253, 1
                  %s258 = sphi %s227, %s227
                  %s259 = sphi %s222, %s222
                $region87: #{_lambda_.15} parent=83 // loop_header_branch
                  %256 = sbr.rel (%p254) target = $region91
                $region88: #{_lambda_.15} parent=83 // loop_body
                  _
                $region89: #{_lambda_.15} parent=83 // loop_footer
                  %s257 = sadd.s32 1, %s253
                $region90: #{_lambda_.15} parent=83 // loop_footer_branch
                  %252 = sbr.rel target = $region86
                $region91: #{_lambda_.15} parent=83 // loop_exit
                  _
                %s261 = ssub.s32 16, 1
                loop: start=0, step=1, limit=1
                $region92: #{_lambda_.15} parent=83 // loop_pre_header
                  _
                $region93: #{_lambda_.15} parent=83 // loop_header
                  %s263 = sphi 0, %s267
                  %p264 = scmp.ge.s32.totalorder %s263, 1
                  %s268 = sphi %s227, %s227
                  %s269 = sphi %s222, %s222
                $region94: #{_lambda_.15} parent=83 // loop_header_branch
                  %266 = sbr.rel (%p264) target = $region98
                $region95: #{_lambda_.15} parent=83 // loop_body
                  %v270 = vld [vmem:[%s268] sm:%s261]
                  %271 = vst [vmem:[%s269] sm:%s261] %v270
                  %v272 = vld [vmem:[%s268 + $0x18] sm:%s261]
                  %273 = vst [vmem:[%s269 + $0x4] sm:%s261] %v272
                  %v274 = vld [vmem:[%s268 + $0x30] sm:%s261]
                  %275 = vst [vmem:[%s269 + $0x8] sm:%s261] %v274
                $region96: #{_lambda_.15} parent=83 // loop_footer
                  %s267 = sadd.s32 1, %s263
                $region97: #{_lambda_.15} parent=83 // loop_footer_branch
                  %262 = sbr.rel target = $region93
                $region98: #{_lambda_.15} parent=83 // loop_exit
                  _
              $region84: #{_lambda_.15} parent=68 // pred_fallthru
                _
            $region69: #{_lambda_.15} parent=64 // pred_fallthru
              _
            // Predicated region
            $region70: #{_lambda_.15} parent=64 // pred_check
              _
            $region71: #{_lambda_.15} parent=64 // pred_check_branch
              %233 = sbr.rel (0) target = $region73
            $region72: #{_lambda_.15} parent=64 // pred_region
              %s235 = ssub.s32 16, 1
              loop: start=0, step=1, limit=1
              $region74: #{_lambda_.15} parent=72 // loop_pre_header
                _
              $region75: #{_lambda_.15} parent=72 // loop_header
                %s237 = sphi 0, %s241
                %p238 = scmp.ge.s32.totalorder %s237, 1
                %s242 = sphi %s227, %s227
                %s243 = sphi %s222, %s222
              $region76: #{_lambda_.15} parent=72 // loop_header_branch
                %240 = sbr.rel (%p238) target = $region80
              $region77: #{_lambda_.15} parent=72 // loop_body
                %v244 = vld [vmem:[%s242] sm:%s235]
                %245 = vst [vmem:[%s243] sm:%s235] %v244
                %v246 = vld [vmem:[%s242 + $0x18] sm:%s235]
                %247 = vst [vmem:[%s243 + $0x4] sm:%s235] %v246
                %v248 = vld [vmem:[%s242 + $0x30] sm:%s235]
                %249 = vst [vmem:[%s243 + $0x8] sm:%s235] %v248
              $region78: #{_lambda_.15} parent=72 // loop_footer
                %s241 = sadd.s32 1, %s237
              $region79: #{_lambda_.15} parent=72 // loop_footer_branch
                %236 = sbr.rel target = $region75
              $region80: #{_lambda_.15} parent=72 // loop_exit
                _
            $region73: #{_lambda_.15} parent=64 // pred_fallthru
              _
          $region65: #{_lambda_.15} parent=60 // pred_fallthru
            _
          %276 = vnop
        $region61: #{_lambda_.15} parent=15 // pred_fallthru
          _
        // Predicated region
        $region99: #{_lambda_.15} parent=15 // pred_check
          %p277 = pneg %p103
        $region100: #{_lambda_.15} parent=15 // pred_check_branch
          %279 = sbr.rel (%p277) target = $region102
        $region101: #{_lambda_.15} parent=15 // pred_region
          %s280 = sand.u32 %s93, 1
          %s281 = sand.u32 %s93, 1
          %s282 = smul.addr %s281, 12
          %s283 = scalar_lea.vmem [#allocation4], %s282
          %s284 = sadd.s32 %s17, 4
          %s285 = smul.addr %s16, 18
          %s286 = sadd.s32 %s284, %s285
          %s287 = smul.addr %s286, 4
          %s288 = scalar_lea.vmem %s2, %s287
          // Predicated region
          $region103: #{_lambda_.15} parent=101 // pred_check
            _
          $region104: #{_lambda_.15} parent=101 // pred_check_branch
            %290 = sbr.rel (0) target = $region106
          $region105: #{_lambda_.15} parent=101 // pred_region
            // Predicated region
            $region107: #{_lambda_.15} parent=105 // pred_check
              _
            $region108: #{_lambda_.15} parent=105 // pred_check_branch
              %292 = sbr.rel target = $region110
            $region109: #{_lambda_.15} parent=105 // pred_region
              // Predicated region
              $region122: #{_lambda_.15} parent=109 // pred_check
                _
              $region123: #{_lambda_.15} parent=109 // pred_check_branch
                %312 = sbr.rel (0) target = $region125
              $region124: #{_lambda_.15} parent=109 // pred_region
                loop: start=0, step=1, limit=1
                $region126: #{_lambda_.15} parent=124 // loop_pre_header
                  _
                $region127: #{_lambda_.15} parent=124 // loop_header
                  %s314 = sphi 0, %s318
                  %p315 = scmp.ge.s32.totalorder %s314, 1
                  %s319 = sphi %s288, %s288
                  %s320 = sphi %s283, %s283
                $region128: #{_lambda_.15} parent=124 // loop_header_branch
                  %317 = sbr.rel (%p315) target = $region132
                $region129: #{_lambda_.15} parent=124 // loop_body
                  _
                $region130: #{_lambda_.15} parent=124 // loop_footer
                  %s318 = sadd.s32 1, %s314
                $region131: #{_lambda_.15} parent=124 // loop_footer_branch
                  %313 = sbr.rel target = $region127
                $region132: #{_lambda_.15} parent=124 // loop_exit
                  _
                %s322 = ssub.s32 16, 1
                loop: start=0, step=1, limit=1
                $region133: #{_lambda_.15} parent=124 // loop_pre_header
                  _
                $region134: #{_lambda_.15} parent=124 // loop_header
                  %s324 = sphi 0, %s328
                  %p325 = scmp.ge.s32.totalorder %s324, 1
                  %s329 = sphi %s288, %s288
                  %s330 = sphi %s283, %s283
                $region135: #{_lambda_.15} parent=124 // loop_header_branch
                  %327 = sbr.rel (%p325) target = $region139
                $region136: #{_lambda_.15} parent=124 // loop_body
                  %v331 = vld [vmem:[%s329] sm:%s322]
                  %332 = vst [vmem:[%s330] sm:%s322] %v331
                  %v333 = vld [vmem:[%s329 + $0x18] sm:%s322]
                  %334 = vst [vmem:[%s330 + $0x4] sm:%s322] %v333
                  %v335 = vld [vmem:[%s329 + $0x30] sm:%s322]
                  %336 = vst [vmem:[%s330 + $0x8] sm:%s322] %v335
                $region137: #{_lambda_.15} parent=124 // loop_footer
                  %s328 = sadd.s32 1, %s324
                $region138: #{_lambda_.15} parent=124 // loop_footer_branch
                  %323 = sbr.rel target = $region134
                $region139: #{_lambda_.15} parent=124 // loop_exit
                  _
              $region125: #{_lambda_.15} parent=109 // pred_fallthru
                _
            $region110: #{_lambda_.15} parent=105 // pred_fallthru
              _
            // Predicated region
            $region111: #{_lambda_.15} parent=105 // pred_check
              _
            $region112: #{_lambda_.15} parent=105 // pred_check_branch
              %294 = sbr.rel (0) target = $region114
            $region113: #{_lambda_.15} parent=105 // pred_region
              %s296 = ssub.s32 16, 1
              loop: start=0, step=1, limit=1
              $region115: #{_lambda_.15} parent=113 // loop_pre_header
                _
              $region116: #{_lambda_.15} parent=113 // loop_header
                %s298 = sphi 0, %s302
                %p299 = scmp.ge.s32.totalorder %s298, 1
                %s303 = sphi %s288, %s288
                %s304 = sphi %s283, %s283
              $region117: #{_lambda_.15} parent=113 // loop_header_branch
                %301 = sbr.rel (%p299) target = $region121
              $region118: #{_lambda_.15} parent=113 // loop_body
                %v305 = vld [vmem:[%s303] sm:%s296]
                %306 = vst [vmem:[%s304] sm:%s296] %v305
                %v307 = vld [vmem:[%s303 + $0x18] sm:%s296]
                %308 = vst [vmem:[%s304 + $0x4] sm:%s296] %v307
                %v309 = vld [vmem:[%s303 + $0x30] sm:%s296]
                %310 = vst [vmem:[%s304 + $0x8] sm:%s296] %v309
              $region119: #{_lambda_.15} parent=113 // loop_footer
                %s302 = sadd.s32 1, %s298
              $region120: #{_lambda_.15} parent=113 // loop_footer_branch
                %297 = sbr.rel target = $region116
              $region121: #{_lambda_.15} parent=113 // loop_exit
                _
            $region114: #{_lambda_.15} parent=105 // pred_fallthru
              _
          $region106: #{_lambda_.15} parent=101 // pred_fallthru
            _
          %337 = vnop
        $region102: #{_lambda_.15} parent=15 // pred_fallthru
          _
      $region16: #{_lambda_.15} parent=5 // pred_fallthru
        _
      %p338 = scmp.le.s32.totalorder 1, %s9
      %p339 = scmp.lt.s32.totalorder %s9, 5
      %p340 = pnand %p338, %p339
      %p341 = pneg %p340
      // Predicated region
      $region140: #{_lambda_.15} parent=5 // pred_check
        _
      $region141: #{_lambda_.15} parent=5 // pred_check_branch
        %343 = sbr.rel (%p340) target = $region143
      $region142: #{_lambda_.15} parent=5 // pred_region
        %s344 = ssub.s32 %s9, 1
        %s345 = sand.u32 %s36, 1
        %s346 = sand.u32 %s36, 1
        %s347 = smul.addr %s346, 12
        %s348 = scalar_lea.vmem [#allocation2], %s347
        // Predicated region
        $region144: #{_lambda_.15} parent=142 // pred_check
          %p349 = pneg %p49
        $region145: #{_lambda_.15} parent=142 // pred_check_branch
          %351 = sbr.rel (%p349) target = $region147
        $region146: #{_lambda_.15} parent=142 // pred_region
          _
        $region147: #{_lambda_.15} parent=142 // pred_fallthru
          _
        %s352 = sand.u32 %s66, 1
        %s353 = sand.u32 %s66, 1
        %s354 = smul.addr %s353, 12
        %s355 = scalar_lea.vmem [#allocation3], %s354
        // Predicated region
        $region148: #{_lambda_.15} parent=142 // pred_check
          %p356 = pneg %p79
        $region149: #{_lambda_.15} parent=142 // pred_check_branch
          %358 = sbr.rel (%p356) target = $region151
        $region150: #{_lambda_.15} parent=142 // pred_region
          _
        $region151: #{_lambda_.15} parent=142 // pred_fallthru
          _
        %s359 = sand.u32 %s96, 1
        %s360 = sand.u32 %s96, 1
        %s361 = smul.addr %s360, 12
        %s362 = scalar_lea.vmem [#allocation4], %s361
        // Predicated region
        $region152: #{_lambda_.15} parent=142 // pred_check
          %p363 = pneg %p109
        $region153: #{_lambda_.15} parent=142 // pred_check_branch
          %365 = sbr.rel (%p363) target = $region155
        $region154: #{_lambda_.15} parent=142 // pred_region
          _
        $region155: #{_lambda_.15} parent=142 // pred_fallthru
          _
        %s366 = sand.u32 %s36, 1
        %s367 = sand.u32 %s36, 1
        %s368 = smul.addr %s367, 12
        %s369 = scalar_lea.vmem [#allocation2], %s368
        %p370 = pneg %p49
        %p371 = pneg %p46
        %s372 = sand.u32 %s66, 1
        %s373 = sand.u32 %s66, 1
        %s374 = smul.addr %s373, 12
        %s375 = scalar_lea.vmem [#allocation3], %s374
        %p376 = pneg %p79
        %p377 = pneg %p76
        %s378 = sand.u32 %s96, 1
        %s379 = sand.u32 %s96, 1
        %s380 = smul.addr %s379, 12
        %s381 = scalar_lea.vmem [#allocation4], %s380
        %p382 = pneg %p109
        %p383 = pneg %p106
        %p384 = pneg %p137
        %p385 = pneg %p134
        %s386 = sand.u32 %s124, 1
        %s387 = sand.u32 %s124, 1
        %s388 = smul.addr %s387, 12
        %s389 = scalar_lea.vmem [#allocation5], %s388
        %s390 = sadd.s32 %s19, 2
        %s391 = sadd.s32 %s19, 4
        %v393 = vld [vmem:[%s348] sm:$0xf]
        %v394 = vld [vmem:[%s348 + $0x4] sm:$0xf]
        %v395 = vld [vmem:[%s348 + $0x8] sm:$0x1]
        %v396 = vld [vmem:[%s355] sm:$0xf]
        %v397 = vld [vmem:[%s355 + $0x4] sm:$0xf]
        %v398 = vld [vmem:[%s355 + $0x8] sm:$0x1]
        %v399 = vld [vmem:[%s362] sm:$0xf]
        %v400 = vld [vmem:[%s362 + $0x4] sm:$0xf]
        %v401 = vld [vmem:[%s362 + $0x8] sm:$0x1]
        %v405 = vunpack.c.l.b16 %v393
        %v406 = vunpack.c.l.b16 %v394
        %v407 = vunpack.c.l.b16 %v395
        %v408 = vpack.c.b16 %v406, %v405
        %v409 = vpack.c.b16 %v407, %v407
        %v415 = vunpack.c.l.b16 %v396
        %v416 = vunpack.c.l.b16 %v397
        %v417 = vunpack.c.l.b16 %v398
        %v418 = vpack.c.b16 %v416, %v415
        %v419 = vpack.c.b16 %v417, %v417
        %422 = vmatpush.bf16.xpose.msra.mxu0 0
        %423 = vmatpush.bf16.xpose.msra.mxu0 0
        %424 = vmatpush.bf16.xpose.msra.mxu0 0
        %425 = vmatpush.bf16.xpose.msra.mxu0 0
        %426 = vmatpush.bf16.xpose.msra.mxu0 0
        %427 = vmatpush.bf16.xpose.msra.mxu0 0
        %428 = vmatpush.bf16.xpose.msra.mxu0 %v419
        %429 = vmatpush.bf16.xpose.msra.mxu0 %v418
        %430 = vmatmul.bf16.gmra.mxu0 %v408
        %v431 = vpop.f32.mrf.mxu0
        %v432 = vadd.f32 0.0, %v431
        %v433 = vpop.f32.mrf.mxu0
        %v434 = vadd.f32 0.0, %v433
        %435 = vmatmul.bf16.gmra.mxu0 %v409
        %v436 = vpop.f32.mrf.mxu0
        %v437 = vadd.f32 0.0, %v436
        %v438 = vpop.f32.mrf.mxu0
        %439 = vdwg.mxu0
        %v440 = vmul.f32 %v432, 0.088388346
        %v441 = vmul.f32 %v434, 0.088388346
        %v442 = vmul.f32 %v437, 0.088388346
        %vm443 = vcmask 138240
        %v444 = vsel %vm443, %v440, -inf
        %445 = vmax.xlane.f32.xlu0 %v444
        %v446 = vpop.xlane.xlu0 %445
        %v447 = vsel %vm443, %v441, -inf
        %448 = vmax.xlane.f32.xlu0 %v447
        %v449 = vpop.xlane.xlu0 %448
        %vm450 = vcmask 131072
        %v451 = vsel %vm450, %v442, -inf
        %452 = vmax.xlane.f32.xlu0 %v451
        %v453 = vpop.xlane.xlu0 %452
        %v454 = vsub.f32 %v440, %v446
        %v455 = vsub.f32 %v441, %v449
        %v456 = vsub.f32 %v442, %v453
        %v457 = vmul.f32 %v454, 1.442695
        %v458 = vpow.pop %v457
        %v459 = vmul.f32 %v455, 1.442695
        %v460 = vpow.pop %v459
        %v461 = vmul.f32 %v456, 1.442695
        %v462 = vpow.pop %v461
        %v463 = vsel %vm443, %v458, 0.0
        %464 = vadd.xlane.f32.xlu0 %v463
        %v465 = vpop.xlane.xlu0 %464
        %v466 = vsel %vm443, %v460, 0.0
        %467 = vadd.xlane.f32.xlu0 %v466
        %v468 = vpop.xlane.xlu0 %467
        %v469 = vsel %vm450, %v462, 0.0
        %470 = vadd.xlane.f32.xlu0 %v469
        %v471 = vpop.xlane.xlu0 %470
        %v472 = vrcp.pop %v465
        %v473 = vrcp.pop %v468
        %v474 = vrcp.pop %v471
        %v475 = vmul.f32 %v458, %v472
        %v476 = vmul.f32 %v460, %v473
        %v477 = vmul.f32 %v462, %v474
        %v478 = vpack.c.bf16 %v476, %v475
        %v479 = vpack.c.bf16 %v477, %v477
        %v483 = vunpack.c.l.b16 %v399
        %v484 = vunpack.c.l.b16 %v400
        %v485 = vunpack.c.l.b16 %v401
        %v486 = vpack.c.b16 %v484, %v483
        %v487 = vpack.c.b16 %v485, %v485
        %v490 = vsel %vm443, %v478, 0
        %v493 = vsel %vm443, %v479, 0
        %vm495 = vcmask 1040384
        %v496 = vsel 0, 4294967295, 65535
        %v497 = vsel %vm495, %v496, 0
        %v499 = vand.u32 %v487, %v497
        %501 = vmatpush.bf16.msra.mxu0 0
        %502 = vmatpush.bf16.msra.mxu0 0
        %503 = vmatpush.bf16.msra.mxu0 0
        %504 = vmatpush.bf16.msra.mxu0 0
        %505 = vmatpush.bf16.msra.mxu0 0
        %506 = vmatpush.bf16.msra.mxu0 0
        %507 = vmatpush.bf16.msra.mxu0 %v499
        %508 = vmatpush.bf16.msra.mxu0 %v486
        %509 = vmatmul.bf16.gmra.mxu0 %v490
        %v510 = vpop.f32.mrf.mxu0
        %v511 = vadd.f32 0.0, %v510
        %v512 = vpop.f32.mrf.mxu0
        %v513 = vadd.f32 0.0, %v512
        %514 = vmatmul.bf16.gmra.mxu0 %v493
        %v515 = vpop.f32.mrf.mxu0
        %v516 = vadd.f32 0.0, %v515
        %v517 = vpop.f32.mrf.mxu0
        %518 = vdwg.mxu0
        %v519 = vpack.c.bf16 %v511, %v511
        %v520 = vpack.c.bf16 %v513, %v513
        %v521 = vpack.c.bf16 %v516, %v516
        %522 = vst [vmem:[%s389] sm:$0xf] %v519
        %523 = vst [vmem:[%s389 + $0x4] sm:$0xf] %v520
        %vm524 = vcmask 1040384
        %vm525 = vsmask.f32 256
        %vm526 = vmand %vm524, %vm525
        %v527 = vld [vmem:[%s389 + $0x8] sm:$0x1]
        %v528 = vsel %vm526, %v521, %v527
        %529 = vst [vmem:[%s389 + $0x8] sm:$0x1] %v528
        %s530 = sand.u32 %s124, 1
        %s531 = sand.u32 %s124, 1
        %s532 = smul.addr %s531, 12
        %s533 = scalar_lea.vmem [#allocation5], %s532
        // Predicated region
        $region156: #{_lambda_.15} parent=142 // pred_check
          %p534 = pneg %p134
        $region157: #{_lambda_.15} parent=142 // pred_check_branch
          %536 = sbr.rel (%p534) target = $region159
        $region158: #{_lambda_.15} parent=142 // pred_region
          %s537 = smul.addr %s18, 6
          %s538 = sadd.s32 %s19, %s537
          %s539 = smul.addr %s538, 4
          %s540 = scalar_lea.vmem %s3, %s539
          // Predicated region
          $region160: #{_lambda_.15} parent=158 // pred_check
            _
          $region161: #{_lambda_.15} parent=158 // pred_check_branch
            %542 = sbr.rel (0) target = $region163
          $region162: #{_lambda_.15} parent=158 // pred_region
            // Predicated region
            $region164: #{_lambda_.15} parent=162 // pred_check
              _
            $region165: #{_lambda_.15} parent=162 // pred_check_branch
              %544 = sbr.rel target = $region167
            $region166: #{_lambda_.15} parent=162 // pred_region
              // Predicated region
              $region179: #{_lambda_.15} parent=166 // pred_check
                _
              $region180: #{_lambda_.15} parent=166 // pred_check_branch
                %564 = sbr.rel (0) target = $region182
              $region181: #{_lambda_.15} parent=166 // pred_region
                loop: start=0, step=1, limit=1
                $region183: #{_lambda_.15} parent=181 // loop_pre_header
                  _
                $region184: #{_lambda_.15} parent=181 // loop_header
                  %s566 = sphi 0, %s570
                  %p567 = scmp.ge.s32.totalorder %s566, 1
                  %s571 = sphi %s533, %s533
                  %s572 = sphi %s540, %s540
                $region185: #{_lambda_.15} parent=181 // loop_header_branch
                  %569 = sbr.rel (%p567) target = $region189
                $region186: #{_lambda_.15} parent=181 // loop_body
                  _
                $region187: #{_lambda_.15} parent=181 // loop_footer
                  %s570 = sadd.s32 1, %s566
                $region188: #{_lambda_.15} parent=181 // loop_footer_branch
                  %565 = sbr.rel target = $region184
                $region189: #{_lambda_.15} parent=181 // loop_exit
                  _
                %s574 = ssub.s32 16, 1
                loop: start=0, step=1, limit=1
                $region190: #{_lambda_.15} parent=181 // loop_pre_header
                  _
                $region191: #{_lambda_.15} parent=181 // loop_header
                  %s576 = sphi 0, %s580
                  %p577 = scmp.ge.s32.totalorder %s576, 1
                  %s581 = sphi %s533, %s533
                  %s582 = sphi %s540, %s540
                $region192: #{_lambda_.15} parent=181 // loop_header_branch
                  %579 = sbr.rel (%p577) target = $region196
                $region193: #{_lambda_.15} parent=181 // loop_body
                  %v583 = vld [vmem:[%s581] sm:%s574]
                  %584 = vst [vmem:[%s582] sm:%s574] %v583
                  %v585 = vld [vmem:[%s581 + $0x4] sm:%s574]
                  %586 = vst [vmem:[%s582 + $0x8] sm:%s574] %v585
                  %v587 = vld [vmem:[%s581 + $0x8] sm:%s574]
                  %588 = vst [vmem:[%s582 + $0x10] sm:%s574] %v587
                $region194: #{_lambda_.15} parent=181 // loop_footer
                  %s580 = sadd.s32 1, %s576
                $region195: #{_lambda_.15} parent=181 // loop_footer_branch
                  %575 = sbr.rel target = $region191
                $region196: #{_lambda_.15} parent=181 // loop_exit
                  _
              $region182: #{_lambda_.15} parent=166 // pred_fallthru
                _
            $region167: #{_lambda_.15} parent=162 // pred_fallthru
              _
            // Predicated region
            $region168: #{_lambda_.15} parent=162 // pred_check
              _
            $region169: #{_lambda_.15} parent=162 // pred_check_branch
              %546 = sbr.rel (0) target = $region171
            $region170: #{_lambda_.15} parent=162 // pred_region
              %s548 = ssub.s32 16, 1
              loop: start=0, step=1, limit=1
              $region172: #{_lambda_.15} parent=170 // loop_pre_header
                _
              $region173: #{_lambda_.15} parent=170 // loop_header
                %s550 = sphi 0, %s554
                %p551 = scmp.ge.s32.totalorder %s550, 1
                %s555 = sphi %s533, %s533
                %s556 = sphi %s540, %s540
              $region174: #{_lambda_.15} parent=170 // loop_header_branch
                %553 = sbr.rel (%p551) target = $region178
              $region175: #{_lambda_.15} parent=170 // loop_body
                %v557 = vld [vmem:[%s555] sm:%s548]
                %558 = vst [vmem:[%s556] sm:%s548] %v557
                %v559 = vld [vmem:[%s555 + $0x4] sm:%s548]
                %560 = vst [vmem:[%s556 + $0x8] sm:%s548] %v559
                %v561 = vld [vmem:[%s555 + $0x8] sm:%s548]
                %562 = vst [vmem:[%s556 + $0x10] sm:%s548] %v561
              $region176: #{_lambda_.15} parent=170 // loop_footer
                %s554 = sadd.s32 1, %s550
              $region177: #{_lambda_.15} parent=170 // loop_footer_branch
                %549 = sbr.rel target = $region173
              $region178: #{_lambda_.15} parent=170 // loop_exit
                _
            $region171: #{_lambda_.15} parent=162 // pred_fallthru
              _
          $region163: #{_lambda_.15} parent=158 // pred_fallthru
            _
          %589 = vnop
        $region159: #{_lambda_.15} parent=142 // pred_fallthru
          _
      $region143: #{_lambda_.15} parent=5 // pred_fallthru
        _
      %p590 = scmp.le.s32.totalorder 2, %s9
      // Predicated region
      $region197: #{_lambda_.15} parent=5 // pred_check
        %p591 = pneg %p590
      $region198: #{_lambda_.15} parent=5 // pred_check_branch
        %593 = sbr.rel (%p591) target = $region200
      $region199: #{_lambda_.15} parent=5 // pred_region
        %s594 = ssub.s32 %s9, 2
        // Predicated region
        $region201: #{_lambda_.15} parent=199 // pred_check
          %p595 = pneg %p140
        $region202: #{_lambda_.15} parent=199 // pred_check_branch
          %597 = sbr.rel (%p595) target = $region204
        $region203: #{_lambda_.15} parent=199 // pred_region
          %s598 = sand.u32 %s125, 1
          %s599 = sand.u32 %s125, 1
          %s600 = smul.addr %s599, 12
          %s601 = scalar_lea.vmem [#allocation5], %s600
        $region204: #{_lambda_.15} parent=199 // pred_fallthru
          _
      $region200: #{_lambda_.15} parent=5 // pred_fallthru
        _
    $region6: #{_lambda_.15} parent=1 // loop_footer
      %s13 = sadd.s32 1, %s9
    $region7: #{_lambda_.15} parent=1 // loop_footer_branch
      %8 = sbr.rel target = $region3
    $region8: #{_lambda_.15} parent=1 // loop_exit
      _

// kernel: _lambda_.16
$region0: #{_lambda_.16}
  #allocation0 [shape = 'u32[]', space=smem, size = 0x4, offset = 0x4, fixed_abs, tag = 'smem constant byte address 0x4 - core index']
  #allocation1 [shape = 'u32[72,128]{1,0:T(1,128)}', space=vmem, size = 0x9000, scoped, tag = 'internal scratch']
  %s0 = inlined_call_operand.vmem [shape: bf16[34,256], index: 0, kind: input, shape index: {}]
  %s1 = inlined_call_operand.hbm [shape: bf16[256,256], index: 1, kind: input, shape index: {}]
  %s2 = inlined_call_operand.vmem [shape: f32[1,256], index: 2, kind: input, shape index: {}]
  %s3 = inlined_call_operand.vmem [shape: bf16[34,256], index: 3, kind: input, shape index: {}]
  %s4 = inlined_call_operand.vmem [shape: bf16[34,256], index: 4, kind: output, shape index: {}]
  %s5 = sld [smem:[#allocation0]]
  $region30: #{_lambda_.16} parent=0
    _
  %s7 = ssub.s32 1, %s5
  %s8 = scalar_select 0, %s7, %s5
  $region1: #{_lambda_.16} parent=0
    #allocation2 [shape = 'u8[131072]{0}', space=vmem, size = 0x20000, scoped, tag = 'input window, operand 1, single buffered']
    #allocation3 [shape = 's32[1]{0}', space=sflag, size = 0x4, scoped, tag = 'scoped memory for _lambda_.16']
    %9 = vsyncpa [#allocation3], 0
    // Predicated region
    $region2: #{_lambda_.16} parent=1 // pred_check
      _
    $region3: #{_lambda_.16} parent=1 // pred_check_branch
      %11 = sbr.rel (0) target = $region5
    $region4: #{_lambda_.16} parent=1 // pred_region
      _
    $region5: #{_lambda_.16} parent=1 // pred_fallthru
      _
    // Predicated region
    $region6: #{_lambda_.16} parent=1 // pred_check
      _
    $region7: #{_lambda_.16} parent=1 // pred_check_branch
      %13 = sbr.rel (0) target = $region9
    $region8: #{_lambda_.16} parent=1 // pred_region
      %15 = vsyncadd [#allocation3], 0
      %s16 = sshll.u32 %s1, 4
      %s17 = int_to_ptr.hbm [resolvable:$true] %s16
      %s18 = sshll.u32 [#allocation2], 4
      %s19 = int_to_ptr.vmem [resolvable:$true] %s18
      %24 = dma.hbm_to_vmem [thread:$0]  %s17, 4096, %s19, [#allocation3], 128, 128, 8
    $region9: #{_lambda_.16} parent=1 // pred_fallthru
      _
    // Predicated region
    $region10: #{_lambda_.16} parent=1 // pred_check
      _
    $region11: #{_lambda_.16} parent=1 // pred_check_branch
      %26 = sbr.rel (0) target = $region13
    $region12: #{_lambda_.16} parent=1 // pred_region
      _
    $region13: #{_lambda_.16} parent=1 // pred_fallthru
      _
    // Predicated region
    $region14: #{_lambda_.16} parent=1 // pred_check
      _
    $region15: #{_lambda_.16} parent=1 // pred_check_branch
      %28 = sbr.rel (0) target = $region17
    $region16: #{_lambda_.16} parent=1 // pred_region
      _
    $region17: #{_lambda_.16} parent=1 // pred_fallthru
      _
    // Predicated region
    $region18: #{_lambda_.16} parent=1 // pred_check
      _
    $region19: #{_lambda_.16} parent=1 // pred_check_branch
      %30 = sbr.rel (0) target = $region21
    $region20: #{_lambda_.16} parent=1 // pred_region
      %32 = dma.done [#allocation3], 4096
    $region21: #{_lambda_.16} parent=1 // pred_fallthru
      _
    %v33 = vld [vmem:[%s0] sm:$0xff]
    %v34 = vld [vmem:[%s0 + $0x8] sm:$0xff]
    %v35 = vld [vmem:[%s0 + $0x10] sm:$0xff]
    %v36 = vld [vmem:[%s0 + $0x18] sm:$0xff]
    %v37 = vld [vmem:[%s0 + $0x20] sm:$0x11]
    %v38 = vld [vmem:[#allocation2] sm:$0xff]
    %v39 = vld [vmem:[#allocation2 + $0x8] sm:$0xff]
    %v40 = vld [vmem:[#allocation2 + $0x10] sm:$0xff]
    %v41 = vld [vmem:[#allocation2 + $0x18] sm:$0xff]
    %v42 = vld [vmem:[#allocation2 + $0x20] sm:$0xff]
    %v43 = vld [vmem:[#allocation2 + $0x28] sm:$0xff]
    %v44 = vld [vmem:[#allocation2 + $0x30] sm:$0xff]
    %v45 = vld [vmem:[#allocation2 + $0x38] sm:$0xff]
    %v46 = vld [vmem:[#allocation2 + $0x40] sm:$0xff]
    %v47 = vld [vmem:[#allocation2 + $0x48] sm:$0xff]
    %v48 = vld [vmem:[#allocation2 + $0x50] sm:$0xff]
    %v49 = vld [vmem:[#allocation2 + $0x58] sm:$0xff]
    %v50 = vld [vmem:[#allocation2 + $0x60] sm:$0xff]
    %v51 = vld [vmem:[#allocation2 + $0x68] sm:$0xff]
    %v52 = vld [vmem:[#allocation2 + $0x70] sm:$0xff]
    %v53 = vld [vmem:[#allocation2 + $0x78] sm:$0xff]
    %v54 = vld [vmem:[#allocation2 + $0x80] sm:$0xff]
    %v55 = vld [vmem:[#allocation2 + $0x88] sm:$0xff]
    %v56 = vld [vmem:[#allocation2 + $0x90] sm:$0xff]
    %v57 = vld [vmem:[#allocation2 + $0x98] sm:$0xff]
    %v58 = vld [vmem:[#allocation2 + $0xa0] sm:$0xff]
    %v59 = vld [vmem:[#allocation2 + $0xa8] sm:$0xff]
    %v60 = vld [vmem:[#allocation2 + $0xb0] sm:$0xff]
    %v61 = vld [vmem:[#allocation2 + $0xb8] sm:$0xff]
    %v62 = vld [vmem:[#allocation2 + $0xc0] sm:$0xff]
    %v63 = vld [vmem:[#allocation2 + $0xc8] sm:$0xff]
    %v64 = vld [vmem:[#allocation2 + $0xd0] sm:$0xff]
    %v65 = vld [vmem:[#allocation2 + $0xd8] sm:$0xff]
    %v66 = vld [vmem:[#allocation2 + $0xe0] sm:$0xff]
    %v67 = vld [vmem:[#allocation2 + $0xe8] sm:$0xff]
    %v68 = vld [vmem:[#allocation2 + $0xf0] sm:$0xff]
    %v69 = vld [vmem:[#allocation2 + $0xf8] sm:$0xff]
    %v70 = vld [vmem:[%s2] sm:$0x3]
    %v72 = vperm.slane %v70, 0
    %v73 = vperm.slane %v70, 1
    %v81 = vunpack.c.l.b16 %v33
    %v82 = vunpack.c.h.b16 %v33
    %v83 = vunpack.c.l.b16 %v34
    %v84 = vunpack.c.h.b16 %v34
    %v85 = vunpack.c.l.b16 %v35
    %v86 = vunpack.c.h.b16 %v35
    %v87 = vunpack.c.l.b16 %v36
    %v88 = vunpack.c.h.b16 %v36
    %v89 = vunpack.c.l.b16 %v37
    %v90 = vunpack.c.h.b16 %v37
    %v91 = vpack.c.b16 %v83, %v81
    %v92 = vpack.c.b16 %v84, %v82
    %v93 = vpack.c.b16 %v87, %v85
    %v94 = vpack.c.b16 %v88, %v86
    %v95 = vpack.c.b16 %v89, %v89
    %v96 = vpack.c.b16 %v90, %v90
    %v135 = vunpack.c.l.b16 %v38
    %v136 = vunpack.c.h.b16 %v38
    %v137 = vunpack.c.l.b16 %v39
    %v138 = vunpack.c.h.b16 %v39
    %v139 = vunpack.c.l.b16 %v40
    %v140 = vunpack.c.h.b16 %v40
    %v141 = vunpack.c.l.b16 %v41
    %v142 = vunpack.c.h.b16 %v41
    %v143 = vunpack.c.l.b16 %v42
    %v144 = vunpack.c.h.b16 %v42
    %v145 = vunpack.c.l.b16 %v43
    %v146 = vunpack.c.h.b16 %v43
    %v147 = vunpack.c.l.b16 %v44
    %v148 = vunpack.c.h.b16 %v44
    %v149 = vunpack.c.l.b16 %v45
    %v150 = vunpack.c.h.b16 %v45
    %v151 = vunpack.c.l.b16 %v46
    %v152 = vunpack.c.h.b16 %v46
    %v153 = vunpack.c.l.b16 %v47
    %v154 = vunpack.c.h.b16 %v47
    %v155 = vunpack.c.l.b16 %v48
    %v156 = vunpack.c.h.b16 %v48
    %v157 = vunpack.c.l.b16 %v49
    %v158 = vunpack.c.h.b16 %v49
    %v159 = vunpack.c.l.b16 %v50
    %v160 = vunpack.c.h.b16 %v50
    %v161 = vunpack.c.l.b16 %v51
    %v162 = vunpack.c.h.b16 %v51
    %v163 = vunpack.c.l.b16 %v52
    %v164 = vunpack.c.h.b16 %v52
    %v165 = vunpack.c.l.b16 %v53
    %v166 = vunpack.c.h.b16 %v53
    %v167 = vunpack.c.l.b16 %v54
    %v168 = vunpack.c.h.b16 %v54
    %v169 = vunpack.c.l.b16 %v55
    %v170 = vunpack.c.h.b16 %v55
    %v171 = vunpack.c.l.b16 %v56
    %v172 = vunpack.c.h.b16 %v56
    %v173 = vunpack.c.l.b16 %v57
    %v174 = vunpack.c.h.b16 %v57
    %v175 = vunpack.c.l.b16 %v58
    %v176 = vunpack.c.h.b16 %v58
    %v177 = vunpack.c.l.b16 %v59
    %v178 = vunpack.c.h.b16 %v59
    %v179 = vunpack.c.l.b16 %v60
    %v180 = vunpack.c.h.b16 %v60
    %v181 = vunpack.c.l.b16 %v61
    %v182 = vunpack.c.h.b16 %v61
    %v183 = vunpack.c.l.b16 %v62
    %v184 = vunpack.c.h.b16 %v62
    %v185 = vunpack.c.l.b16 %v63
    %v186 = vunpack.c.h.b16 %v63
    %v187 = vunpack.c.l.b16 %v64
    %v188 = vunpack.c.h.b16 %v64
    %v189 = vunpack.c.l.b16 %v65
    %v190 = vunpack.c.h.b16 %v65
    %v191 = vunpack.c.l.b16 %v66
    %v192 = vunpack.c.h.b16 %v66
    %v193 = vunpack.c.l.b16 %v67
    %v194 = vunpack.c.h.b16 %v67
    %v195 = vunpack.c.l.b16 %v68
    %v196 = vunpack.c.h.b16 %v68
    %v197 = vunpack.c.l.b16 %v69
    %v198 = vunpack.c.h.b16 %v69
    %v199 = vpack.c.b16 %v137, %v135
    %v200 = vpack.c.b16 %v138, %v136
    %v201 = vpack.c.b16 %v141, %v139
    %v202 = vpack.c.b16 %v142, %v140
    %v203 = vpack.c.b16 %v145, %v143
    %v204 = vpack.c.b16 %v146, %v144
    %v205 = vpack.c.b16 %v149, %v147
    %v206 = vpack.c.b16 %v150, %v148
    %v207 = vpack.c.b16 %v153, %v151
    %v208 = vpack.c.b16 %v154, %v152
    %v209 = vpack.c.b16 %v157, %v155
    %v210 = vpack.c.b16 %v158, %v156
    %v211 = vpack.c.b16 %v161, %v159
    %v212 = vpack.c.b16 %v162, %v160
    %v213 = vpack.c.b16 %v165, %v163
    %v214 = vpack.c.b16 %v166, %v164
    %v215 = vpack.c.b16 %v169, %v167
    %v216 = vpack.c.b16 %v170, %v168
    %v217 = vpack.c.b16 %v173, %v171
    %v218 = vpack.c.b16 %v174, %v172
    %v219 = vpack.c.b16 %v177, %v175
    %v220 = vpack.c.b16 %v178, %v176
    %v221 = vpack.c.b16 %v181, %v179
    %v222 = vpack.c.b16 %v182, %v180
    %v223 = vpack.c.b16 %v185, %v183
    %v224 = vpack.c.b16 %v186, %v184
    %v225 = vpack.c.b16 %v189, %v187
    %v226 = vpack.c.b16 %v190, %v188
    %v227 = vpack.c.b16 %v193, %v191
    %v228 = vpack.c.b16 %v194, %v192
    %v229 = vpack.c.b16 %v197, %v195
    %v230 = vpack.c.b16 %v198, %v196
    %263 = vmatpush.bf16.msra.mxu0 %v213
    %264 = vmatpush.bf16.msra.mxu0 %v211
    %265 = vmatpush.bf16.msra.mxu0 %v209
    %266 = vmatpush.bf16.msra.mxu0 %v207
    %267 = vmatpush.bf16.msra.mxu0 %v205
    %268 = vmatpush.bf16.msra.mxu0 %v203
    %269 = vmatpush.bf16.msra.mxu0 %v201
    %270 = vmatpush.bf16.msra.mxu0 %v199
    %271 = vmatmul.bf16.gmra.mxu0 %v91
    %v272 = vpop.f32.mrf.mxu0
    %v273 = vadd.f32 %v72, %v272
    %v274 = vpop.f32.mrf.mxu0
    %v275 = vadd.f32 %v72, %v274
    %276 = vmatmul.bf16.gmra.mxu0 %v93
    %v277 = vpop.f32.mrf.mxu0
    %v278 = vadd.f32 %v72, %v277
    %v279 = vpop.f32.mrf.mxu0
    %v280 = vadd.f32 %v72, %v279
    %281 = vmatmul.bf16.gmra.mxu0 %v95
    %v282 = vpop.f32.mrf.mxu0
    %v283 = vadd.f32 %v72, %v282
    %v284 = vpop.f32.mrf.mxu0
    %285 = vdwg.mxu0
    %286 = vmatpush.bf16.msra.mxu0 %v229
    %287 = vmatpush.bf16.msra.mxu0 %v227
    %288 = vmatpush.bf16.msra.mxu0 %v225
    %289 = vmatpush.bf16.msra.mxu0 %v223
    %290 = vmatpush.bf16.msra.mxu0 %v221
    %291 = vmatpush.bf16.msra.mxu0 %v219
    %292 = vmatpush.bf16.msra.mxu0 %v217
    %293 = vmatpush.bf16.msra.mxu0 %v215
    %294 = vmatmul.bf16.gmra.mxu0 %v92
    %v295 = vpop.f32.mrf.mxu0
    %v296 = vadd.f32 %v273, %v295
    %v297 = vpop.f32.mrf.mxu0
    %v298 = vadd.f32 %v275, %v297
    %299 = vmatmul.bf16.gmra.mxu0 %v94
    %v300 = vpop.f32.mrf.mxu0
    %v301 = vadd.f32 %v278, %v300
    %v302 = vpop.f32.mrf.mxu0
    %v303 = vadd.f32 %v280, %v302
    %304 = vmatmul.bf16.gmra.mxu0 %v96
    %v305 = vpop.f32.mrf.mxu0
    %v306 = vadd.f32 %v283, %v305
    %v307 = vpop.f32.mrf.mxu0
    %308 = vdwg.mxu0
    %309 = vmatpush.bf16.msra.mxu0 %v214
    %310 = vmatpush.bf16.msra.mxu0 %v212
    %311 = vmatpush.bf16.msra.mxu0 %v210
    %312 = vmatpush.bf16.msra.mxu0 %v208
    %313 = vmatpush.bf16.msra.mxu0 %v206
    %314 = vmatpush.bf16.msra.mxu0 %v204
    %315 = vmatpush.bf16.msra.mxu0 %v202
    %316 = vmatpush.bf16.msra.mxu0 %v200
    %317 = vmatmul.bf16.gmra.mxu0 %v91
    %v318 = vpop.f32.mrf.mxu0
    %v319 = vadd.f32 %v73, %v318
    %v320 = vpop.f32.mrf.mxu0
    %v321 = vadd.f32 %v73, %v320
    %322 = vmatmul.bf16.gmra.mxu0 %v93
    %v323 = vpop.f32.mrf.mxu0
    %v324 = vadd.f32 %v73, %v323
    %v325 = vpop.f32.mrf.mxu0
    %v326 = vadd.f32 %v73, %v325
    %327 = vmatmul.bf16.gmra.mxu0 %v95
    %v328 = vpop.f32.mrf.mxu0
    %v329 = vadd.f32 %v73, %v328
    %v330 = vpop.f32.mrf.mxu0
    %331 = vdwg.mxu0
    %332 = vmatpush.bf16.msra.mxu0 %v230
    %333 = vmatpush.bf16.msra.mxu0 %v228
    %334 = vmatpush.bf16.msra.mxu0 %v226
    %335 = vmatpush.bf16.msra.mxu0 %v224
    %336 = vmatpush.bf16.msra.mxu0 %v222
    %337 = vmatpush.bf16.msra.mxu0 %v220
    %338 = vmatpush.bf16.msra.mxu0 %v218
    %339 = vmatpush.bf16.msra.mxu0 %v216
    %340 = vmatmul.bf16.gmra.mxu0 %v92
    %v341 = vpop.f32.mrf.mxu0
    %v342 = vadd.f32 %v319, %v341
    %v343 = vpop.f32.mrf.mxu0
    %v344 = vadd.f32 %v321, %v343
    %345 = vmatmul.bf16.gmra.mxu0 %v94
    %v346 = vpop.f32.mrf.mxu0
    %v347 = vadd.f32 %v324, %v346
    %v348 = vpop.f32.mrf.mxu0
    %v349 = vadd.f32 %v326, %v348
    %350 = vmatmul.bf16.gmra.mxu0 %v96
    %v351 = vpop.f32.mrf.mxu0
    %v352 = vadd.f32 %v329, %v351
    %v353 = vpop.f32.mrf.mxu0
    %354 = vdwg.mxu0
    %v355 = vld [vmem:[%s3] sm:$0xff]
    %v356 = vld [vmem:[%s3 + $0x8] sm:$0xff]
    %v357 = vld [vmem:[%s3 + $0x10] sm:$0xff]
    %v358 = vld [vmem:[%s3 + $0x18] sm:$0xff]
    %v359 = vld [vmem:[%s3 + $0x20] sm:$0x11]
    %v360 = vunpack.c.l.bf16 %v355
    %v361 = vunpack.c.h.bf16 %v355
    %v362 = vunpack.c.l.bf16 %v356
    %v363 = vunpack.c.h.bf16 %v356
    %v364 = vunpack.c.l.bf16 %v357
    %v365 = vunpack.c.h.bf16 %v357
    %v366 = vunpack.c.l.bf16 %v358
    %v367 = vunpack.c.h.bf16 %v358
    %v368 = vunpack.c.l.bf16 %v359
    %v369 = vunpack.c.h.bf16 %v359
    %v370 = vadd.f32 %v296, %v360
    %v371 = vadd.f32 %v342, %v361
    %v372 = vadd.f32 %v298, %v362
    %v373 = vadd.f32 %v344, %v363
    %v374 = vadd.f32 %v301, %v364
    %v375 = vadd.f32 %v347, %v365
    %v376 = vadd.f32 %v303, %v366
    %v377 = vadd.f32 %v349, %v367
    %v378 = vadd.f32 %v306, %v368
    %v379 = vadd.f32 %v352, %v369
    %v380 = vpack.c.bf16 %v371, %v370
    %v381 = vpack.c.bf16 %v373, %v372
    %v382 = vpack.c.bf16 %v375, %v374
    %v383 = vpack.c.bf16 %v377, %v376
    %v384 = vpack.c.bf16 %v379, %v378
    %385 = vst [vmem:[%s4] sm:$0xff] %v380
    %386 = vst [vmem:[%s4 + $0x8] sm:$0xff] %v381
    %387 = vst [vmem:[%s4 + $0x10] sm:$0xff] %v382
    %388 = vst [vmem:[%s4 + $0x18] sm:$0xff] %v383
    %389 = vst [vmem:[%s4 + $0x20] sm:$0x11] %v384
    // Predicated region
    $region22: #{_lambda_.16} parent=1 // pred_check
      _
    $region23: #{_lambda_.16} parent=1 // pred_check_branch
      %391 = sbr.rel (0) target = $region25
    $region24: #{_lambda_.16} parent=1 // pred_region
      _
    $region25: #{_lambda_.16} parent=1 // pred_fallthru
      _
    // Predicated region
    $region26: #{_lambda_.16} parent=1 // pred_check
      _
    $region27: #{_lambda_.16} parent=1 // pred_check_branch
      %393 = sbr.rel (0) target = $region29
    $region28: #{_lambda_.16} parent=1 // pred_region
      _
    $region29: #{_lambda_.16} parent=1 // pred_fallthru
      _
    %394 = vsyncpa [#allocation3], 1

// kernel: _lambda_.14
$region0: #{_lambda_.14}
  #allocation0 [shape = 'u32[]', space=smem, size = 0x4, offset = 0x4, fixed_abs, tag = 'smem constant byte address 0x4 - core index']
  #allocation1 [shape = 'u32[72,128]{1,0:T(1,128)}', space=vmem, size = 0x9000, scoped, tag = 'internal scratch']
  %s0 = inlined_call_operand.vmem [shape: bf16[34,256], index: 0, kind: input, shape index: {}]
  %s1 = inlined_call_operand.vmem [shape: f32[1,256], index: 1, kind: input, shape index: {}]
  %s2 = inlined_call_operand.vmem [shape: f32[1,256], index: 2, kind: input, shape index: {}]
  %s3 = inlined_call_operand.hbm [shape: bf16[256,768], index: 3, kind: input, shape index: {}]
  %s4 = inlined_call_operand.vmem [shape: f32[1,768], index: 4, kind: input, shape index: {}]
  %s5 = inlined_call_operand.vmem [shape: bf16[34,768], index: 5, kind: output, shape index: {}]
  %s6 = sld [smem:[#allocation0]]
  $region79: #{_lambda_.14} parent=0
    _
  %s8 = ssub.s32 1, %s6
  %s9 = scalar_select 0, %s8, %s6
  $region1: #{_lambda_.14} parent=0
    #allocation2 [shape = 'u8[393216]{0}', space=vmem, size = 0x60000, scoped, tag = 'input window, operand 3']
    #allocation3 [shape = 's32[2]{0}', space=sflag, size = 0x8, scoped, tag = 'scoped memory for _lambda_.14']
    #allocation4 [shape = 'u8[61440]{0}', space=vmem, size = 0xf000, scoped, tag = 'output window, operand 0']
    %10 = vsyncpa [#allocation3], 0
    %s11 = scalar_lea.sflag [#allocation3], 1
    %12 = vsyncpa %s11, 0
    loop: start=0, step=1, limit=4
    $region2: #{_lambda_.14} parent=1 // loop_pre_header
      _
    $region3: #{_lambda_.14} parent=1 // loop_header
      %s14 = sphi 0, %s18
      %p15 = scmp.ge.s32.totalorder %s14, 4
      %s21 = sphi 0, %s33
      %s22 = sphi 0, %s29
      %s23 = sphi 0, %s21
      %s24 = sphi 0, %s22
      %s25 = sphi 0, %s23
      %s26 = sphi 0, %s24
      %s36 = sphi 0, %s38
      %s39 = sphi 0, %s36
      %s40 = sphi 0, %s39
      %s56 = sphi 0, %s40
      %s60 = sphi 0, %s60
      %s62 = sphi 0, %s60
      %s63 = sphi 0, %s62
      %s77 = sphi 0, %s63
      %s81 = sphi 0, %s81
      %s83 = sphi 0, %s81
      %s84 = sphi 0, %s83
      %s98 = sphi 0, %s84
      %s104 = sphi 0, %s106
      %s107 = sphi 0, %s104
      %s108 = sphi 0, %s107
      %s124 = sphi 0, %s108
      %s130 = sphi 0, %s132
      %s133 = sphi 0, %s130
      %s134 = sphi 0, %s133
      %s150 = sphi 0, %s134
      %s158 = sphi 0, %s160
      %s161 = sphi 0, %s158
      %s162 = sphi 0, %s161
      %s178 = sphi 0, %s162
    $region4: #{_lambda_.14} parent=1 // loop_header_branch
      %17 = sbr.rel (%p15) target = $region8
    $region5: #{_lambda_.14} parent=1 // loop_body
      %s19 = ssub.s32 %s14, 1
      %s20 = ssub.s32 %s14, 2
      %s27 = sadd.s32 1, %s22
      %p28 = scmp.ge.s32.totalorder %s27, 1
      %s29 = scalar_select %p28, 0, %s27
      %s30 = sadd.s32 1, %s21
      %s31 = scalar_select %p28, %s30, %s21
      %p32 = scmp.ge.s32.totalorder %s31, 2
      %s33 = scalar_select %p32, 0, %s31
      %s34 = ssub.s32 %s22, %s29
      %p35 = scmp.eq.s32.totalorder %s34, 0
      %s37 = sadd.s32 %s36, 1
      %s38 = scalar_select %p35, %s36, %s37
      %p41 = pneg %p35
      %p42 = scmp.eq.s32.totalorder %s14, 1
      %p43 = por %p41, %p42
      %p44 = scmp.ne.s32.totalorder %s36, %s39
      %p45 = scmp.eq.s32.totalorder %s14, 0
      %p46 = por %p44, %p45
      %p47 = scmp.ne.s32.totalorder %s36, %s39
      %p48 = scmp.eq.s32.totalorder %s19, 1
      %p49 = por %p47, %p48
      %p50 = scmp.ne.s32.totalorder %s39, %s40
      %p51 = scmp.eq.s32.totalorder %s19, 0
      %p52 = por %p50, %p51
      %p53 = scmp.ne.s32.totalorder %s39, %s40
      %p54 = scmp.eq.s32.totalorder %s20, 1
      %p55 = por %p53, %p54
      %p57 = scmp.ne.s32.totalorder %s40, %s56
      %p58 = scmp.eq.s32.totalorder %s20, 0
      %p59 = por %p57, %p58
      %s61 = sadd.s32 %s60, 1
      %p64 = scmp.eq.s32.totalorder %s14, 1
      %p65 = scmp.ne.s32.totalorder %s60, %s62
      %p66 = scmp.eq.s32.totalorder %s14, 0
      %p67 = por %p65, %p66
      %p68 = scmp.ne.s32.totalorder %s60, %s62
      %p69 = scmp.eq.s32.totalorder %s19, 1
      %p70 = por %p68, %p69
      %p71 = scmp.ne.s32.totalorder %s62, %s63
      %p72 = scmp.eq.s32.totalorder %s19, 0
      %p73 = por %p71, %p72
      %p74 = scmp.ne.s32.totalorder %s62, %s63
      %p75 = scmp.eq.s32.totalorder %s20, 1
      %p76 = por %p74, %p75
      %p78 = scmp.ne.s32.totalorder %s63, %s77
      %p79 = scmp.eq.s32.totalorder %s20, 0
      %p80 = por %p78, %p79
      %s82 = sadd.s32 %s81, 1
      %p85 = scmp.eq.s32.totalorder %s14, 1
      %p86 = scmp.ne.s32.totalorder %s81, %s83
      %p87 = scmp.eq.s32.totalorder %s14, 0
      %p88 = por %p86, %p87
      %p89 = scmp.ne.s32.totalorder %s81, %s83
      %p90 = scmp.eq.s32.totalorder %s19, 1
      %p91 = por %p89, %p90
      %p92 = scmp.ne.s32.totalorder %s83, %s84
      %p93 = scmp.eq.s32.totalorder %s19, 0
      %p94 = por %p92, %p93
      %p95 = scmp.ne.s32.totalorder %s83, %s84
      %p96 = scmp.eq.s32.totalorder %s20, 1
      %p97 = por %p95, %p96
      %p99 = scmp.ne.s32.totalorder %s84, %s98
      %p100 = scmp.eq.s32.totalorder %s20, 0
      %p101 = por %p99, %p100
      %s102 = ssub.s32 %s21, %s33
      %p103 = scmp.eq.s32.totalorder %s102, 0
      %s105 = sadd.s32 %s104, 1
      %s106 = scalar_select %p103, %s104, %s105
      %p109 = pneg %p103
      %p110 = scmp.eq.s32.totalorder %s14, 1
      %p111 = por %p109, %p110
      %p112 = scmp.ne.s32.totalorder %s104, %s107
      %p113 = scmp.eq.s32.totalorder %s14, 0
      %p114 = por %p112, %p113
      %p115 = scmp.ne.s32.totalorder %s104, %s107
      %p116 = scmp.eq.s32.totalorder %s19, 1
      %p117 = por %p115, %p116
      %p118 = scmp.ne.s32.totalorder %s107, %s108
      %p119 = scmp.eq.s32.totalorder %s19, 0
      %p120 = por %p118, %p119
      %p121 = scmp.ne.s32.totalorder %s107, %s108
      %p122 = scmp.eq.s32.totalorder %s20, 1
      %p123 = por %p121, %p122
      %p125 = scmp.ne.s32.totalorder %s108, %s124
      %p126 = scmp.eq.s32.totalorder %s20, 0
      %p127 = por %p125, %p126
      %s128 = ssub.s32 %s21, %s33
      %p129 = scmp.eq.s32.totalorder %s128, 0
      %s131 = sadd.s32 %s130, 1
      %s132 = scalar_select %p129, %s130, %s131
      %p135 = pneg %p129
      %p136 = scmp.eq.s32.totalorder %s14, 1
      %p137 = por %p135, %p136
      %p138 = scmp.ne.s32.totalorder %s130, %s133
      %p139 = scmp.eq.s32.totalorder %s14, 0
      %p140 = por %p138, %p139
      %p141 = scmp.ne.s32.totalorder %s130, %s133
      %p142 = scmp.eq.s32.totalorder %s19, 1
      %p143 = por %p141, %p142
      %p144 = scmp.ne.s32.totalorder %s133, %s134
      %p145 = scmp.eq.s32.totalorder %s19, 0
      %p146 = por %p144, %p145
      %p147 = scmp.ne.s32.totalorder %s133, %s134
      %p148 = scmp.eq.s32.totalorder %s20, 1
      %p149 = por %p147, %p148
      %p151 = scmp.ne.s32.totalorder %s134, %s150
      %p152 = scmp.eq.s32.totalorder %s20, 0
      %p153 = por %p151, %p152
      %s154 = ssub.s32 %s22, %s29
      %s155 = ssub.s32 %s21, %s33
      %s156 = sor.u32 %s154, %s155
      %p157 = scmp.eq.s32.totalorder %s156, 0
      %s159 = sadd.s32 %s158, 1
      %s160 = scalar_select %p157, %s158, %s159
      %p163 = pneg %p157
      %p164 = scmp.eq.s32.totalorder %s14, 1
      %p165 = por %p163, %p164
      %p166 = scmp.ne.s32.totalorder %s158, %s161
      %p167 = scmp.eq.s32.totalorder %s14, 0
      %p168 = por %p166, %p167
      %p169 = scmp.ne.s32.totalorder %s158, %s161
      %p170 = scmp.eq.s32.totalorder %s19, 1
      %p171 = por %p169, %p170
      %p172 = scmp.ne.s32.totalorder %s161, %s162
      %p173 = scmp.eq.s32.totalorder %s19, 0
      %p174 = por %p172, %p173
      %p175 = scmp.ne.s32.totalorder %s161, %s162
      %p176 = scmp.eq.s32.totalorder %s20, 1
      %p177 = por %p175, %p176
      %p179 = scmp.ne.s32.totalorder %s162, %s178
      %p180 = scmp.eq.s32.totalorder %s20, 0
      %p181 = por %p179, %p180
      %p182 = scmp.le.s32.totalorder 1, %s14
      %p183 = scmp.lt.s32.totalorder %s14, 3
      %p184 = pnand %p182, %p183
      %p185 = pneg %p184
      // Predicated region
      $region9: #{_lambda_.14} parent=5 // pred_check
        _
      $region10: #{_lambda_.14} parent=5 // pred_check_branch
        %187 = sbr.rel (%p184) target = $region12
      $region11: #{_lambda_.14} parent=5 // pred_region
        %s188 = ssub.s32 %s14, 1
        // Predicated region
        $region13: #{_lambda_.14} parent=11 // pred_check
          %p189 = pneg %p52
        $region14: #{_lambda_.14} parent=11 // pred_check_branch
          %191 = sbr.rel (%p189) target = $region16
        $region15: #{_lambda_.14} parent=11 // pred_region
          %s192 = smul.u32 5, %s24
          %p193 = scmp.lt.s32.totalorder %s192, 4
          %s194 = scalar_select %p193, %s192, 4
          %s195 = smul.addr %s194, 2
          %s196 = smul.addr %s195, 4
          %s197 = scalar_lea.vmem %s0, %s196
          %s198 = smul.u32 5, %s24
        $region16: #{_lambda_.14} parent=11 // pred_fallthru
          _
        // Predicated region
        $region17: #{_lambda_.14} parent=11 // pred_check
          %p199 = pneg %p73
        $region18: #{_lambda_.14} parent=11 // pred_check_branch
          %201 = sbr.rel (%p199) target = $region20
        $region19: #{_lambda_.14} parent=11 // pred_region
          _
        $region20: #{_lambda_.14} parent=11 // pred_fallthru
          _
        // Predicated region
        $region21: #{_lambda_.14} parent=11 // pred_check
          %p202 = pneg %p94
        $region22: #{_lambda_.14} parent=11 // pred_check_branch
          %204 = sbr.rel (%p202) target = $region24
        $region23: #{_lambda_.14} parent=11 // pred_region
          _
        $region24: #{_lambda_.14} parent=11 // pred_fallthru
          _
      $region12: #{_lambda_.14} parent=5 // pred_fallthru
        _
      %p205 = scmp.lt.s32.totalorder %s14, 2
      // Predicated region
      $region25: #{_lambda_.14} parent=5 // pred_check
        %p206 = pneg %p205
      $region26: #{_lambda_.14} parent=5 // pred_check_branch
        %208 = sbr.rel (%p206) target = $region28
      $region27: #{_lambda_.14} parent=5 // pred_region
        // Predicated region
        $region29: #{_lambda_.14} parent=27 // pred_check
          %p209 = pneg %p114
        $region30: #{_lambda_.14} parent=27 // pred_check_branch
          %211 = sbr.rel (%p209) target = $region32
        $region31: #{_lambda_.14} parent=27 // pred_region
          %s212 = sand.u32 %s104, 1
          %s213 = scalar_lea.sflag [#allocation3], %s212
          %s214 = sand.u32 %s104, 1
          %s215 = smul.addr %s214, 384
          %s216 = scalar_lea.vmem [#allocation2], %s215
          %s217 = smul.u32 3, %s21
          %219 = vsyncadd %s213, 0
          %s220 = smul.addr %s217, 4
          %s221 = scalar_lea.hbm %s3, %s220
          %s222 = sshll.u32 %s221, 4
          %s223 = int_to_ptr.hbm [resolvable:$true] %s222
          %s224 = sshll.u32 %s216, 4
          %s225 = int_to_ptr.vmem [resolvable:$true] %s224
          %230 = dma.hbm_to_vmem [thread:$0]  %s223, 6144, %s225, %s213, 384, 192, 12
        $region32: #{_lambda_.14} parent=27 // pred_fallthru
          _
        // Predicated region
        $region33: #{_lambda_.14} parent=27 // pred_check
          %p231 = pneg %p140
        $region34: #{_lambda_.14} parent=27 // pred_check_branch
          %233 = sbr.rel (%p231) target = $region36
        $region35: #{_lambda_.14} parent=27 // pred_region
          %s234 = smul.u32 3, %s21
          %p235 = scmp.lt.s32.totalorder %s234, 5
          %s236 = scalar_select %p235, %s234, 5
          %s237 = scalar_lea.vmem %s4, %s236
          %s238 = smul.u32 3, %s21
        $region36: #{_lambda_.14} parent=27 // pred_fallthru
          _
      $region28: #{_lambda_.14} parent=5 // pred_fallthru
        _
      %p239 = scmp.le.s32.totalorder 1, %s14
      %p240 = scmp.lt.s32.totalorder %s14, 3
      %p241 = pnand %p239, %p240
      %p242 = pneg %p241
      // Predicated region
      $region37: #{_lambda_.14} parent=5 // pred_check
        _
      $region38: #{_lambda_.14} parent=5 // pred_check_branch
        %244 = sbr.rel (%p241) target = $region40
      $region39: #{_lambda_.14} parent=5 // pred_region
        %s245 = ssub.s32 %s14, 1
        %s246 = sand.u32 %s107, 1
        %s247 = scalar_lea.sflag [#allocation3], %s246
        %s248 = sand.u32 %s107, 1
        %s249 = smul.addr %s248, 384
        %s250 = scalar_lea.vmem [#allocation2], %s249
        // Predicated region
        $region41: #{_lambda_.14} parent=39 // pred_check
          %p251 = pneg %p120
        $region42: #{_lambda_.14} parent=39 // pred_check_branch
          %253 = sbr.rel (%p251) target = $region44
        $region43: #{_lambda_.14} parent=39 // pred_region
          %255 = dma.done %s247, 6144
        $region44: #{_lambda_.14} parent=39 // pred_fallthru
          _
        %s256 = smul.u32 5, %s24
        %p257 = scmp.lt.s32.totalorder %s256, 4
        %s258 = scalar_select %p257, %s256, 4
        %s259 = smul.addr %s258, 2
        %s260 = smul.addr %s259, 4
        %s261 = scalar_lea.vmem %s0, %s260
        %p262 = pneg %p52
        %p263 = pneg %p49
        %p264 = pneg %p73
        %p265 = pneg %p70
        %p266 = pneg %p94
        %p267 = pneg %p91
        %s268 = sand.u32 %s107, 1
        %s269 = scalar_lea.sflag [#allocation3], %s268
        %s270 = sand.u32 %s107, 1
        %s271 = smul.addr %s270, 384
        %s272 = scalar_lea.vmem [#allocation2], %s271
        %p273 = pneg %p120
        %p274 = pneg %p117
        %s275 = smul.u32 3, %s23
        %p276 = scmp.lt.s32.totalorder %s275, 5
        %s277 = scalar_select %p276, %s275, 5
        %s278 = scalar_lea.vmem %s4, %s277
        %p279 = pneg %p146
        %p280 = pneg %p143
        %p281 = pneg %p174
        %p282 = pneg %p171
        %s283 = sand.u32 %s161, 1
        %s284 = sand.u32 %s161, 1
        %s285 = smul.addr %s284, 60
        %s286 = scalar_lea.vmem [#allocation4], %s285
        %s287 = smul.u32 5, %s24
        %p288 = scmp.lt.s32.totalorder %s287, 4
        %s289 = scalar_select %p288, %s287, 4
        %s290 = smul.addr %s289, 2
        %s291 = smul.addr %s290, 4
        %s292 = scalar_lea.vmem %s0, %s291
        %s293 = smul.u32 5, %s24
        %s294 = smul.u32 3, %s23
        %s295 = smul.u32 3, %s23
        %p296 = scmp.lt.s32.totalorder %s295, 5
        %s297 = scalar_select %p296, %s295, 5
        %s298 = scalar_lea.vmem %s4, %s297
        %s299 = smul.u32 3, %s23
        %s300 = smul.u32 5, %s24
        %s301 = smul.u32 3, %s23
        %v302 = vld [vmem:[%s292] sm:$0xff]
        %v303 = vld [vmem:[%s292 + $0x8] sm:$0xff]
        %v304 = vld [vmem:[%s292 + $0x10] sm:$0xff]
        %v305 = vld [vmem:[%s292 + $0x18] sm:$0xff]
        %v306 = vld [vmem:[%s292 + $0x20] sm:$0x11]
        %v307 = vunpack.c.l.bf16 %v302
        %v308 = vunpack.c.h.bf16 %v302
        %v309 = vunpack.c.l.bf16 %v303
        %v310 = vunpack.c.h.bf16 %v303
        %v311 = vunpack.c.l.bf16 %v304
        %v312 = vunpack.c.h.bf16 %v304
        %v313 = vunpack.c.l.bf16 %v305
        %v314 = vunpack.c.h.bf16 %v305
        %v315 = vunpack.c.l.bf16 %v306
        %v316 = vunpack.c.h.bf16 %v306
        %v317 = vadd.f32 %v307, %v308
        %318 = vadd.xlane.f32.xlu0 %v317
        %v319 = vpop.xlane.xlu0 %318
        %v320 = vadd.f32 %v309, %v310
        %321 = vadd.xlane.f32.xlu0 %v320
        %v322 = vpop.xlane.xlu0 %321
        %v323 = vadd.f32 %v311, %v312
        %324 = vadd.xlane.f32.xlu0 %v323
        %v325 = vpop.xlane.xlu0 %324
        %v326 = vadd.f32 %v313, %v314
        %327 = vadd.xlane.f32.xlu0 %v326
        %v328 = vpop.xlane.xlu0 %327
        %vm329 = vcmask 1041408
        %v330 = vsel %vm329, %v315, 0.0
        %v331 = vsel %vm329, %v316, 0.0
        %v332 = vadd.f32 %v330, %v331
        %333 = vadd.xlane.f32.xlu0 %v332
        %v334 = vpop.xlane.xlu0 %333
        %v335 = vrcp.pop 256.0
        %v336 = vmul.f32 256.0, %v335
        %v337 = vsub.f32 1.0, %v336
        %v338 = vmul.f32 %v335, %v337
        %v339 = vadd.f32 %v335, %v338
        %vm340 = vweird.f32 %v335
        %v341 = vsel %vm340, %v335, %v339
        %v342 = vmul.f32 %v319, %v341
        %v343 = vmul.f32 %v322, %v341
        %v344 = vmul.f32 %v325, %v341
        %v345 = vmul.f32 %v328, %v341
        %v346 = vmul.f32 %v334, %v341
        %v347 = vsub.f32 %v307, %v342
        %v348 = vsub.f32 %v308, %v342
        %v349 = vsub.f32 %v309, %v343
        %v350 = vsub.f32 %v310, %v343
        %v351 = vsub.f32 %v311, %v344
        %v352 = vsub.f32 %v312, %v344
        %v353 = vsub.f32 %v313, %v345
        %v354 = vsub.f32 %v314, %v345
        %v355 = vsub.f32 %v315, %v346
        %v356 = vsub.f32 %v316, %v346
        %v357 = vmul.f32 %v347, %v347
        %v358 = vmul.f32 %v348, %v348
        %v359 = vmul.f32 %v349, %v349
        %v360 = vmul.f32 %v350, %v350
        %v361 = vmul.f32 %v351, %v351
        %v362 = vmul.f32 %v352, %v352
        %v363 = vmul.f32 %v353, %v353
        %v364 = vmul.f32 %v354, %v354
        %v365 = vmul.f32 %v355, %v355
        %v366 = vmul.f32 %v356, %v356
        %v367 = vadd.f32 %v357, %v358
        %368 = vadd.xlane.f32.xlu0 %v367
        %v369 = vpop.xlane.xlu0 %368
        %v370 = vadd.f32 %v359, %v360
        %371 = vadd.xlane.f32.xlu0 %v370
        %v372 = vpop.xlane.xlu0 %371
        %v373 = vadd.f32 %v361, %v362
        %374 = vadd.xlane.f32.xlu0 %v373
        %v375 = vpop.xlane.xlu0 %374
        %v376 = vadd.f32 %v363, %v364
        %377 = vadd.xlane.f32.xlu0 %v376
        %v378 = vpop.xlane.xlu0 %377
        %v379 = vsel %vm329, %v365, 0.0
        %v380 = vsel %vm329, %v366, 0.0
        %v381 = vadd.f32 %v379, %v380
        %382 = vadd.xlane.f32.xlu0 %v381
        %v383 = vpop.xlane.xlu0 %382
        %v384 = vmul.f32 %v369, %v341
        %v385 = vmul.f32 %v372, %v341
        %v386 = vmul.f32 %v375, %v341
        %v387 = vmul.f32 %v378, %v341
        %v388 = vmul.f32 %v383, %v341
        %v389 = vadd.f32 %v384, 1e-06
        %v390 = vadd.f32 %v385, 1e-06
        %v391 = vadd.f32 %v386, 1e-06
        %v392 = vadd.f32 %v387, 1e-06
        %v393 = vadd.f32 %v388, 1e-06
        %v394 = vrsqrt.pop %v389
        %v395 = vmul.f32 %v394, %v389
        %v396 = vmul.f32 %v395, %v394
        %v397 = vmul.f32 0.5, %v396
        %v398 = vsub.f32 1.5, %v397
        %v399 = vmul.f32 %v394, %v398
        %vm400 = vweird.f32 %v389
        %vm401 = vweird.f32 %v394
        %vm402 = vmor %vm400, %vm401
        %v403 = vsel %vm402, %v394, %v399
        %v404 = vrsqrt.pop %v390
        %v405 = vmul.f32 %v404, %v390
        %v406 = vmul.f32 %v405, %v404
        %v407 = vmul.f32 0.5, %v406
        %v408 = vsub.f32 1.5, %v407
        %v409 = vmul.f32 %v404, %v408
        %vm410 = vweird.f32 %v390
        %vm411 = vweird.f32 %v404
        %vm412 = vmor %vm410, %vm411
        %v413 = vsel %vm412, %v404, %v409
        %v414 = vrsqrt.pop %v391
        %v415 = vmul.f32 %v414, %v391
        %v416 = vmul.f32 %v415, %v414
        %v417 = vmul.f32 0.5, %v416
        %v418 = vsub.f32 1.5, %v417
        %v419 = vmul.f32 %v414, %v418
        %vm420 = vweird.f32 %v391
        %vm421 = vweird.f32 %v414
        %vm422 = vmor %vm420, %vm421
        %v423 = vsel %vm422, %v414, %v419
        %v424 = vrsqrt.pop %v392
        %v425 = vmul.f32 %v424, %v392
        %v426 = vmul.f32 %v425, %v424
        %v427 = vmul.f32 0.5, %v426
        %v428 = vsub.f32 1.5, %v427
        %v429 = vmul.f32 %v424, %v428
        %vm430 = vweird.f32 %v392
        %vm431 = vweird.f32 %v424
        %vm432 = vmor %vm430, %vm431
        %v433 = vsel %vm432, %v424, %v429
        %v434 = vrsqrt.pop %v393
        %v435 = vmul.f32 %v434, %v393
        %v436 = vmul.f32 %v435, %v434
        %v437 = vmul.f32 0.5, %v436
        %v438 = vsub.f32 1.5, %v437
        %v439 = vmul.f32 %v434, %v438
        %vm440 = vweird.f32 %v393
        %vm441 = vweird.f32 %v434
        %vm442 = vmor %vm440, %vm441
        %v443 = vsel %vm442, %v434, %v439
        %v444 = vmul.f32 %v347, %v403
        %v445 = vmul.f32 %v348, %v403
        %v446 = vmul.f32 %v349, %v413
        %v447 = vmul.f32 %v350, %v413
        %v448 = vmul.f32 %v351, %v423
        %v449 = vmul.f32 %v352, %v423
        %v450 = vmul.f32 %v353, %v433
        %v451 = vmul.f32 %v354, %v433
        %v452 = vmul.f32 %v355, %v443
        %v453 = vmul.f32 %v356, %v443
        %v454 = vld [vmem:[%s1] sm:$0x3]
        %v456 = vperm.slane %v454, 0
        %v457 = vperm.slane %v454, 1
        %v460 = vmul.f32 %v444, %v456
        %v461 = vmul.f32 %v445, %v457
        %v462 = vmul.f32 %v446, %v456
        %v463 = vmul.f32 %v447, %v457
        %v464 = vmul.f32 %v448, %v456
        %v465 = vmul.f32 %v449, %v457
        %v466 = vmul.f32 %v450, %v456
        %v467 = vmul.f32 %v451, %v457
        %v468 = vmul.f32 %v452, %v456
        %v469 = vmul.f32 %v453, %v457
        %v470 = vld [vmem:[%s2] sm:$0x3]
        %v472 = vperm.slane %v470, 0
        %v473 = vperm.slane %v470, 1
        %v476 = vadd.f32 %v460, %v472
        %v477 = vadd.f32 %v461, %v473
        %v478 = vadd.f32 %v462, %v472
        %v479 = vadd.f32 %v463, %v473
        %v480 = vadd.f32 %v464, %v472
        %v481 = vadd.f32 %v465, %v473
        %v482 = vadd.f32 %v466, %v472
        %v483 = vadd.f32 %v467, %v473
        %v484 = vadd.f32 %v468, %v472
        %v485 = vadd.f32 %v469, %v473
        %v486 = vpack.c.bf16 %v478, %v476
        %v487 = vpack.c.bf16 %v479, %v477
        %v488 = vpack.c.bf16 %v482, %v480
        %v489 = vpack.c.bf16 %v483, %v481
        %v490 = vpack.c.bf16 %v484, %v484
        %v491 = vpack.c.bf16 %v485, %v485
        %v492 = vld [vmem:[%s250] sm:$0xff]
        %v493 = vld [vmem:[%s250 + $0x8] sm:$0xf]
        %v494 = vld [vmem:[%s250 + $0xc] sm:$0xff]
        %v495 = vld [vmem:[%s250 + $0x14] sm:$0xf]
        %v496 = vld [vmem:[%s250 + $0x18] sm:$0xff]
        %v497 = vld [vmem:[%s250 + $0x20] sm:$0xf]
        %v498 = vld [vmem:[%s250 + $0x24] sm:$0xff]
        %v499 = vld [vmem:[%s250 + $0x2c] sm:$0xf]
        %v500 = vld [vmem:[%s250 + $0x30] sm:$0xff]
        %v501 = vld [vmem:[%s250 + $0x38] sm:$0xf]
        %v502 = vld [vmem:[%s250 + $0x3c] sm:$0xff]
        %v503 = vld [vmem:[%s250 + $0x44] sm:$0xf]
        %v504 = vld [vmem:[%s250 + $0x48] sm:$0xff]
        %v505 = vld [vmem:[%s250 + $0x50] sm:$0xf]
        %v506 = vld [vmem:[%s250 + $0x54] sm:$0xff]
        %v507 = vld [vmem:[%s250 + $0x5c] sm:$0xf]
        %v508 = vld [vmem:[%s250 + $0x60] sm:$0xff]
        %v509 = vld [vmem:[%s250 + $0x68] sm:$0xf]
        %v510 = vld [vmem:[%s250 + $0x6c] sm:$0xff]
        %v511 = vld [vmem:[%s250 + $0x74] sm:$0xf]
        %v512 = vld [vmem:[%s250 + $0x78] sm:$0xff]
        %v513 = vld [vmem:[%s250 + $0x80] sm:$0xf]
        %v514 = vld [vmem:[%s250 + $0x84] sm:$0xff]
        %v515 = vld [vmem:[%s250 + $0x8c] sm:$0xf]
        %v516 = vld [vmem:[%s250 + $0x90] sm:$0xff]
        %v517 = vld [vmem:[%s250 + $0x98] sm:$0xf]
        %v518 = vld [vmem:[%s250 + $0x9c] sm:$0xff]
        %v519 = vld [vmem:[%s250 + $0xa4] sm:$0xf]
        %v520 = vld [vmem:[%s250 + $0xa8] sm:$0xff]
        %v521 = vld [vmem:[%s250 + $0xb0] sm:$0xf]
        %v522 = vld [vmem:[%s250 + $0xb4] sm:$0xff]
        %v523 = vld [vmem:[%s250 + $0xbc] sm:$0xf]
        %v524 = vld [vmem:[%s250 + $0xc0] sm:$0xff]
        %v525 = vld [vmem:[%s250 + $0xc8] sm:$0xf]
        %v526 = vld [vmem:[%s250 + $0xcc] sm:$0xff]
        %v527 = vld [vmem:[%s250 + $0xd4] sm:$0xf]
        %v528 = vld [vmem:[%s250 + $0xd8] sm:$0xff]
        %v529 = vld [vmem:[%s250 + $0xe0] sm:$0xf]
        %v530 = vld [vmem:[%s250 + $0xe4] sm:$0xff]
        %v531 = vld [vmem:[%s250 + $0xec] sm:$0xf]
        %v532 = vld [vmem:[%s250 + $0xf0] sm:$0xff]
        %v533 = vld [vmem:[%s250 + $0xf8] sm:$0xf]
        %v534 = vld [vmem:[%s250 + $0xfc] sm:$0xff]
        %v535 = vld [vmem:[%s250 + $0x104] sm:$0xf]
        %v536 = vld [vmem:[%s250 + $0x108] sm:$0xff]
        %v537 = vld [vmem:[%s250 + $0x110] sm:$0xf]
        %v538 = vld [vmem:[%s250 + $0x114] sm:$0xff]
        %v539 = vld [vmem:[%s250 + $0x11c] sm:$0xf]
        %v540 = vld [vmem:[%s250 + $0x120] sm:$0xff]
        %v541 = vld [vmem:[%s250 + $0x128] sm:$0xf]
        %v542 = vld [vmem:[%s250 + $0x12c] sm:$0xff]
        %v543 = vld [vmem:[%s250 + $0x134] sm:$0xf]
        %v544 = vld [vmem:[%s250 + $0x138] sm:$0xff]
        %v545 = vld [vmem:[%s250 + $0x140] sm:$0xf]
        %v546 = vld [vmem:[%s250 + $0x144] sm:$0xff]
        %v547 = vld [vmem:[%s250 + $0x14c] sm:$0xf]
        %v548 = vld [vmem:[%s250 + $0x150] sm:$0xff]
        %v549 = vld [vmem:[%s250 + $0x158] sm:$0xf]
        %v550 = vld [vmem:[%s250 + $0x15c] sm:$0xff]
        %v551 = vld [vmem:[%s250 + $0x164] sm:$0xf]
        %v552 = vld [vmem:[%s250 + $0x168] sm:$0xff]
        %v553 = vld [vmem:[%s250 + $0x170] sm:$0xf]
        %v554 = vld [vmem:[%s250 + $0x174] sm:$0xff]
        %v555 = vld [vmem:[%s250 + $0x17c] sm:$0xf]
        %v556 = vld [vmem:[%s298] sm:$0x7]
        %v558 = vperm.slane %v556, 0
        %v559 = vperm.slane %v556, 1
        %v560 = vperm.slane %v556, 2
        %v628 = vunpack.c.l.b16 %v492
        %v629 = vunpack.c.h.b16 %v492
        %v630 = vunpack.c.l.b16 %v493
        %v631 = vunpack.c.l.b16 %v494
        %v632 = vunpack.c.h.b16 %v494
        %v633 = vunpack.c.l.b16 %v495
        %v634 = vunpack.c.l.b16 %v496
        %v635 = vunpack.c.h.b16 %v496
        %v636 = vunpack.c.l.b16 %v497
        %v637 = vunpack.c.l.b16 %v498
        %v638 = vunpack.c.h.b16 %v498
        %v639 = vunpack.c.l.b16 %v499
        %v640 = vunpack.c.l.b16 %v500
        %v641 = vunpack.c.h.b16 %v500
        %v642 = vunpack.c.l.b16 %v501
        %v643 = vunpack.c.l.b16 %v502
        %v644 = vunpack.c.h.b16 %v502
        %v645 = vunpack.c.l.b16 %v503
        %v646 = vunpack.c.l.b16 %v504
        %v647 = vunpack.c.h.b16 %v504
        %v648 = vunpack.c.l.b16 %v505
        %v649 = vunpack.c.l.b16 %v506
        %v650 = vunpack.c.h.b16 %v506
        %v651 = vunpack.c.l.b16 %v507
        %v652 = vunpack.c.l.b16 %v508
        %v653 = vunpack.c.h.b16 %v508
        %v654 = vunpack.c.l.b16 %v509
        %v655 = vunpack.c.l.b16 %v510
        %v656 = vunpack.c.h.b16 %v510
        %v657 = vunpack.c.l.b16 %v511
        %v658 = vunpack.c.l.b16 %v512
        %v659 = vunpack.c.h.b16 %v512
        %v660 = vunpack.c.l.b16 %v513
        %v661 = vunpack.c.l.b16 %v514
        %v662 = vunpack.c.h.b16 %v514
        %v663 = vunpack.c.l.b16 %v515
        %v664 = vunpack.c.l.b16 %v516
        %v665 = vunpack.c.h.b16 %v516
        %v666 = vunpack.c.l.b16 %v517
        %v667 = vunpack.c.l.b16 %v518
        %v668 = vunpack.c.h.b16 %v518
        %v669 = vunpack.c.l.b16 %v519
        %v670 = vunpack.c.l.b16 %v520
        %v671 = vunpack.c.h.b16 %v520
        %v672 = vunpack.c.l.b16 %v521
        %v673 = vunpack.c.l.b16 %v522
        %v674 = vunpack.c.h.b16 %v522
        %v675 = vunpack.c.l.b16 %v523
        %v676 = vunpack.c.l.b16 %v524
        %v677 = vunpack.c.h.b16 %v524
        %v678 = vunpack.c.l.b16 %v525
        %v679 = vunpack.c.l.b16 %v526
        %v680 = vunpack.c.h.b16 %v526
        %v681 = vunpack.c.l.b16 %v527
        %v682 = vunpack.c.l.b16 %v528
        %v683 = vunpack.c.h.b16 %v528
        %v684 = vunpack.c.l.b16 %v529
        %v685 = vunpack.c.l.b16 %v530
        %v686 = vunpack.c.h.b16 %v530
        %v687 = vunpack.c.l.b16 %v531
        %v688 = vunpack.c.l.b16 %v532
        %v689 = vunpack.c.h.b16 %v532
        %v690 = vunpack.c.l.b16 %v533
        %v691 = vunpack.c.l.b16 %v534
        %v692 = vunpack.c.h.b16 %v534
        %v693 = vunpack.c.l.b16 %v535
        %v694 = vunpack.c.l.b16 %v536
        %v695 = vunpack.c.h.b16 %v536
        %v696 = vunpack.c.l.b16 %v537
        %v697 = vunpack.c.l.b16 %v538
        %v698 = vunpack.c.h.b16 %v538
        %v699 = vunpack.c.l.b16 %v539
        %v700 = vunpack.c.l.b16 %v540
        %v701 = vunpack.c.h.b16 %v540
        %v702 = vunpack.c.l.b16 %v541
        %v703 = vunpack.c.l.b16 %v542
        %v704 = vunpack.c.h.b16 %v542
        %v705 = vunpack.c.l.b16 %v543
        %v706 = vunpack.c.l.b16 %v544
        %v707 = vunpack.c.h.b16 %v544
        %v708 = vunpack.c.l.b16 %v545
        %v709 = vunpack.c.l.b16 %v546
        %v710 = vunpack.c.h.b16 %v546
        %v711 = vunpack.c.l.b16 %v547
        %v712 = vunpack.c.l.b16 %v548
        %v713 = vunpack.c.h.b16 %v548
        %v714 = vunpack.c.l.b16 %v549
        %v715 = vunpack.c.l.b16 %v550
        %v716 = vunpack.c.h.b16 %v550
        %v717 = vunpack.c.l.b16 %v551
        %v718 = vunpack.c.l.b16 %v552
        %v719 = vunpack.c.h.b16 %v552
        %v720 = vunpack.c.l.b16 %v553
        %v721 = vunpack.c.l.b16 %v554
        %v722 = vunpack.c.h.b16 %v554
        %v723 = vunpack.c.l.b16 %v555
        %v724 = vpack.c.b16 %v631, %v628
        %v725 = vpack.c.b16 %v632, %v629
        %v726 = vpack.c.b16 %v633, %v630
        %v727 = vpack.c.b16 %v637, %v634
        %v728 = vpack.c.b16 %v638, %v635
        %v729 = vpack.c.b16 %v639, %v636
        %v730 = vpack.c.b16 %v643, %v640
        %v731 = vpack.c.b16 %v644, %v641
        %v732 = vpack.c.b16 %v645, %v642
        %v733 = vpack.c.b16 %v649, %v646
        %v734 = vpack.c.b16 %v650, %v647
        %v735 = vpack.c.b16 %v651, %v648
        %v736 = vpack.c.b16 %v655, %v652
        %v737 = vpack.c.b16 %v656, %v653
        %v738 = vpack.c.b16 %v657, %v654
        %v739 = vpack.c.b16 %v661, %v658
        %v740 = vpack.c.b16 %v662, %v659
        %v741 = vpack.c.b16 %v663, %v660
        %v742 = vpack.c.b16 %v667, %v664
        %v743 = vpack.c.b16 %v668, %v665
        %v744 = vpack.c.b16 %v669, %v666
        %v745 = vpack.c.b16 %v673, %v670
        %v746 = vpack.c.b16 %v674, %v671
        %v747 = vpack.c.b16 %v675, %v672
        %v748 = vpack.c.b16 %v679, %v676
        %v749 = vpack.c.b16 %v680, %v677
        %v750 = vpack.c.b16 %v681, %v678
        %v751 = vpack.c.b16 %v685, %v682
        %v752 = vpack.c.b16 %v686, %v683
        %v753 = vpack.c.b16 %v687, %v684
        %v754 = vpack.c.b16 %v691, %v688
        %v755 = vpack.c.b16 %v692, %v689
        %v756 = vpack.c.b16 %v693, %v690
        %v757 = vpack.c.b16 %v697, %v694
        %v758 = vpack.c.b16 %v698, %v695
        %v759 = vpack.c.b16 %v699, %v696
        %v760 = vpack.c.b16 %v703, %v700
        %v761 = vpack.c.b16 %v704, %v701
        %v762 = vpack.c.b16 %v705, %v702
        %v763 = vpack.c.b16 %v709, %v706
        %v764 = vpack.c.b16 %v710, %v707
        %v765 = vpack.c.b16 %v711, %v708
        %v766 = vpack.c.b16 %v715, %v712
        %v767 = vpack.c.b16 %v716, %v713
        %v768 = vpack.c.b16 %v717, %v714
        %v769 = vpack.c.b16 %v721, %v718
        %v770 = vpack.c.b16 %v722, %v719
        %v771 = vpack.c.b16 %v723, %v720
        %820 = vmatpush.bf16.msra.mxu0 %v745
        %821 = vmatpush.bf16.msra.mxu0 %v742
        %822 = vmatpush.bf16.msra.mxu0 %v739
        %823 = vmatpush.bf16.msra.mxu0 %v736
        %824 = vmatpush.bf16.msra.mxu0 %v733
        %825 = vmatpush.bf16.msra.mxu0 %v730
        %826 = vmatpush.bf16.msra.mxu0 %v727
        %827 = vmatpush.bf16.msra.mxu0 %v724
        %828 = vmatmul.bf16.gmra.mxu0 %v486
        %v829 = vpop.f32.mrf.mxu0
        %v830 = vadd.f32 %v558, %v829
        %v831 = vpop.f32.mrf.mxu0
        %v832 = vadd.f32 %v558, %v831
        %833 = vmatmul.bf16.gmra.mxu0 %v488
        %v834 = vpop.f32.mrf.mxu0
        %v835 = vadd.f32 %v558, %v834
        %v836 = vpop.f32.mrf.mxu0
        %v837 = vadd.f32 %v558, %v836
        %838 = vmatmul.bf16.gmra.mxu0 %v490
        %v839 = vpop.f32.mrf.mxu0
        %v840 = vadd.f32 %v558, %v839
        %v841 = vpop.f32.mrf.mxu0
        %842 = vdwg.mxu0
        %843 = vmatpush.bf16.msra.mxu0 %v769
        %844 = vmatpush.bf16.msra.mxu0 %v766
        %845 = vmatpush.bf16.msra.mxu0 %v763
        %846 = vmatpush.bf16.msra.mxu0 %v760
        %847 = vmatpush.bf16.msra.mxu0 %v757
        %848 = vmatpush.bf16.msra.mxu0 %v754
        %849 = vmatpush.bf16.msra.mxu0 %v751
        %850 = vmatpush.bf16.msra.mxu0 %v748
        %851 = vmatmul.bf16.gmra.mxu0 %v487
        %v852 = vpop.f32.mrf.mxu0
        %v853 = vadd.f32 %v830, %v852
        %v854 = vpop.f32.mrf.mxu0
        %v855 = vadd.f32 %v832, %v854
        %856 = vmatmul.bf16.gmra.mxu0 %v489
        %v857 = vpop.f32.mrf.mxu0
        %v858 = vadd.f32 %v835, %v857
        %v859 = vpop.f32.mrf.mxu0
        %v860 = vadd.f32 %v837, %v859
        %861 = vmatmul.bf16.gmra.mxu0 %v491
        %v862 = vpop.f32.mrf.mxu0
        %v863 = vadd.f32 %v840, %v862
        %v864 = vpop.f32.mrf.mxu0
        %865 = vdwg.mxu0
        %866 = vmatpush.bf16.msra.mxu0 %v746
        %867 = vmatpush.bf16.msra.mxu0 %v743
        %868 = vmatpush.bf16.msra.mxu0 %v740
        %869 = vmatpush.bf16.msra.mxu0 %v737
        %870 = vmatpush.bf16.msra.mxu0 %v734
        %871 = vmatpush.bf16.msra.mxu0 %v731
        %872 = vmatpush.bf16.msra.mxu0 %v728
        %873 = vmatpush.bf16.msra.mxu0 %v725
        %874 = vmatmul.bf16.gmra.mxu0 %v486
        %v875 = vpop.f32.mrf.mxu0
        %v876 = vadd.f32 %v559, %v875
        %v877 = vpop.f32.mrf.mxu0
        %v878 = vadd.f32 %v559, %v877
        %879 = vmatmul.bf16.gmra.mxu0 %v488
        %v880 = vpop.f32.mrf.mxu0
        %v881 = vadd.f32 %v559, %v880
        %v882 = vpop.f32.mrf.mxu0
        %v883 = vadd.f32 %v559, %v882
        %884 = vmatmul.bf16.gmra.mxu0 %v490
        %v885 = vpop.f32.mrf.mxu0
        %v886 = vadd.f32 %v559, %v885
        %v887 = vpop.f32.mrf.mxu0
        %888 = vdwg.mxu0
        %889 = vmatpush.bf16.msra.mxu0 %v770
        %890 = vmatpush.bf16.msra.mxu0 %v767
        %891 = vmatpush.bf16.msra.mxu0 %v764
        %892 = vmatpush.bf16.msra.mxu0 %v761
        %893 = vmatpush.bf16.msra.mxu0 %v758
        %894 = vmatpush.bf16.msra.mxu0 %v755
        %895 = vmatpush.bf16.msra.mxu0 %v752
        %896 = vmatpush.bf16.msra.mxu0 %v749
        %897 = vmatmul.bf16.gmra.mxu0 %v487
        %v898 = vpop.f32.mrf.mxu0
        %v899 = vadd.f32 %v876, %v898
        %v900 = vpop.f32.mrf.mxu0
        %v901 = vadd.f32 %v878, %v900
        %902 = vmatmul.bf16.gmra.mxu0 %v489
        %v903 = vpop.f32.mrf.mxu0
        %v904 = vadd.f32 %v881, %v903
        %v905 = vpop.f32.mrf.mxu0
        %v906 = vadd.f32 %v883, %v905
        %907 = vmatmul.bf16.gmra.mxu0 %v491
        %v908 = vpop.f32.mrf.mxu0
        %v909 = vadd.f32 %v886, %v908
        %v910 = vpop.f32.mrf.mxu0
        %911 = vdwg.mxu0
        %912 = vmatpush.bf16.msra.mxu0 %v747
        %913 = vmatpush.bf16.msra.mxu0 %v744
        %914 = vmatpush.bf16.msra.mxu0 %v741
        %915 = vmatpush.bf16.msra.mxu0 %v738
        %916 = vmatpush.bf16.msra.mxu0 %v735
        %917 = vmatpush.bf16.msra.mxu0 %v732
        %918 = vmatpush.bf16.msra.mxu0 %v729
        %919 = vmatpush.bf16.msra.mxu0 %v726
        %920 = vmatmul.bf16.gmra.mxu0 %v486
        %v921 = vpop.f32.mrf.mxu0
        %v922 = vadd.f32 %v560, %v921
        %v923 = vpop.f32.mrf.mxu0
        %v924 = vadd.f32 %v560, %v923
        %925 = vmatmul.bf16.gmra.mxu0 %v488
        %v926 = vpop.f32.mrf.mxu0
        %v927 = vadd.f32 %v560, %v926
        %v928 = vpop.f32.mrf.mxu0
        %v929 = vadd.f32 %v560, %v928
        %930 = vmatmul.bf16.gmra.mxu0 %v490
        %v931 = vpop.f32.mrf.mxu0
        %v932 = vadd.f32 %v560, %v931
        %v933 = vpop.f32.mrf.mxu0
        %934 = vdwg.mxu0
        %935 = vmatpush.bf16.msra.mxu0 %v771
        %936 = vmatpush.bf16.msra.mxu0 %v768
        %937 = vmatpush.bf16.msra.mxu0 %v765
        %938 = vmatpush.bf16.msra.mxu0 %v762
        %939 = vmatpush.bf16.msra.mxu0 %v759
        %940 = vmatpush.bf16.msra.mxu0 %v756
        %941 = vmatpush.bf16.msra.mxu0 %v753
        %942 = vmatpush.bf16.msra.mxu0 %v750
        %943 = vmatmul.bf16.gmra.mxu0 %v487
        %v944 = vpop.f32.mrf.mxu0
        %v945 = vadd.f32 %v922, %v944
        %v946 = vpop.f32.mrf.mxu0
        %v947 = vadd.f32 %v924, %v946
        %948 = vmatmul.bf16.gmra.mxu0 %v489
        %v949 = vpop.f32.mrf.mxu0
        %v950 = vadd.f32 %v927, %v949
        %v951 = vpop.f32.mrf.mxu0
        %v952 = vadd.f32 %v929, %v951
        %953 = vmatmul.bf16.gmra.mxu0 %v491
        %v954 = vpop.f32.mrf.mxu0
        %v955 = vadd.f32 %v932, %v954
        %v956 = vpop.f32.mrf.mxu0
        %957 = vdwg.mxu0
        %v958 = vpack.c.bf16 %v899, %v853
        %v959 = vpack.c.bf16 %v945, %v945
        %v960 = vpack.c.bf16 %v901, %v855
        %v961 = vpack.c.bf16 %v947, %v947
        %v962 = vpack.c.bf16 %v904, %v858
        %v963 = vpack.c.bf16 %v950, %v950
        %v964 = vpack.c.bf16 %v906, %v860
        %v965 = vpack.c.bf16 %v952, %v952
        %v966 = vpack.c.bf16 %v909, %v863
        %v967 = vpack.c.bf16 %v955, %v955
        %968 = vst [vmem:[%s286] sm:$0xff] %v958
        %969 = vst [vmem:[%s286 + $0x8] sm:$0xf] %v959
        %970 = vst [vmem:[%s286 + $0xc] sm:$0xff] %v960
        %971 = vst [vmem:[%s286 + $0x14] sm:$0xf] %v961
        %972 = vst [vmem:[%s286 + $0x18] sm:$0xff] %v962
        %973 = vst [vmem:[%s286 + $0x20] sm:$0xf] %v963
        %974 = vst [vmem:[%s286 + $0x24] sm:$0xff] %v964
        %975 = vst [vmem:[%s286 + $0x2c] sm:$0xf] %v965
        %976 = vst [vmem:[%s286 + $0x30] sm:$0x11] %v966
        %977 = vst [vmem:[%s286 + $0x38] sm:$0x1] %v967
        %s978 = sand.u32 %s161, 1
        %s979 = sand.u32 %s161, 1
        %s980 = smul.addr %s979, 60
        %s981 = scalar_lea.vmem [#allocation4], %s980
        // Predicated region
        $region45: #{_lambda_.14} parent=39 // pred_check
          %p982 = pneg %p171
        $region46: #{_lambda_.14} parent=39 // pred_check_branch
          %984 = sbr.rel (%p982) target = $region48
        $region47: #{_lambda_.14} parent=39 // pred_region
          %s985 = smul.u32 5, %s24
          %s986 = smul.u32 3, %s23
          %s987 = smul.addr %s985, 6
          %s988 = sadd.s32 %s986, %s987
          %s989 = smul.addr %s988, 4
          %s990 = scalar_lea.vmem %s5, %s989
          // Predicated region
          $region49: #{_lambda_.14} parent=47 // pred_check
            _
          $region50: #{_lambda_.14} parent=47 // pred_check_branch
            %992 = sbr.rel (0) target = $region52
          $region51: #{_lambda_.14} parent=47 // pred_region
            // Predicated region
            $region53: #{_lambda_.14} parent=51 // pred_check
              _
            $region54: #{_lambda_.14} parent=51 // pred_check_branch
              %994 = sbr.rel (0) target = $region56
            $region55: #{_lambda_.14} parent=51 // pred_region
              %s995 = scalar_lea.vmem %s981, 8 [#allocation4]
              %s996 = scalar_lea.vmem %s990, 8
              loop: start=0, step=1, limit=1
              $region57: #{_lambda_.14} parent=55 // loop_pre_header
                _
              $region58: #{_lambda_.14} parent=55 // loop_header
                %s998 = sphi 0, %s1002
                %p999 = scmp.ge.s32.totalorder %s998, 1
                %s1003 = sphi %s981, %s981
                %s1004 = sphi %s990, %s990
              $region59: #{_lambda_.14} parent=55 // loop_header_branch
                %1001 = sbr.rel (%p999) target = $region63
              $region60: #{_lambda_.14} parent=55 // loop_body
                %v1005 = vld [vmem:[%s1003] sm:$0xff]
                %1006 = vst [vmem:[%s1004] sm:$0xff] %v1005
                %v1007 = vld [vmem:[%s1003 + $0xc] sm:$0xff]
                %1008 = vst [vmem:[%s1004 + $0x18] sm:$0xff] %v1007
                %v1009 = vld [vmem:[%s1003 + $0x18] sm:$0xff]
                %1010 = vst [vmem:[%s1004 + $0x30] sm:$0xff] %v1009
                %v1011 = vld [vmem:[%s1003 + $0x24] sm:$0xff]
                %1012 = vst [vmem:[%s1004 + $0x48] sm:$0xff] %v1011
                %v1013 = vld [vmem:[%s1003 + $0x30] sm:$0xff]
                %1014 = vst [vmem:[%s1004 + $0x60] sm:$0xff] %v1013
              $region61: #{_lambda_.14} parent=55 // loop_footer
                %s1002 = sadd.s32 1, %s998
              $region62: #{_lambda_.14} parent=55 // loop_footer_branch
                %997 = sbr.rel target = $region58
              $region63: #{_lambda_.14} parent=55 // loop_exit
                _
              %s1016 = ssub.s32 16, 1
              loop: start=0, step=1, limit=1
              $region64: #{_lambda_.14} parent=55 // loop_pre_header
                _
              $region65: #{_lambda_.14} parent=55 // loop_header
                %s1018 = sphi 0, %s1022
                %p1019 = scmp.ge.s32.totalorder %s1018, 1
                %s1023 = sphi %s995, %s995
                %s1024 = sphi %s996, %s996
              $region66: #{_lambda_.14} parent=55 // loop_header_branch
                %1021 = sbr.rel (%p1019) target = $region70
              $region67: #{_lambda_.14} parent=55 // loop_body
                %v1025 = vld [vmem:[%s1023] sm:%s1016]
                %1026 = vst [vmem:[%s1024] sm:%s1016] %v1025
                %v1027 = vld [vmem:[%s1023 + $0xc] sm:%s1016]
                %1028 = vst [vmem:[%s1024 + $0x18] sm:%s1016] %v1027
                %v1029 = vld [vmem:[%s1023 + $0x18] sm:%s1016]
                %1030 = vst [vmem:[%s1024 + $0x30] sm:%s1016] %v1029
                %v1031 = vld [vmem:[%s1023 + $0x24] sm:%s1016]
                %1032 = vst [vmem:[%s1024 + $0x48] sm:%s1016] %v1031
                %v1033 = vld [vmem:[%s1023 + $0x30] sm:%s1016]
                %1034 = vst [vmem:[%s1024 + $0x60] sm:%s1016] %v1033
              $region68: #{_lambda_.14} parent=55 // loop_footer
                %s1022 = sadd.s32 1, %s1018
              $region69: #{_lambda_.14} parent=55 // loop_footer_branch
                %1017 = sbr.rel target = $region65
              $region70: #{_lambda_.14} parent=55 // loop_exit
                _
            $region56: #{_lambda_.14} parent=51 // pred_fallthru
              _
          $region52: #{_lambda_.14} parent=47 // pred_fallthru
            _
          %1035 = vnop
        $region48: #{_lambda_.14} parent=39 // pred_fallthru
          _
      $region40: #{_lambda_.14} parent=5 // pred_fallthru
        _
      %p1036 = scmp.le.s32.totalorder 2, %s14
      // Predicated region
      $region71: #{_lambda_.14} parent=5 // pred_check
        %p1037 = pneg %p1036
      $region72: #{_lambda_.14} parent=5 // pred_check_branch
        %1039 = sbr.rel (%p1037) target = $region74
      $region73: #{_lambda_.14} parent=5 // pred_region
        %s1040 = ssub.s32 %s14, 2
        // Predicated region
        $region75: #{_lambda_.14} parent=73 // pred_check
          %p1041 = pneg %p177
        $region76: #{_lambda_.14} parent=73 // pred_check_branch
          %1043 = sbr.rel (%p1041) target = $region78
        $region77: #{_lambda_.14} parent=73 // pred_region
          %s1044 = sand.u32 %s162, 1
          %s1045 = sand.u32 %s162, 1
          %s1046 = smul.addr %s1045, 60
          %s1047 = scalar_lea.vmem [#allocation4], %s1046
        $region78: #{_lambda_.14} parent=73 // pred_fallthru
          _
      $region74: #{_lambda_.14} parent=5 // pred_fallthru
        _
    $region6: #{_lambda_.14} parent=1 // loop_footer
      %s18 = sadd.s32 1, %s14
    $region7: #{_lambda_.14} parent=1 // loop_footer_branch
      %13 = sbr.rel target = $region3
    $region8: #{_lambda_.14} parent=1 // loop_exit
      _
    %1048 = vsyncpa [#allocation3], 1
    %s1049 = scalar_lea.sflag [#allocation3], 1
    %1050 = vsyncpa %s1049, 1

// kernel: _lambda_.19
$region0: #{_lambda_.19}
  #allocation0 [shape = 'u32[]', space=smem, size = 0x4, offset = 0x4, fixed_abs, tag = 'smem constant byte address 0x4 - core index']
  #allocation1 [shape = 'u32[72,128]{1,0:T(1,128)}', space=vmem, size = 0x9000, scoped, tag = 'internal scratch']
  %s0 = inlined_call_operand.vmem [shape: bf16[34,256], index: 0, kind: input, shape index: {}]
  %s1 = inlined_call_operand.vmem [shape: f32[1,256], index: 1, kind: input, shape index: {}]
  %s2 = inlined_call_operand.vmem [shape: f32[1,256], index: 2, kind: input, shape index: {}]
  %s3 = inlined_call_operand.vmem [shape: bf16[256,768], index: 3, kind: input, shape index: {}]
  %s4 = inlined_call_operand.vmem [shape: f32[1,768], index: 4, kind: input, shape index: {}]
  %s5 = inlined_call_operand.vmem [shape: bf16[34,768], index: 5, kind: output, shape index: {}]
  %s6 = sld [smem:[#allocation0]]
  $region101: #{_lambda_.19} parent=0
    _
  %s8 = ssub.s32 1, %s6
  %s9 = scalar_select 0, %s8, %s6
  $region1: #{_lambda_.19} parent=0
    #allocation2 [shape = 'u8[393216]{0}', space=vmem, size = 0x60000, scoped, tag = 'input window, operand 3']
    #allocation3 [shape = 'u8[61440]{0}', space=vmem, size = 0xf000, scoped, tag = 'output window, operand 0']
    loop: start=0, step=1, limit=4
    $region2: #{_lambda_.19} parent=1 // loop_pre_header
      _
    $region3: #{_lambda_.19} parent=1 // loop_header
      %s11 = sphi 0, %s15
      %p12 = scmp.ge.s32.totalorder %s11, 4
      %s18 = sphi 0, %s30
      %s19 = sphi 0, %s26
      %s20 = sphi 0, %s18
      %s21 = sphi 0, %s19
      %s22 = sphi 0, %s20
      %s23 = sphi 0, %s21
      %s33 = sphi 0, %s35
      %s36 = sphi 0, %s33
      %s37 = sphi 0, %s36
      %s53 = sphi 0, %s37
      %s57 = sphi 0, %s57
      %s59 = sphi 0, %s57
      %s60 = sphi 0, %s59
      %s74 = sphi 0, %s60
      %s78 = sphi 0, %s78
      %s80 = sphi 0, %s78
      %s81 = sphi 0, %s80
      %s95 = sphi 0, %s81
      %s101 = sphi 0, %s103
      %s104 = sphi 0, %s101
      %s105 = sphi 0, %s104
      %s121 = sphi 0, %s105
      %s127 = sphi 0, %s129
      %s130 = sphi 0, %s127
      %s131 = sphi 0, %s130
      %s147 = sphi 0, %s131
      %s155 = sphi 0, %s157
      %s158 = sphi 0, %s155
      %s159 = sphi 0, %s158
      %s175 = sphi 0, %s159
    $region4: #{_lambda_.19} parent=1 // loop_header_branch
      %14 = sbr.rel (%p12) target = $region8
    $region5: #{_lambda_.19} parent=1 // loop_body
      %s16 = ssub.s32 %s11, 1
      %s17 = ssub.s32 %s11, 2
      %s24 = sadd.s32 1, %s19
      %p25 = scmp.ge.s32.totalorder %s24, 1
      %s26 = scalar_select %p25, 0, %s24
      %s27 = sadd.s32 1, %s18
      %s28 = scalar_select %p25, %s27, %s18
      %p29 = scmp.ge.s32.totalorder %s28, 2
      %s30 = scalar_select %p29, 0, %s28
      %s31 = ssub.s32 %s19, %s26
      %p32 = scmp.eq.s32.totalorder %s31, 0
      %s34 = sadd.s32 %s33, 1
      %s35 = scalar_select %p32, %s33, %s34
      %p38 = pneg %p32
      %p39 = scmp.eq.s32.totalorder %s11, 1
      %p40 = por %p38, %p39
      %p41 = scmp.ne.s32.totalorder %s33, %s36
      %p42 = scmp.eq.s32.totalorder %s11, 0
      %p43 = por %p41, %p42
      %p44 = scmp.ne.s32.totalorder %s33, %s36
      %p45 = scmp.eq.s32.totalorder %s16, 1
      %p46 = por %p44, %p45
      %p47 = scmp.ne.s32.totalorder %s36, %s37
      %p48 = scmp.eq.s32.totalorder %s16, 0
      %p49 = por %p47, %p48
      %p50 = scmp.ne.s32.totalorder %s36, %s37
      %p51 = scmp.eq.s32.totalorder %s17, 1
      %p52 = por %p50, %p51
      %p54 = scmp.ne.s32.totalorder %s37, %s53
      %p55 = scmp.eq.s32.totalorder %s17, 0
      %p56 = por %p54, %p55
      %s58 = sadd.s32 %s57, 1
      %p61 = scmp.eq.s32.totalorder %s11, 1
      %p62 = scmp.ne.s32.totalorder %s57, %s59
      %p63 = scmp.eq.s32.totalorder %s11, 0
      %p64 = por %p62, %p63
      %p65 = scmp.ne.s32.totalorder %s57, %s59
      %p66 = scmp.eq.s32.totalorder %s16, 1
      %p67 = por %p65, %p66
      %p68 = scmp.ne.s32.totalorder %s59, %s60
      %p69 = scmp.eq.s32.totalorder %s16, 0
      %p70 = por %p68, %p69
      %p71 = scmp.ne.s32.totalorder %s59, %s60
      %p72 = scmp.eq.s32.totalorder %s17, 1
      %p73 = por %p71, %p72
      %p75 = scmp.ne.s32.totalorder %s60, %s74
      %p76 = scmp.eq.s32.totalorder %s17, 0
      %p77 = por %p75, %p76
      %s79 = sadd.s32 %s78, 1
      %p82 = scmp.eq.s32.totalorder %s11, 1
      %p83 = scmp.ne.s32.totalorder %s78, %s80
      %p84 = scmp.eq.s32.totalorder %s11, 0
      %p85 = por %p83, %p84
      %p86 = scmp.ne.s32.totalorder %s78, %s80
      %p87 = scmp.eq.s32.totalorder %s16, 1
      %p88 = por %p86, %p87
      %p89 = scmp.ne.s32.totalorder %s80, %s81
      %p90 = scmp.eq.s32.totalorder %s16, 0
      %p91 = por %p89, %p90
      %p92 = scmp.ne.s32.totalorder %s80, %s81
      %p93 = scmp.eq.s32.totalorder %s17, 1
      %p94 = por %p92, %p93
      %p96 = scmp.ne.s32.totalorder %s81, %s95
      %p97 = scmp.eq.s32.totalorder %s17, 0
      %p98 = por %p96, %p97
      %s99 = ssub.s32 %s18, %s30
      %p100 = scmp.eq.s32.totalorder %s99, 0
      %s102 = sadd.s32 %s101, 1
      %s103 = scalar_select %p100, %s101, %s102
      %p106 = pneg %p100
      %p107 = scmp.eq.s32.totalorder %s11, 1
      %p108 = por %p106, %p107
      %p109 = scmp.ne.s32.totalorder %s101, %s104
      %p110 = scmp.eq.s32.totalorder %s11, 0
      %p111 = por %p109, %p110
      %p112 = scmp.ne.s32.totalorder %s101, %s104
      %p113 = scmp.eq.s32.totalorder %s16, 1
      %p114 = por %p112, %p113
      %p115 = scmp.ne.s32.totalorder %s104, %s105
      %p116 = scmp.eq.s32.totalorder %s16, 0
      %p117 = por %p115, %p116
      %p118 = scmp.ne.s32.totalorder %s104, %s105
      %p119 = scmp.eq.s32.totalorder %s17, 1
      %p120 = por %p118, %p119
      %p122 = scmp.ne.s32.totalorder %s105, %s121
      %p123 = scmp.eq.s32.totalorder %s17, 0
      %p124 = por %p122, %p123
      %s125 = ssub.s32 %s18, %s30
      %p126 = scmp.eq.s32.totalorder %s125, 0
      %s128 = sadd.s32 %s127, 1
      %s129 = scalar_select %p126, %s127, %s128
      %p132 = pneg %p126
      %p133 = scmp.eq.s32.totalorder %s11, 1
      %p134 = por %p132, %p133
      %p135 = scmp.ne.s32.totalorder %s127, %s130
      %p136 = scmp.eq.s32.totalorder %s11, 0
      %p137 = por %p135, %p136
      %p138 = scmp.ne.s32.totalorder %s127, %s130
      %p139 = scmp.eq.s32.totalorder %s16, 1
      %p140 = por %p138, %p139
      %p141 = scmp.ne.s32.totalorder %s130, %s131
      %p142 = scmp.eq.s32.totalorder %s16, 0
      %p143 = por %p141, %p142
      %p144 = scmp.ne.s32.totalorder %s130, %s131
      %p145 = scmp.eq.s32.totalorder %s17, 1
      %p146 = por %p144, %p145
      %p148 = scmp.ne.s32.totalorder %s131, %s147
      %p149 = scmp.eq.s32.totalorder %s17, 0
      %p150 = por %p148, %p149
      %s151 = ssub.s32 %s19, %s26
      %s152 = ssub.s32 %s18, %s30
      %s153 = sor.u32 %s151, %s152
      %p154 = scmp.eq.s32.totalorder %s153, 0
      %s156 = sadd.s32 %s155, 1
      %s157 = scalar_select %p154, %s155, %s156
      %p160 = pneg %p154
      %p161 = scmp.eq.s32.totalorder %s11, 1
      %p162 = por %p160, %p161
      %p163 = scmp.ne.s32.totalorder %s155, %s158
      %p164 = scmp.eq.s32.totalorder %s11, 0
      %p165 = por %p163, %p164
      %p166 = scmp.ne.s32.totalorder %s155, %s158
      %p167 = scmp.eq.s32.totalorder %s16, 1
      %p168 = por %p166, %p167
      %p169 = scmp.ne.s32.totalorder %s158, %s159
      %p170 = scmp.eq.s32.totalorder %s16, 0
      %p171 = por %p169, %p170
      %p172 = scmp.ne.s32.totalorder %s158, %s159
      %p173 = scmp.eq.s32.totalorder %s17, 1
      %p174 = por %p172, %p173
      %p176 = scmp.ne.s32.totalorder %s159, %s175
      %p177 = scmp.eq.s32.totalorder %s17, 0
      %p178 = por %p176, %p177
      %p179 = scmp.le.s32.totalorder 1, %s11
      %p180 = scmp.lt.s32.totalorder %s11, 3
      %p181 = pnand %p179, %p180
      %p182 = pneg %p181
      // Predicated region
      $region9: #{_lambda_.19} parent=5 // pred_check
        _
      $region10: #{_lambda_.19} parent=5 // pred_check_branch
        %184 = sbr.rel (%p181) target = $region12
      $region11: #{_lambda_.19} parent=5 // pred_region
        %s185 = ssub.s32 %s11, 1
        // Predicated region
        $region13: #{_lambda_.19} parent=11 // pred_check
          %p186 = pneg %p49
        $region14: #{_lambda_.19} parent=11 // pred_check_branch
          %188 = sbr.rel (%p186) target = $region16
        $region15: #{_lambda_.19} parent=11 // pred_region
          %s189 = smul.u32 5, %s21
          %p190 = scmp.lt.s32.totalorder %s189, 4
          %s191 = scalar_select %p190, %s189, 4
          %s192 = smul.addr %s191, 2
          %s193 = smul.addr %s192, 4
          %s194 = scalar_lea.vmem %s0, %s193
          %s195 = smul.u32 5, %s21
        $region16: #{_lambda_.19} parent=11 // pred_fallthru
          _
        // Predicated region
        $region17: #{_lambda_.19} parent=11 // pred_check
          %p196 = pneg %p70
        $region18: #{_lambda_.19} parent=11 // pred_check_branch
          %198 = sbr.rel (%p196) target = $region20
        $region19: #{_lambda_.19} parent=11 // pred_region
          _
        $region20: #{_lambda_.19} parent=11 // pred_fallthru
          _
        // Predicated region
        $region21: #{_lambda_.19} parent=11 // pred_check
          %p199 = pneg %p91
        $region22: #{_lambda_.19} parent=11 // pred_check_branch
          %201 = sbr.rel (%p199) target = $region24
        $region23: #{_lambda_.19} parent=11 // pred_region
          _
        $region24: #{_lambda_.19} parent=11 // pred_fallthru
          _
      $region12: #{_lambda_.19} parent=5 // pred_fallthru
        _
      %p202 = scmp.lt.s32.totalorder %s11, 2
      // Predicated region
      $region25: #{_lambda_.19} parent=5 // pred_check
        %p203 = pneg %p202
      $region26: #{_lambda_.19} parent=5 // pred_check_branch
        %205 = sbr.rel (%p203) target = $region28
      $region27: #{_lambda_.19} parent=5 // pred_region
        // Predicated region
        $region29: #{_lambda_.19} parent=27 // pred_check
          %p206 = pneg %p111
        $region30: #{_lambda_.19} parent=27 // pred_check_branch
          %208 = sbr.rel (%p206) target = $region32
        $region31: #{_lambda_.19} parent=27 // pred_region
          %s209 = sand.u32 %s101, 1
          %s210 = sand.u32 %s101, 1
          %s211 = smul.addr %s210, 384
          %s212 = scalar_lea.vmem [#allocation2], %s211
          %s213 = smul.u32 3, %s18
          %s214 = smul.addr %s213, 4
          %s215 = scalar_lea.vmem %s3, %s214
          // Predicated region
          $region33: #{_lambda_.19} parent=31 // pred_check
            _
          $region34: #{_lambda_.19} parent=31 // pred_check_branch
            %217 = sbr.rel (0) target = $region36
          $region35: #{_lambda_.19} parent=31 // pred_region
            // Predicated region
            $region37: #{_lambda_.19} parent=35 // pred_check
              _
            $region38: #{_lambda_.19} parent=35 // pred_check_branch
              %219 = sbr.rel (0) target = $region40
            $region39: #{_lambda_.19} parent=35 // pred_region
              %s220 = scalar_lea.vmem %s215, 8
              %s221 = scalar_lea.vmem %s212, 8 [#allocation2]
              loop: start=0, step=1, limit=1
              $region41: #{_lambda_.19} parent=39 // loop_pre_header
                _
              $region42: #{_lambda_.19} parent=39 // loop_header
                %s223 = sphi 0, %s227
                %p224 = scmp.ge.s32.totalorder %s223, 1
                %s228 = sphi %s215, %s215
                %s229 = sphi %s212, %s212
              $region43: #{_lambda_.19} parent=39 // loop_header_branch
                %226 = sbr.rel (%p224) target = $region47
              $region44: #{_lambda_.19} parent=39 // loop_body
                %v230 = vld [vmem:[%s228] sm:$0xff]
                %231 = vst [vmem:[%s229] sm:$0xff] %v230
                %v232 = vld [vmem:[%s228 + $0x18] sm:$0xff]
                %233 = vst [vmem:[%s229 + $0xc] sm:$0xff] %v232
                %v234 = vld [vmem:[%s228 + $0x30] sm:$0xff]
                %235 = vst [vmem:[%s229 + $0x18] sm:$0xff] %v234
                %v236 = vld [vmem:[%s228 + $0x48] sm:$0xff]
                %237 = vst [vmem:[%s229 + $0x24] sm:$0xff] %v236
                %v238 = vld [vmem:[%s228 + $0x60] sm:$0xff]
                %239 = vst [vmem:[%s229 + $0x30] sm:$0xff] %v238
                %v240 = vld [vmem:[%s228 + $0x78] sm:$0xff]
                %241 = vst [vmem:[%s229 + $0x3c] sm:$0xff] %v240
                %v242 = vld [vmem:[%s228 + $0x90] sm:$0xff]
                %243 = vst [vmem:[%s229 + $0x48] sm:$0xff] %v242
                %v244 = vld [vmem:[%s228 + $0xa8] sm:$0xff]
                %245 = vst [vmem:[%s229 + $0x54] sm:$0xff] %v244
                %v246 = vld [vmem:[%s228 + $0xc0] sm:$0xff]
                %247 = vst [vmem:[%s229 + $0x60] sm:$0xff] %v246
                %v248 = vld [vmem:[%s228 + $0xd8] sm:$0xff]
                %249 = vst [vmem:[%s229 + $0x6c] sm:$0xff] %v248
                %v250 = vld [vmem:[%s228 + $0xf0] sm:$0xff]
                %251 = vst [vmem:[%s229 + $0x78] sm:$0xff] %v250
                %v252 = vld [vmem:[%s228 + $0x108] sm:$0xff]
                %253 = vst [vmem:[%s229 + $0x84] sm:$0xff] %v252
                %v254 = vld [vmem:[%s228 + $0x120] sm:$0xff]
                %255 = vst [vmem:[%s229 + $0x90] sm:$0xff] %v254
                %v256 = vld [vmem:[%s228 + $0x138] sm:$0xff]
                %257 = vst [vmem:[%s229 + $0x9c] sm:$0xff] %v256
                %v258 = vld [vmem:[%s228 + $0x150] sm:$0xff]
                %259 = vst [vmem:[%s229 + $0xa8] sm:$0xff] %v258
                %v260 = vld [vmem:[%s228 + $0x168] sm:$0xff]
                %261 = vst [vmem:[%s229 + $0xb4] sm:$0xff] %v260
                %v262 = vld [vmem:[%s228 + $0x180] sm:$0xff]
                %263 = vst [vmem:[%s229 + $0xc0] sm:$0xff] %v262
                %v264 = vld [vmem:[%s228 + $0x198] sm:$0xff]
                %265 = vst [vmem:[%s229 + $0xcc] sm:$0xff] %v264
                %v266 = vld [vmem:[%s228 + $0x1b0] sm:$0xff]
                %267 = vst [vmem:[%s229 + $0xd8] sm:$0xff] %v266
                %v268 = vld [vmem:[%s228 + $0x1c8] sm:$0xff]
                %269 = vst [vmem:[%s229 + $0xe4] sm:$0xff] %v268
                %v270 = vld [vmem:[%s228 + $0x1e0] sm:$0xff]
                %271 = vst [vmem:[%s229 + $0xf0] sm:$0xff] %v270
                %v272 = vld [vmem:[%s228 + $0x1f8] sm:$0xff]
                %273 = vst [vmem:[%s229 + $0xfc] sm:$0xff] %v272
                %v274 = vld [vmem:[%s228 + $0x210] sm:$0xff]
                %275 = vst [vmem:[%s229 + $0x108] sm:$0xff] %v274
                %v276 = vld [vmem:[%s228 + $0x228] sm:$0xff]
                %277 = vst [vmem:[%s229 + $0x114] sm:$0xff] %v276
                %v278 = vld [vmem:[%s228 + $0x240] sm:$0xff]
                %279 = vst [vmem:[%s229 + $0x120] sm:$0xff] %v278
                %v280 = vld [vmem:[%s228 + $0x258] sm:$0xff]
                %281 = vst [vmem:[%s229 + $0x12c] sm:$0xff] %v280
                %v282 = vld [vmem:[%s228 + $0x270] sm:$0xff]
                %283 = vst [vmem:[%s229 + $0x138] sm:$0xff] %v282
                %v284 = vld [vmem:[%s228 + $0x288] sm:$0xff]
                %285 = vst [vmem:[%s229 + $0x144] sm:$0xff] %v284
                %v286 = vld [vmem:[%s228 + $0x2a0] sm:$0xff]
                %287 = vst [vmem:[%s229 + $0x150] sm:$0xff] %v286
                %v288 = vld [vmem:[%s228 + $0x2b8] sm:$0xff]
                %289 = vst [vmem:[%s229 + $0x15c] sm:$0xff] %v288
                %v290 = vld [vmem:[%s228 + $0x2d0] sm:$0xff]
                %291 = vst [vmem:[%s229 + $0x168] sm:$0xff] %v290
                %v292 = vld [vmem:[%s228 + $0x2e8] sm:$0xff]
                %293 = vst [vmem:[%s229 + $0x174] sm:$0xff] %v292
              $region45: #{_lambda_.19} parent=39 // loop_footer
                %s227 = sadd.s32 1, %s223
              $region46: #{_lambda_.19} parent=39 // loop_footer_branch
                %222 = sbr.rel target = $region42
              $region47: #{_lambda_.19} parent=39 // loop_exit
                _
              %s295 = ssub.s32 16, 1
              loop: start=0, step=1, limit=1
              $region48: #{_lambda_.19} parent=39 // loop_pre_header
                _
              $region49: #{_lambda_.19} parent=39 // loop_header
                %s297 = sphi 0, %s301
                %p298 = scmp.ge.s32.totalorder %s297, 1
                %s302 = sphi %s220, %s220
                %s303 = sphi %s221, %s221
              $region50: #{_lambda_.19} parent=39 // loop_header_branch
                %300 = sbr.rel (%p298) target = $region54
              $region51: #{_lambda_.19} parent=39 // loop_body
                %v304 = vld [vmem:[%s302] sm:%s295]
                %305 = vst [vmem:[%s303] sm:%s295] %v304
                %v306 = vld [vmem:[%s302 + $0x18] sm:%s295]
                %307 = vst [vmem:[%s303 + $0xc] sm:%s295] %v306
                %v308 = vld [vmem:[%s302 + $0x30] sm:%s295]
                %309 = vst [vmem:[%s303 + $0x18] sm:%s295] %v308
                %v310 = vld [vmem:[%s302 + $0x48] sm:%s295]
                %311 = vst [vmem:[%s303 + $0x24] sm:%s295] %v310
                %v312 = vld [vmem:[%s302 + $0x60] sm:%s295]
                %313 = vst [vmem:[%s303 + $0x30] sm:%s295] %v312
                %v314 = vld [vmem:[%s302 + $0x78] sm:%s295]
                %315 = vst [vmem:[%s303 + $0x3c] sm:%s295] %v314
                %v316 = vld [vmem:[%s302 + $0x90] sm:%s295]
                %317 = vst [vmem:[%s303 + $0x48] sm:%s295] %v316
                %v318 = vld [vmem:[%s302 + $0xa8] sm:%s295]
                %319 = vst [vmem:[%s303 + $0x54] sm:%s295] %v318
                %v320 = vld [vmem:[%s302 + $0xc0] sm:%s295]
                %321 = vst [vmem:[%s303 + $0x60] sm:%s295] %v320
                %v322 = vld [vmem:[%s302 + $0xd8] sm:%s295]
                %323 = vst [vmem:[%s303 + $0x6c] sm:%s295] %v322
                %v324 = vld [vmem:[%s302 + $0xf0] sm:%s295]
                %325 = vst [vmem:[%s303 + $0x78] sm:%s295] %v324
                %v326 = vld [vmem:[%s302 + $0x108] sm:%s295]
                %327 = vst [vmem:[%s303 + $0x84] sm:%s295] %v326
                %v328 = vld [vmem:[%s302 + $0x120] sm:%s295]
                %329 = vst [vmem:[%s303 + $0x90] sm:%s295] %v328
                %v330 = vld [vmem:[%s302 + $0x138] sm:%s295]
                %331 = vst [vmem:[%s303 + $0x9c] sm:%s295] %v330
                %v332 = vld [vmem:[%s302 + $0x150] sm:%s295]
                %333 = vst [vmem:[%s303 + $0xa8] sm:%s295] %v332
                %v334 = vld [vmem:[%s302 + $0x168] sm:%s295]
                %335 = vst [vmem:[%s303 + $0xb4] sm:%s295] %v334
                %v336 = vld [vmem:[%s302 + $0x180] sm:%s295]
                %337 = vst [vmem:[%s303 + $0xc0] sm:%s295] %v336
                %v338 = vld [vmem:[%s302 + $0x198] sm:%s295]
                %339 = vst [vmem:[%s303 + $0xcc] sm:%s295] %v338
                %v340 = vld [vmem:[%s302 + $0x1b0] sm:%s295]
                %341 = vst [vmem:[%s303 + $0xd8] sm:%s295] %v340
                %v342 = vld [vmem:[%s302 + $0x1c8] sm:%s295]
                %343 = vst [vmem:[%s303 + $0xe4] sm:%s295] %v342
                %v344 = vld [vmem:[%s302 + $0x1e0] sm:%s295]
                %345 = vst [vmem:[%s303 + $0xf0] sm:%s295] %v344
                %v346 = vld [vmem:[%s302 + $0x1f8] sm:%s295]
                %347 = vst [vmem:[%s303 + $0xfc] sm:%s295] %v346
                %v348 = vld [vmem:[%s302 + $0x210] sm:%s295]
                %349 = vst [vmem:[%s303 + $0x108] sm:%s295] %v348
                %v350 = vld [vmem:[%s302 + $0x228] sm:%s295]
                %351 = vst [vmem:[%s303 + $0x114] sm:%s295] %v350
                %v352 = vld [vmem:[%s302 + $0x240] sm:%s295]
                %353 = vst [vmem:[%s303 + $0x120] sm:%s295] %v352
                %v354 = vld [vmem:[%s302 + $0x258] sm:%s295]
                %355 = vst [vmem:[%s303 + $0x12c] sm:%s295] %v354
                %v356 = vld [vmem:[%s302 + $0x270] sm:%s295]
                %357 = vst [vmem:[%s303 + $0x138] sm:%s295] %v356
                %v358 = vld [vmem:[%s302 + $0x288] sm:%s295]
                %359 = vst [vmem:[%s303 + $0x144] sm:%s295] %v358
                %v360 = vld [vmem:[%s302 + $0x2a0] sm:%s295]
                %361 = vst [vmem:[%s303 + $0x150] sm:%s295] %v360
                %v362 = vld [vmem:[%s302 + $0x2b8] sm:%s295]
                %363 = vst [vmem:[%s303 + $0x15c] sm:%s295] %v362
                %v364 = vld [vmem:[%s302 + $0x2d0] sm:%s295]
                %365 = vst [vmem:[%s303 + $0x168] sm:%s295] %v364
                %v366 = vld [vmem:[%s302 + $0x2e8] sm:%s295]
                %367 = vst [vmem:[%s303 + $0x174] sm:%s295] %v366
              $region52: #{_lambda_.19} parent=39 // loop_footer
                %s301 = sadd.s32 1, %s297
              $region53: #{_lambda_.19} parent=39 // loop_footer_branch
                %296 = sbr.rel target = $region49
              $region54: #{_lambda_.19} parent=39 // loop_exit
                _
            $region40: #{_lambda_.19} parent=35 // pred_fallthru
              _
          $region36: #{_lambda_.19} parent=31 // pred_fallthru
            _
          %368 = vnop
        $region32: #{_lambda_.19} parent=27 // pred_fallthru
          _
        // Predicated region
        $region55: #{_lambda_.19} parent=27 // pred_check
          %p369 = pneg %p137
        $region56: #{_lambda_.19} parent=27 // pred_check_branch
          %371 = sbr.rel (%p369) target = $region58
        $region57: #{_lambda_.19} parent=27 // pred_region
          %s372 = smul.u32 3, %s18
          %p373 = scmp.lt.s32.totalorder %s372, 5
          %s374 = scalar_select %p373, %s372, 5
          %s375 = scalar_lea.vmem %s4, %s374
          %s376 = smul.u32 3, %s18
        $region58: #{_lambda_.19} parent=27 // pred_fallthru
          _
      $region28: #{_lambda_.19} parent=5 // pred_fallthru
        _
      %p377 = scmp.le.s32.totalorder 1, %s11
      %p378 = scmp.lt.s32.totalorder %s11, 3
      %p379 = pnand %p377, %p378
      %p380 = pneg %p379
      // Predicated region
      $region59: #{_lambda_.19} parent=5 // pred_check
        _
      $region60: #{_lambda_.19} parent=5 // pred_check_branch
        %382 = sbr.rel (%p379) target = $region62
      $region61: #{_lambda_.19} parent=5 // pred_region
        %s383 = ssub.s32 %s11, 1
        %s384 = sand.u32 %s104, 1
        %s385 = sand.u32 %s104, 1
        %s386 = smul.addr %s385, 384
        %s387 = scalar_lea.vmem [#allocation2], %s386
        // Predicated region
        $region63: #{_lambda_.19} parent=61 // pred_check
          %p388 = pneg %p117
        $region64: #{_lambda_.19} parent=61 // pred_check_branch
          %390 = sbr.rel (%p388) target = $region66
        $region65: #{_lambda_.19} parent=61 // pred_region
          _
        $region66: #{_lambda_.19} parent=61 // pred_fallthru
          _
        %s391 = smul.u32 5, %s21
        %p392 = scmp.lt.s32.totalorder %s391, 4
        %s393 = scalar_select %p392, %s391, 4
        %s394 = smul.addr %s393, 2
        %s395 = smul.addr %s394, 4
        %s396 = scalar_lea.vmem %s0, %s395
        %p397 = pneg %p49
        %p398 = pneg %p46
        %p399 = pneg %p70
        %p400 = pneg %p67
        %p401 = pneg %p91
        %p402 = pneg %p88
        %s403 = sand.u32 %s104, 1
        %s404 = sand.u32 %s104, 1
        %s405 = smul.addr %s404, 384
        %s406 = scalar_lea.vmem [#allocation2], %s405
        %p407 = pneg %p117
        %p408 = pneg %p114
        %s409 = smul.u32 3, %s20
        %p410 = scmp.lt.s32.totalorder %s409, 5
        %s411 = scalar_select %p410, %s409, 5
        %s412 = scalar_lea.vmem %s4, %s411
        %p413 = pneg %p143
        %p414 = pneg %p140
        %p415 = pneg %p171
        %p416 = pneg %p168
        %s417 = sand.u32 %s158, 1
        %s418 = sand.u32 %s158, 1
        %s419 = smul.addr %s418, 60
        %s420 = scalar_lea.vmem [#allocation3], %s419
        %s421 = smul.u32 5, %s21
        %p422 = scmp.lt.s32.totalorder %s421, 4
        %s423 = scalar_select %p422, %s421, 4
        %s424 = smul.addr %s423, 2
        %s425 = smul.addr %s424, 4
        %s426 = scalar_lea.vmem %s0, %s425
        %s427 = smul.u32 5, %s21
        %s428 = smul.u32 3, %s20
        %s429 = smul.u32 3, %s20
        %p430 = scmp.lt.s32.totalorder %s429, 5
        %s431 = scalar_select %p430, %s429, 5
        %s432 = scalar_lea.vmem %s4, %s431
        %s433 = smul.u32 3, %s20
        %s434 = smul.u32 5, %s21
        %s435 = smul.u32 3, %s20
        %v436 = vld [vmem:[%s426] sm:$0xff]
        %v437 = vld [vmem:[%s426 + $0x8] sm:$0xff]
        %v438 = vld [vmem:[%s426 + $0x10] sm:$0xff]
        %v439 = vld [vmem:[%s426 + $0x18] sm:$0xff]
        %v440 = vld [vmem:[%s426 + $0x20] sm:$0x11]
        %v441 = vunpack.c.l.bf16 %v436
        %v442 = vunpack.c.h.bf16 %v436
        %v443 = vunpack.c.l.bf16 %v437
        %v444 = vunpack.c.h.bf16 %v437
        %v445 = vunpack.c.l.bf16 %v438
        %v446 = vunpack.c.h.bf16 %v438
        %v447 = vunpack.c.l.bf16 %v439
        %v448 = vunpack.c.h.bf16 %v439
        %v449 = vunpack.c.l.bf16 %v440
        %v450 = vunpack.c.h.bf16 %v440
        %v451 = vadd.f32 %v441, %v442
        %452 = vadd.xlane.f32.xlu0 %v451
        %v453 = vpop.xlane.xlu0 %452
        %v454 = vadd.f32 %v443, %v444
        %455 = vadd.xlane.f32.xlu0 %v454
        %v456 = vpop.xlane.xlu0 %455
        %v457 = vadd.f32 %v445, %v446
        %458 = vadd.xlane.f32.xlu0 %v457
        %v459 = vpop.xlane.xlu0 %458
        %v460 = vadd.f32 %v447, %v448
        %461 = vadd.xlane.f32.xlu0 %v460
        %v462 = vpop.xlane.xlu0 %461
        %vm463 = vcmask 1041408
        %v464 = vsel %vm463, %v449, 0.0
        %v465 = vsel %vm463, %v450, 0.0
        %v466 = vadd.f32 %v464, %v465
        %467 = vadd.xlane.f32.xlu0 %v466
        %v468 = vpop.xlane.xlu0 %467
        %v469 = vrcp.pop 256.0
        %v470 = vmul.f32 256.0, %v469
        %v471 = vsub.f32 1.0, %v470
        %v472 = vmul.f32 %v469, %v471
        %v473 = vadd.f32 %v469, %v472
        %vm474 = vweird.f32 %v469
        %v475 = vsel %vm474, %v469, %v473
        %v476 = vmul.f32 %v453, %v475
        %v477 = vmul.f32 %v456, %v475
        %v478 = vmul.f32 %v459, %v475
        %v479 = vmul.f32 %v462, %v475
        %v480 = vmul.f32 %v468, %v475
        %v481 = vsub.f32 %v441, %v476
        %v482 = vsub.f32 %v442, %v476
        %v483 = vsub.f32 %v443, %v477
        %v484 = vsub.f32 %v444, %v477
        %v485 = vsub.f32 %v445, %v478
        %v486 = vsub.f32 %v446, %v478
        %v487 = vsub.f32 %v447, %v479
        %v488 = vsub.f32 %v448, %v479
        %v489 = vsub.f32 %v449, %v480
        %v490 = vsub.f32 %v450, %v480
        %v491 = vmul.f32 %v481, %v481
        %v492 = vmul.f32 %v482, %v482
        %v493 = vmul.f32 %v483, %v483
        %v494 = vmul.f32 %v484, %v484
        %v495 = vmul.f32 %v485, %v485
        %v496 = vmul.f32 %v486, %v486
        %v497 = vmul.f32 %v487, %v487
        %v498 = vmul.f32 %v488, %v488
        %v499 = vmul.f32 %v489, %v489
        %v500 = vmul.f32 %v490, %v490
        %v501 = vadd.f32 %v491, %v492
        %502 = vadd.xlane.f32.xlu0 %v501
        %v503 = vpop.xlane.xlu0 %502
        %v504 = vadd.f32 %v493, %v494
        %505 = vadd.xlane.f32.xlu0 %v504
        %v506 = vpop.xlane.xlu0 %505
        %v507 = vadd.f32 %v495, %v496
        %508 = vadd.xlane.f32.xlu0 %v507
        %v509 = vpop.xlane.xlu0 %508
        %v510 = vadd.f32 %v497, %v498
        %511 = vadd.xlane.f32.xlu0 %v510
        %v512 = vpop.xlane.xlu0 %511
        %v513 = vsel %vm463, %v499, 0.0
        %v514 = vsel %vm463, %v500, 0.0
        %v515 = vadd.f32 %v513, %v514
        %516 = vadd.xlane.f32.xlu0 %v515
        %v517 = vpop.xlane.xlu0 %516
        %v518 = vmul.f32 %v503, %v475
        %v519 = vmul.f32 %v506, %v475
        %v520 = vmul.f32 %v509, %v475
        %v521 = vmul.f32 %v512, %v475
        %v522 = vmul.f32 %v517, %v475
        %v523 = vadd.f32 %v518, 1e-06
        %v524 = vadd.f32 %v519, 1e-06
        %v525 = vadd.f32 %v520, 1e-06
        %v526 = vadd.f32 %v521, 1e-06
        %v527 = vadd.f32 %v522, 1e-06
        %v528 = vrsqrt.pop %v523
        %v529 = vmul.f32 %v528, %v523
        %v530 = vmul.f32 %v529, %v528
        %v531 = vmul.f32 0.5, %v530
        %v532 = vsub.f32 1.5, %v531
        %v533 = vmul.f32 %v528, %v532
        %vm534 = vweird.f32 %v523
        %vm535 = vweird.f32 %v528
        %vm536 = vmor %vm534, %vm535
        %v537 = vsel %vm536, %v528, %v533
        %v538 = vrsqrt.pop %v524
        %v539 = vmul.f32 %v538, %v524
        %v540 = vmul.f32 %v539, %v538
        %v541 = vmul.f32 0.5, %v540
        %v542 = vsub.f32 1.5, %v541
        %v543 = vmul.f32 %v538, %v542
        %vm544 = vweird.f32 %v524
        %vm545 = vweird.f32 %v538
        %vm546 = vmor %vm544, %vm545
        %v547 = vsel %vm546, %v538, %v543
        %v548 = vrsqrt.pop %v525
        %v549 = vmul.f32 %v548, %v525
        %v550 = vmul.f32 %v549, %v548
        %v551 = vmul.f32 0.5, %v550
        %v552 = vsub.f32 1.5, %v551
        %v553 = vmul.f32 %v548, %v552
        %vm554 = vweird.f32 %v525
        %vm555 = vweird.f32 %v548
        %vm556 = vmor %vm554, %vm555
        %v557 = vsel %vm556, %v548, %v553
        %v558 = vrsqrt.pop %v526
        %v559 = vmul.f32 %v558, %v526
        %v560 = vmul.f32 %v559, %v558
        %v561 = vmul.f32 0.5, %v560
        %v562 = vsub.f32 1.5, %v561
        %v563 = vmul.f32 %v558, %v562
        %vm564 = vweird.f32 %v526
        %vm565 = vweird.f32 %v558
        %vm566 = vmor %vm564, %vm565
        %v567 = vsel %vm566, %v558, %v563
        %v568 = vrsqrt.pop %v527
        %v569 = vmul.f32 %v568, %v527
        %v570 = vmul.f32 %v569, %v568
        %v571 = vmul.f32 0.5, %v570
        %v572 = vsub.f32 1.5, %v571
        %v573 = vmul.f32 %v568, %v572
        %vm574 = vweird.f32 %v527
        %vm575 = vweird.f32 %v568
        %vm576 = vmor %vm574, %vm575
        %v577 = vsel %vm576, %v568, %v573
        %v578 = vmul.f32 %v481, %v537
        %v579 = vmul.f32 %v482, %v537
        %v580 = vmul.f32 %v483, %v547
        %v581 = vmul.f32 %v484, %v547
        %v582 = vmul.f32 %v485, %v557
        %v583 = vmul.f32 %v486, %v557
        %v584 = vmul.f32 %v487, %v567
        %v585 = vmul.f32 %v488, %v567
        %v586 = vmul.f32 %v489, %v577
        %v587 = vmul.f32 %v490, %v577
        %v588 = vld [vmem:[%s1] sm:$0x3]
        %v590 = vperm.slane %v588, 0
        %v591 = vperm.slane %v588, 1
        %v594 = vmul.f32 %v578, %v590
        %v595 = vmul.f32 %v579, %v591
        %v596 = vmul.f32 %v580, %v590
        %v597 = vmul.f32 %v581, %v591
        %v598 = vmul.f32 %v582, %v590
        %v599 = vmul.f32 %v583, %v591
        %v600 = vmul.f32 %v584, %v590
        %v601 = vmul.f32 %v585, %v591
        %v602 = vmul.f32 %v586, %v590
        %v603 = vmul.f32 %v587, %v591
        %v604 = vld [vmem:[%s2] sm:$0x3]
        %v606 = vperm.slane %v604, 0
        %v607 = vperm.slane %v604, 1
        %v610 = vadd.f32 %v594, %v606
        %v611 = vadd.f32 %v595, %v607
        %v612 = vadd.f32 %v596, %v606
        %v613 = vadd.f32 %v597, %v607
        %v614 = vadd.f32 %v598, %v606
        %v615 = vadd.f32 %v599, %v607
        %v616 = vadd.f32 %v600, %v606
        %v617 = vadd.f32 %v601, %v607
        %v618 = vadd.f32 %v602, %v606
        %v619 = vadd.f32 %v603, %v607
        %v620 = vpack.c.bf16 %v612, %v610
        %v621 = vpack.c.bf16 %v613, %v611
        %v622 = vpack.c.bf16 %v616, %v614
        %v623 = vpack.c.bf16 %v617, %v615
        %v624 = vpack.c.bf16 %v618, %v618
        %v625 = vpack.c.bf16 %v619, %v619
        %v626 = vld [vmem:[%s387] sm:$0xff]
        %v627 = vld [vmem:[%s387 + $0x8] sm:$0xf]
        %v628 = vld [vmem:[%s387 + $0xc] sm:$0xff]
        %v629 = vld [vmem:[%s387 + $0x14] sm:$0xf]
        %v630 = vld [vmem:[%s387 + $0x18] sm:$0xff]
        %v631 = vld [vmem:[%s387 + $0x20] sm:$0xf]
        %v632 = vld [vmem:[%s387 + $0x24] sm:$0xff]
        %v633 = vld [vmem:[%s387 + $0x2c] sm:$0xf]
        %v634 = vld [vmem:[%s387 + $0x30] sm:$0xff]
        %v635 = vld [vmem:[%s387 + $0x38] sm:$0xf]
        %v636 = vld [vmem:[%s387 + $0x3c] sm:$0xff]
        %v637 = vld [vmem:[%s387 + $0x44] sm:$0xf]
        %v638 = vld [vmem:[%s387 + $0x48] sm:$0xff]
        %v639 = vld [vmem:[%s387 + $0x50] sm:$0xf]
        %v640 = vld [vmem:[%s387 + $0x54] sm:$0xff]
        %v641 = vld [vmem:[%s387 + $0x5c] sm:$0xf]
        %v642 = vld [vmem:[%s387 + $0x60] sm:$0xff]
        %v643 = vld [vmem:[%s387 + $0x68] sm:$0xf]
        %v644 = vld [vmem:[%s387 + $0x6c] sm:$0xff]
        %v645 = vld [vmem:[%s387 + $0x74] sm:$0xf]
        %v646 = vld [vmem:[%s387 + $0x78] sm:$0xff]
        %v647 = vld [vmem:[%s387 + $0x80] sm:$0xf]
        %v648 = vld [vmem:[%s387 + $0x84] sm:$0xff]
        %v649 = vld [vmem:[%s387 + $0x8c] sm:$0xf]
        %v650 = vld [vmem:[%s387 + $0x90] sm:$0xff]
        %v651 = vld [vmem:[%s387 + $0x98] sm:$0xf]
        %v652 = vld [vmem:[%s387 + $0x9c] sm:$0xff]
        %v653 = vld [vmem:[%s387 + $0xa4] sm:$0xf]
        %v654 = vld [vmem:[%s387 + $0xa8] sm:$0xff]
        %v655 = vld [vmem:[%s387 + $0xb0] sm:$0xf]
        %v656 = vld [vmem:[%s387 + $0xb4] sm:$0xff]
        %v657 = vld [vmem:[%s387 + $0xbc] sm:$0xf]
        %v658 = vld [vmem:[%s387 + $0xc0] sm:$0xff]
        %v659 = vld [vmem:[%s387 + $0xc8] sm:$0xf]
        %v660 = vld [vmem:[%s387 + $0xcc] sm:$0xff]
        %v661 = vld [vmem:[%s387 + $0xd4] sm:$0xf]
        %v662 = vld [vmem:[%s387 + $0xd8] sm:$0xff]
        %v663 = vld [vmem:[%s387 + $0xe0] sm:$0xf]
        %v664 = vld [vmem:[%s387 + $0xe4] sm:$0xff]
        %v665 = vld [vmem:[%s387 + $0xec] sm:$0xf]
        %v666 = vld [vmem:[%s387 + $0xf0] sm:$0xff]
        %v667 = vld [vmem:[%s387 + $0xf8] sm:$0xf]
        %v668 = vld [vmem:[%s387 + $0xfc] sm:$0xff]
        %v669 = vld [vmem:[%s387 + $0x104] sm:$0xf]
        %v670 = vld [vmem:[%s387 + $0x108] sm:$0xff]
        %v671 = vld [vmem:[%s387 + $0x110] sm:$0xf]
        %v672 = vld [vmem:[%s387 + $0x114] sm:$0xff]
        %v673 = vld [vmem:[%s387 + $0x11c] sm:$0xf]
        %v674 = vld [vmem:[%s387 + $0x120] sm:$0xff]
        %v675 = vld [vmem:[%s387 + $0x128] sm:$0xf]
        %v676 = vld [vmem:[%s387 + $0x12c] sm:$0xff]
        %v677 = vld [vmem:[%s387 + $0x134] sm:$0xf]
        %v678 = vld [vmem:[%s387 + $0x138] sm:$0xff]
        %v679 = vld [vmem:[%s387 + $0x140] sm:$0xf]
        %v680 = vld [vmem:[%s387 + $0x144] sm:$0xff]
        %v681 = vld [vmem:[%s387 + $0x14c] sm:$0xf]
        %v682 = vld [vmem:[%s387 + $0x150] sm:$0xff]
        %v683 = vld [vmem:[%s387 + $0x158] sm:$0xf]
        %v684 = vld [vmem:[%s387 + $0x15c] sm:$0xff]
        %v685 = vld [vmem:[%s387 + $0x164] sm:$0xf]
        %v686 = vld [vmem:[%s387 + $0x168] sm:$0xff]
        %v687 = vld [vmem:[%s387 + $0x170] sm:$0xf]
        %v688 = vld [vmem:[%s387 + $0x174] sm:$0xff]
        %v689 = vld [vmem:[%s387 + $0x17c] sm:$0xf]
        %v690 = vld [vmem:[%s432] sm:$0x7]
        %v692 = vperm.slane %v690, 0
        %v693 = vperm.slane %v690, 1
        %v694 = vperm.slane %v690, 2
        %v762 = vunpack.c.l.b16 %v626
        %v763 = vunpack.c.h.b16 %v626
        %v764 = vunpack.c.l.b16 %v627
        %v765 = vunpack.c.l.b16 %v628
        %v766 = vunpack.c.h.b16 %v628
        %v767 = vunpack.c.l.b16 %v629
        %v768 = vunpack.c.l.b16 %v630
        %v769 = vunpack.c.h.b16 %v630
        %v770 = vunpack.c.l.b16 %v631
        %v771 = vunpack.c.l.b16 %v632
        %v772 = vunpack.c.h.b16 %v632
        %v773 = vunpack.c.l.b16 %v633
        %v774 = vunpack.c.l.b16 %v634
        %v775 = vunpack.c.h.b16 %v634
        %v776 = vunpack.c.l.b16 %v635
        %v777 = vunpack.c.l.b16 %v636
        %v778 = vunpack.c.h.b16 %v636
        %v779 = vunpack.c.l.b16 %v637
        %v780 = vunpack.c.l.b16 %v638
        %v781 = vunpack.c.h.b16 %v638
        %v782 = vunpack.c.l.b16 %v639
        %v783 = vunpack.c.l.b16 %v640
        %v784 = vunpack.c.h.b16 %v640
        %v785 = vunpack.c.l.b16 %v641
        %v786 = vunpack.c.l.b16 %v642
        %v787 = vunpack.c.h.b16 %v642
        %v788 = vunpack.c.l.b16 %v643
        %v789 = vunpack.c.l.b16 %v644
        %v790 = vunpack.c.h.b16 %v644
        %v791 = vunpack.c.l.b16 %v645
        %v792 = vunpack.c.l.b16 %v646
        %v793 = vunpack.c.h.b16 %v646
        %v794 = vunpack.c.l.b16 %v647
        %v795 = vunpack.c.l.b16 %v648
        %v796 = vunpack.c.h.b16 %v648
        %v797 = vunpack.c.l.b16 %v649
        %v798 = vunpack.c.l.b16 %v650
        %v799 = vunpack.c.h.b16 %v650
        %v800 = vunpack.c.l.b16 %v651
        %v801 = vunpack.c.l.b16 %v652
        %v802 = vunpack.c.h.b16 %v652
        %v803 = vunpack.c.l.b16 %v653
        %v804 = vunpack.c.l.b16 %v654
        %v805 = vunpack.c.h.b16 %v654
        %v806 = vunpack.c.l.b16 %v655
        %v807 = vunpack.c.l.b16 %v656
        %v808 = vunpack.c.h.b16 %v656
        %v809 = vunpack.c.l.b16 %v657
        %v810 = vunpack.c.l.b16 %v658
        %v811 = vunpack.c.h.b16 %v658
        %v812 = vunpack.c.l.b16 %v659
        %v813 = vunpack.c.l.b16 %v660
        %v814 = vunpack.c.h.b16 %v660
        %v815 = vunpack.c.l.b16 %v661
        %v816 = vunpack.c.l.b16 %v662
        %v817 = vunpack.c.h.b16 %v662
        %v818 = vunpack.c.l.b16 %v663
        %v819 = vunpack.c.l.b16 %v664
        %v820 = vunpack.c.h.b16 %v664
        %v821 = vunpack.c.l.b16 %v665
        %v822 = vunpack.c.l.b16 %v666
        %v823 = vunpack.c.h.b16 %v666
        %v824 = vunpack.c.l.b16 %v667
        %v825 = vunpack.c.l.b16 %v668
        %v826 = vunpack.c.h.b16 %v668
        %v827 = vunpack.c.l.b16 %v669
        %v828 = vunpack.c.l.b16 %v670
        %v829 = vunpack.c.h.b16 %v670
        %v830 = vunpack.c.l.b16 %v671
        %v831 = vunpack.c.l.b16 %v672
        %v832 = vunpack.c.h.b16 %v672
        %v833 = vunpack.c.l.b16 %v673
        %v834 = vunpack.c.l.b16 %v674
        %v835 = vunpack.c.h.b16 %v674
        %v836 = vunpack.c.l.b16 %v675
        %v837 = vunpack.c.l.b16 %v676
        %v838 = vunpack.c.h.b16 %v676
        %v839 = vunpack.c.l.b16 %v677
        %v840 = vunpack.c.l.b16 %v678
        %v841 = vunpack.c.h.b16 %v678
        %v842 = vunpack.c.l.b16 %v679
        %v843 = vunpack.c.l.b16 %v680
        %v844 = vunpack.c.h.b16 %v680
        %v845 = vunpack.c.l.b16 %v681
        %v846 = vunpack.c.l.b16 %v682
        %v847 = vunpack.c.h.b16 %v682
        %v848 = vunpack.c.l.b16 %v683
        %v849 = vunpack.c.l.b16 %v684
        %v850 = vunpack.c.h.b16 %v684
        %v851 = vunpack.c.l.b16 %v685
        %v852 = vunpack.c.l.b16 %v686
        %v853 = vunpack.c.h.b16 %v686
        %v854 = vunpack.c.l.b16 %v687
        %v855 = vunpack.c.l.b16 %v688
        %v856 = vunpack.c.h.b16 %v688
        %v857 = vunpack.c.l.b16 %v689
        %v858 = vpack.c.b16 %v765, %v762
        %v859 = vpack.c.b16 %v766, %v763
        %v860 = vpack.c.b16 %v767, %v764
        %v861 = vpack.c.b16 %v771, %v768
        %v862 = vpack.c.b16 %v772, %v769
        %v863 = vpack.c.b16 %v773, %v770
        %v864 = vpack.c.b16 %v777, %v774
        %v865 = vpack.c.b16 %v778, %v775
        %v866 = vpack.c.b16 %v779, %v776
        %v867 = vpack.c.b16 %v783, %v780
        %v868 = vpack.c.b16 %v784, %v781
        %v869 = vpack.c.b16 %v785, %v782
        %v870 = vpack.c.b16 %v789, %v786
        %v871 = vpack.c.b16 %v790, %v787
        %v872 = vpack.c.b16 %v791, %v788
        %v873 = vpack.c.b16 %v795, %v792
        %v874 = vpack.c.b16 %v796, %v793
        %v875 = vpack.c.b16 %v797, %v794
        %v876 = vpack.c.b16 %v801, %v798
        %v877 = vpack.c.b16 %v802, %v799
        %v878 = vpack.c.b16 %v803, %v800
        %v879 = vpack.c.b16 %v807, %v804
        %v880 = vpack.c.b16 %v808, %v805
        %v881 = vpack.c.b16 %v809, %v806
        %v882 = vpack.c.b16 %v813, %v810
        %v883 = vpack.c.b16 %v814, %v811
        %v884 = vpack.c.b16 %v815, %v812
        %v885 = vpack.c.b16 %v819, %v816
        %v886 = vpack.c.b16 %v820, %v817
        %v887 = vpack.c.b16 %v821, %v818
        %v888 = vpack.c.b16 %v825, %v822
        %v889 = vpack.c.b16 %v826, %v823
        %v890 = vpack.c.b16 %v827, %v824
        %v891 = vpack.c.b16 %v831, %v828
        %v892 = vpack.c.b16 %v832, %v829
        %v893 = vpack.c.b16 %v833, %v830
        %v894 = vpack.c.b16 %v837, %v834
        %v895 = vpack.c.b16 %v838, %v835
        %v896 = vpack.c.b16 %v839, %v836
        %v897 = vpack.c.b16 %v843, %v840
        %v898 = vpack.c.b16 %v844, %v841
        %v899 = vpack.c.b16 %v845, %v842
        %v900 = vpack.c.b16 %v849, %v846
        %v901 = vpack.c.b16 %v850, %v847
        %v902 = vpack.c.b16 %v851, %v848
        %v903 = vpack.c.b16 %v855, %v852
        %v904 = vpack.c.b16 %v856, %v853
        %v905 = vpack.c.b16 %v857, %v854
        %954 = vmatpush.bf16.msra.mxu0 %v879
        %955 = vmatpush.bf16.msra.mxu0 %v876
        %956 = vmatpush.bf16.msra.mxu0 %v873
        %957 = vmatpush.bf16.msra.mxu0 %v870
        %958 = vmatpush.bf16.msra.mxu0 %v867
        %959 = vmatpush.bf16.msra.mxu0 %v864
        %960 = vmatpush.bf16.msra.mxu0 %v861
        %961 = vmatpush.bf16.msra.mxu0 %v858
        %962 = vmatmul.bf16.gmra.mxu0 %v620
        %v963 = vpop.f32.mrf.mxu0
        %v964 = vadd.f32 %v692, %v963
        %v965 = vpop.f32.mrf.mxu0
        %v966 = vadd.f32 %v692, %v965
        %967 = vmatmul.bf16.gmra.mxu0 %v622
        %v968 = vpop.f32.mrf.mxu0
        %v969 = vadd.f32 %v692, %v968
        %v970 = vpop.f32.mrf.mxu0
        %v971 = vadd.f32 %v692, %v970
        %972 = vmatmul.bf16.gmra.mxu0 %v624
        %v973 = vpop.f32.mrf.mxu0
        %v974 = vadd.f32 %v692, %v973
        %v975 = vpop.f32.mrf.mxu0
        %976 = vdwg.mxu0
        %977 = vmatpush.bf16.msra.mxu0 %v903
        %978 = vmatpush.bf16.msra.mxu0 %v900
        %979 = vmatpush.bf16.msra.mxu0 %v897
        %980 = vmatpush.bf16.msra.mxu0 %v894
        %981 = vmatpush.bf16.msra.mxu0 %v891
        %982 = vmatpush.bf16.msra.mxu0 %v888
        %983 = vmatpush.bf16.msra.mxu0 %v885
        %984 = vmatpush.bf16.msra.mxu0 %v882
        %985 = vmatmul.bf16.gmra.mxu0 %v621
        %v986 = vpop.f32.mrf.mxu0
        %v987 = vadd.f32 %v964, %v986
        %v988 = vpop.f32.mrf.mxu0
        %v989 = vadd.f32 %v966, %v988
        %990 = vmatmul.bf16.gmra.mxu0 %v623
        %v991 = vpop.f32.mrf.mxu0
        %v992 = vadd.f32 %v969, %v991
        %v993 = vpop.f32.mrf.mxu0
        %v994 = vadd.f32 %v971, %v993
        %995 = vmatmul.bf16.gmra.mxu0 %v625
        %v996 = vpop.f32.mrf.mxu0
        %v997 = vadd.f32 %v974, %v996
        %v998 = vpop.f32.mrf.mxu0
        %999 = vdwg.mxu0
        %1000 = vmatpush.bf16.msra.mxu0 %v880
        %1001 = vmatpush.bf16.msra.mxu0 %v877
        %1002 = vmatpush.bf16.msra.mxu0 %v874
        %1003 = vmatpush.bf16.msra.mxu0 %v871
        %1004 = vmatpush.bf16.msra.mxu0 %v868
        %1005 = vmatpush.bf16.msra.mxu0 %v865
        %1006 = vmatpush.bf16.msra.mxu0 %v862
        %1007 = vmatpush.bf16.msra.mxu0 %v859
        %1008 = vmatmul.bf16.gmra.mxu0 %v620
        %v1009 = vpop.f32.mrf.mxu0
        %v1010 = vadd.f32 %v693, %v1009
        %v1011 = vpop.f32.mrf.mxu0
        %v1012 = vadd.f32 %v693, %v1011
        %1013 = vmatmul.bf16.gmra.mxu0 %v622
        %v1014 = vpop.f32.mrf.mxu0
        %v1015 = vadd.f32 %v693, %v1014
        %v1016 = vpop.f32.mrf.mxu0
        %v1017 = vadd.f32 %v693, %v1016
        %1018 = vmatmul.bf16.gmra.mxu0 %v624
        %v1019 = vpop.f32.mrf.mxu0
        %v1020 = vadd.f32 %v693, %v1019
        %v1021 = vpop.f32.mrf.mxu0
        %1022 = vdwg.mxu0
        %1023 = vmatpush.bf16.msra.mxu0 %v904
        %1024 = vmatpush.bf16.msra.mxu0 %v901
        %1025 = vmatpush.bf16.msra.mxu0 %v898
        %1026 = vmatpush.bf16.msra.mxu0 %v895
        %1027 = vmatpush.bf16.msra.mxu0 %v892
        %1028 = vmatpush.bf16.msra.mxu0 %v889
        %1029 = vmatpush.bf16.msra.mxu0 %v886
        %1030 = vmatpush.bf16.msra.mxu0 %v883
        %1031 = vmatmul.bf16.gmra.mxu0 %v621
        %v1032 = vpop.f32.mrf.mxu0
        %v1033 = vadd.f32 %v1010, %v1032
        %v1034 = vpop.f32.mrf.mxu0
        %v1035 = vadd.f32 %v1012, %v1034
        %1036 = vmatmul.bf16.gmra.mxu0 %v623
        %v1037 = vpop.f32.mrf.mxu0
        %v1038 = vadd.f32 %v1015, %v1037
        %v1039 = vpop.f32.mrf.mxu0
        %v1040 = vadd.f32 %v1017, %v1039
        %1041 = vmatmul.bf16.gmra.mxu0 %v625
        %v1042 = vpop.f32.mrf.mxu0
        %v1043 = vadd.f32 %v1020, %v1042
        %v1044 = vpop.f32.mrf.mxu0
        %1045 = vdwg.mxu0
        %1046 = vmatpush.bf16.msra.mxu0 %v881
        %1047 = vmatpush.bf16.msra.mxu0 %v878
        %1048 = vmatpush.bf16.msra.mxu0 %v875
        %1049 = vmatpush.bf16.msra.mxu0 %v872
        %1050 = vmatpush.bf16.msra.mxu0 %v869
        %1051 = vmatpush.bf16.msra.mxu0 %v866
        %1052 = vmatpush.bf16.msra.mxu0 %v863
        %1053 = vmatpush.bf16.msra.mxu0 %v860
        %1054 = vmatmul.bf16.gmra.mxu0 %v620
        %v1055 = vpop.f32.mrf.mxu0
        %v1056 = vadd.f32 %v694, %v1055
        %v1057 = vpop.f32.mrf.mxu0
        %v1058 = vadd.f32 %v694, %v1057
        %1059 = vmatmul.bf16.gmra.mxu0 %v622
        %v1060 = vpop.f32.mrf.mxu0
        %v1061 = vadd.f32 %v694, %v1060
        %v1062 = vpop.f32.mrf.mxu0
        %v1063 = vadd.f32 %v694, %v1062
        %1064 = vmatmul.bf16.gmra.mxu0 %v624
        %v1065 = vpop.f32.mrf.mxu0
        %v1066 = vadd.f32 %v694, %v1065
        %v1067 = vpop.f32.mrf.mxu0
        %1068 = vdwg.mxu0
        %1069 = vmatpush.bf16.msra.mxu0 %v905
        %1070 = vmatpush.bf16.msra.mxu0 %v902
        %1071 = vmatpush.bf16.msra.mxu0 %v899
        %1072 = vmatpush.bf16.msra.mxu0 %v896
        %1073 = vmatpush.bf16.msra.mxu0 %v893
        %1074 = vmatpush.bf16.msra.mxu0 %v890
        %1075 = vmatpush.bf16.msra.mxu0 %v887
        %1076 = vmatpush.bf16.msra.mxu0 %v884
        %1077 = vmatmul.bf16.gmra.mxu0 %v621
        %v1078 = vpop.f32.mrf.mxu0
        %v1079 = vadd.f32 %v1056, %v1078
        %v1080 = vpop.f32.mrf.mxu0
        %v1081 = vadd.f32 %v1058, %v1080
        %1082 = vmatmul.bf16.gmra.mxu0 %v623
        %v1083 = vpop.f32.mrf.mxu0
        %v1084 = vadd.f32 %v1061, %v1083
        %v1085 = vpop.f32.mrf.mxu0
        %v1086 = vadd.f32 %v1063, %v1085
        %1087 = vmatmul.bf16.gmra.mxu0 %v625
        %v1088 = vpop.f32.mrf.mxu0
        %v1089 = vadd.f32 %v1066, %v1088
        %v1090 = vpop.f32.mrf.mxu0
        %1091 = vdwg.mxu0
        %v1092 = vpack.c.bf16 %v1033, %v987
        %v1093 = vpack.c.bf16 %v1079, %v1079
        %v1094 = vpack.c.bf16 %v1035, %v989
        %v1095 = vpack.c.bf16 %v1081, %v1081
        %v1096 = vpack.c.bf16 %v1038, %v992
        %v1097 = vpack.c.bf16 %v1084, %v1084
        %v1098 = vpack.c.bf16 %v1040, %v994
        %v1099 = vpack.c.bf16 %v1086, %v1086
        %v1100 = vpack.c.bf16 %v1043, %v997
        %v1101 = vpack.c.bf16 %v1089, %v1089
        %1102 = vst [vmem:[%s420] sm:$0xff] %v1092
        %1103 = vst [vmem:[%s420 + $0x8] sm:$0xf] %v1093
        %1104 = vst [vmem:[%s420 + $0xc] sm:$0xff] %v1094
        %1105 = vst [vmem:[%s420 + $0x14] sm:$0xf] %v1095
        %1106 = vst [vmem:[%s420 + $0x18] sm:$0xff] %v1096
        %1107 = vst [vmem:[%s420 + $0x20] sm:$0xf] %v1097
        %1108 = vst [vmem:[%s420 + $0x24] sm:$0xff] %v1098
        %1109 = vst [vmem:[%s420 + $0x2c] sm:$0xf] %v1099
        %1110 = vst [vmem:[%s420 + $0x30] sm:$0x11] %v1100
        %1111 = vst [vmem:[%s420 + $0x38] sm:$0x1] %v1101
        %s1112 = sand.u32 %s158, 1
        %s1113 = sand.u32 %s158, 1
        %s1114 = smul.addr %s1113, 60
        %s1115 = scalar_lea.vmem [#allocation3], %s1114
        // Predicated region
        $region67: #{_lambda_.19} parent=61 // pred_check
          %p1116 = pneg %p168
        $region68: #{_lambda_.19} parent=61 // pred_check_branch
          %1118 = sbr.rel (%p1116) target = $region70
        $region69: #{_lambda_.19} parent=61 // pred_region
          %s1119 = smul.u32 5, %s21
          %s1120 = smul.u32 3, %s20
          %s1121 = smul.addr %s1119, 6
          %s1122 = sadd.s32 %s1120, %s1121
          %s1123 = smul.addr %s1122, 4
          %s1124 = scalar_lea.vmem %s5, %s1123
          // Predicated region
          $region71: #{_lambda_.19} parent=69 // pred_check
            _
          $region72: #{_lambda_.19} parent=69 // pred_check_branch
            %1126 = sbr.rel (0) target = $region74
          $region73: #{_lambda_.19} parent=69 // pred_region
            // Predicated region
            $region75: #{_lambda_.19} parent=73 // pred_check
              _
            $region76: #{_lambda_.19} parent=73 // pred_check_branch
              %1128 = sbr.rel (0) target = $region78
            $region77: #{_lambda_.19} parent=73 // pred_region
              %s1129 = scalar_lea.vmem %s1115, 8 [#allocation3]
              %s1130 = scalar_lea.vmem %s1124, 8
              loop: start=0, step=1, limit=1
              $region79: #{_lambda_.19} parent=77 // loop_pre_header
                _
              $region80: #{_lambda_.19} parent=77 // loop_header
                %s1132 = sphi 0, %s1136
                %p1133 = scmp.ge.s32.totalorder %s1132, 1
                %s1137 = sphi %s1115, %s1115
                %s1138 = sphi %s1124, %s1124
              $region81: #{_lambda_.19} parent=77 // loop_header_branch
                %1135 = sbr.rel (%p1133) target = $region85
              $region82: #{_lambda_.19} parent=77 // loop_body
                %v1139 = vld [vmem:[%s1137] sm:$0xff]
                %1140 = vst [vmem:[%s1138] sm:$0xff] %v1139
                %v1141 = vld [vmem:[%s1137 + $0xc] sm:$0xff]
                %1142 = vst [vmem:[%s1138 + $0x18] sm:$0xff] %v1141
                %v1143 = vld [vmem:[%s1137 + $0x18] sm:$0xff]
                %1144 = vst [vmem:[%s1138 + $0x30] sm:$0xff] %v1143
                %v1145 = vld [vmem:[%s1137 + $0x24] sm:$0xff]
                %1146 = vst [vmem:[%s1138 + $0x48] sm:$0xff] %v1145
                %v1147 = vld [vmem:[%s1137 + $0x30] sm:$0xff]
                %1148 = vst [vmem:[%s1138 + $0x60] sm:$0xff] %v1147
              $region83: #{_lambda_.19} parent=77 // loop_footer
                %s1136 = sadd.s32 1, %s1132
              $region84: #{_lambda_.19} parent=77 // loop_footer_branch
                %1131 = sbr.rel target = $region80
              $region85: #{_lambda_.19} parent=77 // loop_exit
                _
              %s1150 = ssub.s32 16, 1
              loop: start=0, step=1, limit=1
              $region86: #{_lambda_.19} parent=77 // loop_pre_header
                _
              $region87: #{_lambda_.19} parent=77 // loop_header
                %s1152 = sphi 0, %s1156
                %p1153 = scmp.ge.s32.totalorder %s1152, 1
                %s1157 = sphi %s1129, %s1129
                %s1158 = sphi %s1130, %s1130
              $region88: #{_lambda_.19} parent=77 // loop_header_branch
                %1155 = sbr.rel (%p1153) target = $region92
              $region89: #{_lambda_.19} parent=77 // loop_body
                %v1159 = vld [vmem:[%s1157] sm:%s1150]
                %1160 = vst [vmem:[%s1158] sm:%s1150] %v1159
                %v1161 = vld [vmem:[%s1157 + $0xc] sm:%s1150]
                %1162 = vst [vmem:[%s1158 + $0x18] sm:%s1150] %v1161
                %v1163 = vld [vmem:[%s1157 + $0x18] sm:%s1150]
                %1164 = vst [vmem:[%s1158 + $0x30] sm:%s1150] %v1163
                %v1165 = vld [vmem:[%s1157 + $0x24] sm:%s1150]
                %1166 = vst [vmem:[%s1158 + $0x48] sm:%s1150] %v1165
                %v1167 = vld [vmem:[%s1157 + $0x30] sm:%s1150]
                %1168 = vst [vmem:[%s1158 + $0x60] sm:%s1150] %v1167
              $region90: #{_lambda_.19} parent=77 // loop_footer
                %s1156 = sadd.s32 1, %s1152
              $region91: #{_lambda_.19} parent=77 // loop_footer_branch
                %1151 = sbr.rel target = $region87
              $region92: #{_lambda_.19} parent=77 // loop_exit
                _
            $region78: #{_lambda_.19} parent=73 // pred_fallthru
              _
          $region74: #{_lambda_.19} parent=69 // pred_fallthru
            _
          %1169 = vnop
        $region70: #{_lambda_.19} parent=61 // pred_fallthru
          _
      $region62: #{_lambda_.19} parent=5 // pred_fallthru
        _
      %p1170 = scmp.le.s32.totalorder 2, %s11
      // Predicated region
      $region93: #{_lambda_.19} parent=5 // pred_check
        %p1171 = pneg %p1170
      $region94: #{_lambda_.19} parent=5 // pred_check_branch
        %1173 = sbr.rel (%p1171) target = $region96
      $region95: #{_lambda_.19} parent=5 // pred_region
        %s1174 = ssub.s32 %s11, 2
        // Predicated region
        $region97: #{_lambda_.19} parent=95 // pred_check
          %p1175 = pneg %p174
        $region98: #{_lambda_.19} parent=95 // pred_check_branch
          %1177 = sbr.rel (%p1175) target = $region100
        $region99: #{_lambda_.19} parent=95 // pred_region
          %s1178 = sand.u32 %s159, 1
          %s1179 = sand.u32 %s159, 1
          %s1180 = smul.addr %s1179, 60
          %s1181 = scalar_lea.vmem [#allocation3], %s1180
        $region100: #{_lambda_.19} parent=95 // pred_fallthru
          _
      $region96: #{_lambda_.19} parent=5 // pred_fallthru
        _
    $region6: #{_lambda_.19} parent=1 // loop_footer
      %s15 = sadd.s32 1, %s11
    $region7: #{_lambda_.19} parent=1 // loop_footer_branch
      %10 = sbr.rel target = $region3
    $region8: #{_lambda_.19} parent=1 // loop_exit
      _

// kernel: _lambda_.17
$region0: #{_lambda_.17}
  #allocation0 [shape = 'u32[]', space=smem, size = 0x4, offset = 0x4, fixed_abs, tag = 'smem constant byte address 0x4 - core index']
  #allocation1 [shape = 'u32[72,128]{1,0:T(1,128)}', space=vmem, size = 0x9000, scoped, tag = 'internal scratch']
  %s0 = inlined_call_operand.vmem [shape: bf16[34,256], index: 0, kind: input, shape index: {}]
  %s1 = inlined_call_operand.vmem [shape: f32[1,256], index: 1, kind: input, shape index: {}]
  %s2 = inlined_call_operand.vmem [shape: f32[1,256], index: 2, kind: input, shape index: {}]
  %s3 = inlined_call_operand.hbm [shape: bf16[256,1024], index: 3, kind: input, shape index: {}]
  %s4 = inlined_call_operand.vmem [shape: f32[1,1024], index: 4, kind: input, shape index: {}]
  %s5 = inlined_call_operand.vmem [shape: bf16[34,1024], index: 5, kind: output, shape index: {}]
  %s6 = sld [smem:[#allocation0]]
  $region76: #{_lambda_.17} parent=0
    _
  %s8 = ssub.s32 1, %s6
  %s9 = scalar_select 0, %s8, %s6
  $region1: #{_lambda_.17} parent=0
    #allocation2 [shape = 'u8[524288]{0}', space=vmem, size = 0x80000, scoped, tag = 'input window, operand 3']
    #allocation3 [shape = 's32[2]{0}', space=sflag, size = 0x8, scoped, tag = 'scoped memory for _lambda_.17']
    #allocation4 [shape = 'u8[81920]{0}', space=vmem, size = 0x14000, scoped, tag = 'output window, operand 0']
    %10 = vsyncpa [#allocation3], 0
    %s11 = scalar_lea.sflag [#allocation3], 1
    %12 = vsyncpa %s11, 0
    loop: start=0, step=1, limit=4
    $region2: #{_lambda_.17} parent=1 // loop_pre_header
      _
    $region3: #{_lambda_.17} parent=1 // loop_header
      %s14 = sphi 0, %s18
      %p15 = scmp.ge.s32.totalorder %s14, 4
      %s21 = sphi 0, %s33
      %s22 = sphi 0, %s29
      %s23 = sphi 0, %s21
      %s24 = sphi 0, %s22
      %s25 = sphi 0, %s23
      %s26 = sphi 0, %s24
      %s36 = sphi 0, %s38
      %s39 = sphi 0, %s36
      %s40 = sphi 0, %s39
      %s56 = sphi 0, %s40
      %s60 = sphi 0, %s60
      %s62 = sphi 0, %s60
      %s63 = sphi 0, %s62
      %s77 = sphi 0, %s63
      %s81 = sphi 0, %s81
      %s83 = sphi 0, %s81
      %s84 = sphi 0, %s83
      %s98 = sphi 0, %s84
      %s104 = sphi 0, %s106
      %s107 = sphi 0, %s104
      %s108 = sphi 0, %s107
      %s124 = sphi 0, %s108
      %s130 = sphi 0, %s132
      %s133 = sphi 0, %s130
      %s134 = sphi 0, %s133
      %s150 = sphi 0, %s134
      %s158 = sphi 0, %s160
      %s161 = sphi 0, %s158
      %s162 = sphi 0, %s161
      %s178 = sphi 0, %s162
    $region4: #{_lambda_.17} parent=1 // loop_header_branch
      %17 = sbr.rel (%p15) target = $region8
    $region5: #{_lambda_.17} parent=1 // loop_body
      %s19 = ssub.s32 %s14, 1
      %s20 = ssub.s32 %s14, 2
      %s27 = sadd.s32 1, %s22
      %p28 = scmp.ge.s32.totalorder %s27, 1
      %s29 = scalar_select %p28, 0, %s27
      %s30 = sadd.s32 1, %s21
      %s31 = scalar_select %p28, %s30, %s21
      %p32 = scmp.ge.s32.totalorder %s31, 2
      %s33 = scalar_select %p32, 0, %s31
      %s34 = ssub.s32 %s22, %s29
      %p35 = scmp.eq.s32.totalorder %s34, 0
      %s37 = sadd.s32 %s36, 1
      %s38 = scalar_select %p35, %s36, %s37
      %p41 = pneg %p35
      %p42 = scmp.eq.s32.totalorder %s14, 1
      %p43 = por %p41, %p42
      %p44 = scmp.ne.s32.totalorder %s36, %s39
      %p45 = scmp.eq.s32.totalorder %s14, 0
      %p46 = por %p44, %p45
      %p47 = scmp.ne.s32.totalorder %s36, %s39
      %p48 = scmp.eq.s32.totalorder %s19, 1
      %p49 = por %p47, %p48
      %p50 = scmp.ne.s32.totalorder %s39, %s40
      %p51 = scmp.eq.s32.totalorder %s19, 0
      %p52 = por %p50, %p51
      %p53 = scmp.ne.s32.totalorder %s39, %s40
      %p54 = scmp.eq.s32.totalorder %s20, 1
      %p55 = por %p53, %p54
      %p57 = scmp.ne.s32.totalorder %s40, %s56
      %p58 = scmp.eq.s32.totalorder %s20, 0
      %p59 = por %p57, %p58
      %s61 = sadd.s32 %s60, 1
      %p64 = scmp.eq.s32.totalorder %s14, 1
      %p65 = scmp.ne.s32.totalorder %s60, %s62
      %p66 = scmp.eq.s32.totalorder %s14, 0
      %p67 = por %p65, %p66
      %p68 = scmp.ne.s32.totalorder %s60, %s62
      %p69 = scmp.eq.s32.totalorder %s19, 1
      %p70 = por %p68, %p69
      %p71 = scmp.ne.s32.totalorder %s62, %s63
      %p72 = scmp.eq.s32.totalorder %s19, 0
      %p73 = por %p71, %p72
      %p74 = scmp.ne.s32.totalorder %s62, %s63
      %p75 = scmp.eq.s32.totalorder %s20, 1
      %p76 = por %p74, %p75
      %p78 = scmp.ne.s32.totalorder %s63, %s77
      %p79 = scmp.eq.s32.totalorder %s20, 0
      %p80 = por %p78, %p79
      %s82 = sadd.s32 %s81, 1
      %p85 = scmp.eq.s32.totalorder %s14, 1
      %p86 = scmp.ne.s32.totalorder %s81, %s83
      %p87 = scmp.eq.s32.totalorder %s14, 0
      %p88 = por %p86, %p87
      %p89 = scmp.ne.s32.totalorder %s81, %s83
      %p90 = scmp.eq.s32.totalorder %s19, 1
      %p91 = por %p89, %p90
      %p92 = scmp.ne.s32.totalorder %s83, %s84
      %p93 = scmp.eq.s32.totalorder %s19, 0
      %p94 = por %p92, %p93
      %p95 = scmp.ne.s32.totalorder %s83, %s84
      %p96 = scmp.eq.s32.totalorder %s20, 1
      %p97 = por %p95, %p96
      %p99 = scmp.ne.s32.totalorder %s84, %s98
      %p100 = scmp.eq.s32.totalorder %s20, 0
      %p101 = por %p99, %p100
      %s102 = ssub.s32 %s21, %s33
      %p103 = scmp.eq.s32.totalorder %s102, 0
      %s105 = sadd.s32 %s104, 1
      %s106 = scalar_select %p103, %s104, %s105
      %p109 = pneg %p103
      %p110 = scmp.eq.s32.totalorder %s14, 1
      %p111 = por %p109, %p110
      %p112 = scmp.ne.s32.totalorder %s104, %s107
      %p113 = scmp.eq.s32.totalorder %s14, 0
      %p114 = por %p112, %p113
      %p115 = scmp.ne.s32.totalorder %s104, %s107
      %p116 = scmp.eq.s32.totalorder %s19, 1
      %p117 = por %p115, %p116
      %p118 = scmp.ne.s32.totalorder %s107, %s108
      %p119 = scmp.eq.s32.totalorder %s19, 0
      %p120 = por %p118, %p119
      %p121 = scmp.ne.s32.totalorder %s107, %s108
      %p122 = scmp.eq.s32.totalorder %s20, 1
      %p123 = por %p121, %p122
      %p125 = scmp.ne.s32.totalorder %s108, %s124
      %p126 = scmp.eq.s32.totalorder %s20, 0
      %p127 = por %p125, %p126
      %s128 = ssub.s32 %s21, %s33
      %p129 = scmp.eq.s32.totalorder %s128, 0
      %s131 = sadd.s32 %s130, 1
      %s132 = scalar_select %p129, %s130, %s131
      %p135 = pneg %p129
      %p136 = scmp.eq.s32.totalorder %s14, 1
      %p137 = por %p135, %p136
      %p138 = scmp.ne.s32.totalorder %s130, %s133
      %p139 = scmp.eq.s32.totalorder %s14, 0
      %p140 = por %p138, %p139
      %p141 = scmp.ne.s32.totalorder %s130, %s133
      %p142 = scmp.eq.s32.totalorder %s19, 1
      %p143 = por %p141, %p142
      %p144 = scmp.ne.s32.totalorder %s133, %s134
      %p145 = scmp.eq.s32.totalorder %s19, 0
      %p146 = por %p144, %p145
      %p147 = scmp.ne.s32.totalorder %s133, %s134
      %p148 = scmp.eq.s32.totalorder %s20, 1
      %p149 = por %p147, %p148
      %p151 = scmp.ne.s32.totalorder %s134, %s150
      %p152 = scmp.eq.s32.totalorder %s20, 0
      %p153 = por %p151, %p152
      %s154 = ssub.s32 %s22, %s29
      %s155 = ssub.s32 %s21, %s33
      %s156 = sor.u32 %s154, %s155
      %p157 = scmp.eq.s32.totalorder %s156, 0
      %s159 = sadd.s32 %s158, 1
      %s160 = scalar_select %p157, %s158, %s159
      %p163 = pneg %p157
      %p164 = scmp.eq.s32.totalorder %s14, 1
      %p165 = por %p163, %p164
      %p166 = scmp.ne.s32.totalorder %s158, %s161
      %p167 = scmp.eq.s32.totalorder %s14, 0
      %p168 = por %p166, %p167
      %p169 = scmp.ne.s32.totalorder %s158, %s161
      %p170 = scmp.eq.s32.totalorder %s19, 1
      %p171 = por %p169, %p170
      %p172 = scmp.ne.s32.totalorder %s161, %s162
      %p173 = scmp.eq.s32.totalorder %s19, 0
      %p174 = por %p172, %p173
      %p175 = scmp.ne.s32.totalorder %s161, %s162
      %p176 = scmp.eq.s32.totalorder %s20, 1
      %p177 = por %p175, %p176
      %p179 = scmp.ne.s32.totalorder %s162, %s178
      %p180 = scmp.eq.s32.totalorder %s20, 0
      %p181 = por %p179, %p180
      %p182 = scmp.le.s32.totalorder 1, %s14
      %p183 = scmp.lt.s32.totalorder %s14, 3
      %p184 = pnand %p182, %p183
      %p185 = pneg %p184
      // Predicated region
      $region9: #{_lambda_.17} parent=5 // pred_check
        _
      $region10: #{_lambda_.17} parent=5 // pred_check_branch
        %187 = sbr.rel (%p184) target = $region12
      $region11: #{_lambda_.17} parent=5 // pred_region
        %s188 = ssub.s32 %s14, 1
        // Predicated region
        $region13: #{_lambda_.17} parent=11 // pred_check
          %p189 = pneg %p52
        $region14: #{_lambda_.17} parent=11 // pred_check_branch
          %191 = sbr.rel (%p189) target = $region16
        $region15: #{_lambda_.17} parent=11 // pred_region
          %s192 = smul.u32 5, %s24
          %p193 = scmp.lt.s32.totalorder %s192, 4
          %s194 = scalar_select %p193, %s192, 4
          %s195 = smul.addr %s194, 2
          %s196 = smul.addr %s195, 4
          %s197 = scalar_lea.vmem %s0, %s196
          %s198 = smul.u32 5, %s24
        $region16: #{_lambda_.17} parent=11 // pred_fallthru
          _
        // Predicated region
        $region17: #{_lambda_.17} parent=11 // pred_check
          %p199 = pneg %p73
        $region18: #{_lambda_.17} parent=11 // pred_check_branch
          %201 = sbr.rel (%p199) target = $region20
        $region19: #{_lambda_.17} parent=11 // pred_region
          _
        $region20: #{_lambda_.17} parent=11 // pred_fallthru
          _
        // Predicated region
        $region21: #{_lambda_.17} parent=11 // pred_check
          %p202 = pneg %p94
        $region22: #{_lambda_.17} parent=11 // pred_check_branch
          %204 = sbr.rel (%p202) target = $region24
        $region23: #{_lambda_.17} parent=11 // pred_region
          _
        $region24: #{_lambda_.17} parent=11 // pred_fallthru
          _
      $region12: #{_lambda_.17} parent=5 // pred_fallthru
        _
      %p205 = scmp.lt.s32.totalorder %s14, 2
      // Predicated region
      $region25: #{_lambda_.17} parent=5 // pred_check
        %p206 = pneg %p205
      $region26: #{_lambda_.17} parent=5 // pred_check_branch
        %208 = sbr.rel (%p206) target = $region28
      $region27: #{_lambda_.17} parent=5 // pred_region
        // Predicated region
        $region29: #{_lambda_.17} parent=27 // pred_check
          %p209 = pneg %p114
        $region30: #{_lambda_.17} parent=27 // pred_check_branch
          %211 = sbr.rel (%p209) target = $region32
        $region31: #{_lambda_.17} parent=27 // pred_region
          %s212 = sand.u32 %s104, 1
          %s213 = scalar_lea.sflag [#allocation3], %s212
          %s214 = sand.u32 %s104, 1
          %s215 = smul.addr %s214, 512
          %s216 = scalar_lea.vmem [#allocation2], %s215
          %s217 = smul.u32 4, %s21
          %219 = vsyncadd %s213, 0
          %s220 = smul.addr %s217, 4
          %s221 = scalar_lea.hbm %s3, %s220
          %s222 = sshll.u32 %s221, 4
          %s223 = int_to_ptr.hbm [resolvable:$true] %s222
          %s224 = sshll.u32 %s216, 4
          %s225 = int_to_ptr.vmem [resolvable:$true] %s224
          %230 = dma.hbm_to_vmem [thread:$0]  %s223, 8192, %s225, %s213, 512, 256, 16
        $region32: #{_lambda_.17} parent=27 // pred_fallthru
          _
        // Predicated region
        $region33: #{_lambda_.17} parent=27 // pred_check
          %p231 = pneg %p140
        $region34: #{_lambda_.17} parent=27 // pred_check_branch
          %233 = sbr.rel (%p231) target = $region36
        $region35: #{_lambda_.17} parent=27 // pred_region
          %s234 = smul.u32 4, %s21
          %p235 = scmp.lt.s32.totalorder %s234, 7
          %s236 = scalar_select %p235, %s234, 7
          %s237 = scalar_lea.vmem %s4, %s236
          %s238 = smul.u32 4, %s21
        $region36: #{_lambda_.17} parent=27 // pred_fallthru
          _
      $region28: #{_lambda_.17} parent=5 // pred_fallthru
        _
      %p239 = scmp.le.s32.totalorder 1, %s14
      %p240 = scmp.lt.s32.totalorder %s14, 3
      %p241 = pnand %p239, %p240
      %p242 = pneg %p241
      // Predicated region
      $region37: #{_lambda_.17} parent=5 // pred_check
        _
      $region38: #{_lambda_.17} parent=5 // pred_check_branch
        %244 = sbr.rel (%p241) target = $region40
      $region39: #{_lambda_.17} parent=5 // pred_region
        %s245 = ssub.s32 %s14, 1
        %s246 = sand.u32 %s107, 1
        %s247 = scalar_lea.sflag [#allocation3], %s246
        %s248 = sand.u32 %s107, 1
        %s249 = smul.addr %s248, 512
        %s250 = scalar_lea.vmem [#allocation2], %s249
        // Predicated region
        $region41: #{_lambda_.17} parent=39 // pred_check
          %p251 = pneg %p120
        $region42: #{_lambda_.17} parent=39 // pred_check_branch
          %253 = sbr.rel (%p251) target = $region44
        $region43: #{_lambda_.17} parent=39 // pred_region
          %255 = dma.done %s247, 8192
        $region44: #{_lambda_.17} parent=39 // pred_fallthru
          _
        %s256 = smul.u32 5, %s24
        %p257 = scmp.lt.s32.totalorder %s256, 4
        %s258 = scalar_select %p257, %s256, 4
        %s259 = smul.addr %s258, 2
        %s260 = smul.addr %s259, 4
        %s261 = scalar_lea.vmem %s0, %s260
        %p262 = pneg %p52
        %p263 = pneg %p49
        %p264 = pneg %p73
        %p265 = pneg %p70
        %p266 = pneg %p94
        %p267 = pneg %p91
        %s268 = sand.u32 %s107, 1
        %s269 = scalar_lea.sflag [#allocation3], %s268
        %s270 = sand.u32 %s107, 1
        %s271 = smul.addr %s270, 512
        %s272 = scalar_lea.vmem [#allocation2], %s271
        %p273 = pneg %p120
        %p274 = pneg %p117
        %s275 = smul.u32 4, %s23
        %p276 = scmp.lt.s32.totalorder %s275, 7
        %s277 = scalar_select %p276, %s275, 7
        %s278 = scalar_lea.vmem %s4, %s277
        %p279 = pneg %p146
        %p280 = pneg %p143
        %p281 = pneg %p174
        %p282 = pneg %p171
        %s283 = sand.u32 %s161, 1
        %s284 = sand.u32 %s161, 1
        %s285 = smul.addr %s284, 80
        %s286 = scalar_lea.vmem [#allocation4], %s285
        %s287 = smul.u32 5, %s24
        %p288 = scmp.lt.s32.totalorder %s287, 4
        %s289 = scalar_select %p288, %s287, 4
        %s290 = smul.addr %s289, 2
        %s291 = smul.addr %s290, 4
        %s292 = scalar_lea.vmem %s0, %s291
        %s293 = smul.u32 5, %s24
        %s294 = smul.u32 4, %s23
        %s295 = smul.u32 4, %s23
        %p296 = scmp.lt.s32.totalorder %s295, 7
        %s297 = scalar_select %p296, %s295, 7
        %s298 = scalar_lea.vmem %s4, %s297
        %s299 = smul.u32 4, %s23
        %s300 = smul.u32 5, %s24
        %s301 = smul.u32 4, %s23
        %v302 = vld [vmem:[%s292] sm:$0xff]
        %v303 = vld [vmem:[%s292 + $0x8] sm:$0xff]
        %v304 = vld [vmem:[%s292 + $0x10] sm:$0xff]
        %v305 = vld [vmem:[%s292 + $0x18] sm:$0xff]
        %v306 = vld [vmem:[%s292 + $0x20] sm:$0x11]
        %v307 = vunpack.c.l.bf16 %v302
        %v308 = vunpack.c.h.bf16 %v302
        %v309 = vunpack.c.l.bf16 %v303
        %v310 = vunpack.c.h.bf16 %v303
        %v311 = vunpack.c.l.bf16 %v304
        %v312 = vunpack.c.h.bf16 %v304
        %v313 = vunpack.c.l.bf16 %v305
        %v314 = vunpack.c.h.bf16 %v305
        %v315 = vunpack.c.l.bf16 %v306
        %v316 = vunpack.c.h.bf16 %v306
        %v317 = vadd.f32 %v307, %v308
        %318 = vadd.xlane.f32.xlu0 %v317
        %v319 = vpop.xlane.xlu0 %318
        %v320 = vadd.f32 %v309, %v310
        %321 = vadd.xlane.f32.xlu0 %v320
        %v322 = vpop.xlane.xlu0 %321
        %v323 = vadd.f32 %v311, %v312
        %324 = vadd.xlane.f32.xlu0 %v323
        %v325 = vpop.xlane.xlu0 %324
        %v326 = vadd.f32 %v313, %v314
        %327 = vadd.xlane.f32.xlu0 %v326
        %v328 = vpop.xlane.xlu0 %327
        %vm329 = vcmask 1041408
        %v330 = vsel %vm329, %v315, 0.0
        %v331 = vsel %vm329, %v316, 0.0
        %v332 = vadd.f32 %v330, %v331
        %333 = vadd.xlane.f32.xlu0 %v332
        %v334 = vpop.xlane.xlu0 %333
        %v335 = vrcp.pop 256.0
        %v336 = vmul.f32 256.0, %v335
        %v337 = vsub.f32 1.0, %v336
        %v338 = vmul.f32 %v335, %v337
        %v339 = vadd.f32 %v335, %v338
        %vm340 = vweird.f32 %v335
        %v341 = vsel %vm340, %v335, %v339
        %v342 = vmul.f32 %v319, %v341
        %v343 = vmul.f32 %v322, %v341
        %v344 = vmul.f32 %v325, %v341
        %v345 = vmul.f32 %v328, %v341
        %v346 = vmul.f32 %v334, %v341
        %v347 = vsub.f32 %v307, %v342
        %v348 = vsub.f32 %v308, %v342
        %v349 = vsub.f32 %v309, %v343
        %v350 = vsub.f32 %v310, %v343
        %v351 = vsub.f32 %v311, %v344
        %v352 = vsub.f32 %v312, %v344
        %v353 = vsub.f32 %v313, %v345
        %v354 = vsub.f32 %v314, %v345
        %v355 = vsub.f32 %v315, %v346
        %v356 = vsub.f32 %v316, %v346
        %v357 = vmul.f32 %v347, %v347
        %v358 = vmul.f32 %v348, %v348
        %v359 = vmul.f32 %v349, %v349
        %v360 = vmul.f32 %v350, %v350
        %v361 = vmul.f32 %v351, %v351
        %v362 = vmul.f32 %v352, %v352
        %v363 = vmul.f32 %v353, %v353
        %v364 = vmul.f32 %v354, %v354
        %v365 = vmul.f32 %v355, %v355
        %v366 = vmul.f32 %v356, %v356
        %v367 = vadd.f32 %v357, %v358
        %368 = vadd.xlane.f32.xlu0 %v367
        %v369 = vpop.xlane.xlu0 %368
        %v370 = vadd.f32 %v359, %v360
        %371 = vadd.xlane.f32.xlu0 %v370
        %v372 = vpop.xlane.xlu0 %371
        %v373 = vadd.f32 %v361, %v362
        %374 = vadd.xlane.f32.xlu0 %v373
        %v375 = vpop.xlane.xlu0 %374
        %v376 = vadd.f32 %v363, %v364
        %377 = vadd.xlane.f32.xlu0 %v376
        %v378 = vpop.xlane.xlu0 %377
        %v379 = vsel %vm329, %v365, 0.0
        %v380 = vsel %vm329, %v366, 0.0
        %v381 = vadd.f32 %v379, %v380
        %382 = vadd.xlane.f32.xlu0 %v381
        %v383 = vpop.xlane.xlu0 %382
        %v384 = vmul.f32 %v369, %v341
        %v385 = vmul.f32 %v372, %v341
        %v386 = vmul.f32 %v375, %v341
        %v387 = vmul.f32 %v378, %v341
        %v388 = vmul.f32 %v383, %v341
        %v389 = vadd.f32 %v384, 1e-06
        %v390 = vadd.f32 %v385, 1e-06
        %v391 = vadd.f32 %v386, 1e-06
        %v392 = vadd.f32 %v387, 1e-06
        %v393 = vadd.f32 %v388, 1e-06
        %v394 = vrsqrt.pop %v389
        %v395 = vmul.f32 %v394, %v389
        %v396 = vmul.f32 %v395, %v394
        %v397 = vmul.f32 0.5, %v396
        %v398 = vsub.f32 1.5, %v397
        %v399 = vmul.f32 %v394, %v398
        %vm400 = vweird.f32 %v389
        %vm401 = vweird.f32 %v394
        %vm402 = vmor %vm400, %vm401
        %v403 = vsel %vm402, %v394, %v399
        %v404 = vrsqrt.pop %v390
        %v405 = vmul.f32 %v404, %v390
        %v406 = vmul.f32 %v405, %v404
        %v407 = vmul.f32 0.5, %v406
        %v408 = vsub.f32 1.5, %v407
        %v409 = vmul.f32 %v404, %v408
        %vm410 = vweird.f32 %v390
        %vm411 = vweird.f32 %v404
        %vm412 = vmor %vm410, %vm411
        %v413 = vsel %vm412, %v404, %v409
        %v414 = vrsqrt.pop %v391
        %v415 = vmul.f32 %v414, %v391
        %v416 = vmul.f32 %v415, %v414
        %v417 = vmul.f32 0.5, %v416
        %v418 = vsub.f32 1.5, %v417
        %v419 = vmul.f32 %v414, %v418
        %vm420 = vweird.f32 %v391
        %vm421 = vweird.f32 %v414
        %vm422 = vmor %vm420, %vm421
        %v423 = vsel %vm422, %v414, %v419
        %v424 = vrsqrt.pop %v392
        %v425 = vmul.f32 %v424, %v392
        %v426 = vmul.f32 %v425, %v424
        %v427 = vmul.f32 0.5, %v426
        %v428 = vsub.f32 1.5, %v427
        %v429 = vmul.f32 %v424, %v428
        %vm430 = vweird.f32 %v392
        %vm431 = vweird.f32 %v424
        %vm432 = vmor %vm430, %vm431
        %v433 = vsel %vm432, %v424, %v429
        %v434 = vrsqrt.pop %v393
        %v435 = vmul.f32 %v434, %v393
        %v436 = vmul.f32 %v435, %v434
        %v437 = vmul.f32 0.5, %v436
        %v438 = vsub.f32 1.5, %v437
        %v439 = vmul.f32 %v434, %v438
        %vm440 = vweird.f32 %v393
        %vm441 = vweird.f32 %v434
        %vm442 = vmor %vm440, %vm441
        %v443 = vsel %vm442, %v434, %v439
        %v444 = vmul.f32 %v347, %v403
        %v445 = vmul.f32 %v348, %v403
        %v446 = vmul.f32 %v349, %v413
        %v447 = vmul.f32 %v350, %v413
        %v448 = vmul.f32 %v351, %v423
        %v449 = vmul.f32 %v352, %v423
        %v450 = vmul.f32 %v353, %v433
        %v451 = vmul.f32 %v354, %v433
        %v452 = vmul.f32 %v355, %v443
        %v453 = vmul.f32 %v356, %v443
        %v454 = vld [vmem:[%s1] sm:$0x3]
        %v456 = vperm.slane %v454, 0
        %v457 = vperm.slane %v454, 1
        %v460 = vmul.f32 %v444, %v456
        %v461 = vmul.f32 %v445, %v457
        %v462 = vmul.f32 %v446, %v456
        %v463 = vmul.f32 %v447, %v457
        %v464 = vmul.f32 %v448, %v456
        %v465 = vmul.f32 %v449, %v457
        %v466 = vmul.f32 %v450, %v456
        %v467 = vmul.f32 %v451, %v457
        %v468 = vmul.f32 %v452, %v456
        %v469 = vmul.f32 %v453, %v457
        %v470 = vld [vmem:[%s2] sm:$0x3]
        %v472 = vperm.slane %v470, 0
        %v473 = vperm.slane %v470, 1
        %v476 = vadd.f32 %v460, %v472
        %v477 = vadd.f32 %v461, %v473
        %v478 = vadd.f32 %v462, %v472
        %v479 = vadd.f32 %v463, %v473
        %v480 = vadd.f32 %v464, %v472
        %v481 = vadd.f32 %v465, %v473
        %v482 = vadd.f32 %v466, %v472
        %v483 = vadd.f32 %v467, %v473
        %v484 = vadd.f32 %v468, %v472
        %v485 = vadd.f32 %v469, %v473
        %v486 = vpack.c.bf16 %v478, %v476
        %v487 = vpack.c.bf16 %v479, %v477
        %v488 = vpack.c.bf16 %v482, %v480
        %v489 = vpack.c.bf16 %v483, %v481
        %v490 = vpack.c.bf16 %v484, %v484
        %v491 = vpack.c.bf16 %v485, %v485
        %v492 = vld [vmem:[%s250] sm:$0xff]
        %v493 = vld [vmem:[%s250 + $0x8] sm:$0xff]
        %v494 = vld [vmem:[%s250 + $0x10] sm:$0xff]
        %v495 = vld [vmem:[%s250 + $0x18] sm:$0xff]
        %v496 = vld [vmem:[%s250 + $0x20] sm:$0xff]
        %v497 = vld [vmem:[%s250 + $0x28] sm:$0xff]
        %v498 = vld [vmem:[%s250 + $0x30] sm:$0xff]
        %v499 = vld [vmem:[%s250 + $0x38] sm:$0xff]
        %v500 = vld [vmem:[%s250 + $0x40] sm:$0xff]
        %v501 = vld [vmem:[%s250 + $0x48] sm:$0xff]
        %v502 = vld [vmem:[%s250 + $0x50] sm:$0xff]
        %v503 = vld [vmem:[%s250 + $0x58] sm:$0xff]
        %v504 = vld [vmem:[%s250 + $0x60] sm:$0xff]
        %v505 = vld [vmem:[%s250 + $0x68] sm:$0xff]
        %v506 = vld [vmem:[%s250 + $0x70] sm:$0xff]
        %v507 = vld [vmem:[%s250 + $0x78] sm:$0xff]
        %v508 = vld [vmem:[%s250 + $0x80] sm:$0xff]
        %v509 = vld [vmem:[%s250 + $0x88] sm:$0xff]
        %v510 = vld [vmem:[%s250 + $0x90] sm:$0xff]
        %v511 = vld [vmem:[%s250 + $0x98] sm:$0xff]
        %v512 = vld [vmem:[%s250 + $0xa0] sm:$0xff]
        %v513 = vld [vmem:[%s250 + $0xa8] sm:$0xff]
        %v514 = vld [vmem:[%s250 + $0xb0] sm:$0xff]
        %v515 = vld [vmem:[%s250 + $0xb8] sm:$0xff]
        %v516 = vld [vmem:[%s250 + $0xc0] sm:$0xff]
        %v517 = vld [vmem:[%s250 + $0xc8] sm:$0xff]
        %v518 = vld [vmem:[%s250 + $0xd0] sm:$0xff]
        %v519 = vld [vmem:[%s250 + $0xd8] sm:$0xff]
        %v520 = vld [vmem:[%s250 + $0xe0] sm:$0xff]
        %v521 = vld [vmem:[%s250 + $0xe8] sm:$0xff]
        %v522 = vld [vmem:[%s250 + $0xf0] sm:$0xff]
        %v523 = vld [vmem:[%s250 + $0xf8] sm:$0xff]
        %v524 = vld [vmem:[%s250 + $0x100] sm:$0xff]
        %v525 = vld [vmem:[%s250 + $0x108] sm:$0xff]
        %v526 = vld [vmem:[%s250 + $0x110] sm:$0xff]
        %v527 = vld [vmem:[%s250 + $0x118] sm:$0xff]
        %v528 = vld [vmem:[%s250 + $0x120] sm:$0xff]
        %v529 = vld [vmem:[%s250 + $0x128] sm:$0xff]
        %v530 = vld [vmem:[%s250 + $0x130] sm:$0xff]
        %v531 = vld [vmem:[%s250 + $0x138] sm:$0xff]
        %v532 = vld [vmem:[%s250 + $0x140] sm:$0xff]
        %v533 = vld [vmem:[%s250 + $0x148] sm:$0xff]
        %v534 = vld [vmem:[%s250 + $0x150] sm:$0xff]
        %v535 = vld [vmem:[%s250 + $0x158] sm:$0xff]
        %v536 = vld [vmem:[%s250 + $0x160] sm:$0xff]
        %v537 = vld [vmem:[%s250 + $0x168] sm:$0xff]
        %v538 = vld [vmem:[%s250 + $0x170] sm:$0xff]
        %v539 = vld [vmem:[%s250 + $0x178] sm:$0xff]
        %v540 = vld [vmem:[%s250 + $0x180] sm:$0xff]
        %v541 = vld [vmem:[%s250 + $0x188] sm:$0xff]
        %v542 = vld [vmem:[%s250 + $0x190] sm:$0xff]
        %v543 = vld [vmem:[%s250 + $0x198] sm:$0xff]
        %v544 = vld [vmem:[%s250 + $0x1a0] sm:$0xff]
        %v545 = vld [vmem:[%s250 + $0x1a8] sm:$0xff]
        %v546 = vld [vmem:[%s250 + $0x1b0] sm:$0xff]
        %v547 = vld [vmem:[%s250 + $0x1b8] sm:$0xff]
        %v548 = vld [vmem:[%s250 + $0x1c0] sm:$0xff]
        %v549 = vld [vmem:[%s250 + $0x1c8] sm:$0xff]
        %v550 = vld [vmem:[%s250 + $0x1d0] sm:$0xff]
        %v551 = vld [vmem:[%s250 + $0x1d8] sm:$0xff]
        %v552 = vld [vmem:[%s250 + $0x1e0] sm:$0xff]
        %v553 = vld [vmem:[%s250 + $0x1e8] sm:$0xff]
        %v554 = vld [vmem:[%s250 + $0x1f0] sm:$0xff]
        %v555 = vld [vmem:[%s250 + $0x1f8] sm:$0xff]
        %v556 = vld [vmem:[%s298] sm:$0xf]
        %v558 = vperm.slane %v556, 0
        %v559 = vperm.slane %v556, 1
        %v560 = vperm.slane %v556, 2
        %v561 = vperm.slane %v556, 3
        %v630 = vunpack.c.l.b16 %v492
        %v631 = vunpack.c.h.b16 %v492
        %v632 = vunpack.c.l.b16 %v493
        %v633 = vunpack.c.h.b16 %v493
        %v634 = vunpack.c.l.b16 %v494
        %v635 = vunpack.c.h.b16 %v494
        %v636 = vunpack.c.l.b16 %v495
        %v637 = vunpack.c.h.b16 %v495
        %v638 = vunpack.c.l.b16 %v496
        %v639 = vunpack.c.h.b16 %v496
        %v640 = vunpack.c.l.b16 %v497
        %v641 = vunpack.c.h.b16 %v497
        %v642 = vunpack.c.l.b16 %v498
        %v643 = vunpack.c.h.b16 %v498
        %v644 = vunpack.c.l.b16 %v499
        %v645 = vunpack.c.h.b16 %v499
        %v646 = vunpack.c.l.b16 %v500
        %v647 = vunpack.c.h.b16 %v500
        %v648 = vunpack.c.l.b16 %v501
        %v649 = vunpack.c.h.b16 %v501
        %v650 = vunpack.c.l.b16 %v502
        %v651 = vunpack.c.h.b16 %v502
        %v652 = vunpack.c.l.b16 %v503
        %v653 = vunpack.c.h.b16 %v503
        %v654 = vunpack.c.l.b16 %v504
        %v655 = vunpack.c.h.b16 %v504
        %v656 = vunpack.c.l.b16 %v505
        %v657 = vunpack.c.h.b16 %v505
        %v658 = vunpack.c.l.b16 %v506
        %v659 = vunpack.c.h.b16 %v506
        %v660 = vunpack.c.l.b16 %v507
        %v661 = vunpack.c.h.b16 %v507
        %v662 = vunpack.c.l.b16 %v508
        %v663 = vunpack.c.h.b16 %v508
        %v664 = vunpack.c.l.b16 %v509
        %v665 = vunpack.c.h.b16 %v509
        %v666 = vunpack.c.l.b16 %v510
        %v667 = vunpack.c.h.b16 %v510
        %v668 = vunpack.c.l.b16 %v511
        %v669 = vunpack.c.h.b16 %v511
        %v670 = vunpack.c.l.b16 %v512
        %v671 = vunpack.c.h.b16 %v512
        %v672 = vunpack.c.l.b16 %v513
        %v673 = vunpack.c.h.b16 %v513
        %v674 = vunpack.c.l.b16 %v514
        %v675 = vunpack.c.h.b16 %v514
        %v676 = vunpack.c.l.b16 %v515
        %v677 = vunpack.c.h.b16 %v515
        %v678 = vunpack.c.l.b16 %v516
        %v679 = vunpack.c.h.b16 %v516
        %v680 = vunpack.c.l.b16 %v517
        %v681 = vunpack.c.h.b16 %v517
        %v682 = vunpack.c.l.b16 %v518
        %v683 = vunpack.c.h.b16 %v518
        %v684 = vunpack.c.l.b16 %v519
        %v685 = vunpack.c.h.b16 %v519
        %v686 = vunpack.c.l.b16 %v520
        %v687 = vunpack.c.h.b16 %v520
        %v688 = vunpack.c.l.b16 %v521
        %v689 = vunpack.c.h.b16 %v521
        %v690 = vunpack.c.l.b16 %v522
        %v691 = vunpack.c.h.b16 %v522
        %v692 = vunpack.c.l.b16 %v523
        %v693 = vunpack.c.h.b16 %v523
        %v694 = vunpack.c.l.b16 %v524
        %v695 = vunpack.c.h.b16 %v524
        %v696 = vunpack.c.l.b16 %v525
        %v697 = vunpack.c.h.b16 %v525
        %v698 = vunpack.c.l.b16 %v526
        %v699 = vunpack.c.h.b16 %v526
        %v700 = vunpack.c.l.b16 %v527
        %v701 = vunpack.c.h.b16 %v527
        %v702 = vunpack.c.l.b16 %v528
        %v703 = vunpack.c.h.b16 %v528
        %v704 = vunpack.c.l.b16 %v529
        %v705 = vunpack.c.h.b16 %v529
        %v706 = vunpack.c.l.b16 %v530
        %v707 = vunpack.c.h.b16 %v530
        %v708 = vunpack.c.l.b16 %v531
        %v709 = vunpack.c.h.b16 %v531
        %v710 = vunpack.c.l.b16 %v532
        %v711 = vunpack.c.h.b16 %v532
        %v712 = vunpack.c.l.b16 %v533
        %v713 = vunpack.c.h.b16 %v533
        %v714 = vunpack.c.l.b16 %v534
        %v715 = vunpack.c.h.b16 %v534
        %v716 = vunpack.c.l.b16 %v535
        %v717 = vunpack.c.h.b16 %v535
        %v718 = vunpack.c.l.b16 %v536
        %v719 = vunpack.c.h.b16 %v536
        %v720 = vunpack.c.l.b16 %v537
        %v721 = vunpack.c.h.b16 %v537
        %v722 = vunpack.c.l.b16 %v538
        %v723 = vunpack.c.h.b16 %v538
        %v724 = vunpack.c.l.b16 %v539
        %v725 = vunpack.c.h.b16 %v539
        %v726 = vunpack.c.l.b16 %v540
        %v727 = vunpack.c.h.b16 %v540
        %v728 = vunpack.c.l.b16 %v541
        %v729 = vunpack.c.h.b16 %v541
        %v730 = vunpack.c.l.b16 %v542
        %v731 = vunpack.c.h.b16 %v542
        %v732 = vunpack.c.l.b16 %v543
        %v733 = vunpack.c.h.b16 %v543
        %v734 = vunpack.c.l.b16 %v544
        %v735 = vunpack.c.h.b16 %v544
        %v736 = vunpack.c.l.b16 %v545
        %v737 = vunpack.c.h.b16 %v545
        %v738 = vunpack.c.l.b16 %v546
        %v739 = vunpack.c.h.b16 %v546
        %v740 = vunpack.c.l.b16 %v547
        %v741 = vunpack.c.h.b16 %v547
        %v742 = vunpack.c.l.b16 %v548
        %v743 = vunpack.c.h.b16 %v548
        %v744 = vunpack.c.l.b16 %v549
        %v745 = vunpack.c.h.b16 %v549
        %v746 = vunpack.c.l.b16 %v550
        %v747 = vunpack.c.h.b16 %v550
        %v748 = vunpack.c.l.b16 %v551
        %v749 = vunpack.c.h.b16 %v551
        %v750 = vunpack.c.l.b16 %v552
        %v751 = vunpack.c.h.b16 %v552
        %v752 = vunpack.c.l.b16 %v553
        %v753 = vunpack.c.h.b16 %v553
        %v754 = vunpack.c.l.b16 %v554
        %v755 = vunpack.c.h.b16 %v554
        %v756 = vunpack.c.l.b16 %v555
        %v757 = vunpack.c.h.b16 %v555
        %v758 = vpack.c.b16 %v634, %v630
        %v759 = vpack.c.b16 %v635, %v631
        %v760 = vpack.c.b16 %v636, %v632
        %v761 = vpack.c.b16 %v637, %v633
        %v762 = vpack.c.b16 %v642, %v638
        %v763 = vpack.c.b16 %v643, %v639
        %v764 = vpack.c.b16 %v644, %v640
        %v765 = vpack.c.b16 %v645, %v641
        %v766 = vpack.c.b16 %v650, %v646
        %v767 = vpack.c.b16 %v651, %v647
        %v768 = vpack.c.b16 %v652, %v648
        %v769 = vpack.c.b16 %v653, %v649
        %v770 = vpack.c.b16 %v658, %v654
        %v771 = vpack.c.b16 %v659, %v655
        %v772 = vpack.c.b16 %v660, %v656
        %v773 = vpack.c.b16 %v661, %v657
        %v774 = vpack.c.b16 %v666, %v662
        %v775 = vpack.c.b16 %v667, %v663
        %v776 = vpack.c.b16 %v668, %v664
        %v777 = vpack.c.b16 %v669, %v665
        %v778 = vpack.c.b16 %v674, %v670
        %v779 = vpack.c.b16 %v675, %v671
        %v780 = vpack.c.b16 %v676, %v672
        %v781 = vpack.c.b16 %v677, %v673
        %v782 = vpack.c.b16 %v682, %v678
        %v783 = vpack.c.b16 %v683, %v679
        %v784 = vpack.c.b16 %v684, %v680
        %v785 = vpack.c.b16 %v685, %v681
        %v786 = vpack.c.b16 %v690, %v686
        %v787 = vpack.c.b16 %v691, %v687
        %v788 = vpack.c.b16 %v692, %v688
        %v789 = vpack.c.b16 %v693, %v689
        %v790 = vpack.c.b16 %v698, %v694
        %v791 = vpack.c.b16 %v699, %v695
        %v792 = vpack.c.b16 %v700, %v696
        %v793 = vpack.c.b16 %v701, %v697
        %v794 = vpack.c.b16 %v706, %v702
        %v795 = vpack.c.b16 %v707, %v703
        %v796 = vpack.c.b16 %v708, %v704
        %v797 = vpack.c.b16 %v709, %v705
        %v798 = vpack.c.b16 %v714, %v710
        %v799 = vpack.c.b16 %v715, %v711
        %v800 = vpack.c.b16 %v716, %v712
        %v801 = vpack.c.b16 %v717, %v713
        %v802 = vpack.c.b16 %v722, %v718
        %v803 = vpack.c.b16 %v723, %v719
        %v804 = vpack.c.b16 %v724, %v720
        %v805 = vpack.c.b16 %v725, %v721
        %v806 = vpack.c.b16 %v730, %v726
        %v807 = vpack.c.b16 %v731, %v727
        %v808 = vpack.c.b16 %v732, %v728
        %v809 = vpack.c.b16 %v733, %v729
        %v810 = vpack.c.b16 %v738, %v734
        %v811 = vpack.c.b16 %v739, %v735
        %v812 = vpack.c.b16 %v740, %v736
        %v813 = vpack.c.b16 %v741, %v737
        %v814 = vpack.c.b16 %v746, %v742
        %v815 = vpack.c.b16 %v747, %v743
        %v816 = vpack.c.b16 %v748, %v744
        %v817 = vpack.c.b16 %v749, %v745
        %v818 = vpack.c.b16 %v754, %v750
        %v819 = vpack.c.b16 %v755, %v751
        %v820 = vpack.c.b16 %v756, %v752
        %v821 = vpack.c.b16 %v757, %v753
        %886 = vmatpush.bf16.msra.mxu0 %v786
        %887 = vmatpush.bf16.msra.mxu0 %v782
        %888 = vmatpush.bf16.msra.mxu0 %v778
        %889 = vmatpush.bf16.msra.mxu0 %v774
        %890 = vmatpush.bf16.msra.mxu0 %v770
        %891 = vmatpush.bf16.msra.mxu0 %v766
        %892 = vmatpush.bf16.msra.mxu0 %v762
        %893 = vmatpush.bf16.msra.mxu0 %v758
        %894 = vmatmul.bf16.gmra.mxu0 %v486
        %v895 = vpop.f32.mrf.mxu0
        %v896 = vadd.f32 %v558, %v895
        %v897 = vpop.f32.mrf.mxu0
        %v898 = vadd.f32 %v558, %v897
        %899 = vmatmul.bf16.gmra.mxu0 %v488
        %v900 = vpop.f32.mrf.mxu0
        %v901 = vadd.f32 %v558, %v900
        %v902 = vpop.f32.mrf.mxu0
        %v903 = vadd.f32 %v558, %v902
        %904 = vmatmul.bf16.gmra.mxu0 %v490
        %v905 = vpop.f32.mrf.mxu0
        %v906 = vadd.f32 %v558, %v905
        %v907 = vpop.f32.mrf.mxu0
        %908 = vdwg.mxu0
        %909 = vmatpush.bf16.msra.mxu0 %v818
        %910 = vmatpush.bf16.msra.mxu0 %v814
        %911 = vmatpush.bf16.msra.mxu0 %v810
        %912 = vmatpush.bf16.msra.mxu0 %v806
        %913 = vmatpush.bf16.msra.mxu0 %v802
        %914 = vmatpush.bf16.msra.mxu0 %v798
        %915 = vmatpush.bf16.msra.mxu0 %v794
        %916 = vmatpush.bf16.msra.mxu0 %v790
        %917 = vmatmul.bf16.gmra.mxu0 %v487
        %v918 = vpop.f32.mrf.mxu0
        %v919 = vadd.f32 %v896, %v918
        %v920 = vpop.f32.mrf.mxu0
        %v921 = vadd.f32 %v898, %v920
        %922 = vmatmul.bf16.gmra.mxu0 %v489
        %v923 = vpop.f32.mrf.mxu0
        %v924 = vadd.f32 %v901, %v923
        %v925 = vpop.f32.mrf.mxu0
        %v926 = vadd.f32 %v903, %v925
        %927 = vmatmul.bf16.gmra.mxu0 %v491
        %v928 = vpop.f32.mrf.mxu0
        %v929 = vadd.f32 %v906, %v928
        %v930 = vpop.f32.mrf.mxu0
        %931 = vdwg.mxu0
        %932 = vmatpush.bf16.msra.mxu0 %v787
        %933 = vmatpush.bf16.msra.mxu0 %v783
        %934 = vmatpush.bf16.msra.mxu0 %v779
        %935 = vmatpush.bf16.msra.mxu0 %v775
        %936 = vmatpush.bf16.msra.mxu0 %v771
        %937 = vmatpush.bf16.msra.mxu0 %v767
        %938 = vmatpush.bf16.msra.mxu0 %v763
        %939 = vmatpush.bf16.msra.mxu0 %v759
        %940 = vmatmul.bf16.gmra.mxu0 %v486
        %v941 = vpop.f32.mrf.mxu0
        %v942 = vadd.f32 %v559, %v941
        %v943 = vpop.f32.mrf.mxu0
        %v944 = vadd.f32 %v559, %v943
        %945 = vmatmul.bf16.gmra.mxu0 %v488
        %v946 = vpop.f32.mrf.mxu0
        %v947 = vadd.f32 %v559, %v946
        %v948 = vpop.f32.mrf.mxu0
        %v949 = vadd.f32 %v559, %v948
        %950 = vmatmul.bf16.gmra.mxu0 %v490
        %v951 = vpop.f32.mrf.mxu0
        %v952 = vadd.f32 %v559, %v951
        %v953 = vpop.f32.mrf.mxu0
        %954 = vdwg.mxu0
        %955 = vmatpush.bf16.msra.mxu0 %v819
        %956 = vmatpush.bf16.msra.mxu0 %v815
        %957 = vmatpush.bf16.msra.mxu0 %v811
        %958 = vmatpush.bf16.msra.mxu0 %v807
        %959 = vmatpush.bf16.msra.mxu0 %v803
        %960 = vmatpush.bf16.msra.mxu0 %v799
        %961 = vmatpush.bf16.msra.mxu0 %v795
        %962 = vmatpush.bf16.msra.mxu0 %v791
        %963 = vmatmul.bf16.gmra.mxu0 %v487
        %v964 = vpop.f32.mrf.mxu0
        %v965 = vadd.f32 %v942, %v964
        %v966 = vpop.f32.mrf.mxu0
        %v967 = vadd.f32 %v944, %v966
        %968 = vmatmul.bf16.gmra.mxu0 %v489
        %v969 = vpop.f32.mrf.mxu0
        %v970 = vadd.f32 %v947, %v969
        %v971 = vpop.f32.mrf.mxu0
        %v972 = vadd.f32 %v949, %v971
        %973 = vmatmul.bf16.gmra.mxu0 %v491
        %v974 = vpop.f32.mrf.mxu0
        %v975 = vadd.f32 %v952, %v974
        %v976 = vpop.f32.mrf.mxu0
        %977 = vdwg.mxu0
        %978 = vmatpush.bf16.msra.mxu0 %v788
        %979 = vmatpush.bf16.msra.mxu0 %v784
        %980 = vmatpush.bf16.msra.mxu0 %v780
        %981 = vmatpush.bf16.msra.mxu0 %v776
        %982 = vmatpush.bf16.msra.mxu0 %v772
        %983 = vmatpush.bf16.msra.mxu0 %v768
        %984 = vmatpush.bf16.msra.mxu0 %v764
        %985 = vmatpush.bf16.msra.mxu0 %v760
        %986 = vmatmul.bf16.gmra.mxu0 %v486
        %v987 = vpop.f32.mrf.mxu0
        %v988 = vadd.f32 %v560, %v987
        %v989 = vpop.f32.mrf.mxu0
        %v990 = vadd.f32 %v560, %v989
        %991 = vmatmul.bf16.gmra.mxu0 %v488
        %v992 = vpop.f32.mrf.mxu0
        %v993 = vadd.f32 %v560, %v992
        %v994 = vpop.f32.mrf.mxu0
        %v995 = vadd.f32 %v560, %v994
        %996 = vmatmul.bf16.gmra.mxu0 %v490
        %v997 = vpop.f32.mrf.mxu0
        %v998 = vadd.f32 %v560, %v997
        %v999 = vpop.f32.mrf.mxu0
        %1000 = vdwg.mxu0
        %1001 = vmatpush.bf16.msra.mxu0 %v820
        %1002 = vmatpush.bf16.msra.mxu0 %v816
        %1003 = vmatpush.bf16.msra.mxu0 %v812
        %1004 = vmatpush.bf16.msra.mxu0 %v808
        %1005 = vmatpush.bf16.msra.mxu0 %v804
        %1006 = vmatpush.bf16.msra.mxu0 %v800
        %1007 = vmatpush.bf16.msra.mxu0 %v796
        %1008 = vmatpush.bf16.msra.mxu0 %v792
        %1009 = vmatmul.bf16.gmra.mxu0 %v487
        %v1010 = vpop.f32.mrf.mxu0
        %v1011 = vadd.f32 %v988, %v1010
        %v1012 = vpop.f32.mrf.mxu0
        %v1013 = vadd.f32 %v990, %v1012
        %1014 = vmatmul.bf16.gmra.mxu0 %v489
        %v1015 = vpop.f32.mrf.mxu0
        %v1016 = vadd.f32 %v993, %v1015
        %v1017 = vpop.f32.mrf.mxu0
        %v1018 = vadd.f32 %v995, %v1017
        %1019 = vmatmul.bf16.gmra.mxu0 %v491
        %v1020 = vpop.f32.mrf.mxu0
        %v1021 = vadd.f32 %v998, %v1020
        %v1022 = vpop.f32.mrf.mxu0
        %1023 = vdwg.mxu0
        %1024 = vmatpush.bf16.msra.mxu0 %v789
        %1025 = vmatpush.bf16.msra.mxu0 %v785
        %1026 = vmatpush.bf16.msra.mxu0 %v781
        %1027 = vmatpush.bf16.msra.mxu0 %v777
        %1028 = vmatpush.bf16.msra.mxu0 %v773
        %1029 = vmatpush.bf16.msra.mxu0 %v769
        %1030 = vmatpush.bf16.msra.mxu0 %v765
        %1031 = vmatpush.bf16.msra.mxu0 %v761
        %1032 = vmatmul.bf16.gmra.mxu0 %v486
        %v1033 = vpop.f32.mrf.mxu0
        %v1034 = vadd.f32 %v561, %v1033
        %v1035 = vpop.f32.mrf.mxu0
        %v1036 = vadd.f32 %v561, %v1035
        %1037 = vmatmul.bf16.gmra.mxu0 %v488
        %v1038 = vpop.f32.mrf.mxu0
        %v1039 = vadd.f32 %v561, %v1038
        %v1040 = vpop.f32.mrf.mxu0
        %v1041 = vadd.f32 %v561, %v1040
        %1042 = vmatmul.bf16.gmra.mxu0 %v490
        %v1043 = vpop.f32.mrf.mxu0
        %v1044 = vadd.f32 %v561, %v1043
        %v1045 = vpop.f32.mrf.mxu0
        %1046 = vdwg.mxu0
        %1047 = vmatpush.bf16.msra.mxu0 %v821
        %1048 = vmatpush.bf16.msra.mxu0 %v817
        %1049 = vmatpush.bf16.msra.mxu0 %v813
        %1050 = vmatpush.bf16.msra.mxu0 %v809
        %1051 = vmatpush.bf16.msra.mxu0 %v805
        %1052 = vmatpush.bf16.msra.mxu0 %v801
        %1053 = vmatpush.bf16.msra.mxu0 %v797
        %1054 = vmatpush.bf16.msra.mxu0 %v793
        %1055 = vmatmul.bf16.gmra.mxu0 %v487
        %v1056 = vpop.f32.mrf.mxu0
        %v1057 = vadd.f32 %v1034, %v1056
        %v1058 = vpop.f32.mrf.mxu0
        %v1059 = vadd.f32 %v1036, %v1058
        %1060 = vmatmul.bf16.gmra.mxu0 %v489
        %v1061 = vpop.f32.mrf.mxu0
        %v1062 = vadd.f32 %v1039, %v1061
        %v1063 = vpop.f32.mrf.mxu0
        %v1064 = vadd.f32 %v1041, %v1063
        %1065 = vmatmul.bf16.gmra.mxu0 %v491
        %v1066 = vpop.f32.mrf.mxu0
        %v1067 = vadd.f32 %v1044, %v1066
        %v1068 = vpop.f32.mrf.mxu0
        %1069 = vdwg.mxu0
        %v1070 = vmul.f32 %v919, 0.5
        %v1071 = vmul.f32 %v965, 0.5
        %v1072 = vmul.f32 %v1011, 0.5
        %v1073 = vmul.f32 %v1057, 0.5
        %v1074 = vmul.f32 %v921, 0.5
        %v1075 = vmul.f32 %v967, 0.5
        %v1076 = vmul.f32 %v1013, 0.5
        %v1077 = vmul.f32 %v1059, 0.5
        %v1078 = vmul.f32 %v924, 0.5
        %v1079 = vmul.f32 %v970, 0.5
        %v1080 = vmul.f32 %v1016, 0.5
        %v1081 = vmul.f32 %v1062, 0.5
        %v1082 = vmul.f32 %v926, 0.5
        %v1083 = vmul.f32 %v972, 0.5
        %v1084 = vmul.f32 %v1018, 0.5
        %v1085 = vmul.f32 %v1064, 0.5
        %v1086 = vmul.f32 %v929, 0.5
        %v1087 = vmul.f32 %v975, 0.5
        %v1088 = vmul.f32 %v1021, 0.5
        %v1089 = vmul.f32 %v1067, 0.5
        %v1090 = vmul.f32 %v919, 0.70710677
        %v1091 = vmul.f32 %v965, 0.70710677
        %v1092 = vmul.f32 %v1011, 0.70710677
        %v1093 = vmul.f32 %v1057, 0.70710677
        %v1094 = vmul.f32 %v921, 0.70710677
        %v1095 = vmul.f32 %v967, 0.70710677
        %v1096 = vmul.f32 %v1013, 0.70710677
        %v1097 = vmul.f32 %v1059, 0.70710677
        %v1098 = vmul.f32 %v924, 0.70710677
        %v1099 = vmul.f32 %v970, 0.70710677
        %v1100 = vmul.f32 %v1016, 0.70710677
        %v1101 = vmul.f32 %v1062, 0.70710677
        %v1102 = vmul.f32 %v926, 0.70710677
        %v1103 = vmul.f32 %v972, 0.70710677
        %v1104 = vmul.f32 %v1018, 0.70710677
        %v1105 = vmul.f32 %v1064, 0.70710677
        %v1106 = vmul.f32 %v929, 0.70710677
        %v1107 = vmul.f32 %v975, 0.70710677
        %v1108 = vmul.f32 %v1021, 0.70710677
        %v1109 = vmul.f32 %v1067, 0.70710677
        %vm1110 = vcmp.ge.f32.partialorder %v1090, 0.0
        %vm1111 = vcmp.ge.f32.partialorder %v1091, 0.0
        %vm1112 = vcmp.ge.f32.partialorder %v1092, 0.0
        %vm1113 = vcmp.ge.f32.partialorder %v1093, 0.0
        %vm1114 = vcmp.ge.f32.partialorder %v1094, 0.0
        %vm1115 = vcmp.ge.f32.partialorder %v1095, 0.0
        %vm1116 = vcmp.ge.f32.partialorder %v1096, 0.0
        %vm1117 = vcmp.ge.f32.partialorder %v1097, 0.0
        %vm1118 = vcmp.ge.f32.partialorder %v1098, 0.0
        %vm1119 = vcmp.ge.f32.partialorder %v1099, 0.0
        %vm1120 = vcmp.ge.f32.partialorder %v1100, 0.0
        %vm1121 = vcmp.ge.f32.partialorder %v1101, 0.0
        %vm1122 = vcmp.ge.f32.partialorder %v1102, 0.0
        %vm1123 = vcmp.ge.f32.partialorder %v1103, 0.0
        %vm1124 = vcmp.ge.f32.partialorder %v1104, 0.0
        %vm1125 = vcmp.ge.f32.partialorder %v1105, 0.0
        %vm1126 = vcmp.ge.f32.partialorder %v1106, 0.0
        %vm1127 = vcmp.ge.f32.partialorder %v1107, 0.0
        %vm1128 = vcmp.ge.f32.partialorder %v1108, 0.0
        %vm1129 = vcmp.ge.f32.partialorder %v1109, 0.0
        %v1130 = vsel %vm1110, 1.0, -1.0
        %v1131 = vsel %vm1111, 1.0, -1.0
        %v1132 = vsel %vm1112, 1.0, -1.0
        %v1133 = vsel %vm1113, 1.0, -1.0
        %v1134 = vsel %vm1114, 1.0, -1.0
        %v1135 = vsel %vm1115, 1.0, -1.0
        %v1136 = vsel %vm1116, 1.0, -1.0
        %v1137 = vsel %vm1117, 1.0, -1.0
        %v1138 = vsel %vm1118, 1.0, -1.0
        %v1139 = vsel %vm1119, 1.0, -1.0
        %v1140 = vsel %vm1120, 1.0, -1.0
        %v1141 = vsel %vm1121, 1.0, -1.0
        %v1142 = vsel %vm1122, 1.0, -1.0
        %v1143 = vsel %vm1123, 1.0, -1.0
        %v1144 = vsel %vm1124, 1.0, -1.0
        %v1145 = vsel %vm1125, 1.0, -1.0
        %v1146 = vsel %vm1126, 1.0, -1.0
        %v1147 = vsel %vm1127, 1.0, -1.0
        %v1148 = vsel %vm1128, 1.0, -1.0
        %v1149 = vsel %vm1129, 1.0, -1.0
        %v1150 = vand.u32 2147483647, %v1090
        %v1151 = vand.u32 2147483647, %v1091
        %v1152 = vand.u32 2147483647, %v1092
        %v1153 = vand.u32 2147483647, %v1093
        %v1154 = vand.u32 2147483647, %v1094
        %v1155 = vand.u32 2147483647, %v1095
        %v1156 = vand.u32 2147483647, %v1096
        %v1157 = vand.u32 2147483647, %v1097
        %v1158 = vand.u32 2147483647, %v1098
        %v1159 = vand.u32 2147483647, %v1099
        %v1160 = vand.u32 2147483647, %v1100
        %v1161 = vand.u32 2147483647, %v1101
        %v1162 = vand.u32 2147483647, %v1102
        %v1163 = vand.u32 2147483647, %v1103
        %v1164 = vand.u32 2147483647, %v1104
        %v1165 = vand.u32 2147483647, %v1105
        %v1166 = vand.u32 2147483647, %v1106
        %v1167 = vand.u32 2147483647, %v1107
        %v1168 = vand.u32 2147483647, %v1108
        %v1169 = vand.u32 2147483647, %v1109
        %v1170 = vmul.f32 %v1150, 0.3275911
        %v1171 = vmul.f32 %v1151, 0.3275911
        %v1172 = vmul.f32 %v1152, 0.3275911
        %v1173 = vmul.f32 %v1153, 0.3275911
        %v1174 = vmul.f32 %v1154, 0.3275911
        %v1175 = vmul.f32 %v1155, 0.3275911
        %v1176 = vmul.f32 %v1156, 0.3275911
        %v1177 = vmul.f32 %v1157, 0.3275911
        %v1178 = vmul.f32 %v1158, 0.3275911
        %v1179 = vmul.f32 %v1159, 0.3275911
        %v1180 = vmul.f32 %v1160, 0.3275911
        %v1181 = vmul.f32 %v1161, 0.3275911
        %v1182 = vmul.f32 %v1162, 0.3275911
        %v1183 = vmul.f32 %v1163, 0.3275911
        %v1184 = vmul.f32 %v1164, 0.3275911
        %v1185 = vmul.f32 %v1165, 0.3275911
        %v1186 = vmul.f32 %v1166, 0.3275911
        %v1187 = vmul.f32 %v1167, 0.3275911
        %v1188 = vmul.f32 %v1168, 0.3275911
        %v1189 = vmul.f32 %v1169, 0.3275911
        %v1190 = vadd.f32 %v1170, 1.0
        %v1191 = vadd.f32 %v1171, 1.0
        %v1192 = vadd.f32 %v1172, 1.0
        %v1193 = vadd.f32 %v1173, 1.0
        %v1194 = vadd.f32 %v1174, 1.0
        %v1195 = vadd.f32 %v1175, 1.0
        %v1196 = vadd.f32 %v1176, 1.0
        %v1197 = vadd.f32 %v1177, 1.0
        %v1198 = vadd.f32 %v1178, 1.0
        %v1199 = vadd.f32 %v1179, 1.0
        %v1200 = vadd.f32 %v1180, 1.0
        %v1201 = vadd.f32 %v1181, 1.0
        %v1202 = vadd.f32 %v1182, 1.0
        %v1203 = vadd.f32 %v1183, 1.0
        %v1204 = vadd.f32 %v1184, 1.0
        %v1205 = vadd.f32 %v1185, 1.0
        %v1206 = vadd.f32 %v1186, 1.0
        %v1207 = vadd.f32 %v1187, 1.0
        %v1208 = vadd.f32 %v1188, 1.0
        %v1209 = vadd.f32 %v1189, 1.0
        %v1210 = vrcp.pop %v1190
        %v1211 = vmul.f32 %v1190, %v1210
        %v1212 = vsub.f32 1.0, %v1211
        %v1213 = vmul.f32 %v1210, %v1212
        %v1214 = vadd.f32 %v1210, %v1213
        %vm1215 = vweird.f32 %v1190
        %vm1216 = vweird.f32 %v1210
        %vm1217 = vmor %vm1215, %vm1216
        %v1218 = vsel %vm1217, %v1210, %v1214
        %v1219 = vand.u32 2147483647, %v1190
        %vm1220 = vcmp.eq.f32.partialorder %v1219, 8.507059e+37
        %v1221 = vand.u32 %v1190, 2147483648
        %v1222 = vor.u32 1.1754944e-38, %v1221
        %v1223 = vsel %vm1220, %v1222, %v1218
        %v1224 = vmul.f32 1.0, %v1223
        %v1225 = vrcp.pop %v1191
        %v1226 = vmul.f32 %v1191, %v1225
        %v1227 = vsub.f32 1.0, %v1226
        %v1228 = vmul.f32 %v1225, %v1227
        %v1229 = vadd.f32 %v1225, %v1228
        %vm1230 = vweird.f32 %v1191
        %vm1231 = vweird.f32 %v1225
        %vm1232 = vmor %vm1230, %vm1231
        %v1233 = vsel %vm1232, %v1225, %v1229
        %v1234 = vand.u32 2147483647, %v1191
        %vm1235 = vcmp.eq.f32.partialorder %v1234, 8.507059e+37
        %v1236 = vand.u32 %v1191, 2147483648
        %v1237 = vor.u32 1.1754944e-38, %v1236
        %v1238 = vsel %vm1235, %v1237, %v1233
        %v1239 = vmul.f32 1.0, %v1238
        %v1240 = vrcp.pop %v1192
        %v1241 = vmul.f32 %v1192, %v1240
        %v1242 = vsub.f32 1.0, %v1241
        %v1243 = vmul.f32 %v1240, %v1242
        %v1244 = vadd.f32 %v1240, %v1243
        %vm1245 = vweird.f32 %v1192
        %vm1246 = vweird.f32 %v1240
        %vm1247 = vmor %vm1245, %vm1246
        %v1248 = vsel %vm1247, %v1240, %v1244
        %v1249 = vand.u32 2147483647, %v1192
        %vm1250 = vcmp.eq.f32.partialorder %v1249, 8.507059e+37
        %v1251 = vand.u32 %v1192, 2147483648
        %v1252 = vor.u32 1.1754944e-38, %v1251
        %v1253 = vsel %vm1250, %v1252, %v1248
        %v1254 = vmul.f32 1.0, %v1253
        %v1255 = vrcp.pop %v1193
        %v1256 = vmul.f32 %v1193, %v1255
        %v1257 = vsub.f32 1.0, %v1256
        %v1258 = vmul.f32 %v1255, %v1257
        %v1259 = vadd.f32 %v1255, %v1258
        %vm1260 = vweird.f32 %v1193
        %vm1261 = vweird.f32 %v1255
        %vm1262 = vmor %vm1260, %vm1261
        %v1263 = vsel %vm1262, %v1255, %v1259
        %v1264 = vand.u32 2147483647, %v1193
        %vm1265 = vcmp.eq.f32.partialorder %v1264, 8.507059e+37
        %v1266 = vand.u32 %v1193, 2147483648
        %v1267 = vor.u32 1.1754944e-38, %v1266
        %v1268 = vsel %vm1265, %v1267, %v1263
        %v1269 = vmul.f32 1.0, %v1268
        %v1270 = vrcp.pop %v1194
        %v1271 = vmul.f32 %v1194, %v1270
        %v1272 = vsub.f32 1.0, %v1271
        %v1273 = vmul.f32 %v1270, %v1272
        %v1274 = vadd.f32 %v1270, %v1273
        %vm1275 = vweird.f32 %v1194
        %vm1276 = vweird.f32 %v1270
        %vm1277 = vmor %vm1275, %vm1276
        %v1278 = vsel %vm1277, %v1270, %v1274
        %v1279 = vand.u32 2147483647, %v1194
        %vm1280 = vcmp.eq.f32.partialorder %v1279, 8.507059e+37
        %v1281 = vand.u32 %v1194, 2147483648
        %v1282 = vor.u32 1.1754944e-38, %v1281
        %v1283 = vsel %vm1280, %v1282, %v1278
        %v1284 = vmul.f32 1.0, %v1283
        %v1285 = vrcp.pop %v1195
        %v1286 = vmul.f32 %v1195, %v1285
        %v1287 = vsub.f32 1.0, %v1286
        %v1288 = vmul.f32 %v1285, %v1287
        %v1289 = vadd.f32 %v1285, %v1288
        %vm1290 = vweird.f32 %v1195
        %vm1291 = vweird.f32 %v1285
        %vm1292 = vmor %vm1290, %vm1291
        %v1293 = vsel %vm1292, %v1285, %v1289
        %v1294 = vand.u32 2147483647, %v1195
        %vm1295 = vcmp.eq.f32.partialorder %v1294, 8.507059e+37
        %v1296 = vand.u32 %v1195, 2147483648
        %v1297 = vor.u32 1.1754944e-38, %v1296
        %v1298 = vsel %vm1295, %v1297, %v1293
        %v1299 = vmul.f32 1.0, %v1298
        %v1300 = vrcp.pop %v1196
        %v1301 = vmul.f32 %v1196, %v1300
        %v1302 = vsub.f32 1.0, %v1301
        %v1303 = vmul.f32 %v1300, %v1302
        %v1304 = vadd.f32 %v1300, %v1303
        %vm1305 = vweird.f32 %v1196
        %vm1306 = vweird.f32 %v1300
        %vm1307 = vmor %vm1305, %vm1306
        %v1308 = vsel %vm1307, %v1300, %v1304
        %v1309 = vand.u32 2147483647, %v1196
        %vm1310 = vcmp.eq.f32.partialorder %v1309, 8.507059e+37
        %v1311 = vand.u32 %v1196, 2147483648
        %v1312 = vor.u32 1.1754944e-38, %v1311
        %v1313 = vsel %vm1310, %v1312, %v1308
        %v1314 = vmul.f32 1.0, %v1313
        %v1315 = vrcp.pop %v1197
        %v1316 = vmul.f32 %v1197, %v1315
        %v1317 = vsub.f32 1.0, %v1316
        %v1318 = vmul.f32 %v1315, %v1317
        %v1319 = vadd.f32 %v1315, %v1318
        %vm1320 = vweird.f32 %v1197
        %vm1321 = vweird.f32 %v1315
        %vm1322 = vmor %vm1320, %vm1321
        %v1323 = vsel %vm1322, %v1315, %v1319
        %v1324 = vand.u32 2147483647, %v1197
        %vm1325 = vcmp.eq.f32.partialorder %v1324, 8.507059e+37
        %v1326 = vand.u32 %v1197, 2147483648
        %v1327 = vor.u32 1.1754944e-38, %v1326
        %v1328 = vsel %vm1325, %v1327, %v1323
        %v1329 = vmul.f32 1.0, %v1328
        %v1330 = vrcp.pop %v1198
        %v1331 = vmul.f32 %v1198, %v1330
        %v1332 = vsub.f32 1.0, %v1331
        %v1333 = vmul.f32 %v1330, %v1332
        %v1334 = vadd.f32 %v1330, %v1333
        %vm1335 = vweird.f32 %v1198
        %vm1336 = vweird.f32 %v1330
        %vm1337 = vmor %vm1335, %vm1336
        %v1338 = vsel %vm1337, %v1330, %v1334
        %v1339 = vand.u32 2147483647, %v1198
        %vm1340 = vcmp.eq.f32.partialorder %v1339, 8.507059e+37
        %v1341 = vand.u32 %v1198, 2147483648
        %v1342 = vor.u32 1.1754944e-38, %v1341
        %v1343 = vsel %vm1340, %v1342, %v1338
        %v1344 = vmul.f32 1.0, %v1343
        %v1345 = vrcp.pop %v1199
        %v1346 = vmul.f32 %v1199, %v1345
        %v1347 = vsub.f32 1.0, %v1346
        %v1348 = vmul.f32 %v1345, %v1347
        %v1349 = vadd.f32 %v1345, %v1348
        %vm1350 = vweird.f32 %v1199
        %vm1351 = vweird.f32 %v1345
        %vm1352 = vmor %vm1350, %vm1351
        %v1353 = vsel %vm1352, %v1345, %v1349
        %v1354 = vand.u32 2147483647, %v1199
        %vm1355 = vcmp.eq.f32.partialorder %v1354, 8.507059e+37
        %v1356 = vand.u32 %v1199, 2147483648
        %v1357 = vor.u32 1.1754944e-38, %v1356
        %v1358 = vsel %vm1355, %v1357, %v1353
        %v1359 = vmul.f32 1.0, %v1358
        %v1360 = vrcp.pop %v1200
        %v1361 = vmul.f32 %v1200, %v1360
        %v1362 = vsub.f32 1.0, %v1361
        %v1363 = vmul.f32 %v1360, %v1362
        %v1364 = vadd.f32 %v1360, %v1363
        %vm1365 = vweird.f32 %v1200
        %vm1366 = vweird.f32 %v1360
        %vm1367 = vmor %vm1365, %vm1366
        %v1368 = vsel %vm1367, %v1360, %v1364
        %v1369 = vand.u32 2147483647, %v1200
        %vm1370 = vcmp.eq.f32.partialorder %v1369, 8.507059e+37
        %v1371 = vand.u32 %v1200, 2147483648
        %v1372 = vor.u32 1.1754944e-38, %v1371
        %v1373 = vsel %vm1370, %v1372, %v1368
        %v1374 = vmul.f32 1.0, %v1373
        %v1375 = vrcp.pop %v1201
        %v1376 = vmul.f32 %v1201, %v1375
        %v1377 = vsub.f32 1.0, %v1376
        %v1378 = vmul.f32 %v1375, %v1377
        %v1379 = vadd.f32 %v1375, %v1378
        %vm1380 = vweird.f32 %v1201
        %vm1381 = vweird.f32 %v1375
        %vm1382 = vmor %vm1380, %vm1381
        %v1383 = vsel %vm1382, %v1375, %v1379
        %v1384 = vand.u32 2147483647, %v1201
        %vm1385 = vcmp.eq.f32.partialorder %v1384, 8.507059e+37
        %v1386 = vand.u32 %v1201, 2147483648
        %v1387 = vor.u32 1.1754944e-38, %v1386
        %v1388 = vsel %vm1385, %v1387, %v1383
        %v1389 = vmul.f32 1.0, %v1388
        %v1390 = vrcp.pop %v1202
        %v1391 = vmul.f32 %v1202, %v1390
        %v1392 = vsub.f32 1.0, %v1391
        %v1393 = vmul.f32 %v1390, %v1392
        %v1394 = vadd.f32 %v1390, %v1393
        %vm1395 = vweird.f32 %v1202
        %vm1396 = vweird.f32 %v1390
        %vm1397 = vmor %vm1395, %vm1396
        %v1398 = vsel %vm1397, %v1390, %v1394
        %v1399 = vand.u32 2147483647, %v1202
        %vm1400 = vcmp.eq.f32.partialorder %v1399, 8.507059e+37
        %v1401 = vand.u32 %v1202, 2147483648
        %v1402 = vor.u32 1.1754944e-38, %v1401
        %v1403 = vsel %vm1400, %v1402, %v1398
        %v1404 = vmul.f32 1.0, %v1403
        %v1405 = vrcp.pop %v1203
        %v1406 = vmul.f32 %v1203, %v1405
        %v1407 = vsub.f32 1.0, %v1406
        %v1408 = vmul.f32 %v1405, %v1407
        %v1409 = vadd.f32 %v1405, %v1408
        %vm1410 = vweird.f32 %v1203
        %vm1411 = vweird.f32 %v1405
        %vm1412 = vmor %vm1410, %vm1411
        %v1413 = vsel %vm1412, %v1405, %v1409
        %v1414 = vand.u32 2147483647, %v1203
        %vm1415 = vcmp.eq.f32.partialorder %v1414, 8.507059e+37
        %v1416 = vand.u32 %v1203, 2147483648
        %v1417 = vor.u32 1.1754944e-38, %v1416
        %v1418 = vsel %vm1415, %v1417, %v1413
        %v1419 = vmul.f32 1.0, %v1418
        %v1420 = vrcp.pop %v1204
        %v1421 = vmul.f32 %v1204, %v1420
        %v1422 = vsub.f32 1.0, %v1421
        %v1423 = vmul.f32 %v1420, %v1422
        %v1424 = vadd.f32 %v1420, %v1423
        %vm1425 = vweird.f32 %v1204
        %vm1426 = vweird.f32 %v1420
        %vm1427 = vmor %vm1425, %vm1426
        %v1428 = vsel %vm1427, %v1420, %v1424
        %v1429 = vand.u32 2147483647, %v1204
        %vm1430 = vcmp.eq.f32.partialorder %v1429, 8.507059e+37
        %v1431 = vand.u32 %v1204, 2147483648
        %v1432 = vor.u32 1.1754944e-38, %v1431
        %v1433 = vsel %vm1430, %v1432, %v1428
        %v1434 = vmul.f32 1.0, %v1433
        %v1435 = vrcp.pop %v1205
        %v1436 = vmul.f32 %v1205, %v1435
        %v1437 = vsub.f32 1.0, %v1436
        %v1438 = vmul.f32 %v1435, %v1437
        %v1439 = vadd.f32 %v1435, %v1438
        %vm1440 = vweird.f32 %v1205
        %vm1441 = vweird.f32 %v1435
        %vm1442 = vmor %vm1440, %vm1441
        %v1443 = vsel %vm1442, %v1435, %v1439
        %v1444 = vand.u32 2147483647, %v1205
        %vm1445 = vcmp.eq.f32.partialorder %v1444, 8.507059e+37
        %v1446 = vand.u32 %v1205, 2147483648
        %v1447 = vor.u32 1.1754944e-38, %v1446
        %v1448 = vsel %vm1445, %v1447, %v1443
        %v1449 = vmul.f32 1.0, %v1448
        %v1450 = vrcp.pop %v1206
        %v1451 = vmul.f32 %v1206, %v1450
        %v1452 = vsub.f32 1.0, %v1451
        %v1453 = vmul.f32 %v1450, %v1452
        %v1454 = vadd.f32 %v1450, %v1453
        %vm1455 = vweird.f32 %v1206
        %vm1456 = vweird.f32 %v1450
        %vm1457 = vmor %vm1455, %vm1456
        %v1458 = vsel %vm1457, %v1450, %v1454
        %v1459 = vand.u32 2147483647, %v1206
        %vm1460 = vcmp.eq.f32.partialorder %v1459, 8.507059e+37
        %v1461 = vand.u32 %v1206, 2147483648
        %v1462 = vor.u32 1.1754944e-38, %v1461
        %v1463 = vsel %vm1460, %v1462, %v1458
        %v1464 = vmul.f32 1.0, %v1463
        %v1465 = vrcp.pop %v1207
        %v1466 = vmul.f32 %v1207, %v1465
        %v1467 = vsub.f32 1.0, %v1466
        %v1468 = vmul.f32 %v1465, %v1467
        %v1469 = vadd.f32 %v1465, %v1468
        %vm1470 = vweird.f32 %v1207
        %vm1471 = vweird.f32 %v1465
        %vm1472 = vmor %vm1470, %vm1471
        %v1473 = vsel %vm1472, %v1465, %v1469
        %v1474 = vand.u32 2147483647, %v1207
        %vm1475 = vcmp.eq.f32.partialorder %v1474, 8.507059e+37
        %v1476 = vand.u32 %v1207, 2147483648
        %v1477 = vor.u32 1.1754944e-38, %v1476
        %v1478 = vsel %vm1475, %v1477, %v1473
        %v1479 = vmul.f32 1.0, %v1478
        %v1480 = vrcp.pop %v1208
        %v1481 = vmul.f32 %v1208, %v1480
        %v1482 = vsub.f32 1.0, %v1481
        %v1483 = vmul.f32 %v1480, %v1482
        %v1484 = vadd.f32 %v1480, %v1483
        %vm1485 = vweird.f32 %v1208
        %vm1486 = vweird.f32 %v1480
        %vm1487 = vmor %vm1485, %vm1486
        %v1488 = vsel %vm1487, %v1480, %v1484
        %v1489 = vand.u32 2147483647, %v1208
        %vm1490 = vcmp.eq.f32.partialorder %v1489, 8.507059e+37
        %v1491 = vand.u32 %v1208, 2147483648
        %v1492 = vor.u32 1.1754944e-38, %v1491
        %v1493 = vsel %vm1490, %v1492, %v1488
        %v1494 = vmul.f32 1.0, %v1493
        %v1495 = vrcp.pop %v1209
        %v1496 = vmul.f32 %v1209, %v1495
        %v1497 = vsub.f32 1.0, %v1496
        %v1498 = vmul.f32 %v1495, %v1497
        %v1499 = vadd.f32 %v1495, %v1498
        %vm1500 = vweird.f32 %v1209
        %vm1501 = vweird.f32 %v1495
        %vm1502 = vmor %vm1500, %vm1501
        %v1503 = vsel %vm1502, %v1495, %v1499
        %v1504 = vand.u32 2147483647, %v1209
        %vm1505 = vcmp.eq.f32.partialorder %v1504, 8.507059e+37
        %v1506 = vand.u32 %v1209, 2147483648
        %v1507 = vor.u32 1.1754944e-38, %v1506
        %v1508 = vsel %vm1505, %v1507, %v1503
        %v1509 = vmul.f32 1.0, %v1508
        %v1510 = vmul.f32 %v1224, 1.0614054
        %v1511 = vmul.f32 %v1239, 1.0614054
        %v1512 = vmul.f32 %v1254, 1.0614054
        %v1513 = vmul.f32 %v1269, 1.0614054
        %v1514 = vmul.f32 %v1284, 1.0614054
        %v1515 = vmul.f32 %v1299, 1.0614054
        %v1516 = vmul.f32 %v1314, 1.0614054
        %v1517 = vmul.f32 %v1329, 1.0614054
        %v1518 = vmul.f32 %v1344, 1.0614054
        %v1519 = vmul.f32 %v1359, 1.0614054
        %v1520 = vmul.f32 %v1374, 1.0614054
        %v1521 = vmul.f32 %v1389, 1.0614054
        %v1522 = vmul.f32 %v1404, 1.0614054
        %v1523 = vmul.f32 %v1419, 1.0614054
        %v1524 = vmul.f32 %v1434, 1.0614054
        %v1525 = vmul.f32 %v1449, 1.0614054
        %v1526 = vmul.f32 %v1464, 1.0614054
        %v1527 = vmul.f32 %v1479, 1.0614054
        %v1528 = vmul.f32 %v1494, 1.0614054
        %v1529 = vmul.f32 %v1509, 1.0614054
        %v1530 = vadd.f32 %v1510, -1.4531521
        %v1531 = vadd.f32 %v1511, -1.4531521
        %v1532 = vadd.f32 %v1512, -1.4531521
        %v1533 = vadd.f32 %v1513, -1.4531521
        %v1534 = vadd.f32 %v1514, -1.4531521
        %v1535 = vadd.f32 %v1515, -1.4531521
        %v1536 = vadd.f32 %v1516, -1.4531521
        %v1537 = vadd.f32 %v1517, -1.4531521
        %v1538 = vadd.f32 %v1518, -1.4531521
        %v1539 = vadd.f32 %v1519, -1.4531521
        %v1540 = vadd.f32 %v1520, -1.4531521
        %v1541 = vadd.f32 %v1521, -1.4531521
        %v1542 = vadd.f32 %v1522, -1.4531521
        %v1543 = vadd.f32 %v1523, -1.4531521
        %v1544 = vadd.f32 %v1524, -1.4531521
        %v1545 = vadd.f32 %v1525, -1.4531521
        %v1546 = vadd.f32 %v1526, -1.4531521
        %v1547 = vadd.f32 %v1527, -1.4531521
        %v1548 = vadd.f32 %v1528, -1.4531521
        %v1549 = vadd.f32 %v1529, -1.4531521
        %v1550 = vmul.f32 %v1530, %v1224
        %v1551 = vmul.f32 %v1531, %v1239
        %v1552 = vmul.f32 %v1532, %v1254
        %v1553 = vmul.f32 %v1533, %v1269
        %v1554 = vmul.f32 %v1534, %v1284
        %v1555 = vmul.f32 %v1535, %v1299
        %v1556 = vmul.f32 %v1536, %v1314
        %v1557 = vmul.f32 %v1537, %v1329
        %v1558 = vmul.f32 %v1538, %v1344
        %v1559 = vmul.f32 %v1539, %v1359
        %v1560 = vmul.f32 %v1540, %v1374
        %v1561 = vmul.f32 %v1541, %v1389
        %v1562 = vmul.f32 %v1542, %v1404
        %v1563 = vmul.f32 %v1543, %v1419
        %v1564 = vmul.f32 %v1544, %v1434
        %v1565 = vmul.f32 %v1545, %v1449
        %v1566 = vmul.f32 %v1546, %v1464
        %v1567 = vmul.f32 %v1547, %v1479
        %v1568 = vmul.f32 %v1548, %v1494
        %v1569 = vmul.f32 %v1549, %v1509
        %v1570 = vadd.f32 %v1550, 1.4214138
        %v1571 = vadd.f32 %v1551, 1.4214138
        %v1572 = vadd.f32 %v1552, 1.4214138
        %v1573 = vadd.f32 %v1553, 1.4214138
        %v1574 = vadd.f32 %v1554, 1.4214138
        %v1575 = vadd.f32 %v1555, 1.4214138
        %v1576 = vadd.f32 %v1556, 1.4214138
        %v1577 = vadd.f32 %v1557, 1.4214138
        %v1578 = vadd.f32 %v1558, 1.4214138
        %v1579 = vadd.f32 %v1559, 1.4214138
        %v1580 = vadd.f32 %v1560, 1.4214138
        %v1581 = vadd.f32 %v1561, 1.4214138
        %v1582 = vadd.f32 %v1562, 1.4214138
        %v1583 = vadd.f32 %v1563, 1.4214138
        %v1584 = vadd.f32 %v1564, 1.4214138
        %v1585 = vadd.f32 %v1565, 1.4214138
        %v1586 = vadd.f32 %v1566, 1.4214138
        %v1587 = vadd.f32 %v1567, 1.4214138
        %v1588 = vadd.f32 %v1568, 1.4214138
        %v1589 = vadd.f32 %v1569, 1.4214138
        %v1590 = vmul.f32 %v1570, %v1224
        %v1591 = vmul.f32 %v1571, %v1239
        %v1592 = vmul.f32 %v1572, %v1254
        %v1593 = vmul.f32 %v1573, %v1269
        %v1594 = vmul.f32 %v1574, %v1284
        %v1595 = vmul.f32 %v1575, %v1299
        %v1596 = vmul.f32 %v1576, %v1314
        %v1597 = vmul.f32 %v1577, %v1329
        %v1598 = vmul.f32 %v1578, %v1344
        %v1599 = vmul.f32 %v1579, %v1359
        %v1600 = vmul.f32 %v1580, %v1374
        %v1601 = vmul.f32 %v1581, %v1389
        %v1602 = vmul.f32 %v1582, %v1404
        %v1603 = vmul.f32 %v1583, %v1419
        %v1604 = vmul.f32 %v1584, %v1434
        %v1605 = vmul.f32 %v1585, %v1449
        %v1606 = vmul.f32 %v1586, %v1464
        %v1607 = vmul.f32 %v1587, %v1479
        %v1608 = vmul.f32 %v1588, %v1494
        %v1609 = vmul.f32 %v1589, %v1509
        %v1610 = vadd.f32 %v1590, -0.28449672
        %v1611 = vadd.f32 %v1591, -0.28449672
        %v1612 = vadd.f32 %v1592, -0.28449672
        %v1613 = vadd.f32 %v1593, -0.28449672
        %v1614 = vadd.f32 %v1594, -0.28449672
        %v1615 = vadd.f32 %v1595, -0.28449672
        %v1616 = vadd.f32 %v1596, -0.28449672
        %v1617 = vadd.f32 %v1597, -0.28449672
        %v1618 = vadd.f32 %v1598, -0.28449672
        %v1619 = vadd.f32 %v1599, -0.28449672
        %v1620 = vadd.f32 %v1600, -0.28449672
        %v1621 = vadd.f32 %v1601, -0.28449672
        %v1622 = vadd.f32 %v1602, -0.28449672
        %v1623 = vadd.f32 %v1603, -0.28449672
        %v1624 = vadd.f32 %v1604, -0.28449672
        %v1625 = vadd.f32 %v1605, -0.28449672
        %v1626 = vadd.f32 %v1606, -0.28449672
        %v1627 = vadd.f32 %v1607, -0.28449672
        %v1628 = vadd.f32 %v1608, -0.28449672
        %v1629 = vadd.f32 %v1609, -0.28449672
        %v1630 = vmul.f32 %v1610, %v1224
        %v1631 = vmul.f32 %v1611, %v1239
        %v1632 = vmul.f32 %v1612, %v1254
        %v1633 = vmul.f32 %v1613, %v1269
        %v1634 = vmul.f32 %v1614, %v1284
        %v1635 = vmul.f32 %v1615, %v1299
        %v1636 = vmul.f32 %v1616, %v1314
        %v1637 = vmul.f32 %v1617, %v1329
        %v1638 = vmul.f32 %v1618, %v1344
        %v1639 = vmul.f32 %v1619, %v1359
        %v1640 = vmul.f32 %v1620, %v1374
        %v1641 = vmul.f32 %v1621, %v1389
        %v1642 = vmul.f32 %v1622, %v1404
        %v1643 = vmul.f32 %v1623, %v1419
        %v1644 = vmul.f32 %v1624, %v1434
        %v1645 = vmul.f32 %v1625, %v1449
        %v1646 = vmul.f32 %v1626, %v1464
        %v1647 = vmul.f32 %v1627, %v1479
        %v1648 = vmul.f32 %v1628, %v1494
        %v1649 = vmul.f32 %v1629, %v1509
        %v1650 = vadd.f32 %v1630, 0.2548296
        %v1651 = vadd.f32 %v1631, 0.2548296
        %v1652 = vadd.f32 %v1632, 0.2548296
        %v1653 = vadd.f32 %v1633, 0.2548296
        %v1654 = vadd.f32 %v1634, 0.2548296
        %v1655 = vadd.f32 %v1635, 0.2548296
        %v1656 = vadd.f32 %v1636, 0.2548296
        %v1657 = vadd.f32 %v1637, 0.2548296
        %v1658 = vadd.f32 %v1638, 0.2548296
        %v1659 = vadd.f32 %v1639, 0.2548296
        %v1660 = vadd.f32 %v1640, 0.2548296
        %v1661 = vadd.f32 %v1641, 0.2548296
        %v1662 = vadd.f32 %v1642, 0.2548296
        %v1663 = vadd.f32 %v1643, 0.2548296
        %v1664 = vadd.f32 %v1644, 0.2548296
        %v1665 = vadd.f32 %v1645, 0.2548296
        %v1666 = vadd.f32 %v1646, 0.2548296
        %v1667 = vadd.f32 %v1647, 0.2548296
        %v1668 = vadd.f32 %v1648, 0.2548296
        %v1669 = vadd.f32 %v1649, 0.2548296
        %v1670 = vmul.f32 %v1650, %v1224
        %v1671 = vmul.f32 %v1651, %v1239
        %v1672 = vmul.f32 %v1652, %v1254
        %v1673 = vmul.f32 %v1653, %v1269
        %v1674 = vmul.f32 %v1654, %v1284
        %v1675 = vmul.f32 %v1655, %v1299
        %v1676 = vmul.f32 %v1656, %v1314
        %v1677 = vmul.f32 %v1657, %v1329
        %v1678 = vmul.f32 %v1658, %v1344
        %v1679 = vmul.f32 %v1659, %v1359
        %v1680 = vmul.f32 %v1660, %v1374
        %v1681 = vmul.f32 %v1661, %v1389
        %v1682 = vmul.f32 %v1662, %v1404
        %v1683 = vmul.f32 %v1663, %v1419
        %v1684 = vmul.f32 %v1664, %v1434
        %v1685 = vmul.f32 %v1665, %v1449
        %v1686 = vmul.f32 %v1666, %v1464
        %v1687 = vmul.f32 %v1667, %v1479
        %v1688 = vmul.f32 %v1668, %v1494
        %v1689 = vmul.f32 %v1669, %v1509
        %v1690 = vsub.f32 0.0, %v1150
        %v1691 = vsub.f32 0.0, %v1151
        %v1692 = vsub.f32 0.0, %v1152
        %v1693 = vsub.f32 0.0, %v1153
        %v1694 = vsub.f32 0.0, %v1154
        %v1695 = vsub.f32 0.0, %v1155
        %v1696 = vsub.f32 0.0, %v1156
        %v1697 = vsub.f32 0.0, %v1157
        %v1698 = vsub.f32 0.0, %v1158
        %v1699 = vsub.f32 0.0, %v1159
        %v1700 = vsub.f32 0.0, %v1160
        %v1701 = vsub.f32 0.0, %v1161
        %v1702 = vsub.f32 0.0, %v1162
        %v1703 = vsub.f32 0.0, %v1163
        %v1704 = vsub.f32 0.0, %v1164
        %v1705 = vsub.f32 0.0, %v1165
        %v1706 = vsub.f32 0.0, %v1166
        %v1707 = vsub.f32 0.0, %v1167
        %v1708 = vsub.f32 0.0, %v1168
        %v1709 = vsub.f32 0.0, %v1169
        %v1710 = vmul.f32 %v1690, %v1150
        %v1711 = vmul.f32 %v1691, %v1151
        %v1712 = vmul.f32 %v1692, %v1152
        %v1713 = vmul.f32 %v1693, %v1153
        %v1714 = vmul.f32 %v1694, %v1154
        %v1715 = vmul.f32 %v1695, %v1155
        %v1716 = vmul.f32 %v1696, %v1156
        %v1717 = vmul.f32 %v1697, %v1157
        %v1718 = vmul.f32 %v1698, %v1158
        %v1719 = vmul.f32 %v1699, %v1159
        %v1720 = vmul.f32 %v1700, %v1160
        %v1721 = vmul.f32 %v1701, %v1161
        %v1722 = vmul.f32 %v1702, %v1162
        %v1723 = vmul.f32 %v1703, %v1163
        %v1724 = vmul.f32 %v1704, %v1164
        %v1725 = vmul.f32 %v1705, %v1165
        %v1726 = vmul.f32 %v1706, %v1166
        %v1727 = vmul.f32 %v1707, %v1167
        %v1728 = vmul.f32 %v1708, %v1168
        %v1729 = vmul.f32 %v1709, %v1169
        %v1730 = vmul.f32 %v1710, 1.442695
        %v1731 = vpow.pop %v1730
        %v1732 = vmul.f32 %v1711, 1.442695
        %v1733 = vpow.pop %v1732
        %v1734 = vmul.f32 %v1712, 1.442695
        %v1735 = vpow.pop %v1734
        %v1736 = vmul.f32 %v1713, 1.442695
        %v1737 = vpow.pop %v1736
        %v1738 = vmul.f32 %v1714, 1.442695
        %v1739 = vpow.pop %v1738
        %v1740 = vmul.f32 %v1715, 1.442695
        %v1741 = vpow.pop %v1740
        %v1742 = vmul.f32 %v1716, 1.442695
        %v1743 = vpow.pop %v1742
        %v1744 = vmul.f32 %v1717, 1.442695
        %v1745 = vpow.pop %v1744
        %v1746 = vmul.f32 %v1718, 1.442695
        %v1747 = vpow.pop %v1746
        %v1748 = vmul.f32 %v1719, 1.442695
        %v1749 = vpow.pop %v1748
        %v1750 = vmul.f32 %v1720, 1.442695
        %v1751 = vpow.pop %v1750
        %v1752 = vmul.f32 %v1721, 1.442695
        %v1753 = vpow.pop %v1752
        %v1754 = vmul.f32 %v1722, 1.442695
        %v1755 = vpow.pop %v1754
        %v1756 = vmul.f32 %v1723, 1.442695
        %v1757 = vpow.pop %v1756
        %v1758 = vmul.f32 %v1724, 1.442695
        %v1759 = vpow.pop %v1758
        %v1760 = vmul.f32 %v1725, 1.442695
        %v1761 = vpow.pop %v1760
        %v1762 = vmul.f32 %v1726, 1.442695
        %v1763 = vpow.pop %v1762
        %v1764 = vmul.f32 %v1727, 1.442695
        %v1765 = vpow.pop %v1764
        %v1766 = vmul.f32 %v1728, 1.442695
        %v1767 = vpow.pop %v1766
        %v1768 = vmul.f32 %v1729, 1.442695
        %v1769 = vpow.pop %v1768
        %v1770 = vmul.f32 %v1670, %v1731
        %v1771 = vmul.f32 %v1671, %v1733
        %v1772 = vmul.f32 %v1672, %v1735
        %v1773 = vmul.f32 %v1673, %v1737
        %v1774 = vmul.f32 %v1674, %v1739
        %v1775 = vmul.f32 %v1675, %v1741
        %v1776 = vmul.f32 %v1676, %v1743
        %v1777 = vmul.f32 %v1677, %v1745
        %v1778 = vmul.f32 %v1678, %v1747
        %v1779 = vmul.f32 %v1679, %v1749
        %v1780 = vmul.f32 %v1680, %v1751
        %v1781 = vmul.f32 %v1681, %v1753
        %v1782 = vmul.f32 %v1682, %v1755
        %v1783 = vmul.f32 %v1683, %v1757
        %v1784 = vmul.f32 %v1684, %v1759
        %v1785 = vmul.f32 %v1685, %v1761
        %v1786 = vmul.f32 %v1686, %v1763
        %v1787 = vmul.f32 %v1687, %v1765
        %v1788 = vmul.f32 %v1688, %v1767
        %v1789 = vmul.f32 %v1689, %v1769
        %v1790 = vsub.f32 1.0, %v1770
        %v1791 = vsub.f32 1.0, %v1771
        %v1792 = vsub.f32 1.0, %v1772
        %v1793 = vsub.f32 1.0, %v1773
        %v1794 = vsub.f32 1.0, %v1774
        %v1795 = vsub.f32 1.0, %v1775
        %v1796 = vsub.f32 1.0, %v1776
        %v1797 = vsub.f32 1.0, %v1777
        %v1798 = vsub.f32 1.0, %v1778
        %v1799 = vsub.f32 1.0, %v1779
        %v1800 = vsub.f32 1.0, %v1780
        %v1801 = vsub.f32 1.0, %v1781
        %v1802 = vsub.f32 1.0, %v1782
        %v1803 = vsub.f32 1.0, %v1783
        %v1804 = vsub.f32 1.0, %v1784
        %v1805 = vsub.f32 1.0, %v1785
        %v1806 = vsub.f32 1.0, %v1786
        %v1807 = vsub.f32 1.0, %v1787
        %v1808 = vsub.f32 1.0, %v1788
        %v1809 = vsub.f32 1.0, %v1789
        %v1810 = vmul.f32 %v1130, %v1790
        %v1811 = vmul.f32 %v1131, %v1791
        %v1812 = vmul.f32 %v1132, %v1792
        %v1813 = vmul.f32 %v1133, %v1793
        %v1814 = vmul.f32 %v1134, %v1794
        %v1815 = vmul.f32 %v1135, %v1795
        %v1816 = vmul.f32 %v1136, %v1796
        %v1817 = vmul.f32 %v1137, %v1797
        %v1818 = vmul.f32 %v1138, %v1798
        %v1819 = vmul.f32 %v1139, %v1799
        %v1820 = vmul.f32 %v1140, %v1800
        %v1821 = vmul.f32 %v1141, %v1801
        %v1822 = vmul.f32 %v1142, %v1802
        %v1823 = vmul.f32 %v1143, %v1803
        %v1824 = vmul.f32 %v1144, %v1804
        %v1825 = vmul.f32 %v1145, %v1805
        %v1826 = vmul.f32 %v1146, %v1806
        %v1827 = vmul.f32 %v1147, %v1807
        %v1828 = vmul.f32 %v1148, %v1808
        %v1829 = vmul.f32 %v1149, %v1809
        %v1830 = vadd.f32 %v1810, 1.0
        %v1831 = vadd.f32 %v1811, 1.0
        %v1832 = vadd.f32 %v1812, 1.0
        %v1833 = vadd.f32 %v1813, 1.0
        %v1834 = vadd.f32 %v1814, 1.0
        %v1835 = vadd.f32 %v1815, 1.0
        %v1836 = vadd.f32 %v1816, 1.0
        %v1837 = vadd.f32 %v1817, 1.0
        %v1838 = vadd.f32 %v1818, 1.0
        %v1839 = vadd.f32 %v1819, 1.0
        %v1840 = vadd.f32 %v1820, 1.0
        %v1841 = vadd.f32 %v1821, 1.0
        %v1842 = vadd.f32 %v1822, 1.0
        %v1843 = vadd.f32 %v1823, 1.0
        %v1844 = vadd.f32 %v1824, 1.0
        %v1845 = vadd.f32 %v1825, 1.0
        %v1846 = vadd.f32 %v1826, 1.0
        %v1847 = vadd.f32 %v1827, 1.0
        %v1848 = vadd.f32 %v1828, 1.0
        %v1849 = vadd.f32 %v1829, 1.0
        %v1850 = vmul.f32 %v1070, %v1830
        %v1851 = vmul.f32 %v1071, %v1831
        %v1852 = vmul.f32 %v1072, %v1832
        %v1853 = vmul.f32 %v1073, %v1833
        %v1854 = vmul.f32 %v1074, %v1834
        %v1855 = vmul.f32 %v1075, %v1835
        %v1856 = vmul.f32 %v1076, %v1836
        %v1857 = vmul.f32 %v1077, %v1837
        %v1858 = vmul.f32 %v1078, %v1838
        %v1859 = vmul.f32 %v1079, %v1839
        %v1860 = vmul.f32 %v1080, %v1840
        %v1861 = vmul.f32 %v1081, %v1841
        %v1862 = vmul.f32 %v1082, %v1842
        %v1863 = vmul.f32 %v1083, %v1843
        %v1864 = vmul.f32 %v1084, %v1844
        %v1865 = vmul.f32 %v1085, %v1845
        %v1866 = vmul.f32 %v1086, %v1846
        %v1867 = vmul.f32 %v1087, %v1847
        %v1868 = vmul.f32 %v1088, %v1848
        %v1869 = vmul.f32 %v1089, %v1849
        %v1870 = vpack.c.bf16 %v1851, %v1850
        %v1871 = vpack.c.bf16 %v1853, %v1852
        %v1872 = vpack.c.bf16 %v1855, %v1854
        %v1873 = vpack.c.bf16 %v1857, %v1856
        %v1874 = vpack.c.bf16 %v1859, %v1858
        %v1875 = vpack.c.bf16 %v1861, %v1860
        %v1876 = vpack.c.bf16 %v1863, %v1862
        %v1877 = vpack.c.bf16 %v1865, %v1864
        %v1878 = vpack.c.bf16 %v1867, %v1866
        %v1879 = vpack.c.bf16 %v1869, %v1868
        %1880 = vst [vmem:[%s286] sm:$0xff] %v1870
        %1881 = vst [vmem:[%s286 + $0x8] sm:$0xff] %v1871
        %1882 = vst [vmem:[%s286 + $0x10] sm:$0xff] %v1872
        %1883 = vst [vmem:[%s286 + $0x18] sm:$0xff] %v1873
        %1884 = vst [vmem:[%s286 + $0x20] sm:$0xff] %v1874
        %1885 = vst [vmem:[%s286 + $0x28] sm:$0xff] %v1875
        %1886 = vst [vmem:[%s286 + $0x30] sm:$0xff] %v1876
        %1887 = vst [vmem:[%s286 + $0x38] sm:$0xff] %v1877
        %1888 = vst [vmem:[%s286 + $0x40] sm:$0x11] %v1878
        %1889 = vst [vmem:[%s286 + $0x48] sm:$0x11] %v1879
        %s1890 = sand.u32 %s161, 1
        %s1891 = sand.u32 %s161, 1
        %s1892 = smul.addr %s1891, 80
        %s1893 = scalar_lea.vmem [#allocation4], %s1892
        // Predicated region
        $region45: #{_lambda_.17} parent=39 // pred_check
          %p1894 = pneg %p171
        $region46: #{_lambda_.17} parent=39 // pred_check_branch
          %1896 = sbr.rel (%p1894) target = $region48
        $region47: #{_lambda_.17} parent=39 // pred_region
          %s1897 = smul.u32 5, %s24
          %s1898 = smul.u32 4, %s23
          %s1899 = smul.addr %s1897, 8
          %s1900 = sadd.s32 %s1898, %s1899
          %s1901 = smul.addr %s1900, 4
          %s1902 = scalar_lea.vmem %s5, %s1901
          // Predicated region
          $region49: #{_lambda_.17} parent=47 // pred_check
            _
          $region50: #{_lambda_.17} parent=47 // pred_check_branch
            %1904 = sbr.rel (0) target = $region52
          $region51: #{_lambda_.17} parent=47 // pred_region
            // Predicated region
            $region53: #{_lambda_.17} parent=51 // pred_check
              _
            $region54: #{_lambda_.17} parent=51 // pred_check_branch
              %1906 = sbr.rel (0) target = $region56
            $region55: #{_lambda_.17} parent=51 // pred_region
              loop: start=0, step=1, limit=1
              $region57: #{_lambda_.17} parent=55 // loop_pre_header
                _
              $region58: #{_lambda_.17} parent=55 // loop_header
                %s1908 = sphi 0, %s1912
                %p1909 = scmp.ge.s32.totalorder %s1908, 1
                %s1913 = sphi %s1893, %s1893
                %s1914 = sphi %s1902, %s1902
              $region59: #{_lambda_.17} parent=55 // loop_header_branch
                %1911 = sbr.rel (%p1909) target = $region63
              $region60: #{_lambda_.17} parent=55 // loop_body
                %v1915 = vld [vmem:[%s1913] sm:$0xff]
                %1916 = vst [vmem:[%s1914] sm:$0xff] %v1915
                %v1917 = vld [vmem:[%s1913 + $0x8] sm:$0xff]
                %1918 = vst [vmem:[%s1914 + $0x8] sm:$0xff] %v1917
                %v1919 = vld [vmem:[%s1913 + $0x10] sm:$0xff]
                %1920 = vst [vmem:[%s1914 + $0x20] sm:$0xff] %v1919
                %v1921 = vld [vmem:[%s1913 + $0x18] sm:$0xff]
                %1922 = vst [vmem:[%s1914 + $0x28] sm:$0xff] %v1921
                %v1923 = vld [vmem:[%s1913 + $0x20] sm:$0xff]
                %1924 = vst [vmem:[%s1914 + $0x40] sm:$0xff] %v1923
                %v1925 = vld [vmem:[%s1913 + $0x28] sm:$0xff]
                %1926 = vst [vmem:[%s1914 + $0x48] sm:$0xff] %v1925
                %v1927 = vld [vmem:[%s1913 + $0x30] sm:$0xff]
                %1928 = vst [vmem:[%s1914 + $0x60] sm:$0xff] %v1927
                %v1929 = vld [vmem:[%s1913 + $0x38] sm:$0xff]
                %1930 = vst [vmem:[%s1914 + $0x68] sm:$0xff] %v1929
                %v1931 = vld [vmem:[%s1913 + $0x40] sm:$0xff]
                %1932 = vst [vmem:[%s1914 + $0x80] sm:$0xff] %v1931
                %v1933 = vld [vmem:[%s1913 + $0x48] sm:$0xff]
                %1934 = vst [vmem:[%s1914 + $0x88] sm:$0xff] %v1933
              $region61: #{_lambda_.17} parent=55 // loop_footer
                %s1912 = sadd.s32 1, %s1908
              $region62: #{_lambda_.17} parent=55 // loop_footer_branch
                %1907 = sbr.rel target = $region58
              $region63: #{_lambda_.17} parent=55 // loop_exit
                _
            $region56: #{_lambda_.17} parent=51 // pred_fallthru
              _
            // Predicated region
            $region64: #{_lambda_.17} parent=51 // pred_check
              _
            $region65: #{_lambda_.17} parent=51 // pred_check_branch
              %1936 = sbr.rel target = $region67
            $region66: #{_lambda_.17} parent=51 // pred_region
              _
            $region67: #{_lambda_.17} parent=51 // pred_fallthru
              _
          $region52: #{_lambda_.17} parent=47 // pred_fallthru
            _
          %1937 = vnop
        $region48: #{_lambda_.17} parent=39 // pred_fallthru
          _
      $region40: #{_lambda_.17} parent=5 // pred_fallthru
        _
      %p1938 = scmp.le.s32.totalorder 2, %s14
      // Predicated region
      $region68: #{_lambda_.17} parent=5 // pred_check
        %p1939 = pneg %p1938
      $region69: #{_lambda_.17} parent=5 // pred_check_branch
        %1941 = sbr.rel (%p1939) target = $region71
      $region70: #{_lambda_.17} parent=5 // pred_region
        %s1942 = ssub.s32 %s14, 2
        // Predicated region
        $region72: #{_lambda_.17} parent=70 // pred_check
          %p1943 = pneg %p177
        $region73: #{_lambda_.17} parent=70 // pred_check_branch
          %1945 = sbr.rel (%p1943) target = $region75
        $region74: #{_lambda_.17} parent=70 // pred_region
          %s1946 = sand.u32 %s162, 1
          %s1947 = sand.u32 %s162, 1
          %s1948 = smul.addr %s1947, 80
          %s1949 = scalar_lea.vmem [#allocation4], %s1948
        $region75: #{_lambda_.17} parent=70 // pred_fallthru
          _
      $region71: #{_lambda_.17} parent=5 // pred_fallthru
        _
    $region6: #{_lambda_.17} parent=1 // loop_footer
      %s18 = sadd.s32 1, %s14
    $region7: #{_lambda_.17} parent=1 // loop_footer_branch
      %13 = sbr.rel target = $region3
    $region8: #{_lambda_.17} parent=1 // loop_exit
      _
    %1950 = vsyncpa [#allocation3], 1
    %s1951 = scalar_lea.sflag [#allocation3], 1
    %1952 = vsyncpa %s1951, 1

// kernel: _lambda_.18
$region0: #{_lambda_.18}
  #allocation0 [shape = 'u32[]', space=smem, size = 0x4, offset = 0x4, fixed_abs, tag = 'smem constant byte address 0x4 - core index']
  #allocation1 [shape = 'u32[72,128]{1,0:T(1,128)}', space=vmem, size = 0x9000, scoped, tag = 'internal scratch']
  %s0 = inlined_call_operand.vmem [shape: bf16[34,1024], index: 0, kind: input, shape index: {}]
  %s1 = inlined_call_operand.hbm [shape: bf16[1024,256], index: 1, kind: input, shape index: {}]
  %s2 = inlined_call_operand.vmem [shape: f32[1,256], index: 2, kind: input, shape index: {}]
  %s3 = inlined_call_operand.vmem [shape: bf16[34,256], index: 3, kind: input, shape index: {}]
  %s4 = inlined_call_operand.vmem [shape: bf16[34,256], index: 4, kind: output, shape index: {}]
  %s5 = sld [smem:[#allocation0]]
  $region30: #{_lambda_.18} parent=0
    _
  %s7 = ssub.s32 1, %s5
  %s8 = scalar_select 0, %s7, %s5
  $region1: #{_lambda_.18} parent=0
    #allocation2 [shape = 'u8[524288]{0}', space=vmem, size = 0x80000, scoped, tag = 'input window, operand 1, single buffered']
    #allocation3 [shape = 's32[1]{0}', space=sflag, size = 0x4, scoped, tag = 'scoped memory for _lambda_.18']
    %9 = vsyncpa [#allocation3], 0
    // Predicated region
    $region2: #{_lambda_.18} parent=1 // pred_check
      _
    $region3: #{_lambda_.18} parent=1 // pred_check_branch
      %11 = sbr.rel (0) target = $region5
    $region4: #{_lambda_.18} parent=1 // pred_region
      _
    $region5: #{_lambda_.18} parent=1 // pred_fallthru
      _
    // Predicated region
    $region6: #{_lambda_.18} parent=1 // pred_check
      _
    $region7: #{_lambda_.18} parent=1 // pred_check_branch
      %13 = sbr.rel (0) target = $region9
    $region8: #{_lambda_.18} parent=1 // pred_region
      %15 = vsyncadd [#allocation3], 0
      %s16 = sshll.u32 %s1, 4
      %s17 = int_to_ptr.hbm [resolvable:$true] %s16
      %s18 = sshll.u32 [#allocation2], 4
      %s19 = int_to_ptr.vmem [resolvable:$true] %s18
      %24 = dma.hbm_to_vmem [thread:$0]  %s17, 16384, %s19, [#allocation3], 128, 128, 8
    $region9: #{_lambda_.18} parent=1 // pred_fallthru
      _
    // Predicated region
    $region10: #{_lambda_.18} parent=1 // pred_check
      _
    $region11: #{_lambda_.18} parent=1 // pred_check_branch
      %26 = sbr.rel (0) target = $region13
    $region12: #{_lambda_.18} parent=1 // pred_region
      _
    $region13: #{_lambda_.18} parent=1 // pred_fallthru
      _
    // Predicated region
    $region14: #{_lambda_.18} parent=1 // pred_check
      _
    $region15: #{_lambda_.18} parent=1 // pred_check_branch
      %28 = sbr.rel (0) target = $region17
    $region16: #{_lambda_.18} parent=1 // pred_region
      _
    $region17: #{_lambda_.18} parent=1 // pred_fallthru
      _
    // Predicated region
    $region18: #{_lambda_.18} parent=1 // pred_check
      _
    $region19: #{_lambda_.18} parent=1 // pred_check_branch
      %30 = sbr.rel (0) target = $region21
    $region20: #{_lambda_.18} parent=1 // pred_region
      %32 = dma.done [#allocation3], 16384
    $region21: #{_lambda_.18} parent=1 // pred_fallthru
      _
    %v33 = vld [vmem:[%s0] sm:$0xff]
    %v34 = vld [vmem:[%s0 + $0x8] sm:$0xff]
    %v35 = vld [vmem:[%s0 + $0x10] sm:$0xff]
    %v36 = vld [vmem:[%s0 + $0x18] sm:$0xff]
    %v37 = vld [vmem:[%s0 + $0x20] sm:$0xff]
    %v38 = vld [vmem:[%s0 + $0x28] sm:$0xff]
    %v39 = vld [vmem:[%s0 + $0x30] sm:$0xff]
    %v40 = vld [vmem:[%s0 + $0x38] sm:$0xff]
    %v41 = vld [vmem:[%s0 + $0x40] sm:$0xff]
    %v42 = vld [vmem:[%s0 + $0x48] sm:$0xff]
    %v43 = vld [vmem:[%s0 + $0x50] sm:$0xff]
    %v44 = vld [vmem:[%s0 + $0x58] sm:$0xff]
    %v45 = vld [vmem:[%s0 + $0x60] sm:$0xff]
    %v46 = vld [vmem:[%s0 + $0x68] sm:$0xff]
    %v47 = vld [vmem:[%s0 + $0x70] sm:$0xff]
    %v48 = vld [vmem:[%s0 + $0x78] sm:$0xff]
    %v49 = vld [vmem:[%s0 + $0x80] sm:$0x11]
    %v50 = vld [vmem:[%s0 + $0x88] sm:$0x11]
    %v51 = vld [vmem:[%s0 + $0x90] sm:$0x11]
    %v52 = vld [vmem:[%s0 + $0x98] sm:$0x11]
    %v53 = vld [vmem:[#allocation2] sm:$0xff]
    %v54 = vld [vmem:[#allocation2 + $0x8] sm:$0xff]
    %v55 = vld [vmem:[#allocation2 + $0x10] sm:$0xff]
    %v56 = vld [vmem:[#allocation2 + $0x18] sm:$0xff]
    %v57 = vld [vmem:[#allocation2 + $0x20] sm:$0xff]
    %v58 = vld [vmem:[#allocation2 + $0x28] sm:$0xff]
    %v59 = vld [vmem:[#allocation2 + $0x30] sm:$0xff]
    %v60 = vld [vmem:[#allocation2 + $0x38] sm:$0xff]
    %v61 = vld [vmem:[#allocation2 + $0x40] sm:$0xff]
    %v62 = vld [vmem:[#allocation2 + $0x48] sm:$0xff]
    %v63 = vld [vmem:[#allocation2 + $0x50] sm:$0xff]
    %v64 = vld [vmem:[#allocation2 + $0x58] sm:$0xff]
    %v65 = vld [vmem:[#allocation2 + $0x60] sm:$0xff]
    %v66 = vld [vmem:[#allocation2 + $0x68] sm:$0xff]
    %v67 = vld [vmem:[#allocation2 + $0x70] sm:$0xff]
    %v68 = vld [vmem:[#allocation2 + $0x78] sm:$0xff]
    %v69 = vld [vmem:[#allocation2 + $0x80] sm:$0xff]
    %v70 = vld [vmem:[#allocation2 + $0x88] sm:$0xff]
    %v71 = vld [vmem:[#allocation2 + $0x90] sm:$0xff]
    %v72 = vld [vmem:[#allocation2 + $0x98] sm:$0xff]
    %v73 = vld [vmem:[#allocation2 + $0xa0] sm:$0xff]
    %v74 = vld [vmem:[#allocation2 + $0xa8] sm:$0xff]
    %v75 = vld [vmem:[#allocation2 + $0xb0] sm:$0xff]
    %v76 = vld [vmem:[#allocation2 + $0xb8] sm:$0xff]
    %v77 = vld [vmem:[#allocation2 + $0xc0] sm:$0xff]
    %v78 = vld [vmem:[#allocation2 + $0xc8] sm:$0xff]
    %v79 = vld [vmem:[#allocation2 + $0xd0] sm:$0xff]
    %v80 = vld [vmem:[#allocation2 + $0xd8] sm:$0xff]
    %v81 = vld [vmem:[#allocation2 + $0xe0] sm:$0xff]
    %v82 = vld [vmem:[#allocation2 + $0xe8] sm:$0xff]
    %v83 = vld [vmem:[#allocation2 + $0xf0] sm:$0xff]
    %v84 = vld [vmem:[#allocation2 + $0xf8] sm:$0xff]
    %v85 = vld [vmem:[#allocation2 + $0x100] sm:$0xff]
    %v86 = vld [vmem:[#allocation2 + $0x108] sm:$0xff]
    %v87 = vld [vmem:[#allocation2 + $0x110] sm:$0xff]
    %v88 = vld [vmem:[#allocation2 + $0x118] sm:$0xff]
    %v89 = vld [vmem:[#allocation2 + $0x120] sm:$0xff]
    %v90 = vld [vmem:[#allocation2 + $0x128] sm:$0xff]
    %v91 = vld [vmem:[#allocation2 + $0x130] sm:$0xff]
    %v92 = vld [vmem:[#allocation2 + $0x138] sm:$0xff]
    %v93 = vld [vmem:[#allocation2 + $0x140] sm:$0xff]
    %v94 = vld [vmem:[#allocation2 + $0x148] sm:$0xff]
    %v95 = vld [vmem:[#allocation2 + $0x150] sm:$0xff]
    %v96 = vld [vmem:[#allocation2 + $0x158] sm:$0xff]
    %v97 = vld [vmem:[#allocation2 + $0x160] sm:$0xff]
    %v98 = vld [vmem:[#allocation2 + $0x168] sm:$0xff]
    %v99 = vld [vmem:[#allocation2 + $0x170] sm:$0xff]
    %v100 = vld [vmem:[#allocation2 + $0x178] sm:$0xff]
    %v101 = vld [vmem:[#allocation2 + $0x180] sm:$0xff]
    %v102 = vld [vmem:[#allocation2 + $0x188] sm:$0xff]
    %v103 = vld [vmem:[#allocation2 + $0x190] sm:$0xff]
    %v104 = vld [vmem:[#allocation2 + $0x198] sm:$0xff]
    %v105 = vld [vmem:[#allocation2 + $0x1a0] sm:$0xff]
    %v106 = vld [vmem:[#allocation2 + $0x1a8] sm:$0xff]
    %v107 = vld [vmem:[#allocation2 + $0x1b0] sm:$0xff]
    %v108 = vld [vmem:[#allocation2 + $0x1b8] sm:$0xff]
    %v109 = vld [vmem:[#allocation2 + $0x1c0] sm:$0xff]
    %v110 = vld [vmem:[#allocation2 + $0x1c8] sm:$0xff]
    %v111 = vld [vmem:[#allocation2 + $0x1d0] sm:$0xff]
    %v112 = vld [vmem:[#allocation2 + $0x1d8] sm:$0xff]
    %v113 = vld [vmem:[#allocation2 + $0x1e0] sm:$0xff]
    %v114 = vld [vmem:[#allocation2 + $0x1e8] sm:$0xff]
    %v115 = vld [vmem:[#allocation2 + $0x1f0] sm:$0xff]
    %v116 = vld [vmem:[#allocation2 + $0x1f8] sm:$0xff]
    %v117 = vld [vmem:[#allocation2 + $0x200] sm:$0xff]
    %v118 = vld [vmem:[#allocation2 + $0x208] sm:$0xff]
    %v119 = vld [vmem:[#allocation2 + $0x210] sm:$0xff]
    %v120 = vld [vmem:[#allocation2 + $0x218] sm:$0xff]
    %v121 = vld [vmem:[#allocation2 + $0x220] sm:$0xff]
    %v122 = vld [vmem:[#allocation2 + $0x228] sm:$0xff]
    %v123 = vld [vmem:[#allocation2 + $0x230] sm:$0xff]
    %v124 = vld [vmem:[#allocation2 + $0x238] sm:$0xff]
    %v125 = vld [vmem:[#allocation2 + $0x240] sm:$0xff]
    %v126 = vld [vmem:[#allocation2 + $0x248] sm:$0xff]
    %v127 = vld [vmem:[#allocation2 + $0x250] sm:$0xff]
    %v128 = vld [vmem:[#allocation2 + $0x258] sm:$0xff]
    %v129 = vld [vmem:[#allocation2 + $0x260] sm:$0xff]
    %v130 = vld [vmem:[#allocation2 + $0x268] sm:$0xff]
    %v131 = vld [vmem:[#allocation2 + $0x270] sm:$0xff]
    %v132 = vld [vmem:[#allocation2 + $0x278] sm:$0xff]
    %v133 = vld [vmem:[#allocation2 + $0x280] sm:$0xff]
    %v134 = vld [vmem:[#allocation2 + $0x288] sm:$0xff]
    %v135 = vld [vmem:[#allocation2 + $0x290] sm:$0xff]
    %v136 = vld [vmem:[#allocation2 + $0x298] sm:$0xff]
    %v137 = vld [vmem:[#allocation2 + $0x2a0] sm:$0xff]
    %v138 = vld [vmem:[#allocation2 + $0x2a8] sm:$0xff]
    %v139 = vld [vmem:[#allocation2 + $0x2b0] sm:$0xff]
    %v140 = vld [vmem:[#allocation2 + $0x2b8] sm:$0xff]
    %v141 = vld [vmem:[#allocation2 + $0x2c0] sm:$0xff]
    %v142 = vld [vmem:[#allocation2 + $0x2c8] sm:$0xff]
    %v143 = vld [vmem:[#allocation2 + $0x2d0] sm:$0xff]
    %v144 = vld [vmem:[#allocation2 + $0x2d8] sm:$0xff]
    %v145 = vld [vmem:[#allocation2 + $0x2e0] sm:$0xff]
    %v146 = vld [vmem:[#allocation2 + $0x2e8] sm:$0xff]
    %v147 = vld [vmem:[#allocation2 + $0x2f0] sm:$0xff]
    %v148 = vld [vmem:[#allocation2 + $0x2f8] sm:$0xff]
    %v149 = vld [vmem:[#allocation2 + $0x300] sm:$0xff]
    %v150 = vld [vmem:[#allocation2 + $0x308] sm:$0xff]
    %v151 = vld [vmem:[#allocation2 + $0x310] sm:$0xff]
    %v152 = vld [vmem:[#allocation2 + $0x318] sm:$0xff]
    %v153 = vld [vmem:[#allocation2 + $0x320] sm:$0xff]
    %v154 = vld [vmem:[#allocation2 + $0x328] sm:$0xff]
    %v155 = vld [vmem:[#allocation2 + $0x330] sm:$0xff]
    %v156 = vld [vmem:[#allocation2 + $0x338] sm:$0xff]
    %v157 = vld [vmem:[#allocation2 + $0x340] sm:$0xff]
    %v158 = vld [vmem:[#allocation2 + $0x348] sm:$0xff]
    %v159 = vld [vmem:[#allocation2 + $0x350] sm:$0xff]
    %v160 = vld [vmem:[#allocation2 + $0x358] sm:$0xff]
    %v161 = vld [vmem:[#allocation2 + $0x360] sm:$0xff]
    %v162 = vld [vmem:[#allocation2 + $0x368] sm:$0xff]
    %v163 = vld [vmem:[#allocation2 + $0x370] sm:$0xff]
    %v164 = vld [vmem:[#allocation2 + $0x378] sm:$0xff]
    %v165 = vld [vmem:[#allocation2 + $0x380] sm:$0xff]
    %v166 = vld [vmem:[#allocation2 + $0x388] sm:$0xff]
    %v167 = vld [vmem:[#allocation2 + $0x390] sm:$0xff]
    %v168 = vld [vmem:[#allocation2 + $0x398] sm:$0xff]
    %v169 = vld [vmem:[#allocation2 + $0x3a0] sm:$0xff]
    %v170 = vld [vmem:[#allocation2 + $0x3a8] sm:$0xff]
    %v171 = vld [vmem:[#allocation2 + $0x3b0] sm:$0xff]
    %v172 = vld [vmem:[#allocation2 + $0x3b8] sm:$0xff]
    %v173 = vld [vmem:[#allocation2 + $0x3c0] sm:$0xff]
    %v174 = vld [vmem:[#allocation2 + $0x3c8] sm:$0xff]
    %v175 = vld [vmem:[#allocation2 + $0x3d0] sm:$0xff]
    %v176 = vld [vmem:[#allocation2 + $0x3d8] sm:$0xff]
    %v177 = vld [vmem:[#allocation2 + $0x3e0] sm:$0xff]
    %v178 = vld [vmem:[#allocation2 + $0x3e8] sm:$0xff]
    %v179 = vld [vmem:[#allocation2 + $0x3f0] sm:$0xff]
    %v180 = vld [vmem:[#allocation2 + $0x3f8] sm:$0xff]
    %v181 = vld [vmem:[%s2] sm:$0x3]
    %v183 = vperm.slane %v181, 0
    %v184 = vperm.slane %v181, 1
    %v207 = vunpack.c.l.b16 %v33
    %v208 = vunpack.c.h.b16 %v33
    %v209 = vunpack.c.l.b16 %v34
    %v210 = vunpack.c.h.b16 %v34
    %v211 = vunpack.c.l.b16 %v35
    %v212 = vunpack.c.h.b16 %v35
    %v213 = vunpack.c.l.b16 %v36
    %v214 = vunpack.c.h.b16 %v36
    %v215 = vunpack.c.l.b16 %v37
    %v216 = vunpack.c.h.b16 %v37
    %v217 = vunpack.c.l.b16 %v38
    %v218 = vunpack.c.h.b16 %v38
    %v219 = vunpack.c.l.b16 %v39
    %v220 = vunpack.c.h.b16 %v39
    %v221 = vunpack.c.l.b16 %v40
    %v222 = vunpack.c.h.b16 %v40
    %v223 = vunpack.c.l.b16 %v41
    %v224 = vunpack.c.h.b16 %v41
    %v225 = vunpack.c.l.b16 %v42
    %v226 = vunpack.c.h.b16 %v42
    %v227 = vunpack.c.l.b16 %v43
    %v228 = vunpack.c.h.b16 %v43
    %v229 = vunpack.c.l.b16 %v44
    %v230 = vunpack.c.h.b16 %v44
    %v231 = vunpack.c.l.b16 %v45
    %v232 = vunpack.c.h.b16 %v45
    %v233 = vunpack.c.l.b16 %v46
    %v234 = vunpack.c.h.b16 %v46
    %v235 = vunpack.c.l.b16 %v47
    %v236 = vunpack.c.h.b16 %v47
    %v237 = vunpack.c.l.b16 %v48
    %v238 = vunpack.c.h.b16 %v48
    %v239 = vunpack.c.l.b16 %v49
    %v240 = vunpack.c.h.b16 %v49
    %v241 = vunpack.c.l.b16 %v50
    %v242 = vunpack.c.h.b16 %v50
    %v243 = vunpack.c.l.b16 %v51
    %v244 = vunpack.c.h.b16 %v51
    %v245 = vunpack.c.l.b16 %v52
    %v246 = vunpack.c.h.b16 %v52
    %v247 = vpack.c.b16 %v215, %v207
    %v248 = vpack.c.b16 %v216, %v208
    %v249 = vpack.c.b16 %v217, %v209
    %v250 = vpack.c.b16 %v218, %v210
    %v251 = vpack.c.b16 %v219, %v211
    %v252 = vpack.c.b16 %v220, %v212
    %v253 = vpack.c.b16 %v221, %v213
    %v254 = vpack.c.b16 %v222, %v214
    %v255 = vpack.c.b16 %v231, %v223
    %v256 = vpack.c.b16 %v232, %v224
    %v257 = vpack.c.b16 %v233, %v225
    %v258 = vpack.c.b16 %v234, %v226
    %v259 = vpack.c.b16 %v235, %v227
    %v260 = vpack.c.b16 %v236, %v228
    %v261 = vpack.c.b16 %v237, %v229
    %v262 = vpack.c.b16 %v238, %v230
    %v263 = vpack.c.b16 %v239, %v239
    %v264 = vpack.c.b16 %v240, %v240
    %v265 = vpack.c.b16 %v241, %v241
    %v266 = vpack.c.b16 %v242, %v242
    %v267 = vpack.c.b16 %v243, %v243
    %v268 = vpack.c.b16 %v244, %v244
    %v269 = vpack.c.b16 %v245, %v245
    %v270 = vpack.c.b16 %v246, %v246
    %v423 = vunpack.c.l.b16 %v53
    %v424 = vunpack.c.h.b16 %v53
    %v425 = vunpack.c.l.b16 %v54
    %v426 = vunpack.c.h.b16 %v54
    %v427 = vunpack.c.l.b16 %v55
    %v428 = vunpack.c.h.b16 %v55
    %v429 = vunpack.c.l.b16 %v56
    %v430 = vunpack.c.h.b16 %v56
    %v431 = vunpack.c.l.b16 %v57
    %v432 = vunpack.c.h.b16 %v57
    %v433 = vunpack.c.l.b16 %v58
    %v434 = vunpack.c.h.b16 %v58
    %v435 = vunpack.c.l.b16 %v59
    %v436 = vunpack.c.h.b16 %v59
    %v437 = vunpack.c.l.b16 %v60
    %v438 = vunpack.c.h.b16 %v60
    %v439 = vunpack.c.l.b16 %v61
    %v440 = vunpack.c.h.b16 %v61
    %v441 = vunpack.c.l.b16 %v62
    %v442 = vunpack.c.h.b16 %v62
    %v443 = vunpack.c.l.b16 %v63
    %v444 = vunpack.c.h.b16 %v63
    %v445 = vunpack.c.l.b16 %v64
    %v446 = vunpack.c.h.b16 %v64
    %v447 = vunpack.c.l.b16 %v65
    %v448 = vunpack.c.h.b16 %v65
    %v449 = vunpack.c.l.b16 %v66
    %v450 = vunpack.c.h.b16 %v66
    %v451 = vunpack.c.l.b16 %v67
    %v452 = vunpack.c.h.b16 %v67
    %v453 = vunpack.c.l.b16 %v68
    %v454 = vunpack.c.h.b16 %v68
    %v455 = vunpack.c.l.b16 %v69
    %v456 = vunpack.c.h.b16 %v69
    %v457 = vunpack.c.l.b16 %v70
    %v458 = vunpack.c.h.b16 %v70
    %v459 = vunpack.c.l.b16 %v71
    %v460 = vunpack.c.h.b16 %v71
    %v461 = vunpack.c.l.b16 %v72
    %v462 = vunpack.c.h.b16 %v72
    %v463 = vunpack.c.l.b16 %v73
    %v464 = vunpack.c.h.b16 %v73
    %v465 = vunpack.c.l.b16 %v74
    %v466 = vunpack.c.h.b16 %v74
    %v467 = vunpack.c.l.b16 %v75
    %v468 = vunpack.c.h.b16 %v75
    %v469 = vunpack.c.l.b16 %v76
    %v470 = vunpack.c.h.b16 %v76
    %v471 = vunpack.c.l.b16 %v77
    %v472 = vunpack.c.h.b16 %v77
    %v473 = vunpack.c.l.b16 %v78
    %v474 = vunpack.c.h.b16 %v78
    %v475 = vunpack.c.l.b16 %v79
    %v476 = vunpack.c.h.b16 %v79
    %v477 = vunpack.c.l.b16 %v80
    %v478 = vunpack.c.h.b16 %v80
    %v479 = vunpack.c.l.b16 %v81
    %v480 = vunpack.c.h.b16 %v81
    %v481 = vunpack.c.l.b16 %v82
    %v482 = vunpack.c.h.b16 %v82
    %v483 = vunpack.c.l.b16 %v83
    %v484 = vunpack.c.h.b16 %v83
    %v485 = vunpack.c.l.b16 %v84
    %v486 = vunpack.c.h.b16 %v84
    %v487 = vunpack.c.l.b16 %v85
    %v488 = vunpack.c.h.b16 %v85
    %v489 = vunpack.c.l.b16 %v86
    %v490 = vunpack.c.h.b16 %v86
    %v491 = vunpack.c.l.b16 %v87
    %v492 = vunpack.c.h.b16 %v87
    %v493 = vunpack.c.l.b16 %v88
    %v494 = vunpack.c.h.b16 %v88
    %v495 = vunpack.c.l.b16 %v89
    %v496 = vunpack.c.h.b16 %v89
    %v497 = vunpack.c.l.b16 %v90
    %v498 = vunpack.c.h.b16 %v90
    %v499 = vunpack.c.l.b16 %v91
    %v500 = vunpack.c.h.b16 %v91
    %v501 = vunpack.c.l.b16 %v92
    %v502 = vunpack.c.h.b16 %v92
    %v503 = vunpack.c.l.b16 %v93
    %v504 = vunpack.c.h.b16 %v93
    %v505 = vunpack.c.l.b16 %v94
    %v506 = vunpack.c.h.b16 %v94
    %v507 = vunpack.c.l.b16 %v95
    %v508 = vunpack.c.h.b16 %v95
    %v509 = vunpack.c.l.b16 %v96
    %v510 = vunpack.c.h.b16 %v96
    %v511 = vunpack.c.l.b16 %v97
    %v512 = vunpack.c.h.b16 %v97
    %v513 = vunpack.c.l.b16 %v98
    %v514 = vunpack.c.h.b16 %v98
    %v515 = vunpack.c.l.b16 %v99
    %v516 = vunpack.c.h.b16 %v99
    %v517 = vunpack.c.l.b16 %v100
    %v518 = vunpack.c.h.b16 %v100
    %v519 = vunpack.c.l.b16 %v101
    %v520 = vunpack.c.h.b16 %v101
    %v521 = vunpack.c.l.b16 %v102
    %v522 = vunpack.c.h.b16 %v102
    %v523 = vunpack.c.l.b16 %v103
    %v524 = vunpack.c.h.b16 %v103
    %v525 = vunpack.c.l.b16 %v104
    %v526 = vunpack.c.h.b16 %v104
    %v527 = vunpack.c.l.b16 %v105
    %v528 = vunpack.c.h.b16 %v105
    %v529 = vunpack.c.l.b16 %v106
    %v530 = vunpack.c.h.b16 %v106
    %v531 = vunpack.c.l.b16 %v107
    %v532 = vunpack.c.h.b16 %v107
    %v533 = vunpack.c.l.b16 %v108
    %v534 = vunpack.c.h.b16 %v108
    %v535 = vunpack.c.l.b16 %v109
    %v536 = vunpack.c.h.b16 %v109
    %v537 = vunpack.c.l.b16 %v110
    %v538 = vunpack.c.h.b16 %v110
    %v539 = vunpack.c.l.b16 %v111
    %v540 = vunpack.c.h.b16 %v111
    %v541 = vunpack.c.l.b16 %v112
    %v542 = vunpack.c.h.b16 %v112
    %v543 = vunpack.c.l.b16 %v113
    %v544 = vunpack.c.h.b16 %v113
    %v545 = vunpack.c.l.b16 %v114
    %v546 = vunpack.c.h.b16 %v114
    %v547 = vunpack.c.l.b16 %v115
    %v548 = vunpack.c.h.b16 %v115
    %v549 = vunpack.c.l.b16 %v116
    %v550 = vunpack.c.h.b16 %v116
    %v551 = vunpack.c.l.b16 %v117
    %v552 = vunpack.c.h.b16 %v117
    %v553 = vunpack.c.l.b16 %v118
    %v554 = vunpack.c.h.b16 %v118
    %v555 = vunpack.c.l.b16 %v119
    %v556 = vunpack.c.h.b16 %v119
    %v557 = vunpack.c.l.b16 %v120
    %v558 = vunpack.c.h.b16 %v120
    %v559 = vunpack.c.l.b16 %v121
    %v560 = vunpack.c.h.b16 %v121
    %v561 = vunpack.c.l.b16 %v122
    %v562 = vunpack.c.h.b16 %v122
    %v563 = vunpack.c.l.b16 %v123
    %v564 = vunpack.c.h.b16 %v123
    %v565 = vunpack.c.l.b16 %v124
    %v566 = vunpack.c.h.b16 %v124
    %v567 = vunpack.c.l.b16 %v125
    %v568 = vunpack.c.h.b16 %v125
    %v569 = vunpack.c.l.b16 %v126
    %v570 = vunpack.c.h.b16 %v126
    %v571 = vunpack.c.l.b16 %v127
    %v572 = vunpack.c.h.b16 %v127
    %v573 = vunpack.c.l.b16 %v128
    %v574 = vunpack.c.h.b16 %v128
    %v575 = vunpack.c.l.b16 %v129
    %v576 = vunpack.c.h.b16 %v129
    %v577 = vunpack.c.l.b16 %v130
    %v578 = vunpack.c.h.b16 %v130
    %v579 = vunpack.c.l.b16 %v131
    %v580 = vunpack.c.h.b16 %v131
    %v581 = vunpack.c.l.b16 %v132
    %v582 = vunpack.c.h.b16 %v132
    %v583 = vunpack.c.l.b16 %v133
    %v584 = vunpack.c.h.b16 %v133
    %v585 = vunpack.c.l.b16 %v134
    %v586 = vunpack.c.h.b16 %v134
    %v587 = vunpack.c.l.b16 %v135
    %v588 = vunpack.c.h.b16 %v135
    %v589 = vunpack.c.l.b16 %v136
    %v590 = vunpack.c.h.b16 %v136
    %v591 = vunpack.c.l.b16 %v137
    %v592 = vunpack.c.h.b16 %v137
    %v593 = vunpack.c.l.b16 %v138
    %v594 = vunpack.c.h.b16 %v138
    %v595 = vunpack.c.l.b16 %v139
    %v596 = vunpack.c.h.b16 %v139
    %v597 = vunpack.c.l.b16 %v140
    %v598 = vunpack.c.h.b16 %v140
    %v599 = vunpack.c.l.b16 %v141
    %v600 = vunpack.c.h.b16 %v141
    %v601 = vunpack.c.l.b16 %v142
    %v602 = vunpack.c.h.b16 %v142
    %v603 = vunpack.c.l.b16 %v143
    %v604 = vunpack.c.h.b16 %v143
    %v605 = vunpack.c.l.b16 %v144
    %v606 = vunpack.c.h.b16 %v144
    %v607 = vunpack.c.l.b16 %v145
    %v608 = vunpack.c.h.b16 %v145
    %v609 = vunpack.c.l.b16 %v146
    %v610 = vunpack.c.h.b16 %v146
    %v611 = vunpack.c.l.b16 %v147
    %v612 = vunpack.c.h.b16 %v147
    %v613 = vunpack.c.l.b16 %v148
    %v614 = vunpack.c.h.b16 %v148
    %v615 = vunpack.c.l.b16 %v149
    %v616 = vunpack.c.h.b16 %v149
    %v617 = vunpack.c.l.b16 %v150
    %v618 = vunpack.c.h.b16 %v150
    %v619 = vunpack.c.l.b16 %v151
    %v620 = vunpack.c.h.b16 %v151
    %v621 = vunpack.c.l.b16 %v152
    %v622 = vunpack.c.h.b16 %v152
    %v623 = vunpack.c.l.b16 %v153
    %v624 = vunpack.c.h.b16 %v153
    %v625 = vunpack.c.l.b16 %v154
    %v626 = vunpack.c.h.b16 %v154
    %v627 = vunpack.c.l.b16 %v155
    %v628 = vunpack.c.h.b16 %v155
    %v629 = vunpack.c.l.b16 %v156
    %v630 = vunpack.c.h.b16 %v156
    %v631 = vunpack.c.l.b16 %v157
    %v632 = vunpack.c.h.b16 %v157
    %v633 = vunpack.c.l.b16 %v158
    %v634 = vunpack.c.h.b16 %v158
    %v635 = vunpack.c.l.b16 %v159
    %v636 = vunpack.c.h.b16 %v159
    %v637 = vunpack.c.l.b16 %v160
    %v638 = vunpack.c.h.b16 %v160
    %v639 = vunpack.c.l.b16 %v161
    %v640 = vunpack.c.h.b16 %v161
    %v641 = vunpack.c.l.b16 %v162
    %v642 = vunpack.c.h.b16 %v162
    %v643 = vunpack.c.l.b16 %v163
    %v644 = vunpack.c.h.b16 %v163
    %v645 = vunpack.c.l.b16 %v164
    %v646 = vunpack.c.h.b16 %v164
    %v647 = vunpack.c.l.b16 %v165
    %v648 = vunpack.c.h.b16 %v165
    %v649 = vunpack.c.l.b16 %v166
    %v650 = vunpack.c.h.b16 %v166
    %v651 = vunpack.c.l.b16 %v167
    %v652 = vunpack.c.h.b16 %v167
    %v653 = vunpack.c.l.b16 %v168
    %v654 = vunpack.c.h.b16 %v168
    %v655 = vunpack.c.l.b16 %v169
    %v656 = vunpack.c.h.b16 %v169
    %v657 = vunpack.c.l.b16 %v170
    %v658 = vunpack.c.h.b16 %v170
    %v659 = vunpack.c.l.b16 %v171
    %v660 = vunpack.c.h.b16 %v171
    %v661 = vunpack.c.l.b16 %v172
    %v662 = vunpack.c.h.b16 %v172
    %v663 = vunpack.c.l.b16 %v173
    %v664 = vunpack.c.h.b16 %v173
    %v665 = vunpack.c.l.b16 %v174
    %v666 = vunpack.c.h.b16 %v174
    %v667 = vunpack.c.l.b16 %v175
    %v668 = vunpack.c.h.b16 %v175
    %v669 = vunpack.c.l.b16 %v176
    %v670 = vunpack.c.h.b16 %v176
    %v671 = vunpack.c.l.b16 %v177
    %v672 = vunpack.c.h.b16 %v177
    %v673 = vunpack.c.l.b16 %v178
    %v674 = vunpack.c.h.b16 %v178
    %v675 = vunpack.c.l.b16 %v179
    %v676 = vunpack.c.h.b16 %v179
    %v677 = vunpack.c.l.b16 %v180
    %v678 = vunpack.c.h.b16 %v180
    %v679 = vpack.c.b16 %v425, %v423
    %v680 = vpack.c.b16 %v426, %v424
    %v681 = vpack.c.b16 %v429, %v427
    %v682 = vpack.c.b16 %v430, %v428
    %v683 = vpack.c.b16 %v433, %v431
    %v684 = vpack.c.b16 %v434, %v432
    %v685 = vpack.c.b16 %v437, %v435
    %v686 = vpack.c.b16 %v438, %v436
    %v687 = vpack.c.b16 %v441, %v439
    %v688 = vpack.c.b16 %v442, %v440
    %v689 = vpack.c.b16 %v445, %v443
    %v690 = vpack.c.b16 %v446, %v444
    %v691 = vpack.c.b16 %v449, %v447
    %v692 = vpack.c.b16 %v450, %v448
    %v693 = vpack.c.b16 %v453, %v451
    %v694 = vpack.c.b16 %v454, %v452
    %v695 = vpack.c.b16 %v457, %v455
    %v696 = vpack.c.b16 %v458, %v456
    %v697 = vpack.c.b16 %v461, %v459
    %v698 = vpack.c.b16 %v462, %v460
    %v699 = vpack.c.b16 %v465, %v463
    %v700 = vpack.c.b16 %v466, %v464
    %v701 = vpack.c.b16 %v469, %v467
    %v702 = vpack.c.b16 %v470, %v468
    %v703 = vpack.c.b16 %v473, %v471
    %v704 = vpack.c.b16 %v474, %v472
    %v705 = vpack.c.b16 %v477, %v475
    %v706 = vpack.c.b16 %v478, %v476
    %v707 = vpack.c.b16 %v481, %v479
    %v708 = vpack.c.b16 %v482, %v480
    %v709 = vpack.c.b16 %v485, %v483
    %v710 = vpack.c.b16 %v486, %v484
    %v711 = vpack.c.b16 %v489, %v487
    %v712 = vpack.c.b16 %v490, %v488
    %v713 = vpack.c.b16 %v493, %v491
    %v714 = vpack.c.b16 %v494, %v492
    %v715 = vpack.c.b16 %v497, %v495
    %v716 = vpack.c.b16 %v498, %v496
    %v717 = vpack.c.b16 %v501, %v499
    %v718 = vpack.c.b16 %v502, %v500
    %v719 = vpack.c.b16 %v505, %v503
    %v720 = vpack.c.b16 %v506, %v504
    %v721 = vpack.c.b16 %v509, %v507
    %v722 = vpack.c.b16 %v510, %v508
    %v723 = vpack.c.b16 %v513, %v511
    %v724 = vpack.c.b16 %v514, %v512
    %v725 = vpack.c.b16 %v517, %v515
    %v726 = vpack.c.b16 %v518, %v516
    %v727 = vpack.c.b16 %v521, %v519
    %v728 = vpack.c.b16 %v522, %v520
    %v729 = vpack.c.b16 %v525, %v523
    %v730 = vpack.c.b16 %v526, %v524
    %v731 = vpack.c.b16 %v529, %v527
    %v732 = vpack.c.b16 %v530, %v528
    %v733 = vpack.c.b16 %v533, %v531
    %v734 = vpack.c.b16 %v534, %v532
    %v735 = vpack.c.b16 %v537, %v535
    %v736 = vpack.c.b16 %v538, %v536
    %v737 = vpack.c.b16 %v541, %v539
    %v738 = vpack.c.b16 %v542, %v540
    %v739 = vpack.c.b16 %v545, %v543
    %v740 = vpack.c.b16 %v546, %v544
    %v741 = vpack.c.b16 %v549, %v547
    %v742 = vpack.c.b16 %v550, %v548
    %v743 = vpack.c.b16 %v553, %v551
    %v744 = vpack.c.b16 %v554, %v552
    %v745 = vpack.c.b16 %v557, %v555
    %v746 = vpack.c.b16 %v558, %v556
    %v747 = vpack.c.b16 %v561, %v559
    %v748 = vpack.c.b16 %v562, %v560
    %v749 = vpack.c.b16 %v565, %v563
    %v750 = vpack.c.b16 %v566, %v564
    %v751 = vpack.c.b16 %v569, %v567
    %v752 = vpack.c.b16 %v570, %v568
    %v753 = vpack.c.b16 %v573, %v571
    %v754 = vpack.c.b16 %v574, %v572
    %v755 = vpack.c.b16 %v577, %v575
    %v756 = vpack.c.b16 %v578, %v576
    %v757 = vpack.c.b16 %v581, %v579
    %v758 = vpack.c.b16 %v582, %v580
    %v759 = vpack.c.b16 %v585, %v583
    %v760 = vpack.c.b16 %v586, %v584
    %v761 = vpack.c.b16 %v589, %v587
    %v762 = vpack.c.b16 %v590, %v588
    %v763 = vpack.c.b16 %v593, %v591
    %v764 = vpack.c.b16 %v594, %v592
    %v765 = vpack.c.b16 %v597, %v595
    %v766 = vpack.c.b16 %v598, %v596
    %v767 = vpack.c.b16 %v601, %v599
    %v768 = vpack.c.b16 %v602, %v600
    %v769 = vpack.c.b16 %v605, %v603
    %v770 = vpack.c.b16 %v606, %v604
    %v771 = vpack.c.b16 %v609, %v607
    %v772 = vpack.c.b16 %v610, %v608
    %v773 = vpack.c.b16 %v613, %v611
    %v774 = vpack.c.b16 %v614, %v612
    %v775 = vpack.c.b16 %v617, %v615
    %v776 = vpack.c.b16 %v618, %v616
    %v777 = vpack.c.b16 %v621, %v619
    %v778 = vpack.c.b16 %v622, %v620
    %v779 = vpack.c.b16 %v625, %v623
    %v780 = vpack.c.b16 %v626, %v624
    %v781 = vpack.c.b16 %v629, %v627
    %v782 = vpack.c.b16 %v630, %v628
    %v783 = vpack.c.b16 %v633, %v631
    %v784 = vpack.c.b16 %v634, %v632
    %v785 = vpack.c.b16 %v637, %v635
    %v786 = vpack.c.b16 %v638, %v636
    %v787 = vpack.c.b16 %v641, %v639
    %v788 = vpack.c.b16 %v642, %v640
    %v789 = vpack.c.b16 %v645, %v643
    %v790 = vpack.c.b16 %v646, %v644
    %v791 = vpack.c.b16 %v649, %v647
    %v792 = vpack.c.b16 %v650, %v648
    %v793 = vpack.c.b16 %v653, %v651
    %v794 = vpack.c.b16 %v654, %v652
    %v795 = vpack.c.b16 %v657, %v655
    %v796 = vpack.c.b16 %v658, %v656
    %v797 = vpack.c.b16 %v661, %v659
    %v798 = vpack.c.b16 %v662, %v660
    %v799 = vpack.c.b16 %v665, %v663
    %v800 = vpack.c.b16 %v666, %v664
    %v801 = vpack.c.b16 %v669, %v667
    %v802 = vpack.c.b16 %v670, %v668
    %v803 = vpack.c.b16 %v673, %v671
    %v804 = vpack.c.b16 %v674, %v672
    %v805 = vpack.c.b16 %v677, %v675
    %v806 = vpack.c.b16 %v678, %v676
    %935 = vmatpush.bf16.msra.mxu0 %v693
    %936 = vmatpush.bf16.msra.mxu0 %v691
    %937 = vmatpush.bf16.msra.mxu0 %v689
    %938 = vmatpush.bf16.msra.mxu0 %v687
    %939 = vmatpush.bf16.msra.mxu0 %v685
    %940 = vmatpush.bf16.msra.mxu0 %v683
    %941 = vmatpush.bf16.msra.mxu0 %v681
    %942 = vmatpush.bf16.msra.mxu0 %v679
    %943 = vmatmul.bf16.gmra.mxu0 %v247
    %v944 = vpop.f32.mrf.mxu0
    %v945 = vadd.f32 %v183, %v944
    %v946 = vpop.f32.mrf.mxu0
    %v947 = vadd.f32 %v183, %v946
    %948 = vmatmul.bf16.gmra.mxu0 %v255
    %v949 = vpop.f32.mrf.mxu0
    %v950 = vadd.f32 %v183, %v949
    %v951 = vpop.f32.mrf.mxu0
    %v952 = vadd.f32 %v183, %v951
    %953 = vmatmul.bf16.gmra.mxu0 %v263
    %v954 = vpop.f32.mrf.mxu0
    %v955 = vadd.f32 %v183, %v954
    %v956 = vpop.f32.mrf.mxu0
    %957 = vdwg.mxu0
    %958 = vmatpush.bf16.msra.mxu0 %v709
    %959 = vmatpush.bf16.msra.mxu0 %v707
    %960 = vmatpush.bf16.msra.mxu0 %v705
    %961 = vmatpush.bf16.msra.mxu0 %v703
    %962 = vmatpush.bf16.msra.mxu0 %v701
    %963 = vmatpush.bf16.msra.mxu0 %v699
    %964 = vmatpush.bf16.msra.mxu0 %v697
    %965 = vmatpush.bf16.msra.mxu0 %v695
    %966 = vmatmul.bf16.gmra.mxu0 %v248
    %v967 = vpop.f32.mrf.mxu0
    %v968 = vadd.f32 %v945, %v967
    %v969 = vpop.f32.mrf.mxu0
    %v970 = vadd.f32 %v947, %v969
    %971 = vmatmul.bf16.gmra.mxu0 %v256
    %v972 = vpop.f32.mrf.mxu0
    %v973 = vadd.f32 %v950, %v972
    %v974 = vpop.f32.mrf.mxu0
    %v975 = vadd.f32 %v952, %v974
    %976 = vmatmul.bf16.gmra.mxu0 %v264
    %v977 = vpop.f32.mrf.mxu0
    %v978 = vadd.f32 %v955, %v977
    %v979 = vpop.f32.mrf.mxu0
    %980 = vdwg.mxu0
    %981 = vmatpush.bf16.msra.mxu0 %v725
    %982 = vmatpush.bf16.msra.mxu0 %v723
    %983 = vmatpush.bf16.msra.mxu0 %v721
    %984 = vmatpush.bf16.msra.mxu0 %v719
    %985 = vmatpush.bf16.msra.mxu0 %v717
    %986 = vmatpush.bf16.msra.mxu0 %v715
    %987 = vmatpush.bf16.msra.mxu0 %v713
    %988 = vmatpush.bf16.msra.mxu0 %v711
    %989 = vmatmul.bf16.gmra.mxu0 %v249
    %v990 = vpop.f32.mrf.mxu0
    %v991 = vadd.f32 %v968, %v990
    %v992 = vpop.f32.mrf.mxu0
    %v993 = vadd.f32 %v970, %v992
    %994 = vmatmul.bf16.gmra.mxu0 %v257
    %v995 = vpop.f32.mrf.mxu0
    %v996 = vadd.f32 %v973, %v995
    %v997 = vpop.f32.mrf.mxu0
    %v998 = vadd.f32 %v975, %v997
    %999 = vmatmul.bf16.gmra.mxu0 %v265
    %v1000 = vpop.f32.mrf.mxu0
    %v1001 = vadd.f32 %v978, %v1000
    %v1002 = vpop.f32.mrf.mxu0
    %1003 = vdwg.mxu0
    %1004 = vmatpush.bf16.msra.mxu0 %v741
    %1005 = vmatpush.bf16.msra.mxu0 %v739
    %1006 = vmatpush.bf16.msra.mxu0 %v737
    %1007 = vmatpush.bf16.msra.mxu0 %v735
    %1008 = vmatpush.bf16.msra.mxu0 %v733
    %1009 = vmatpush.bf16.msra.mxu0 %v731
    %1010 = vmatpush.bf16.msra.mxu0 %v729
    %1011 = vmatpush.bf16.msra.mxu0 %v727
    %1012 = vmatmul.bf16.gmra.mxu0 %v250
    %v1013 = vpop.f32.mrf.mxu0
    %v1014 = vadd.f32 %v991, %v1013
    %v1015 = vpop.f32.mrf.mxu0
    %v1016 = vadd.f32 %v993, %v1015
    %1017 = vmatmul.bf16.gmra.mxu0 %v258
    %v1018 = vpop.f32.mrf.mxu0
    %v1019 = vadd.f32 %v996, %v1018
    %v1020 = vpop.f32.mrf.mxu0
    %v1021 = vadd.f32 %v998, %v1020
    %1022 = vmatmul.bf16.gmra.mxu0 %v266
    %v1023 = vpop.f32.mrf.mxu0
    %v1024 = vadd.f32 %v1001, %v1023
    %v1025 = vpop.f32.mrf.mxu0
    %1026 = vdwg.mxu0
    %1027 = vmatpush.bf16.msra.mxu0 %v757
    %1028 = vmatpush.bf16.msra.mxu0 %v755
    %1029 = vmatpush.bf16.msra.mxu0 %v753
    %1030 = vmatpush.bf16.msra.mxu0 %v751
    %1031 = vmatpush.bf16.msra.mxu0 %v749
    %1032 = vmatpush.bf16.msra.mxu0 %v747
    %1033 = vmatpush.bf16.msra.mxu0 %v745
    %1034 = vmatpush.bf16.msra.mxu0 %v743
    %1035 = vmatmul.bf16.gmra.mxu0 %v251
    %v1036 = vpop.f32.mrf.mxu0
    %v1037 = vadd.f32 %v1014, %v1036
    %v1038 = vpop.f32.mrf.mxu0
    %v1039 = vadd.f32 %v1016, %v1038
    %1040 = vmatmul.bf16.gmra.mxu0 %v259
    %v1041 = vpop.f32.mrf.mxu0
    %v1042 = vadd.f32 %v1019, %v1041
    %v1043 = vpop.f32.mrf.mxu0
    %v1044 = vadd.f32 %v1021, %v1043
    %1045 = vmatmul.bf16.gmra.mxu0 %v267
    %v1046 = vpop.f32.mrf.mxu0
    %v1047 = vadd.f32 %v1024, %v1046
    %v1048 = vpop.f32.mrf.mxu0
    %1049 = vdwg.mxu0
    %1050 = vmatpush.bf16.msra.mxu0 %v773
    %1051 = vmatpush.bf16.msra.mxu0 %v771
    %1052 = vmatpush.bf16.msra.mxu0 %v769
    %1053 = vmatpush.bf16.msra.mxu0 %v767
    %1054 = vmatpush.bf16.msra.mxu0 %v765
    %1055 = vmatpush.bf16.msra.mxu0 %v763
    %1056 = vmatpush.bf16.msra.mxu0 %v761
    %1057 = vmatpush.bf16.msra.mxu0 %v759
    %1058 = vmatmul.bf16.gmra.mxu0 %v252
    %v1059 = vpop.f32.mrf.mxu0
    %v1060 = vadd.f32 %v1037, %v1059
    %v1061 = vpop.f32.mrf.mxu0
    %v1062 = vadd.f32 %v1039, %v1061
    %1063 = vmatmul.bf16.gmra.mxu0 %v260
    %v1064 = vpop.f32.mrf.mxu0
    %v1065 = vadd.f32 %v1042, %v1064
    %v1066 = vpop.f32.mrf.mxu0
    %v1067 = vadd.f32 %v1044, %v1066
    %1068 = vmatmul.bf16.gmra.mxu0 %v268
    %v1069 = vpop.f32.mrf.mxu0
    %v1070 = vadd.f32 %v1047, %v1069
    %v1071 = vpop.f32.mrf.mxu0
    %1072 = vdwg.mxu0
    %1073 = vmatpush.bf16.msra.mxu0 %v789
    %1074 = vmatpush.bf16.msra.mxu0 %v787
    %1075 = vmatpush.bf16.msra.mxu0 %v785
    %1076 = vmatpush.bf16.msra.mxu0 %v783
    %1077 = vmatpush.bf16.msra.mxu0 %v781
    %1078 = vmatpush.bf16.msra.mxu0 %v779
    %1079 = vmatpush.bf16.msra.mxu0 %v777
    %1080 = vmatpush.bf16.msra.mxu0 %v775
    %1081 = vmatmul.bf16.gmra.mxu0 %v253
    %v1082 = vpop.f32.mrf.mxu0
    %v1083 = vadd.f32 %v1060, %v1082
    %v1084 = vpop.f32.mrf.mxu0
    %v1085 = vadd.f32 %v1062, %v1084
    %1086 = vmatmul.bf16.gmra.mxu0 %v261
    %v1087 = vpop.f32.mrf.mxu0
    %v1088 = vadd.f32 %v1065, %v1087
    %v1089 = vpop.f32.mrf.mxu0
    %v1090 = vadd.f32 %v1067, %v1089
    %1091 = vmatmul.bf16.gmra.mxu0 %v269
    %v1092 = vpop.f32.mrf.mxu0
    %v1093 = vadd.f32 %v1070, %v1092
    %v1094 = vpop.f32.mrf.mxu0
    %1095 = vdwg.mxu0
    %1096 = vmatpush.bf16.msra.mxu0 %v805
    %1097 = vmatpush.bf16.msra.mxu0 %v803
    %1098 = vmatpush.bf16.msra.mxu0 %v801
    %1099 = vmatpush.bf16.msra.mxu0 %v799
    %1100 = vmatpush.bf16.msra.mxu0 %v797
    %1101 = vmatpush.bf16.msra.mxu0 %v795
    %1102 = vmatpush.bf16.msra.mxu0 %v793
    %1103 = vmatpush.bf16.msra.mxu0 %v791
    %1104 = vmatmul.bf16.gmra.mxu0 %v254
    %v1105 = vpop.f32.mrf.mxu0
    %v1106 = vadd.f32 %v1083, %v1105
    %v1107 = vpop.f32.mrf.mxu0
    %v1108 = vadd.f32 %v1085, %v1107
    %1109 = vmatmul.bf16.gmra.mxu0 %v262
    %v1110 = vpop.f32.mrf.mxu0
    %v1111 = vadd.f32 %v1088, %v1110
    %v1112 = vpop.f32.mrf.mxu0
    %v1113 = vadd.f32 %v1090, %v1112
    %1114 = vmatmul.bf16.gmra.mxu0 %v270
    %v1115 = vpop.f32.mrf.mxu0
    %v1116 = vadd.f32 %v1093, %v1115
    %v1117 = vpop.f32.mrf.mxu0
    %1118 = vdwg.mxu0
    %1119 = vmatpush.bf16.msra.mxu0 %v694
    %1120 = vmatpush.bf16.msra.mxu0 %v692
    %1121 = vmatpush.bf16.msra.mxu0 %v690
    %1122 = vmatpush.bf16.msra.mxu0 %v688
    %1123 = vmatpush.bf16.msra.mxu0 %v686
    %1124 = vmatpush.bf16.msra.mxu0 %v684
    %1125 = vmatpush.bf16.msra.mxu0 %v682
    %1126 = vmatpush.bf16.msra.mxu0 %v680
    %1127 = vmatmul.bf16.gmra.mxu0 %v247
    %v1128 = vpop.f32.mrf.mxu0
    %v1129 = vadd.f32 %v184, %v1128
    %v1130 = vpop.f32.mrf.mxu0
    %v1131 = vadd.f32 %v184, %v1130
    %1132 = vmatmul.bf16.gmra.mxu0 %v255
    %v1133 = vpop.f32.mrf.mxu0
    %v1134 = vadd.f32 %v184, %v1133
    %v1135 = vpop.f32.mrf.mxu0
    %v1136 = vadd.f32 %v184, %v1135
    %1137 = vmatmul.bf16.gmra.mxu0 %v263
    %v1138 = vpop.f32.mrf.mxu0
    %v1139 = vadd.f32 %v184, %v1138
    %v1140 = vpop.f32.mrf.mxu0
    %1141 = vdwg.mxu0
    %1142 = vmatpush.bf16.msra.mxu0 %v710
    %1143 = vmatpush.bf16.msra.mxu0 %v708
    %1144 = vmatpush.bf16.msra.mxu0 %v706
    %1145 = vmatpush.bf16.msra.mxu0 %v704
    %1146 = vmatpush.bf16.msra.mxu0 %v702
    %1147 = vmatpush.bf16.msra.mxu0 %v700
    %1148 = vmatpush.bf16.msra.mxu0 %v698
    %1149 = vmatpush.bf16.msra.mxu0 %v696
    %1150 = vmatmul.bf16.gmra.mxu0 %v248
    %v1151 = vpop.f32.mrf.mxu0
    %v1152 = vadd.f32 %v1129, %v1151
    %v1153 = vpop.f32.mrf.mxu0
    %v1154 = vadd.f32 %v1131, %v1153
    %1155 = vmatmul.bf16.gmra.mxu0 %v256
    %v1156 = vpop.f32.mrf.mxu0
    %v1157 = vadd.f32 %v1134, %v1156
    %v1158 = vpop.f32.mrf.mxu0
    %v1159 = vadd.f32 %v1136, %v1158
    %1160 = vmatmul.bf16.gmra.mxu0 %v264
    %v1161 = vpop.f32.mrf.mxu0
    %v1162 = vadd.f32 %v1139, %v1161
    %v1163 = vpop.f32.mrf.mxu0
    %1164 = vdwg.mxu0
    %1165 = vmatpush.bf16.msra.mxu0 %v726
    %1166 = vmatpush.bf16.msra.mxu0 %v724
    %1167 = vmatpush.bf16.msra.mxu0 %v722
    %1168 = vmatpush.bf16.msra.mxu0 %v720
    %1169 = vmatpush.bf16.msra.mxu0 %v718
    %1170 = vmatpush.bf16.msra.mxu0 %v716
    %1171 = vmatpush.bf16.msra.mxu0 %v714
    %1172 = vmatpush.bf16.msra.mxu0 %v712
    %1173 = vmatmul.bf16.gmra.mxu0 %v249
    %v1174 = vpop.f32.mrf.mxu0
    %v1175 = vadd.f32 %v1152, %v1174
    %v1176 = vpop.f32.mrf.mxu0
    %v1177 = vadd.f32 %v1154, %v1176
    %1178 = vmatmul.bf16.gmra.mxu0 %v257
    %v1179 = vpop.f32.mrf.mxu0
    %v1180 = vadd.f32 %v1157, %v1179
    %v1181 = vpop.f32.mrf.mxu0
    %v1182 = vadd.f32 %v1159, %v1181
    %1183 = vmatmul.bf16.gmra.mxu0 %v265
    %v1184 = vpop.f32.mrf.mxu0
    %v1185 = vadd.f32 %v1162, %v1184
    %v1186 = vpop.f32.mrf.mxu0
    %1187 = vdwg.mxu0
    %1188 = vmatpush.bf16.msra.mxu0 %v742
    %1189 = vmatpush.bf16.msra.mxu0 %v740
    %1190 = vmatpush.bf16.msra.mxu0 %v738
    %1191 = vmatpush.bf16.msra.mxu0 %v736
    %1192 = vmatpush.bf16.msra.mxu0 %v734
    %1193 = vmatpush.bf16.msra.mxu0 %v732
    %1194 = vmatpush.bf16.msra.mxu0 %v730
    %1195 = vmatpush.bf16.msra.mxu0 %v728
    %1196 = vmatmul.bf16.gmra.mxu0 %v250
    %v1197 = vpop.f32.mrf.mxu0
    %v1198 = vadd.f32 %v1175, %v1197
    %v1199 = vpop.f32.mrf.mxu0
    %v1200 = vadd.f32 %v1177, %v1199
    %1201 = vmatmul.bf16.gmra.mxu0 %v258
    %v1202 = vpop.f32.mrf.mxu0
    %v1203 = vadd.f32 %v1180, %v1202
    %v1204 = vpop.f32.mrf.mxu0
    %v1205 = vadd.f32 %v1182, %v1204
    %1206 = vmatmul.bf16.gmra.mxu0 %v266
    %v1207 = vpop.f32.mrf.mxu0
    %v1208 = vadd.f32 %v1185, %v1207
    %v1209 = vpop.f32.mrf.mxu0
    %1210 = vdwg.mxu0
    %1211 = vmatpush.bf16.msra.mxu0 %v758
    %1212 = vmatpush.bf16.msra.mxu0 %v756
    %1213 = vmatpush.bf16.msra.mxu0 %v754
    %1214 = vmatpush.bf16.msra.mxu0 %v752
    %1215 = vmatpush.bf16.msra.mxu0 %v750
    %1216 = vmatpush.bf16.msra.mxu0 %v748
    %1217 = vmatpush.bf16.msra.mxu0 %v746
    %1218 = vmatpush.bf16.msra.mxu0 %v744
    %1219 = vmatmul.bf16.gmra.mxu0 %v251
    %v1220 = vpop.f32.mrf.mxu0
    %v1221 = vadd.f32 %v1198, %v1220
    %v1222 = vpop.f32.mrf.mxu0
    %v1223 = vadd.f32 %v1200, %v1222
    %1224 = vmatmul.bf16.gmra.mxu0 %v259
    %v1225 = vpop.f32.mrf.mxu0
    %v1226 = vadd.f32 %v1203, %v1225
    %v1227 = vpop.f32.mrf.mxu0
    %v1228 = vadd.f32 %v1205, %v1227
    %1229 = vmatmul.bf16.gmra.mxu0 %v267
    %v1230 = vpop.f32.mrf.mxu0
    %v1231 = vadd.f32 %v1208, %v1230
    %v1232 = vpop.f32.mrf.mxu0
    %1233 = vdwg.mxu0
    %1234 = vmatpush.bf16.msra.mxu0 %v774
    %1235 = vmatpush.bf16.msra.mxu0 %v772
    %1236 = vmatpush.bf16.msra.mxu0 %v770
    %1237 = vmatpush.bf16.msra.mxu0 %v768
    %1238 = vmatpush.bf16.msra.mxu0 %v766
    %1239 = vmatpush.bf16.msra.mxu0 %v764
    %1240 = vmatpush.bf16.msra.mxu0 %v762
    %1241 = vmatpush.bf16.msra.mxu0 %v760
    %1242 = vmatmul.bf16.gmra.mxu0 %v252
    %v1243 = vpop.f32.mrf.mxu0
    %v1244 = vadd.f32 %v1221, %v1243
    %v1245 = vpop.f32.mrf.mxu0
    %v1246 = vadd.f32 %v1223, %v1245
    %1247 = vmatmul.bf16.gmra.mxu0 %v260
    %v1248 = vpop.f32.mrf.mxu0
    %v1249 = vadd.f32 %v1226, %v1248
    %v1250 = vpop.f32.mrf.mxu0
    %v1251 = vadd.f32 %v1228, %v1250
    %1252 = vmatmul.bf16.gmra.mxu0 %v268
    %v1253 = vpop.f32.mrf.mxu0
    %v1254 = vadd.f32 %v1231, %v1253
    %v1255 = vpop.f32.mrf.mxu0
    %1256 = vdwg.mxu0
    %1257 = vmatpush.bf16.msra.mxu0 %v790
    %1258 = vmatpush.bf16.msra.mxu0 %v788
    %1259 = vmatpush.bf16.msra.mxu0 %v786
    %1260 = vmatpush.bf16.msra.mxu0 %v784
    %1261 = vmatpush.bf16.msra.mxu0 %v782
    %1262 = vmatpush.bf16.msra.mxu0 %v780
    %1263 = vmatpush.bf16.msra.mxu0 %v778
    %1264 = vmatpush.bf16.msra.mxu0 %v776
    %1265 = vmatmul.bf16.gmra.mxu0 %v253
    %v1266 = vpop.f32.mrf.mxu0
    %v1267 = vadd.f32 %v1244, %v1266
    %v1268 = vpop.f32.mrf.mxu0
    %v1269 = vadd.f32 %v1246, %v1268
    %1270 = vmatmul.bf16.gmra.mxu0 %v261
    %v1271 = vpop.f32.mrf.mxu0
    %v1272 = vadd.f32 %v1249, %v1271
    %v1273 = vpop.f32.mrf.mxu0
    %v1274 = vadd.f32 %v1251, %v1273
    %1275 = vmatmul.bf16.gmra.mxu0 %v269
    %v1276 = vpop.f32.mrf.mxu0
    %v1277 = vadd.f32 %v1254, %v1276
    %v1278 = vpop.f32.mrf.mxu0
    %1279 = vdwg.mxu0
    %1280 = vmatpush.bf16.msra.mxu0 %v806
    %1281 = vmatpush.bf16.msra.mxu0 %v804
    %1282 = vmatpush.bf16.msra.mxu0 %v802
    %1283 = vmatpush.bf16.msra.mxu0 %v800
    %1284 = vmatpush.bf16.msra.mxu0 %v798
    %1285 = vmatpush.bf16.msra.mxu0 %v796
    %1286 = vmatpush.bf16.msra.mxu0 %v794
    %1287 = vmatpush.bf16.msra.mxu0 %v792
    %1288 = vmatmul.bf16.gmra.mxu0 %v254
    %v1289 = vpop.f32.mrf.mxu0
    %v1290 = vadd.f32 %v1267, %v1289
    %v1291 = vpop.f32.mrf.mxu0
    %v1292 = vadd.f32 %v1269, %v1291
    %1293 = vmatmul.bf16.gmra.mxu0 %v262
    %v1294 = vpop.f32.mrf.mxu0
    %v1295 = vadd.f32 %v1272, %v1294
    %v1296 = vpop.f32.mrf.mxu0
    %v1297 = vadd.f32 %v1274, %v1296
    %1298 = vmatmul.bf16.gmra.mxu0 %v270
    %v1299 = vpop.f32.mrf.mxu0
    %v1300 = vadd.f32 %v1277, %v1299
    %v1301 = vpop.f32.mrf.mxu0
    %1302 = vdwg.mxu0
    %v1303 = vld [vmem:[%s3] sm:$0xff]
    %v1304 = vld [vmem:[%s3 + $0x8] sm:$0xff]
    %v1305 = vld [vmem:[%s3 + $0x10] sm:$0xff]
    %v1306 = vld [vmem:[%s3 + $0x18] sm:$0xff]
    %v1307 = vld [vmem:[%s3 + $0x20] sm:$0x11]
    %v1308 = vunpack.c.l.bf16 %v1303
    %v1309 = vunpack.c.h.bf16 %v1303
    %v1310 = vunpack.c.l.bf16 %v1304
    %v1311 = vunpack.c.h.bf16 %v1304
    %v1312 = vunpack.c.l.bf16 %v1305
    %v1313 = vunpack.c.h.bf16 %v1305
    %v1314 = vunpack.c.l.bf16 %v1306
    %v1315 = vunpack.c.h.bf16 %v1306
    %v1316 = vunpack.c.l.bf16 %v1307
    %v1317 = vunpack.c.h.bf16 %v1307
    %v1318 = vadd.f32 %v1106, %v1308
    %v1319 = vadd.f32 %v1290, %v1309
    %v1320 = vadd.f32 %v1108, %v1310
    %v1321 = vadd.f32 %v1292, %v1311
    %v1322 = vadd.f32 %v1111, %v1312
    %v1323 = vadd.f32 %v1295, %v1313
    %v1324 = vadd.f32 %v1113, %v1314
    %v1325 = vadd.f32 %v1297, %v1315
    %v1326 = vadd.f32 %v1116, %v1316
    %v1327 = vadd.f32 %v1300, %v1317
    %v1328 = vpack.c.bf16 %v1319, %v1318
    %v1329 = vpack.c.bf16 %v1321, %v1320
    %v1330 = vpack.c.bf16 %v1323, %v1322
    %v1331 = vpack.c.bf16 %v1325, %v1324
    %v1332 = vpack.c.bf16 %v1327, %v1326
    %1333 = vst [vmem:[%s4] sm:$0xff] %v1328
    %1334 = vst [vmem:[%s4 + $0x8] sm:$0xff] %v1329
    %1335 = vst [vmem:[%s4 + $0x10] sm:$0xff] %v1330
    %1336 = vst [vmem:[%s4 + $0x18] sm:$0xff] %v1331
    %1337 = vst [vmem:[%s4 + $0x20] sm:$0x11] %v1332
    // Predicated region
    $region22: #{_lambda_.18} parent=1 // pred_check
      _
    $region23: #{_lambda_.18} parent=1 // pred_check_branch
      %1339 = sbr.rel (0) target = $region25
    $region24: #{_lambda_.18} parent=1 // pred_region
      _
    $region25: #{_lambda_.18} parent=1 // pred_fallthru
      _
    // Predicated region
    $region26: #{_lambda_.18} parent=1 // pred_check
      _
    $region27: #{_lambda_.18} parent=1 // pred_check_branch
      %1341 = sbr.rel (0) target = $region29
    $region28: #{_lambda_.18} parent=1 // pred_region
      _
    $region29: #{_lambda_.18} parent=1 // pred_fallthru
      _
    %1342 = vsyncpa [#allocation3], 1

// kernel: _lambda_.24
$region0: #{_lambda_.24}
  #allocation0 [shape = 'u32[]', space=smem, size = 0x4, offset = 0x4, fixed_abs, tag = 'smem constant byte address 0x4 - core index']
  #allocation1 [shape = 'u32[72,128]{1,0:T(1,128)}', space=vmem, size = 0x9000, scoped, tag = 'internal scratch']
  %s0 = inlined_call_operand.vmem [shape: bf16[34,256], index: 0, kind: input, shape index: {}]
  %s1 = inlined_call_operand.vmem [shape: f32[1,256], index: 1, kind: input, shape index: {}]
  %s2 = inlined_call_operand.vmem [shape: f32[1,256], index: 2, kind: input, shape index: {}]
  %s3 = inlined_call_operand.vmem [shape: bf16[34,256], index: 3, kind: output, shape index: {}]
  %s4 = sld [smem:[#allocation0]]
  $region22: #{_lambda_.24} parent=0
    _
  %s6 = ssub.s32 1, %s4
  %s7 = scalar_select 0, %s6, %s4
  // Predicated region
  $region2: #{_lambda_.24} parent=0 // pred_check
    _
  $region3: #{_lambda_.24} parent=0 // pred_check_branch
    %9 = sbr.rel (0) target = $region5
  $region4: #{_lambda_.24} parent=0 // pred_region
    _
  $region5: #{_lambda_.24} parent=0 // pred_fallthru
    _
  // Predicated region
  $region6: #{_lambda_.24} parent=0 // pred_check
    _
  $region7: #{_lambda_.24} parent=0 // pred_check_branch
    %11 = sbr.rel (0) target = $region9
  $region8: #{_lambda_.24} parent=0 // pred_region
    _
  $region9: #{_lambda_.24} parent=0 // pred_fallthru
    _
  // Predicated region
  $region10: #{_lambda_.24} parent=0 // pred_check
    _
  $region11: #{_lambda_.24} parent=0 // pred_check_branch
    %13 = sbr.rel (0) target = $region13
  $region12: #{_lambda_.24} parent=0 // pred_region
    _
  $region13: #{_lambda_.24} parent=0 // pred_fallthru
    _
  %v14 = vld [vmem:[%s0] sm:$0xff]
  %v15 = vld [vmem:[%s0 + $0x8] sm:$0xff]
  %v16 = vld [vmem:[%s0 + $0x10] sm:$0xff]
  %v17 = vld [vmem:[%s0 + $0x18] sm:$0xff]
  %v18 = vld [vmem:[%s0 + $0x20] sm:$0x11]
  %v19 = vunpack.c.l.bf16 %v14
  %v20 = vunpack.c.h.bf16 %v14
  %v21 = vunpack.c.l.bf16 %v15
  %v22 = vunpack.c.h.bf16 %v15
  %v23 = vunpack.c.l.bf16 %v16
  %v24 = vunpack.c.h.bf16 %v16
  %v25 = vunpack.c.l.bf16 %v17
  %v26 = vunpack.c.h.bf16 %v17
  %v27 = vunpack.c.l.bf16 %v18
  %v28 = vunpack.c.h.bf16 %v18
  %v29 = vadd.f32 %v19, %v20
  %30 = vadd.xlane.f32.xlu0 %v29
  %v31 = vpop.xlane.xlu0 %30
  %v32 = vadd.f32 %v21, %v22
  %33 = vadd.xlane.f32.xlu0 %v32
  %v34 = vpop.xlane.xlu0 %33
  %v35 = vadd.f32 %v23, %v24
  %36 = vadd.xlane.f32.xlu0 %v35
  %v37 = vpop.xlane.xlu0 %36
  %v38 = vadd.f32 %v25, %v26
  %39 = vadd.xlane.f32.xlu0 %v38
  %v40 = vpop.xlane.xlu0 %39
  %vm41 = vcmask 1041408
  %v42 = vsel %vm41, %v27, 0.0
  %v43 = vsel %vm41, %v28, 0.0
  %v44 = vadd.f32 %v42, %v43
  %45 = vadd.xlane.f32.xlu0 %v44
  %v46 = vpop.xlane.xlu0 %45
  %v47 = vrcp.pop 256.0
  %v48 = vmul.f32 256.0, %v47
  %v49 = vsub.f32 1.0, %v48
  %v50 = vmul.f32 %v47, %v49
  %v51 = vadd.f32 %v47, %v50
  %vm52 = vweird.f32 %v47
  %v53 = vsel %vm52, %v47, %v51
  %v54 = vmul.f32 %v31, %v53
  %v55 = vmul.f32 %v34, %v53
  %v56 = vmul.f32 %v37, %v53
  %v57 = vmul.f32 %v40, %v53
  %v58 = vmul.f32 %v46, %v53
  %v59 = vsub.f32 %v19, %v54
  %v60 = vsub.f32 %v20, %v54
  %v61 = vsub.f32 %v21, %v55
  %v62 = vsub.f32 %v22, %v55
  %v63 = vsub.f32 %v23, %v56
  %v64 = vsub.f32 %v24, %v56
  %v65 = vsub.f32 %v25, %v57
  %v66 = vsub.f32 %v26, %v57
  %v67 = vsub.f32 %v27, %v58
  %v68 = vsub.f32 %v28, %v58
  %v69 = vmul.f32 %v59, %v59
  %v70 = vmul.f32 %v60, %v60
  %v71 = vmul.f32 %v61, %v61
  %v72 = vmul.f32 %v62, %v62
  %v73 = vmul.f32 %v63, %v63
  %v74 = vmul.f32 %v64, %v64
  %v75 = vmul.f32 %v65, %v65
  %v76 = vmul.f32 %v66, %v66
  %v77 = vmul.f32 %v67, %v67
  %v78 = vmul.f32 %v68, %v68
  %v79 = vadd.f32 %v69, %v70
  %80 = vadd.xlane.f32.xlu0 %v79
  %v81 = vpop.xlane.xlu0 %80
  %v82 = vadd.f32 %v71, %v72
  %83 = vadd.xlane.f32.xlu0 %v82
  %v84 = vpop.xlane.xlu0 %83
  %v85 = vadd.f32 %v73, %v74
  %86 = vadd.xlane.f32.xlu0 %v85
  %v87 = vpop.xlane.xlu0 %86
  %v88 = vadd.f32 %v75, %v76
  %89 = vadd.xlane.f32.xlu0 %v88
  %v90 = vpop.xlane.xlu0 %89
  %v91 = vsel %vm41, %v77, 0.0
  %v92 = vsel %vm41, %v78, 0.0
  %v93 = vadd.f32 %v91, %v92
  %94 = vadd.xlane.f32.xlu0 %v93
  %v95 = vpop.xlane.xlu0 %94
  %v96 = vmul.f32 %v81, %v53
  %v97 = vmul.f32 %v84, %v53
  %v98 = vmul.f32 %v87, %v53
  %v99 = vmul.f32 %v90, %v53
  %v100 = vmul.f32 %v95, %v53
  %v101 = vadd.f32 %v96, 1e-06
  %v102 = vadd.f32 %v97, 1e-06
  %v103 = vadd.f32 %v98, 1e-06
  %v104 = vadd.f32 %v99, 1e-06
  %v105 = vadd.f32 %v100, 1e-06
  %v106 = vrsqrt.pop %v101
  %v107 = vmul.f32 %v106, %v101
  %v108 = vmul.f32 %v107, %v106
  %v109 = vmul.f32 0.5, %v108
  %v110 = vsub.f32 1.5, %v109
  %v111 = vmul.f32 %v106, %v110
  %vm112 = vweird.f32 %v101
  %vm113 = vweird.f32 %v106
  %vm114 = vmor %vm112, %vm113
  %v115 = vsel %vm114, %v106, %v111
  %v116 = vrsqrt.pop %v102
  %v117 = vmul.f32 %v116, %v102
  %v118 = vmul.f32 %v117, %v116
  %v119 = vmul.f32 0.5, %v118
  %v120 = vsub.f32 1.5, %v119
  %v121 = vmul.f32 %v116, %v120
  %vm122 = vweird.f32 %v102
  %vm123 = vweird.f32 %v116
  %vm124 = vmor %vm122, %vm123
  %v125 = vsel %vm124, %v116, %v121
  %v126 = vrsqrt.pop %v103
  %v127 = vmul.f32 %v126, %v103
  %v128 = vmul.f32 %v127, %v126
  %v129 = vmul.f32 0.5, %v128
  %v130 = vsub.f32 1.5, %v129
  %v131 = vmul.f32 %v126, %v130
  %vm132 = vweird.f32 %v103
  %vm133 = vweird.f32 %v126
  %vm134 = vmor %vm132, %vm133
  %v135 = vsel %vm134, %v126, %v131
  %v136 = vrsqrt.pop %v104
  %v137 = vmul.f32 %v136, %v104
  %v138 = vmul.f32 %v137, %v136
  %v139 = vmul.f32 0.5, %v138
  %v140 = vsub.f32 1.5, %v139
  %v141 = vmul.f32 %v136, %v140
  %vm142 = vweird.f32 %v104
  %vm143 = vweird.f32 %v136
  %vm144 = vmor %vm142, %vm143
  %v145 = vsel %vm144, %v136, %v141
  %v146 = vrsqrt.pop %v105
  %v147 = vmul.f32 %v146, %v105
  %v148 = vmul.f32 %v147, %v146
  %v149 = vmul.f32 0.5, %v148
  %v150 = vsub.f32 1.5, %v149
  %v151 = vmul.f32 %v146, %v150
  %vm152 = vweird.f32 %v105
  %vm153 = vweird.f32 %v146
  %vm154 = vmor %vm152, %vm153
  %v155 = vsel %vm154, %v146, %v151
  %v156 = vmul.f32 %v59, %v115
  %v157 = vmul.f32 %v60, %v115
  %v158 = vmul.f32 %v61, %v125
  %v159 = vmul.f32 %v62, %v125
  %v160 = vmul.f32 %v63, %v135
  %v161 = vmul.f32 %v64, %v135
  %v162 = vmul.f32 %v65, %v145
  %v163 = vmul.f32 %v66, %v145
  %v164 = vmul.f32 %v67, %v155
  %v165 = vmul.f32 %v68, %v155
  %v166 = vld [vmem:[%s1] sm:$0x3]
  %v168 = vperm.slane %v166, 0
  %v169 = vperm.slane %v166, 1
  %v172 = vmul.f32 %v156, %v168
  %v173 = vmul.f32 %v157, %v169
  %v174 = vmul.f32 %v158, %v168
  %v175 = vmul.f32 %v159, %v169
  %v176 = vmul.f32 %v160, %v168
  %v177 = vmul.f32 %v161, %v169
  %v178 = vmul.f32 %v162, %v168
  %v179 = vmul.f32 %v163, %v169
  %v180 = vmul.f32 %v164, %v168
  %v181 = vmul.f32 %v165, %v169
  %v182 = vld [vmem:[%s2] sm:$0x3]
  %v184 = vperm.slane %v182, 0
  %v185 = vperm.slane %v182, 1
  %v188 = vadd.f32 %v172, %v184
  %v189 = vadd.f32 %v173, %v185
  %v190 = vadd.f32 %v174, %v184
  %v191 = vadd.f32 %v175, %v185
  %v192 = vadd.f32 %v176, %v184
  %v193 = vadd.f32 %v177, %v185
  %v194 = vadd.f32 %v178, %v184
  %v195 = vadd.f32 %v179, %v185
  %v196 = vadd.f32 %v180, %v184
  %v197 = vadd.f32 %v181, %v185
  %v198 = vpack.c.bf16 %v189, %v188
  %v199 = vpack.c.bf16 %v191, %v190
  %v200 = vpack.c.bf16 %v193, %v192
  %v201 = vpack.c.bf16 %v195, %v194
  %v202 = vpack.c.bf16 %v197, %v196
  %203 = vst [vmem:[%s3] sm:$0xff] %v198
  %204 = vst [vmem:[%s3 + $0x8] sm:$0xff] %v199
  %205 = vst [vmem:[%s3 + $0x10] sm:$0xff] %v200
  %206 = vst [vmem:[%s3 + $0x18] sm:$0xff] %v201
  %207 = vst [vmem:[%s3 + $0x20] sm:$0x11] %v202
  // Predicated region
  $region14: #{_lambda_.24} parent=0 // pred_check
    _
  $region15: #{_lambda_.24} parent=0 // pred_check_branch
    %209 = sbr.rel (0) target = $region17
  $region16: #{_lambda_.24} parent=0 // pred_region
    _
  $region17: #{_lambda_.24} parent=0 // pred_fallthru
    _
  // Predicated region
  $region18: #{_lambda_.24} parent=0 // pred_check
    _
  $region19: #{_lambda_.24} parent=0 // pred_check_branch
    %211 = sbr.rel (0) target = $region21
  $region20: #{_lambda_.24} parent=0 // pred_region
    _
  $region21: #{_lambda_.24} parent=0 // pred_fallthru
    _

// kernel: _lambda_.25
$region0: #{_lambda_.25}
  #allocation0 [shape = 'u32[]', space=smem, size = 0x4, offset = 0x4, fixed_abs, tag = 'smem constant byte address 0x4 - core index']
  #allocation1 [shape = 'u32[72,128]{1,0:T(1,128)}', space=vmem, size = 0x9000, scoped, tag = 'internal scratch']
  %s0 = inlined_call_operand.vmem [shape: bf16[2,17,256], index: 0, kind: input, shape index: {}]
  %s1 = inlined_call_operand.vmem [shape: bf16[256,1024], index: 1, kind: input, shape index: {}]
  %s2 = inlined_call_operand.vmem [shape: bf16[256,1024], index: 2, kind: input, shape index: {}]
  %s3 = inlined_call_operand.vmem [shape: f32[1,1024], index: 3, kind: input, shape index: {}]
  %s4 = inlined_call_operand.hbm [shape: f32[2,1024], index: 4, kind: output, shape index: {}]
  %s5 = sld [smem:[#allocation0]]
  $region26: #{_lambda_.25} parent=0
    _
  %s7 = ssub.s32 1, %s5
  %s8 = scalar_select 0, %s7, %s5
  $region1: #{_lambda_.25} parent=0
    #allocation2 [shape = 'u8[8192]{0}', space=vmem, size = 0x2000, scoped, tag = 'output window, operand 0, single buffered']
    #allocation3 [shape = 's32[1]{0}', space=sflag, size = 0x4, scoped, tag = 'scoped memory for _lambda_.25']
    %9 = vsyncpa [#allocation3], 0
    // Predicated region
    $region2: #{_lambda_.25} parent=1 // pred_check
      _
    $region3: #{_lambda_.25} parent=1 // pred_check_branch
      %11 = sbr.rel (0) target = $region5
    $region4: #{_lambda_.25} parent=1 // pred_region
      _
    $region5: #{_lambda_.25} parent=1 // pred_fallthru
      _
    // Predicated region
    $region6: #{_lambda_.25} parent=1 // pred_check
      _
    $region7: #{_lambda_.25} parent=1 // pred_check_branch
      %13 = sbr.rel (0) target = $region9
    $region8: #{_lambda_.25} parent=1 // pred_region
      _
    $region9: #{_lambda_.25} parent=1 // pred_fallthru
      _
    // Predicated region
    $region10: #{_lambda_.25} parent=1 // pred_check
      _
    $region11: #{_lambda_.25} parent=1 // pred_check_branch
      %15 = sbr.rel (0) target = $region13
    $region12: #{_lambda_.25} parent=1 // pred_region
      _
    $region13: #{_lambda_.25} parent=1 // pred_fallthru
      _
    // Predicated region
    $region14: #{_lambda_.25} parent=1 // pred_check
      _
    $region15: #{_lambda_.25} parent=1 // pred_check_branch
      %17 = sbr.rel (0) target = $region17
    $region16: #{_lambda_.25} parent=1 // pred_region
      _
    $region17: #{_lambda_.25} parent=1 // pred_fallthru
      _
    %v18 = vld [vmem:[%s0] sm:$0xff]
    %v19 = vld [vmem:[%s0 + $0x8] sm:$0xff]
    %v20 = vld [vmem:[%s0 + $0x10] sm:$0x11]
    %v21 = vld [vmem:[%s0 + $0x18] sm:$0xff]
    %v22 = vld [vmem:[%s0 + $0x20] sm:$0xff]
    %v23 = vld [vmem:[%s0 + $0x28] sm:$0x11]
    %v24 = vunpack.c.l.bf16 %v18
    %v25 = vunpack.c.h.bf16 %v18
    %v26 = vunpack.c.l.bf16 %v19
    %v27 = vunpack.c.h.bf16 %v19
    %v28 = vunpack.c.l.bf16 %v20
    %v29 = vunpack.c.h.bf16 %v20
    %v30 = vunpack.c.l.bf16 %v21
    %v31 = vunpack.c.h.bf16 %v21
    %v32 = vunpack.c.l.bf16 %v22
    %v33 = vunpack.c.h.bf16 %v22
    %v34 = vunpack.c.l.bf16 %v23
    %v35 = vunpack.c.h.bf16 %v23
    %v36 = vadd.f32 %v24, %v26
    %vm37 = vcmask 1040384
    %v38 = vsel %vm37, %v28, 0.0
    %v39 = vadd.f32 %v36, %v38
    %v40 = vrot.slane %v39, 4
    %v41 = vadd.f32 %v39, %v40
    %v42 = vrot.slane %v41, 2
    %v43 = vadd.f32 %v41, %v42
    %v44 = vrot.slane %v43, 1
    %v45 = vadd.f32 %v43, %v44
    %v46 = vadd.f32 %v25, %v27
    %v47 = vsel %vm37, %v29, 0.0
    %v48 = vadd.f32 %v46, %v47
    %v49 = vrot.slane %v48, 4
    %v50 = vadd.f32 %v48, %v49
    %v51 = vrot.slane %v50, 2
    %v52 = vadd.f32 %v50, %v51
    %v53 = vrot.slane %v52, 1
    %v54 = vadd.f32 %v52, %v53
    %v55 = vadd.f32 %v30, %v32
    %v56 = vsel %vm37, %v34, 0.0
    %v57 = vadd.f32 %v55, %v56
    %v58 = vrot.slane %v57, 4
    %v59 = vadd.f32 %v57, %v58
    %v60 = vrot.slane %v59, 2
    %v61 = vadd.f32 %v59, %v60
    %v62 = vrot.slane %v61, 1
    %v63 = vadd.f32 %v61, %v62
    %v64 = vadd.f32 %v31, %v33
    %v65 = vsel %vm37, %v35, 0.0
    %v66 = vadd.f32 %v64, %v65
    %v67 = vrot.slane %v66, 4
    %v68 = vadd.f32 %v66, %v67
    %v69 = vrot.slane %v68, 2
    %v70 = vadd.f32 %v68, %v69
    %v71 = vrot.slane %v70, 1
    %v72 = vadd.f32 %v70, %v71
    %v73 = vsub.f32 %v45, %v24
    %v74 = vsub.f32 %v54, %v25
    %v75 = vsub.f32 %v63, %v30
    %v76 = vsub.f32 %v72, %v31
    %v77 = vmul.f32 %v73, 0.0625
    %v78 = vmul.f32 %v74, 0.0625
    %v79 = vmul.f32 %v75, 0.0625
    %v80 = vmul.f32 %v76, 0.0625
    %v81 = vpack.c.bf16 %v24, %v24
    %v82 = vpack.c.bf16 %v25, %v25
    %v83 = vpack.c.bf16 %v30, %v30
    %v84 = vpack.c.bf16 %v31, %v31
    %v85 = vld [vmem:[%s1] sm:$0xff]
    %v86 = vld [vmem:[%s1 + $0x8] sm:$0xff]
    %v87 = vld [vmem:[%s1 + $0x10] sm:$0xff]
    %v88 = vld [vmem:[%s1 + $0x18] sm:$0xff]
    %v89 = vld [vmem:[%s1 + $0x20] sm:$0xff]
    %v90 = vld [vmem:[%s1 + $0x28] sm:$0xff]
    %v91 = vld [vmem:[%s1 + $0x30] sm:$0xff]
    %v92 = vld [vmem:[%s1 + $0x38] sm:$0xff]
    %v93 = vld [vmem:[%s1 + $0x40] sm:$0xff]
    %v94 = vld [vmem:[%s1 + $0x48] sm:$0xff]
    %v95 = vld [vmem:[%s1 + $0x50] sm:$0xff]
    %v96 = vld [vmem:[%s1 + $0x58] sm:$0xff]
    %v97 = vld [vmem:[%s1 + $0x60] sm:$0xff]
    %v98 = vld [vmem:[%s1 + $0x68] sm:$0xff]
    %v99 = vld [vmem:[%s1 + $0x70] sm:$0xff]
    %v100 = vld [vmem:[%s1 + $0x78] sm:$0xff]
    %v101 = vld [vmem:[%s1 + $0x80] sm:$0xff]
    %v102 = vld [vmem:[%s1 + $0x88] sm:$0xff]
    %v103 = vld [vmem:[%s1 + $0x90] sm:$0xff]
    %v104 = vld [vmem:[%s1 + $0x98] sm:$0xff]
    %v105 = vld [vmem:[%s1 + $0xa0] sm:$0xff]
    %v106 = vld [vmem:[%s1 + $0xa8] sm:$0xff]
    %v107 = vld [vmem:[%s1 + $0xb0] sm:$0xff]
    %v108 = vld [vmem:[%s1 + $0xb8] sm:$0xff]
    %v109 = vld [vmem:[%s1 + $0xc0] sm:$0xff]
    %v110 = vld [vmem:[%s1 + $0xc8] sm:$0xff]
    %v111 = vld [vmem:[%s1 + $0xd0] sm:$0xff]
    %v112 = vld [vmem:[%s1 + $0xd8] sm:$0xff]
    %v113 = vld [vmem:[%s1 + $0xe0] sm:$0xff]
    %v114 = vld [vmem:[%s1 + $0xe8] sm:$0xff]
    %v115 = vld [vmem:[%s1 + $0xf0] sm:$0xff]
    %v116 = vld [vmem:[%s1 + $0xf8] sm:$0xff]
    %v117 = vld [vmem:[%s1 + $0x100] sm:$0xff]
    %v118 = vld [vmem:[%s1 + $0x108] sm:$0xff]
    %v119 = vld [vmem:[%s1 + $0x110] sm:$0xff]
    %v120 = vld [vmem:[%s1 + $0x118] sm:$0xff]
    %v121 = vld [vmem:[%s1 + $0x120] sm:$0xff]
    %v122 = vld [vmem:[%s1 + $0x128] sm:$0xff]
    %v123 = vld [vmem:[%s1 + $0x130] sm:$0xff]
    %v124 = vld [vmem:[%s1 + $0x138] sm:$0xff]
    %v125 = vld [vmem:[%s1 + $0x140] sm:$0xff]
    %v126 = vld [vmem:[%s1 + $0x148] sm:$0xff]
    %v127 = vld [vmem:[%s1 + $0x150] sm:$0xff]
    %v128 = vld [vmem:[%s1 + $0x158] sm:$0xff]
    %v129 = vld [vmem:[%s1 + $0x160] sm:$0xff]
    %v130 = vld [vmem:[%s1 + $0x168] sm:$0xff]
    %v131 = vld [vmem:[%s1 + $0x170] sm:$0xff]
    %v132 = vld [vmem:[%s1 + $0x178] sm:$0xff]
    %v133 = vld [vmem:[%s1 + $0x180] sm:$0xff]
    %v134 = vld [vmem:[%s1 + $0x188] sm:$0xff]
    %v135 = vld [vmem:[%s1 + $0x190] sm:$0xff]
    %v136 = vld [vmem:[%s1 + $0x198] sm:$0xff]
    %v137 = vld [vmem:[%s1 + $0x1a0] sm:$0xff]
    %v138 = vld [vmem:[%s1 + $0x1a8] sm:$0xff]
    %v139 = vld [vmem:[%s1 + $0x1b0] sm:$0xff]
    %v140 = vld [vmem:[%s1 + $0x1b8] sm:$0xff]
    %v141 = vld [vmem:[%s1 + $0x1c0] sm:$0xff]
    %v142 = vld [vmem:[%s1 + $0x1c8] sm:$0xff]
    %v143 = vld [vmem:[%s1 + $0x1d0] sm:$0xff]
    %v144 = vld [vmem:[%s1 + $0x1d8] sm:$0xff]
    %v145 = vld [vmem:[%s1 + $0x1e0] sm:$0xff]
    %v146 = vld [vmem:[%s1 + $0x1e8] sm:$0xff]
    %v147 = vld [vmem:[%s1 + $0x1f0] sm:$0xff]
    %v148 = vld [vmem:[%s1 + $0x1f8] sm:$0xff]
    %v149 = vld [vmem:[%s1 + $0x200] sm:$0xff]
    %v150 = vld [vmem:[%s1 + $0x208] sm:$0xff]
    %v151 = vld [vmem:[%s1 + $0x210] sm:$0xff]
    %v152 = vld [vmem:[%s1 + $0x218] sm:$0xff]
    %v153 = vld [vmem:[%s1 + $0x220] sm:$0xff]
    %v154 = vld [vmem:[%s1 + $0x228] sm:$0xff]
    %v155 = vld [vmem:[%s1 + $0x230] sm:$0xff]
    %v156 = vld [vmem:[%s1 + $0x238] sm:$0xff]
    %v157 = vld [vmem:[%s1 + $0x240] sm:$0xff]
    %v158 = vld [vmem:[%s1 + $0x248] sm:$0xff]
    %v159 = vld [vmem:[%s1 + $0x250] sm:$0xff]
    %v160 = vld [vmem:[%s1 + $0x258] sm:$0xff]
    %v161 = vld [vmem:[%s1 + $0x260] sm:$0xff]
    %v162 = vld [vmem:[%s1 + $0x268] sm:$0xff]
    %v163 = vld [vmem:[%s1 + $0x270] sm:$0xff]
    %v164 = vld [vmem:[%s1 + $0x278] sm:$0xff]
    %v165 = vld [vmem:[%s1 + $0x280] sm:$0xff]
    %v166 = vld [vmem:[%s1 + $0x288] sm:$0xff]
    %v167 = vld [vmem:[%s1 + $0x290] sm:$0xff]
    %v168 = vld [vmem:[%s1 + $0x298] sm:$0xff]
    %v169 = vld [vmem:[%s1 + $0x2a0] sm:$0xff]
    %v170 = vld [vmem:[%s1 + $0x2a8] sm:$0xff]
    %v171 = vld [vmem:[%s1 + $0x2b0] sm:$0xff]
    %v172 = vld [vmem:[%s1 + $0x2b8] sm:$0xff]
    %v173 = vld [vmem:[%s1 + $0x2c0] sm:$0xff]
    %v174 = vld [vmem:[%s1 + $0x2c8] sm:$0xff]
    %v175 = vld [vmem:[%s1 + $0x2d0] sm:$0xff]
    %v176 = vld [vmem:[%s1 + $0x2d8] sm:$0xff]
    %v177 = vld [vmem:[%s1 + $0x2e0] sm:$0xff]
    %v178 = vld [vmem:[%s1 + $0x2e8] sm:$0xff]
    %v179 = vld [vmem:[%s1 + $0x2f0] sm:$0xff]
    %v180 = vld [vmem:[%s1 + $0x2f8] sm:$0xff]
    %v181 = vld [vmem:[%s1 + $0x300] sm:$0xff]
    %v182 = vld [vmem:[%s1 + $0x308] sm:$0xff]
    %v183 = vld [vmem:[%s1 + $0x310] sm:$0xff]
    %v184 = vld [vmem:[%s1 + $0x318] sm:$0xff]
    %v185 = vld [vmem:[%s1 + $0x320] sm:$0xff]
    %v186 = vld [vmem:[%s1 + $0x328] sm:$0xff]
    %v187 = vld [vmem:[%s1 + $0x330] sm:$0xff]
    %v188 = vld [vmem:[%s1 + $0x338] sm:$0xff]
    %v189 = vld [vmem:[%s1 + $0x340] sm:$0xff]
    %v190 = vld [vmem:[%s1 + $0x348] sm:$0xff]
    %v191 = vld [vmem:[%s1 + $0x350] sm:$0xff]
    %v192 = vld [vmem:[%s1 + $0x358] sm:$0xff]
    %v193 = vld [vmem:[%s1 + $0x360] sm:$0xff]
    %v194 = vld [vmem:[%s1 + $0x368] sm:$0xff]
    %v195 = vld [vmem:[%s1 + $0x370] sm:$0xff]
    %v196 = vld [vmem:[%s1 + $0x378] sm:$0xff]
    %v197 = vld [vmem:[%s1 + $0x380] sm:$0xff]
    %v198 = vld [vmem:[%s1 + $0x388] sm:$0xff]
    %v199 = vld [vmem:[%s1 + $0x390] sm:$0xff]
    %v200 = vld [vmem:[%s1 + $0x398] sm:$0xff]
    %v201 = vld [vmem:[%s1 + $0x3a0] sm:$0xff]
    %v202 = vld [vmem:[%s1 + $0x3a8] sm:$0xff]
    %v203 = vld [vmem:[%s1 + $0x3b0] sm:$0xff]
    %v204 = vld [vmem:[%s1 + $0x3b8] sm:$0xff]
    %v205 = vld [vmem:[%s1 + $0x3c0] sm:$0xff]
    %v206 = vld [vmem:[%s1 + $0x3c8] sm:$0xff]
    %v207 = vld [vmem:[%s1 + $0x3d0] sm:$0xff]
    %v208 = vld [vmem:[%s1 + $0x3d8] sm:$0xff]
    %v209 = vld [vmem:[%s1 + $0x3e0] sm:$0xff]
    %v210 = vld [vmem:[%s1 + $0x3e8] sm:$0xff]
    %v211 = vld [vmem:[%s1 + $0x3f0] sm:$0xff]
    %v212 = vld [vmem:[%s1 + $0x3f8] sm:$0xff]
    %v213 = vpack.c.bf16 %v77, %v77
    %v214 = vpack.c.bf16 %v78, %v78
    %v215 = vpack.c.bf16 %v79, %v79
    %v216 = vpack.c.bf16 %v80, %v80
    %v217 = vld [vmem:[%s2] sm:$0xff]
    %v218 = vld [vmem:[%s2 + $0x8] sm:$0xff]
    %v219 = vld [vmem:[%s2 + $0x10] sm:$0xff]
    %v220 = vld [vmem:[%s2 + $0x18] sm:$0xff]
    %v221 = vld [vmem:[%s2 + $0x20] sm:$0xff]
    %v222 = vld [vmem:[%s2 + $0x28] sm:$0xff]
    %v223 = vld [vmem:[%s2 + $0x30] sm:$0xff]
    %v224 = vld [vmem:[%s2 + $0x38] sm:$0xff]
    %v225 = vld [vmem:[%s2 + $0x40] sm:$0xff]
    %v226 = vld [vmem:[%s2 + $0x48] sm:$0xff]
    %v227 = vld [vmem:[%s2 + $0x50] sm:$0xff]
    %v228 = vld [vmem:[%s2 + $0x58] sm:$0xff]
    %v229 = vld [vmem:[%s2 + $0x60] sm:$0xff]
    %v230 = vld [vmem:[%s2 + $0x68] sm:$0xff]
    %v231 = vld [vmem:[%s2 + $0x70] sm:$0xff]
    %v232 = vld [vmem:[%s2 + $0x78] sm:$0xff]
    %v233 = vld [vmem:[%s2 + $0x80] sm:$0xff]
    %v234 = vld [vmem:[%s2 + $0x88] sm:$0xff]
    %v235 = vld [vmem:[%s2 + $0x90] sm:$0xff]
    %v236 = vld [vmem:[%s2 + $0x98] sm:$0xff]
    %v237 = vld [vmem:[%s2 + $0xa0] sm:$0xff]
    %v238 = vld [vmem:[%s2 + $0xa8] sm:$0xff]
    %v239 = vld [vmem:[%s2 + $0xb0] sm:$0xff]
    %v240 = vld [vmem:[%s2 + $0xb8] sm:$0xff]
    %v241 = vld [vmem:[%s2 + $0xc0] sm:$0xff]
    %v242 = vld [vmem:[%s2 + $0xc8] sm:$0xff]
    %v243 = vld [vmem:[%s2 + $0xd0] sm:$0xff]
    %v244 = vld [vmem:[%s2 + $0xd8] sm:$0xff]
    %v245 = vld [vmem:[%s2 + $0xe0] sm:$0xff]
    %v246 = vld [vmem:[%s2 + $0xe8] sm:$0xff]
    %v247 = vld [vmem:[%s2 + $0xf0] sm:$0xff]
    %v248 = vld [vmem:[%s2 + $0xf8] sm:$0xff]
    %v249 = vld [vmem:[%s2 + $0x100] sm:$0xff]
    %v250 = vld [vmem:[%s2 + $0x108] sm:$0xff]
    %v251 = vld [vmem:[%s2 + $0x110] sm:$0xff]
    %v252 = vld [vmem:[%s2 + $0x118] sm:$0xff]
    %v253 = vld [vmem:[%s2 + $0x120] sm:$0xff]
    %v254 = vld [vmem:[%s2 + $0x128] sm:$0xff]
    %v255 = vld [vmem:[%s2 + $0x130] sm:$0xff]
    %v256 = vld [vmem:[%s2 + $0x138] sm:$0xff]
    %v257 = vld [vmem:[%s2 + $0x140] sm:$0xff]
    %v258 = vld [vmem:[%s2 + $0x148] sm:$0xff]
    %v259 = vld [vmem:[%s2 + $0x150] sm:$0xff]
    %v260 = vld [vmem:[%s2 + $0x158] sm:$0xff]
    %v261 = vld [vmem:[%s2 + $0x160] sm:$0xff]
    %v262 = vld [vmem:[%s2 + $0x168] sm:$0xff]
    %v263 = vld [vmem:[%s2 + $0x170] sm:$0xff]
    %v264 = vld [vmem:[%s2 + $0x178] sm:$0xff]
    %v265 = vld [vmem:[%s2 + $0x180] sm:$0xff]
    %v266 = vld [vmem:[%s2 + $0x188] sm:$0xff]
    %v267 = vld [vmem:[%s2 + $0x190] sm:$0xff]
    %v268 = vld [vmem:[%s2 + $0x198] sm:$0xff]
    %v269 = vld [vmem:[%s2 + $0x1a0] sm:$0xff]
    %v270 = vld [vmem:[%s2 + $0x1a8] sm:$0xff]
    %v271 = vld [vmem:[%s2 + $0x1b0] sm:$0xff]
    %v272 = vld [vmem:[%s2 + $0x1b8] sm:$0xff]
    %v273 = vld [vmem:[%s2 + $0x1c0] sm:$0xff]
    %v274 = vld [vmem:[%s2 + $0x1c8] sm:$0xff]
    %v275 = vld [vmem:[%s2 + $0x1d0] sm:$0xff]
    %v276 = vld [vmem:[%s2 + $0x1d8] sm:$0xff]
    %v277 = vld [vmem:[%s2 + $0x1e0] sm:$0xff]
    %v278 = vld [vmem:[%s2 + $0x1e8] sm:$0xff]
    %v279 = vld [vmem:[%s2 + $0x1f0] sm:$0xff]
    %v280 = vld [vmem:[%s2 + $0x1f8] sm:$0xff]
    %v281 = vld [vmem:[%s2 + $0x200] sm:$0xff]
    %v282 = vld [vmem:[%s2 + $0x208] sm:$0xff]
    %v283 = vld [vmem:[%s2 + $0x210] sm:$0xff]
    %v284 = vld [vmem:[%s2 + $0x218] sm:$0xff]
    %v285 = vld [vmem:[%s2 + $0x220] sm:$0xff]
    %v286 = vld [vmem:[%s2 + $0x228] sm:$0xff]
    %v287 = vld [vmem:[%s2 + $0x230] sm:$0xff]
    %v288 = vld [vmem:[%s2 + $0x238] sm:$0xff]
    %v289 = vld [vmem:[%s2 + $0x240] sm:$0xff]
    %v290 = vld [vmem:[%s2 + $0x248] sm:$0xff]
    %v291 = vld [vmem:[%s2 + $0x250] sm:$0xff]
    %v292 = vld [vmem:[%s2 + $0x258] sm:$0xff]
    %v293 = vld [vmem:[%s2 + $0x260] sm:$0xff]
    %v294 = vld [vmem:[%s2 + $0x268] sm:$0xff]
    %v295 = vld [vmem:[%s2 + $0x270] sm:$0xff]
    %v296 = vld [vmem:[%s2 + $0x278] sm:$0xff]
    %v297 = vld [vmem:[%s2 + $0x280] sm:$0xff]
    %v298 = vld [vmem:[%s2 + $0x288] sm:$0xff]
    %v299 = vld [vmem:[%s2 + $0x290] sm:$0xff]
    %v300 = vld [vmem:[%s2 + $0x298] sm:$0xff]
    %v301 = vld [vmem:[%s2 + $0x2a0] sm:$0xff]
    %v302 = vld [vmem:[%s2 + $0x2a8] sm:$0xff]
    %v303 = vld [vmem:[%s2 + $0x2b0] sm:$0xff]
    %v304 = vld [vmem:[%s2 + $0x2b8] sm:$0xff]
    %v305 = vld [vmem:[%s2 + $0x2c0] sm:$0xff]
    %v306 = vld [vmem:[%s2 + $0x2c8] sm:$0xff]
    %v307 = vld [vmem:[%s2 + $0x2d0] sm:$0xff]
    %v308 = vld [vmem:[%s2 + $0x2d8] sm:$0xff]
    %v309 = vld [vmem:[%s2 + $0x2e0] sm:$0xff]
    %v310 = vld [vmem:[%s2 + $0x2e8] sm:$0xff]
    %v311 = vld [vmem:[%s2 + $0x2f0] sm:$0xff]
    %v312 = vld [vmem:[%s2 + $0x2f8] sm:$0xff]
    %v313 = vld [vmem:[%s2 + $0x300] sm:$0xff]
    %v314 = vld [vmem:[%s2 + $0x308] sm:$0xff]
    %v315 = vld [vmem:[%s2 + $0x310] sm:$0xff]
    %v316 = vld [vmem:[%s2 + $0x318] sm:$0xff]
    %v317 = vld [vmem:[%s2 + $0x320] sm:$0xff]
    %v318 = vld [vmem:[%s2 + $0x328] sm:$0xff]
    %v319 = vld [vmem:[%s2 + $0x330] sm:$0xff]
    %v320 = vld [vmem:[%s2 + $0x338] sm:$0xff]
    %v321 = vld [vmem:[%s2 + $0x340] sm:$0xff]
    %v322 = vld [vmem:[%s2 + $0x348] sm:$0xff]
    %v323 = vld [vmem:[%s2 + $0x350] sm:$0xff]
    %v324 = vld [vmem:[%s2 + $0x358] sm:$0xff]
    %v325 = vld [vmem:[%s2 + $0x360] sm:$0xff]
    %v326 = vld [vmem:[%s2 + $0x368] sm:$0xff]
    %v327 = vld [vmem:[%s2 + $0x370] sm:$0xff]
    %v328 = vld [vmem:[%s2 + $0x378] sm:$0xff]
    %v329 = vld [vmem:[%s2 + $0x380] sm:$0xff]
    %v330 = vld [vmem:[%s2 + $0x388] sm:$0xff]
    %v331 = vld [vmem:[%s2 + $0x390] sm:$0xff]
    %v332 = vld [vmem:[%s2 + $0x398] sm:$0xff]
    %v333 = vld [vmem:[%s2 + $0x3a0] sm:$0xff]
    %v334 = vld [vmem:[%s2 + $0x3a8] sm:$0xff]
    %v335 = vld [vmem:[%s2 + $0x3b0] sm:$0xff]
    %v336 = vld [vmem:[%s2 + $0x3b8] sm:$0xff]
    %v337 = vld [vmem:[%s2 + $0x3c0] sm:$0xff]
    %v338 = vld [vmem:[%s2 + $0x3c8] sm:$0xff]
    %v339 = vld [vmem:[%s2 + $0x3d0] sm:$0xff]
    %v340 = vld [vmem:[%s2 + $0x3d8] sm:$0xff]
    %v341 = vld [vmem:[%s2 + $0x3e0] sm:$0xff]
    %v342 = vld [vmem:[%s2 + $0x3e8] sm:$0xff]
    %v343 = vld [vmem:[%s2 + $0x3f0] sm:$0xff]
    %v344 = vld [vmem:[%s2 + $0x3f8] sm:$0xff]
    %v349 = vunpack.c.l.b16 %v213
    %v350 = vunpack.c.l.b16 %v214
    %v351 = vunpack.c.l.b16 %v215
    %v352 = vunpack.c.l.b16 %v216
    %v353 = vrot.slane %v351, 7
    %vm354 = vcmask 1041409
    %v355 = vsel %vm354, %v353, %v349
    %v356 = vrot.slane %v352, 7
    %v357 = vsel %vm354, %v356, %v350
    %v358 = vpack.c.b16 %v355, %v355
    %v359 = vpack.c.b16 %v357, %v357
    %v490 = vunpack.c.l.b16 %v217
    %v491 = vunpack.c.h.b16 %v217
    %v492 = vunpack.c.l.b16 %v218
    %v493 = vunpack.c.h.b16 %v218
    %v494 = vunpack.c.l.b16 %v219
    %v495 = vunpack.c.h.b16 %v219
    %v496 = vunpack.c.l.b16 %v220
    %v497 = vunpack.c.h.b16 %v220
    %v498 = vunpack.c.l.b16 %v221
    %v499 = vunpack.c.h.b16 %v221
    %v500 = vunpack.c.l.b16 %v222
    %v501 = vunpack.c.h.b16 %v222
    %v502 = vunpack.c.l.b16 %v223
    %v503 = vunpack.c.h.b16 %v223
    %v504 = vunpack.c.l.b16 %v224
    %v505 = vunpack.c.h.b16 %v224
    %v506 = vunpack.c.l.b16 %v225
    %v507 = vunpack.c.h.b16 %v225
    %v508 = vunpack.c.l.b16 %v226
    %v509 = vunpack.c.h.b16 %v226
    %v510 = vunpack.c.l.b16 %v227
    %v511 = vunpack.c.h.b16 %v227
    %v512 = vunpack.c.l.b16 %v228
    %v513 = vunpack.c.h.b16 %v228
    %v514 = vunpack.c.l.b16 %v229
    %v515 = vunpack.c.h.b16 %v229
    %v516 = vunpack.c.l.b16 %v230
    %v517 = vunpack.c.h.b16 %v230
    %v518 = vunpack.c.l.b16 %v231
    %v519 = vunpack.c.h.b16 %v231
    %v520 = vunpack.c.l.b16 %v232
    %v521 = vunpack.c.h.b16 %v232
    %v522 = vunpack.c.l.b16 %v233
    %v523 = vunpack.c.h.b16 %v233
    %v524 = vunpack.c.l.b16 %v234
    %v525 = vunpack.c.h.b16 %v234
    %v526 = vunpack.c.l.b16 %v235
    %v527 = vunpack.c.h.b16 %v235
    %v528 = vunpack.c.l.b16 %v236
    %v529 = vunpack.c.h.b16 %v236
    %v530 = vunpack.c.l.b16 %v237
    %v531 = vunpack.c.h.b16 %v237
    %v532 = vunpack.c.l.b16 %v238
    %v533 = vunpack.c.h.b16 %v238
    %v534 = vunpack.c.l.b16 %v239
    %v535 = vunpack.c.h.b16 %v239
    %v536 = vunpack.c.l.b16 %v240
    %v537 = vunpack.c.h.b16 %v240
    %v538 = vunpack.c.l.b16 %v241
    %v539 = vunpack.c.h.b16 %v241
    %v540 = vunpack.c.l.b16 %v242
    %v541 = vunpack.c.h.b16 %v242
    %v542 = vunpack.c.l.b16 %v243
    %v543 = vunpack.c.h.b16 %v243
    %v544 = vunpack.c.l.b16 %v244
    %v545 = vunpack.c.h.b16 %v244
    %v546 = vunpack.c.l.b16 %v245
    %v547 = vunpack.c.h.b16 %v245
    %v548 = vunpack.c.l.b16 %v246
    %v549 = vunpack.c.h.b16 %v246
    %v550 = vunpack.c.l.b16 %v247
    %v551 = vunpack.c.h.b16 %v247
    %v552 = vunpack.c.l.b16 %v248
    %v553 = vunpack.c.h.b16 %v248
    %v554 = vunpack.c.l.b16 %v249
    %v555 = vunpack.c.h.b16 %v249
    %v556 = vunpack.c.l.b16 %v250
    %v557 = vunpack.c.h.b16 %v250
    %v558 = vunpack.c.l.b16 %v251
    %v559 = vunpack.c.h.b16 %v251
    %v560 = vunpack.c.l.b16 %v252
    %v561 = vunpack.c.h.b16 %v252
    %v562 = vunpack.c.l.b16 %v253
    %v563 = vunpack.c.h.b16 %v253
    %v564 = vunpack.c.l.b16 %v254
    %v565 = vunpack.c.h.b16 %v254
    %v566 = vunpack.c.l.b16 %v255
    %v567 = vunpack.c.h.b16 %v255
    %v568 = vunpack.c.l.b16 %v256
    %v569 = vunpack.c.h.b16 %v256
    %v570 = vunpack.c.l.b16 %v257
    %v571 = vunpack.c.h.b16 %v257
    %v572 = vunpack.c.l.b16 %v258
    %v573 = vunpack.c.h.b16 %v258
    %v574 = vunpack.c.l.b16 %v259
    %v575 = vunpack.c.h.b16 %v259
    %v576 = vunpack.c.l.b16 %v260
    %v577 = vunpack.c.h.b16 %v260
    %v578 = vunpack.c.l.b16 %v261
    %v579 = vunpack.c.h.b16 %v261
    %v580 = vunpack.c.l.b16 %v262
    %v581 = vunpack.c.h.b16 %v262
    %v582 = vunpack.c.l.b16 %v263
    %v583 = vunpack.c.h.b16 %v263
    %v584 = vunpack.c.l.b16 %v264
    %v585 = vunpack.c.h.b16 %v264
    %v586 = vunpack.c.l.b16 %v265
    %v587 = vunpack.c.h.b16 %v265
    %v588 = vunpack.c.l.b16 %v266
    %v589 = vunpack.c.h.b16 %v266
    %v590 = vunpack.c.l.b16 %v267
    %v591 = vunpack.c.h.b16 %v267
    %v592 = vunpack.c.l.b16 %v268
    %v593 = vunpack.c.h.b16 %v268
    %v594 = vunpack.c.l.b16 %v269
    %v595 = vunpack.c.h.b16 %v269
    %v596 = vunpack.c.l.b16 %v270
    %v597 = vunpack.c.h.b16 %v270
    %v598 = vunpack.c.l.b16 %v271
    %v599 = vunpack.c.h.b16 %v271
    %v600 = vunpack.c.l.b16 %v272
    %v601 = vunpack.c.h.b16 %v272
    %v602 = vunpack.c.l.b16 %v273
    %v603 = vunpack.c.h.b16 %v273
    %v604 = vunpack.c.l.b16 %v274
    %v605 = vunpack.c.h.b16 %v274
    %v606 = vunpack.c.l.b16 %v275
    %v607 = vunpack.c.h.b16 %v275
    %v608 = vunpack.c.l.b16 %v276
    %v609 = vunpack.c.h.b16 %v276
    %v610 = vunpack.c.l.b16 %v277
    %v611 = vunpack.c.h.b16 %v277
    %v612 = vunpack.c.l.b16 %v278
    %v613 = vunpack.c.h.b16 %v278
    %v614 = vunpack.c.l.b16 %v279
    %v615 = vunpack.c.h.b16 %v279
    %v616 = vunpack.c.l.b16 %v280
    %v617 = vunpack.c.h.b16 %v280
    %v618 = vunpack.c.l.b16 %v281
    %v619 = vunpack.c.h.b16 %v281
    %v620 = vunpack.c.l.b16 %v282
    %v621 = vunpack.c.h.b16 %v282
    %v622 = vunpack.c.l.b16 %v283
    %v623 = vunpack.c.h.b16 %v283
    %v624 = vunpack.c.l.b16 %v284
    %v625 = vunpack.c.h.b16 %v284
    %v626 = vunpack.c.l.b16 %v285
    %v627 = vunpack.c.h.b16 %v285
    %v628 = vunpack.c.l.b16 %v286
    %v629 = vunpack.c.h.b16 %v286
    %v630 = vunpack.c.l.b16 %v287
    %v631 = vunpack.c.h.b16 %v287
    %v632 = vunpack.c.l.b16 %v288
    %v633 = vunpack.c.h.b16 %v288
    %v634 = vunpack.c.l.b16 %v289
    %v635 = vunpack.c.h.b16 %v289
    %v636 = vunpack.c.l.b16 %v290
    %v637 = vunpack.c.h.b16 %v290
    %v638 = vunpack.c.l.b16 %v291
    %v639 = vunpack.c.h.b16 %v291
    %v640 = vunpack.c.l.b16 %v292
    %v641 = vunpack.c.h.b16 %v292
    %v642 = vunpack.c.l.b16 %v293
    %v643 = vunpack.c.h.b16 %v293
    %v644 = vunpack.c.l.b16 %v294
    %v645 = vunpack.c.h.b16 %v294
    %v646 = vunpack.c.l.b16 %v295
    %v647 = vunpack.c.h.b16 %v295
    %v648 = vunpack.c.l.b16 %v296
    %v649 = vunpack.c.h.b16 %v296
    %v650 = vunpack.c.l.b16 %v297
    %v651 = vunpack.c.h.b16 %v297
    %v652 = vunpack.c.l.b16 %v298
    %v653 = vunpack.c.h.b16 %v298
    %v654 = vunpack.c.l.b16 %v299
    %v655 = vunpack.c.h.b16 %v299
    %v656 = vunpack.c.l.b16 %v300
    %v657 = vunpack.c.h.b16 %v300
    %v658 = vunpack.c.l.b16 %v301
    %v659 = vunpack.c.h.b16 %v301
    %v660 = vunpack.c.l.b16 %v302
    %v661 = vunpack.c.h.b16 %v302
    %v662 = vunpack.c.l.b16 %v303
    %v663 = vunpack.c.h.b16 %v303
    %v664 = vunpack.c.l.b16 %v304
    %v665 = vunpack.c.h.b16 %v304
    %v666 = vunpack.c.l.b16 %v305
    %v667 = vunpack.c.h.b16 %v305
    %v668 = vunpack.c.l.b16 %v306
    %v669 = vunpack.c.h.b16 %v306
    %v670 = vunpack.c.l.b16 %v307
    %v671 = vunpack.c.h.b16 %v307
    %v672 = vunpack.c.l.b16 %v308
    %v673 = vunpack.c.h.b16 %v308
    %v674 = vunpack.c.l.b16 %v309
    %v675 = vunpack.c.h.b16 %v309
    %v676 = vunpack.c.l.b16 %v310
    %v677 = vunpack.c.h.b16 %v310
    %v678 = vunpack.c.l.b16 %v311
    %v679 = vunpack.c.h.b16 %v311
    %v680 = vunpack.c.l.b16 %v312
    %v681 = vunpack.c.h.b16 %v312
    %v682 = vunpack.c.l.b16 %v313
    %v683 = vunpack.c.h.b16 %v313
    %v684 = vunpack.c.l.b16 %v314
    %v685 = vunpack.c.h.b16 %v314
    %v686 = vunpack.c.l.b16 %v315
    %v687 = vunpack.c.h.b16 %v315
    %v688 = vunpack.c.l.b16 %v316
    %v689 = vunpack.c.h.b16 %v316
    %v690 = vunpack.c.l.b16 %v317
    %v691 = vunpack.c.h.b16 %v317
    %v692 = vunpack.c.l.b16 %v318
    %v693 = vunpack.c.h.b16 %v318
    %v694 = vunpack.c.l.b16 %v319
    %v695 = vunpack.c.h.b16 %v319
    %v696 = vunpack.c.l.b16 %v320
    %v697 = vunpack.c.h.b16 %v320
    %v698 = vunpack.c.l.b16 %v321
    %v699 = vunpack.c.h.b16 %v321
    %v700 = vunpack.c.l.b16 %v322
    %v701 = vunpack.c.h.b16 %v322
    %v702 = vunpack.c.l.b16 %v323
    %v703 = vunpack.c.h.b16 %v323
    %v704 = vunpack.c.l.b16 %v324
    %v705 = vunpack.c.h.b16 %v324
    %v706 = vunpack.c.l.b16 %v325
    %v707 = vunpack.c.h.b16 %v325
    %v708 = vunpack.c.l.b16 %v326
    %v709 = vunpack.c.h.b16 %v326
    %v710 = vunpack.c.l.b16 %v327
    %v711 = vunpack.c.h.b16 %v327
    %v712 = vunpack.c.l.b16 %v328
    %v713 = vunpack.c.h.b16 %v328
    %v714 = vunpack.c.l.b16 %v329
    %v715 = vunpack.c.h.b16 %v329
    %v716 = vunpack.c.l.b16 %v330
    %v717 = vunpack.c.h.b16 %v330
    %v718 = vunpack.c.l.b16 %v331
    %v719 = vunpack.c.h.b16 %v331
    %v720 = vunpack.c.l.b16 %v332
    %v721 = vunpack.c.h.b16 %v332
    %v722 = vunpack.c.l.b16 %v333
    %v723 = vunpack.c.h.b16 %v333
    %v724 = vunpack.c.l.b16 %v334
    %v725 = vunpack.c.h.b16 %v334
    %v726 = vunpack.c.l.b16 %v335
    %v727 = vunpack.c.h.b16 %v335
    %v728 = vunpack.c.l.b16 %v336
    %v729 = vunpack.c.h.b16 %v336
    %v730 = vunpack.c.l.b16 %v337
    %v731 = vunpack.c.h.b16 %v337
    %v732 = vunpack.c.l.b16 %v338
    %v733 = vunpack.c.h.b16 %v338
    %v734 = vunpack.c.l.b16 %v339
    %v735 = vunpack.c.h.b16 %v339
    %v736 = vunpack.c.l.b16 %v340
    %v737 = vunpack.c.h.b16 %v340
    %v738 = vunpack.c.l.b16 %v341
    %v739 = vunpack.c.h.b16 %v341
    %v740 = vunpack.c.l.b16 %v342
    %v741 = vunpack.c.h.b16 %v342
    %v742 = vunpack.c.l.b16 %v343
    %v743 = vunpack.c.h.b16 %v343
    %v744 = vunpack.c.l.b16 %v344
    %v745 = vunpack.c.h.b16 %v344
    %v746 = vpack.c.b16 %v498, %v490
    %v747 = vpack.c.b16 %v499, %v491
    %v748 = vpack.c.b16 %v500, %v492
    %v749 = vpack.c.b16 %v501, %v493
    %v750 = vpack.c.b16 %v502, %v494
    %v751 = vpack.c.b16 %v503, %v495
    %v752 = vpack.c.b16 %v504, %v496
    %v753 = vpack.c.b16 %v505, %v497
    %v754 = vpack.c.b16 %v514, %v506
    %v755 = vpack.c.b16 %v515, %v507
    %v756 = vpack.c.b16 %v516, %v508
    %v757 = vpack.c.b16 %v517, %v509
    %v758 = vpack.c.b16 %v518, %v510
    %v759 = vpack.c.b16 %v519, %v511
    %v760 = vpack.c.b16 %v520, %v512
    %v761 = vpack.c.b16 %v521, %v513
    %v762 = vpack.c.b16 %v530, %v522
    %v763 = vpack.c.b16 %v531, %v523
    %v764 = vpack.c.b16 %v532, %v524
    %v765 = vpack.c.b16 %v533, %v525
    %v766 = vpack.c.b16 %v534, %v526
    %v767 = vpack.c.b16 %v535, %v527
    %v768 = vpack.c.b16 %v536, %v528
    %v769 = vpack.c.b16 %v537, %v529
    %v770 = vpack.c.b16 %v546, %v538
    %v771 = vpack.c.b16 %v547, %v539
    %v772 = vpack.c.b16 %v548, %v540
    %v773 = vpack.c.b16 %v549, %v541
    %v774 = vpack.c.b16 %v550, %v542
    %v775 = vpack.c.b16 %v551, %v543
    %v776 = vpack.c.b16 %v552, %v544
    %v777 = vpack.c.b16 %v553, %v545
    %v778 = vpack.c.b16 %v562, %v554
    %v779 = vpack.c.b16 %v563, %v555
    %v780 = vpack.c.b16 %v564, %v556
    %v781 = vpack.c.b16 %v565, %v557
    %v782 = vpack.c.b16 %v566, %v558
    %v783 = vpack.c.b16 %v567, %v559
    %v784 = vpack.c.b16 %v568, %v560
    %v785 = vpack.c.b16 %v569, %v561
    %v786 = vpack.c.b16 %v578, %v570
    %v787 = vpack.c.b16 %v579, %v571
    %v788 = vpack.c.b16 %v580, %v572
    %v789 = vpack.c.b16 %v581, %v573
    %v790 = vpack.c.b16 %v582, %v574
    %v791 = vpack.c.b16 %v583, %v575
    %v792 = vpack.c.b16 %v584, %v576
    %v793 = vpack.c.b16 %v585, %v577
    %v794 = vpack.c.b16 %v594, %v586
    %v795 = vpack.c.b16 %v595, %v587
    %v796 = vpack.c.b16 %v596, %v588
    %v797 = vpack.c.b16 %v597, %v589
    %v798 = vpack.c.b16 %v598, %v590
    %v799 = vpack.c.b16 %v599, %v591
    %v800 = vpack.c.b16 %v600, %v592
    %v801 = vpack.c.b16 %v601, %v593
    %v802 = vpack.c.b16 %v610, %v602
    %v803 = vpack.c.b16 %v611, %v603
    %v804 = vpack.c.b16 %v612, %v604
    %v805 = vpack.c.b16 %v613, %v605
    %v806 = vpack.c.b16 %v614, %v606
    %v807 = vpack.c.b16 %v615, %v607
    %v808 = vpack.c.b16 %v616, %v608
    %v809 = vpack.c.b16 %v617, %v609
    %v810 = vpack.c.b16 %v626, %v618
    %v811 = vpack.c.b16 %v627, %v619
    %v812 = vpack.c.b16 %v628, %v620
    %v813 = vpack.c.b16 %v629, %v621
    %v814 = vpack.c.b16 %v630, %v622
    %v815 = vpack.c.b16 %v631, %v623
    %v816 = vpack.c.b16 %v632, %v624
    %v817 = vpack.c.b16 %v633, %v625
    %v818 = vpack.c.b16 %v642, %v634
    %v819 = vpack.c.b16 %v643, %v635
    %v820 = vpack.c.b16 %v644, %v636
    %v821 = vpack.c.b16 %v645, %v637
    %v822 = vpack.c.b16 %v646, %v638
    %v823 = vpack.c.b16 %v647, %v639
    %v824 = vpack.c.b16 %v648, %v640
    %v825 = vpack.c.b16 %v649, %v641
    %v826 = vpack.c.b16 %v658, %v650
    %v827 = vpack.c.b16 %v659, %v651
    %v828 = vpack.c.b16 %v660, %v652
    %v829 = vpack.c.b16 %v661, %v653
    %v830 = vpack.c.b16 %v662, %v654
    %v831 = vpack.c.b16 %v663, %v655
    %v832 = vpack.c.b16 %v664, %v656
    %v833 = vpack.c.b16 %v665, %v657
    %v834 = vpack.c.b16 %v674, %v666
    %v835 = vpack.c.b16 %v675, %v667
    %v836 = vpack.c.b16 %v676, %v668
    %v837 = vpack.c.b16 %v677, %v669
    %v838 = vpack.c.b16 %v678, %v670
    %v839 = vpack.c.b16 %v679, %v671
    %v840 = vpack.c.b16 %v680, %v672
    %v841 = vpack.c.b16 %v681, %v673
    %v842 = vpack.c.b16 %v690, %v682
    %v843 = vpack.c.b16 %v691, %v683
    %v844 = vpack.c.b16 %v692, %v684
    %v845 = vpack.c.b16 %v693, %v685
    %v846 = vpack.c.b16 %v694, %v686
    %v847 = vpack.c.b16 %v695, %v687
    %v848 = vpack.c.b16 %v696, %v688
    %v849 = vpack.c.b16 %v697, %v689
    %v850 = vpack.c.b16 %v706, %v698
    %v851 = vpack.c.b16 %v707, %v699
    %v852 = vpack.c.b16 %v708, %v700
    %v853 = vpack.c.b16 %v709, %v701
    %v854 = vpack.c.b16 %v710, %v702
    %v855 = vpack.c.b16 %v711, %v703
    %v856 = vpack.c.b16 %v712, %v704
    %v857 = vpack.c.b16 %v713, %v705
    %v858 = vpack.c.b16 %v722, %v714
    %v859 = vpack.c.b16 %v723, %v715
    %v860 = vpack.c.b16 %v724, %v716
    %v861 = vpack.c.b16 %v725, %v717
    %v862 = vpack.c.b16 %v726, %v718
    %v863 = vpack.c.b16 %v727, %v719
    %v864 = vpack.c.b16 %v728, %v720
    %v865 = vpack.c.b16 %v729, %v721
    %v866 = vpack.c.b16 %v738, %v730
    %v867 = vpack.c.b16 %v739, %v731
    %v868 = vpack.c.b16 %v740, %v732
    %v869 = vpack.c.b16 %v741, %v733
    %v870 = vpack.c.b16 %v742, %v734
    %v871 = vpack.c.b16 %v743, %v735
    %v872 = vpack.c.b16 %v744, %v736
    %v873 = vpack.c.b16 %v745, %v737
    %1002 = vmatpush.bf16.msra.mxu0 %v802
    %1003 = vmatpush.bf16.msra.mxu0 %v794
    %1004 = vmatpush.bf16.msra.mxu0 %v786
    %1005 = vmatpush.bf16.msra.mxu0 %v778
    %1006 = vmatpush.bf16.msra.mxu0 %v770
    %1007 = vmatpush.bf16.msra.mxu0 %v762
    %1008 = vmatpush.bf16.msra.mxu0 %v754
    %1009 = vmatpush.bf16.msra.mxu0 %v746
    %1010 = vmatmul.bf16.gmra.mxu0 %v358
    %v1011 = vpop.f32.mrf.mxu0
    %v1012 = vadd.f32 0.0, %v1011
    %v1013 = vpop.f32.mrf.mxu0
    %1014 = vdwg.mxu0
    %1015 = vmatpush.bf16.msra.mxu0 %v866
    %1016 = vmatpush.bf16.msra.mxu0 %v858
    %1017 = vmatpush.bf16.msra.mxu0 %v850
    %1018 = vmatpush.bf16.msra.mxu0 %v842
    %1019 = vmatpush.bf16.msra.mxu0 %v834
    %1020 = vmatpush.bf16.msra.mxu0 %v826
    %1021 = vmatpush.bf16.msra.mxu0 %v818
    %1022 = vmatpush.bf16.msra.mxu0 %v810
    %1023 = vmatmul.bf16.gmra.mxu0 %v359
    %v1024 = vpop.f32.mrf.mxu0
    %v1025 = vadd.f32 %v1012, %v1024
    %v1026 = vpop.f32.mrf.mxu0
    %1027 = vdwg.mxu0
    %1028 = vmatpush.bf16.msra.mxu0 %v803
    %1029 = vmatpush.bf16.msra.mxu0 %v795
    %1030 = vmatpush.bf16.msra.mxu0 %v787
    %1031 = vmatpush.bf16.msra.mxu0 %v779
    %1032 = vmatpush.bf16.msra.mxu0 %v771
    %1033 = vmatpush.bf16.msra.mxu0 %v763
    %1034 = vmatpush.bf16.msra.mxu0 %v755
    %1035 = vmatpush.bf16.msra.mxu0 %v747
    %1036 = vmatmul.bf16.gmra.mxu0 %v358
    %v1037 = vpop.f32.mrf.mxu0
    %v1038 = vadd.f32 0.0, %v1037
    %v1039 = vpop.f32.mrf.mxu0
    %1040 = vdwg.mxu0
    %1041 = vmatpush.bf16.msra.mxu0 %v867
    %1042 = vmatpush.bf16.msra.mxu0 %v859
    %1043 = vmatpush.bf16.msra.mxu0 %v851
    %1044 = vmatpush.bf16.msra.mxu0 %v843
    %1045 = vmatpush.bf16.msra.mxu0 %v835
    %1046 = vmatpush.bf16.msra.mxu0 %v827
    %1047 = vmatpush.bf16.msra.mxu0 %v819
    %1048 = vmatpush.bf16.msra.mxu0 %v811
    %1049 = vmatmul.bf16.gmra.mxu0 %v359
    %v1050 = vpop.f32.mrf.mxu0
    %v1051 = vadd.f32 %v1038, %v1050
    %v1052 = vpop.f32.mrf.mxu0
    %1053 = vdwg.mxu0
    %1054 = vmatpush.bf16.msra.mxu0 %v804
    %1055 = vmatpush.bf16.msra.mxu0 %v796
    %1056 = vmatpush.bf16.msra.mxu0 %v788
    %1057 = vmatpush.bf16.msra.mxu0 %v780
    %1058 = vmatpush.bf16.msra.mxu0 %v772
    %1059 = vmatpush.bf16.msra.mxu0 %v764
    %1060 = vmatpush.bf16.msra.mxu0 %v756
    %1061 = vmatpush.bf16.msra.mxu0 %v748
    %1062 = vmatmul.bf16.gmra.mxu0 %v358
    %v1063 = vpop.f32.mrf.mxu0
    %v1064 = vadd.f32 0.0, %v1063
    %v1065 = vpop.f32.mrf.mxu0
    %1066 = vdwg.mxu0
    %1067 = vmatpush.bf16.msra.mxu0 %v868
    %1068 = vmatpush.bf16.msra.mxu0 %v860
    %1069 = vmatpush.bf16.msra.mxu0 %v852
    %1070 = vmatpush.bf16.msra.mxu0 %v844
    %1071 = vmatpush.bf16.msra.mxu0 %v836
    %1072 = vmatpush.bf16.msra.mxu0 %v828
    %1073 = vmatpush.bf16.msra.mxu0 %v820
    %1074 = vmatpush.bf16.msra.mxu0 %v812
    %1075 = vmatmul.bf16.gmra.mxu0 %v359
    %v1076 = vpop.f32.mrf.mxu0
    %v1077 = vadd.f32 %v1064, %v1076
    %v1078 = vpop.f32.mrf.mxu0
    %1079 = vdwg.mxu0
    %1080 = vmatpush.bf16.msra.mxu0 %v805
    %1081 = vmatpush.bf16.msra.mxu0 %v797
    %1082 = vmatpush.bf16.msra.mxu0 %v789
    %1083 = vmatpush.bf16.msra.mxu0 %v781
    %1084 = vmatpush.bf16.msra.mxu0 %v773
    %1085 = vmatpush.bf16.msra.mxu0 %v765
    %1086 = vmatpush.bf16.msra.mxu0 %v757
    %1087 = vmatpush.bf16.msra.mxu0 %v749
    %1088 = vmatmul.bf16.gmra.mxu0 %v358
    %v1089 = vpop.f32.mrf.mxu0
    %v1090 = vadd.f32 0.0, %v1089
    %v1091 = vpop.f32.mrf.mxu0
    %1092 = vdwg.mxu0
    %1093 = vmatpush.bf16.msra.mxu0 %v869
    %1094 = vmatpush.bf16.msra.mxu0 %v861
    %1095 = vmatpush.bf16.msra.mxu0 %v853
    %1096 = vmatpush.bf16.msra.mxu0 %v845
    %1097 = vmatpush.bf16.msra.mxu0 %v837
    %1098 = vmatpush.bf16.msra.mxu0 %v829
    %1099 = vmatpush.bf16.msra.mxu0 %v821
    %1100 = vmatpush.bf16.msra.mxu0 %v813
    %1101 = vmatmul.bf16.gmra.mxu0 %v359
    %v1102 = vpop.f32.mrf.mxu0
    %v1103 = vadd.f32 %v1090, %v1102
    %v1104 = vpop.f32.mrf.mxu0
    %1105 = vdwg.mxu0
    %1106 = vmatpush.bf16.msra.mxu0 %v806
    %1107 = vmatpush.bf16.msra.mxu0 %v798
    %1108 = vmatpush.bf16.msra.mxu0 %v790
    %1109 = vmatpush.bf16.msra.mxu0 %v782
    %1110 = vmatpush.bf16.msra.mxu0 %v774
    %1111 = vmatpush.bf16.msra.mxu0 %v766
    %1112 = vmatpush.bf16.msra.mxu0 %v758
    %1113 = vmatpush.bf16.msra.mxu0 %v750
    %1114 = vmatmul.bf16.gmra.mxu0 %v358
    %v1115 = vpop.f32.mrf.mxu0
    %v1116 = vadd.f32 0.0, %v1115
    %v1117 = vpop.f32.mrf.mxu0
    %1118 = vdwg.mxu0
    %1119 = vmatpush.bf16.msra.mxu0 %v870
    %1120 = vmatpush.bf16.msra.mxu0 %v862
    %1121 = vmatpush.bf16.msra.mxu0 %v854
    %1122 = vmatpush.bf16.msra.mxu0 %v846
    %1123 = vmatpush.bf16.msra.mxu0 %v838
    %1124 = vmatpush.bf16.msra.mxu0 %v830
    %1125 = vmatpush.bf16.msra.mxu0 %v822
    %1126 = vmatpush.bf16.msra.mxu0 %v814
    %1127 = vmatmul.bf16.gmra.mxu0 %v359
    %v1128 = vpop.f32.mrf.mxu0
    %v1129 = vadd.f32 %v1116, %v1128
    %v1130 = vpop.f32.mrf.mxu0
    %1131 = vdwg.mxu0
    %1132 = vmatpush.bf16.msra.mxu0 %v807
    %1133 = vmatpush.bf16.msra.mxu0 %v799
    %1134 = vmatpush.bf16.msra.mxu0 %v791
    %1135 = vmatpush.bf16.msra.mxu0 %v783
    %1136 = vmatpush.bf16.msra.mxu0 %v775
    %1137 = vmatpush.bf16.msra.mxu0 %v767
    %1138 = vmatpush.bf16.msra.mxu0 %v759
    %1139 = vmatpush.bf16.msra.mxu0 %v751
    %1140 = vmatmul.bf16.gmra.mxu0 %v358
    %v1141 = vpop.f32.mrf.mxu0
    %v1142 = vadd.f32 0.0, %v1141
    %v1143 = vpop.f32.mrf.mxu0
    %1144 = vdwg.mxu0
    %1145 = vmatpush.bf16.msra.mxu0 %v871
    %1146 = vmatpush.bf16.msra.mxu0 %v863
    %1147 = vmatpush.bf16.msra.mxu0 %v855
    %1148 = vmatpush.bf16.msra.mxu0 %v847
    %1149 = vmatpush.bf16.msra.mxu0 %v839
    %1150 = vmatpush.bf16.msra.mxu0 %v831
    %1151 = vmatpush.bf16.msra.mxu0 %v823
    %1152 = vmatpush.bf16.msra.mxu0 %v815
    %1153 = vmatmul.bf16.gmra.mxu0 %v359
    %v1154 = vpop.f32.mrf.mxu0
    %v1155 = vadd.f32 %v1142, %v1154
    %v1156 = vpop.f32.mrf.mxu0
    %1157 = vdwg.mxu0
    %1158 = vmatpush.bf16.msra.mxu0 %v808
    %1159 = vmatpush.bf16.msra.mxu0 %v800
    %1160 = vmatpush.bf16.msra.mxu0 %v792
    %1161 = vmatpush.bf16.msra.mxu0 %v784
    %1162 = vmatpush.bf16.msra.mxu0 %v776
    %1163 = vmatpush.bf16.msra.mxu0 %v768
    %1164 = vmatpush.bf16.msra.mxu0 %v760
    %1165 = vmatpush.bf16.msra.mxu0 %v752
    %1166 = vmatmul.bf16.gmra.mxu0 %v358
    %v1167 = vpop.f32.mrf.mxu0
    %v1168 = vadd.f32 0.0, %v1167
    %v1169 = vpop.f32.mrf.mxu0
    %1170 = vdwg.mxu0
    %1171 = vmatpush.bf16.msra.mxu0 %v872
    %1172 = vmatpush.bf16.msra.mxu0 %v864
    %1173 = vmatpush.bf16.msra.mxu0 %v856
    %1174 = vmatpush.bf16.msra.mxu0 %v848
    %1175 = vmatpush.bf16.msra.mxu0 %v840
    %1176 = vmatpush.bf16.msra.mxu0 %v832
    %1177 = vmatpush.bf16.msra.mxu0 %v824
    %1178 = vmatpush.bf16.msra.mxu0 %v816
    %1179 = vmatmul.bf16.gmra.mxu0 %v359
    %v1180 = vpop.f32.mrf.mxu0
    %v1181 = vadd.f32 %v1168, %v1180
    %v1182 = vpop.f32.mrf.mxu0
    %1183 = vdwg.mxu0
    %1184 = vmatpush.bf16.msra.mxu0 %v809
    %1185 = vmatpush.bf16.msra.mxu0 %v801
    %1186 = vmatpush.bf16.msra.mxu0 %v793
    %1187 = vmatpush.bf16.msra.mxu0 %v785
    %1188 = vmatpush.bf16.msra.mxu0 %v777
    %1189 = vmatpush.bf16.msra.mxu0 %v769
    %1190 = vmatpush.bf16.msra.mxu0 %v761
    %1191 = vmatpush.bf16.msra.mxu0 %v753
    %1192 = vmatmul.bf16.gmra.mxu0 %v358
    %v1193 = vpop.f32.mrf.mxu0
    %v1194 = vadd.f32 0.0, %v1193
    %v1195 = vpop.f32.mrf.mxu0
    %1196 = vdwg.mxu0
    %1197 = vmatpush.bf16.msra.mxu0 %v873
    %1198 = vmatpush.bf16.msra.mxu0 %v865
    %1199 = vmatpush.bf16.msra.mxu0 %v857
    %1200 = vmatpush.bf16.msra.mxu0 %v849
    %1201 = vmatpush.bf16.msra.mxu0 %v841
    %1202 = vmatpush.bf16.msra.mxu0 %v833
    %1203 = vmatpush.bf16.msra.mxu0 %v825
    %1204 = vmatpush.bf16.msra.mxu0 %v817
    %1205 = vmatmul.bf16.gmra.mxu0 %v359
    %v1206 = vpop.f32.mrf.mxu0
    %v1207 = vadd.f32 %v1194, %v1206
    %v1208 = vpop.f32.mrf.mxu0
    %1209 = vdwg.mxu0
    %v1214 = vunpack.c.l.b16 %v81
    %v1215 = vunpack.c.l.b16 %v82
    %v1216 = vunpack.c.l.b16 %v83
    %v1217 = vunpack.c.l.b16 %v84
    %v1218 = vrot.slane %v1216, 7
    %v1219 = vsel %vm354, %v1218, %v1214
    %v1220 = vrot.slane %v1217, 7
    %v1221 = vsel %vm354, %v1220, %v1215
    %v1222 = vpack.c.b16 %v1219, %v1219
    %v1223 = vpack.c.b16 %v1221, %v1221
    %v1354 = vunpack.c.l.b16 %v85
    %v1355 = vunpack.c.h.b16 %v85
    %v1356 = vunpack.c.l.b16 %v86
    %v1357 = vunpack.c.h.b16 %v86
    %v1358 = vunpack.c.l.b16 %v87
    %v1359 = vunpack.c.h.b16 %v87
    %v1360 = vunpack.c.l.b16 %v88
    %v1361 = vunpack.c.h.b16 %v88
    %v1362 = vunpack.c.l.b16 %v89
    %v1363 = vunpack.c.h.b16 %v89
    %v1364 = vunpack.c.l.b16 %v90
    %v1365 = vunpack.c.h.b16 %v90
    %v1366 = vunpack.c.l.b16 %v91
    %v1367 = vunpack.c.h.b16 %v91
    %v1368 = vunpack.c.l.b16 %v92
    %v1369 = vunpack.c.h.b16 %v92
    %v1370 = vunpack.c.l.b16 %v93
    %v1371 = vunpack.c.h.b16 %v93
    %v1372 = vunpack.c.l.b16 %v94
    %v1373 = vunpack.c.h.b16 %v94
    %v1374 = vunpack.c.l.b16 %v95
    %v1375 = vunpack.c.h.b16 %v95
    %v1376 = vunpack.c.l.b16 %v96
    %v1377 = vunpack.c.h.b16 %v96
    %v1378 = vunpack.c.l.b16 %v97
    %v1379 = vunpack.c.h.b16 %v97
    %v1380 = vunpack.c.l.b16 %v98
    %v1381 = vunpack.c.h.b16 %v98
    %v1382 = vunpack.c.l.b16 %v99
    %v1383 = vunpack.c.h.b16 %v99
    %v1384 = vunpack.c.l.b16 %v100
    %v1385 = vunpack.c.h.b16 %v100
    %v1386 = vunpack.c.l.b16 %v101
    %v1387 = vunpack.c.h.b16 %v101
    %v1388 = vunpack.c.l.b16 %v102
    %v1389 = vunpack.c.h.b16 %v102
    %v1390 = vunpack.c.l.b16 %v103
    %v1391 = vunpack.c.h.b16 %v103
    %v1392 = vunpack.c.l.b16 %v104
    %v1393 = vunpack.c.h.b16 %v104
    %v1394 = vunpack.c.l.b16 %v105
    %v1395 = vunpack.c.h.b16 %v105
    %v1396 = vunpack.c.l.b16 %v106
    %v1397 = vunpack.c.h.b16 %v106
    %v1398 = vunpack.c.l.b16 %v107
    %v1399 = vunpack.c.h.b16 %v107
    %v1400 = vunpack.c.l.b16 %v108
    %v1401 = vunpack.c.h.b16 %v108
    %v1402 = vunpack.c.l.b16 %v109
    %v1403 = vunpack.c.h.b16 %v109
    %v1404 = vunpack.c.l.b16 %v110
    %v1405 = vunpack.c.h.b16 %v110
    %v1406 = vunpack.c.l.b16 %v111
    %v1407 = vunpack.c.h.b16 %v111
    %v1408 = vunpack.c.l.b16 %v112
    %v1409 = vunpack.c.h.b16 %v112
    %v1410 = vunpack.c.l.b16 %v113
    %v1411 = vunpack.c.h.b16 %v113
    %v1412 = vunpack.c.l.b16 %v114
    %v1413 = vunpack.c.h.b16 %v114
    %v1414 = vunpack.c.l.b16 %v115
    %v1415 = vunpack.c.h.b16 %v115
    %v1416 = vunpack.c.l.b16 %v116
    %v1417 = vunpack.c.h.b16 %v116
    %v1418 = vunpack.c.l.b16 %v117
    %v1419 = vunpack.c.h.b16 %v117
    %v1420 = vunpack.c.l.b16 %v118
    %v1421 = vunpack.c.h.b16 %v118
    %v1422 = vunpack.c.l.b16 %v119
    %v1423 = vunpack.c.h.b16 %v119
    %v1424 = vunpack.c.l.b16 %v120
    %v1425 = vunpack.c.h.b16 %v120
    %v1426 = vunpack.c.l.b16 %v121
    %v1427 = vunpack.c.h.b16 %v121
    %v1428 = vunpack.c.l.b16 %v122
    %v1429 = vunpack.c.h.b16 %v122
    %v1430 = vunpack.c.l.b16 %v123
    %v1431 = vunpack.c.h.b16 %v123
    %v1432 = vunpack.c.l.b16 %v124
    %v1433 = vunpack.c.h.b16 %v124
    %v1434 = vunpack.c.l.b16 %v125
    %v1435 = vunpack.c.h.b16 %v125
    %v1436 = vunpack.c.l.b16 %v126
    %v1437 = vunpack.c.h.b16 %v126
    %v1438 = vunpack.c.l.b16 %v127
    %v1439 = vunpack.c.h.b16 %v127
    %v1440 = vunpack.c.l.b16 %v128
    %v1441 = vunpack.c.h.b16 %v128
    %v1442 = vunpack.c.l.b16 %v129
    %v1443 = vunpack.c.h.b16 %v129
    %v1444 = vunpack.c.l.b16 %v130
    %v1445 = vunpack.c.h.b16 %v130
    %v1446 = vunpack.c.l.b16 %v131
    %v1447 = vunpack.c.h.b16 %v131
    %v1448 = vunpack.c.l.b16 %v132
    %v1449 = vunpack.c.h.b16 %v132
    %v1450 = vunpack.c.l.b16 %v133
    %v1451 = vunpack.c.h.b16 %v133
    %v1452 = vunpack.c.l.b16 %v134
    %v1453 = vunpack.c.h.b16 %v134
    %v1454 = vunpack.c.l.b16 %v135
    %v1455 = vunpack.c.h.b16 %v135
    %v1456 = vunpack.c.l.b16 %v136
    %v1457 = vunpack.c.h.b16 %v136
    %v1458 = vunpack.c.l.b16 %v137
    %v1459 = vunpack.c.h.b16 %v137
    %v1460 = vunpack.c.l.b16 %v138
    %v1461 = vunpack.c.h.b16 %v138
    %v1462 = vunpack.c.l.b16 %v139
    %v1463 = vunpack.c.h.b16 %v139
    %v1464 = vunpack.c.l.b16 %v140
    %v1465 = vunpack.c.h.b16 %v140
    %v1466 = vunpack.c.l.b16 %v141
    %v1467 = vunpack.c.h.b16 %v141
    %v1468 = vunpack.c.l.b16 %v142
    %v1469 = vunpack.c.h.b16 %v142
    %v1470 = vunpack.c.l.b16 %v143
    %v1471 = vunpack.c.h.b16 %v143
    %v1472 = vunpack.c.l.b16 %v144
    %v1473 = vunpack.c.h.b16 %v144
    %v1474 = vunpack.c.l.b16 %v145
    %v1475 = vunpack.c.h.b16 %v145
    %v1476 = vunpack.c.l.b16 %v146
    %v1477 = vunpack.c.h.b16 %v146
    %v1478 = vunpack.c.l.b16 %v147
    %v1479 = vunpack.c.h.b16 %v147
    %v1480 = vunpack.c.l.b16 %v148
    %v1481 = vunpack.c.h.b16 %v148
    %v1482 = vunpack.c.l.b16 %v149
    %v1483 = vunpack.c.h.b16 %v149
    %v1484 = vunpack.c.l.b16 %v150
    %v1485 = vunpack.c.h.b16 %v150
    %v1486 = vunpack.c.l.b16 %v151
    %v1487 = vunpack.c.h.b16 %v151
    %v1488 = vunpack.c.l.b16 %v152
    %v1489 = vunpack.c.h.b16 %v152
    %v1490 = vunpack.c.l.b16 %v153
    %v1491 = vunpack.c.h.b16 %v153
    %v1492 = vunpack.c.l.b16 %v154
    %v1493 = vunpack.c.h.b16 %v154
    %v1494 = vunpack.c.l.b16 %v155
    %v1495 = vunpack.c.h.b16 %v155
    %v1496 = vunpack.c.l.b16 %v156
    %v1497 = vunpack.c.h.b16 %v156
    %v1498 = vunpack.c.l.b16 %v157
    %v1499 = vunpack.c.h.b16 %v157
    %v1500 = vunpack.c.l.b16 %v158
    %v1501 = vunpack.c.h.b16 %v158
    %v1502 = vunpack.c.l.b16 %v159
    %v1503 = vunpack.c.h.b16 %v159
    %v1504 = vunpack.c.l.b16 %v160
    %v1505 = vunpack.c.h.b16 %v160
    %v1506 = vunpack.c.l.b16 %v161
    %v1507 = vunpack.c.h.b16 %v161
    %v1508 = vunpack.c.l.b16 %v162
    %v1509 = vunpack.c.h.b16 %v162
    %v1510 = vunpack.c.l.b16 %v163
    %v1511 = vunpack.c.h.b16 %v163
    %v1512 = vunpack.c.l.b16 %v164
    %v1513 = vunpack.c.h.b16 %v164
    %v1514 = vunpack.c.l.b16 %v165
    %v1515 = vunpack.c.h.b16 %v165
    %v1516 = vunpack.c.l.b16 %v166
    %v1517 = vunpack.c.h.b16 %v166
    %v1518 = vunpack.c.l.b16 %v167
    %v1519 = vunpack.c.h.b16 %v167
    %v1520 = vunpack.c.l.b16 %v168
    %v1521 = vunpack.c.h.b16 %v168
    %v1522 = vunpack.c.l.b16 %v169
    %v1523 = vunpack.c.h.b16 %v169
    %v1524 = vunpack.c.l.b16 %v170
    %v1525 = vunpack.c.h.b16 %v170
    %v1526 = vunpack.c.l.b16 %v171
    %v1527 = vunpack.c.h.b16 %v171
    %v1528 = vunpack.c.l.b16 %v172
    %v1529 = vunpack.c.h.b16 %v172
    %v1530 = vunpack.c.l.b16 %v173
    %v1531 = vunpack.c.h.b16 %v173
    %v1532 = vunpack.c.l.b16 %v174
    %v1533 = vunpack.c.h.b16 %v174
    %v1534 = vunpack.c.l.b16 %v175
    %v1535 = vunpack.c.h.b16 %v175
    %v1536 = vunpack.c.l.b16 %v176
    %v1537 = vunpack.c.h.b16 %v176
    %v1538 = vunpack.c.l.b16 %v177
    %v1539 = vunpack.c.h.b16 %v177
    %v1540 = vunpack.c.l.b16 %v178
    %v1541 = vunpack.c.h.b16 %v178
    %v1542 = vunpack.c.l.b16 %v179
    %v1543 = vunpack.c.h.b16 %v179
    %v1544 = vunpack.c.l.b16 %v180
    %v1545 = vunpack.c.h.b16 %v180
    %v1546 = vunpack.c.l.b16 %v181
    %v1547 = vunpack.c.h.b16 %v181
    %v1548 = vunpack.c.l.b16 %v182
    %v1549 = vunpack.c.h.b16 %v182
    %v1550 = vunpack.c.l.b16 %v183
    %v1551 = vunpack.c.h.b16 %v183
    %v1552 = vunpack.c.l.b16 %v184
    %v1553 = vunpack.c.h.b16 %v184
    %v1554 = vunpack.c.l.b16 %v185
    %v1555 = vunpack.c.h.b16 %v185
    %v1556 = vunpack.c.l.b16 %v186
    %v1557 = vunpack.c.h.b16 %v186
    %v1558 = vunpack.c.l.b16 %v187
    %v1559 = vunpack.c.h.b16 %v187
    %v1560 = vunpack.c.l.b16 %v188
    %v1561 = vunpack.c.h.b16 %v188
    %v1562 = vunpack.c.l.b16 %v189
    %v1563 = vunpack.c.h.b16 %v189
    %v1564 = vunpack.c.l.b16 %v190
    %v1565 = vunpack.c.h.b16 %v190
    %v1566 = vunpack.c.l.b16 %v191
    %v1567 = vunpack.c.h.b16 %v191
    %v1568 = vunpack.c.l.b16 %v192
    %v1569 = vunpack.c.h.b16 %v192
    %v1570 = vunpack.c.l.b16 %v193
    %v1571 = vunpack.c.h.b16 %v193
    %v1572 = vunpack.c.l.b16 %v194
    %v1573 = vunpack.c.h.b16 %v194
    %v1574 = vunpack.c.l.b16 %v195
    %v1575 = vunpack.c.h.b16 %v195
    %v1576 = vunpack.c.l.b16 %v196
    %v1577 = vunpack.c.h.b16 %v196
    %v1578 = vunpack.c.l.b16 %v197
    %v1579 = vunpack.c.h.b16 %v197
    %v1580 = vunpack.c.l.b16 %v198
    %v1581 = vunpack.c.h.b16 %v198
    %v1582 = vunpack.c.l.b16 %v199
    %v1583 = vunpack.c.h.b16 %v199
    %v1584 = vunpack.c.l.b16 %v200
    %v1585 = vunpack.c.h.b16 %v200
    %v1586 = vunpack.c.l.b16 %v201
    %v1587 = vunpack.c.h.b16 %v201
    %v1588 = vunpack.c.l.b16 %v202
    %v1589 = vunpack.c.h.b16 %v202
    %v1590 = vunpack.c.l.b16 %v203
    %v1591 = vunpack.c.h.b16 %v203
    %v1592 = vunpack.c.l.b16 %v204
    %v1593 = vunpack.c.h.b16 %v204
    %v1594 = vunpack.c.l.b16 %v205
    %v1595 = vunpack.c.h.b16 %v205
    %v1596 = vunpack.c.l.b16 %v206
    %v1597 = vunpack.c.h.b16 %v206
    %v1598 = vunpack.c.l.b16 %v207
    %v1599 = vunpack.c.h.b16 %v207
    %v1600 = vunpack.c.l.b16 %v208
    %v1601 = vunpack.c.h.b16 %v208
    %v1602 = vunpack.c.l.b16 %v209
    %v1603 = vunpack.c.h.b16 %v209
    %v1604 = vunpack.c.l.b16 %v210
    %v1605 = vunpack.c.h.b16 %v210
    %v1606 = vunpack.c.l.b16 %v211
    %v1607 = vunpack.c.h.b16 %v211
    %v1608 = vunpack.c.l.b16 %v212
    %v1609 = vunpack.c.h.b16 %v212
    %v1610 = vpack.c.b16 %v1362, %v1354
    %v1611 = vpack.c.b16 %v1363, %v1355
    %v1612 = vpack.c.b16 %v1364, %v1356
    %v1613 = vpack.c.b16 %v1365, %v1357
    %v1614 = vpack.c.b16 %v1366, %v1358
    %v1615 = vpack.c.b16 %v1367, %v1359
    %v1616 = vpack.c.b16 %v1368, %v1360
    %v1617 = vpack.c.b16 %v1369, %v1361
    %v1618 = vpack.c.b16 %v1378, %v1370
    %v1619 = vpack.c.b16 %v1379, %v1371
    %v1620 = vpack.c.b16 %v1380, %v1372
    %v1621 = vpack.c.b16 %v1381, %v1373
    %v1622 = vpack.c.b16 %v1382, %v1374
    %v1623 = vpack.c.b16 %v1383, %v1375
    %v1624 = vpack.c.b16 %v1384, %v1376
    %v1625 = vpack.c.b16 %v1385, %v1377
    %v1626 = vpack.c.b16 %v1394, %v1386
    %v1627 = vpack.c.b16 %v1395, %v1387
    %v1628 = vpack.c.b16 %v1396, %v1388
    %v1629 = vpack.c.b16 %v1397, %v1389
    %v1630 = vpack.c.b16 %v1398, %v1390
    %v1631 = vpack.c.b16 %v1399, %v1391
    %v1632 = vpack.c.b16 %v1400, %v1392
    %v1633 = vpack.c.b16 %v1401, %v1393
    %v1634 = vpack.c.b16 %v1410, %v1402
    %v1635 = vpack.c.b16 %v1411, %v1403
    %v1636 = vpack.c.b16 %v1412, %v1404
    %v1637 = vpack.c.b16 %v1413, %v1405
    %v1638 = vpack.c.b16 %v1414, %v1406
    %v1639 = vpack.c.b16 %v1415, %v1407
    %v1640 = vpack.c.b16 %v1416, %v1408
    %v1641 = vpack.c.b16 %v1417, %v1409
    %v1642 = vpack.c.b16 %v1426, %v1418
    %v1643 = vpack.c.b16 %v1427, %v1419
    %v1644 = vpack.c.b16 %v1428, %v1420
    %v1645 = vpack.c.b16 %v1429, %v1421
    %v1646 = vpack.c.b16 %v1430, %v1422
    %v1647 = vpack.c.b16 %v1431, %v1423
    %v1648 = vpack.c.b16 %v1432, %v1424
    %v1649 = vpack.c.b16 %v1433, %v1425
    %v1650 = vpack.c.b16 %v1442, %v1434
    %v1651 = vpack.c.b16 %v1443, %v1435
    %v1652 = vpack.c.b16 %v1444, %v1436
    %v1653 = vpack.c.b16 %v1445, %v1437
    %v1654 = vpack.c.b16 %v1446, %v1438
    %v1655 = vpack.c.b16 %v1447, %v1439
    %v1656 = vpack.c.b16 %v1448, %v1440
    %v1657 = vpack.c.b16 %v1449, %v1441
    %v1658 = vpack.c.b16 %v1458, %v1450
    %v1659 = vpack.c.b16 %v1459, %v1451
    %v1660 = vpack.c.b16 %v1460, %v1452
    %v1661 = vpack.c.b16 %v1461, %v1453
    %v1662 = vpack.c.b16 %v1462, %v1454
    %v1663 = vpack.c.b16 %v1463, %v1455
    %v1664 = vpack.c.b16 %v1464, %v1456
    %v1665 = vpack.c.b16 %v1465, %v1457
    %v1666 = vpack.c.b16 %v1474, %v1466
    %v1667 = vpack.c.b16 %v1475, %v1467
    %v1668 = vpack.c.b16 %v1476, %v1468
    %v1669 = vpack.c.b16 %v1477, %v1469
    %v1670 = vpack.c.b16 %v1478, %v1470
    %v1671 = vpack.c.b16 %v1479, %v1471
    %v1672 = vpack.c.b16 %v1480, %v1472
    %v1673 = vpack.c.b16 %v1481, %v1473
    %v1674 = vpack.c.b16 %v1490, %v1482
    %v1675 = vpack.c.b16 %v1491, %v1483
    %v1676 = vpack.c.b16 %v1492, %v1484
    %v1677 = vpack.c.b16 %v1493, %v1485
    %v1678 = vpack.c.b16 %v1494, %v1486
    %v1679 = vpack.c.b16 %v1495, %v1487
    %v1680 = vpack.c.b16 %v1496, %v1488
    %v1681 = vpack.c.b16 %v1497, %v1489
    %v1682 = vpack.c.b16 %v1506, %v1498
    %v1683 = vpack.c.b16 %v1507, %v1499
    %v1684 = vpack.c.b16 %v1508, %v1500
    %v1685 = vpack.c.b16 %v1509, %v1501
    %v1686 = vpack.c.b16 %v1510, %v1502
    %v1687 = vpack.c.b16 %v1511, %v1503
    %v1688 = vpack.c.b16 %v1512, %v1504
    %v1689 = vpack.c.b16 %v1513, %v1505
    %v1690 = vpack.c.b16 %v1522, %v1514
    %v1691 = vpack.c.b16 %v1523, %v1515
    %v1692 = vpack.c.b16 %v1524, %v1516
    %v1693 = vpack.c.b16 %v1525, %v1517
    %v1694 = vpack.c.b16 %v1526, %v1518
    %v1695 = vpack.c.b16 %v1527, %v1519
    %v1696 = vpack.c.b16 %v1528, %v1520
    %v1697 = vpack.c.b16 %v1529, %v1521
    %v1698 = vpack.c.b16 %v1538, %v1530
    %v1699 = vpack.c.b16 %v1539, %v1531
    %v1700 = vpack.c.b16 %v1540, %v1532
    %v1701 = vpack.c.b16 %v1541, %v1533
    %v1702 = vpack.c.b16 %v1542, %v1534
    %v1703 = vpack.c.b16 %v1543, %v1535
    %v1704 = vpack.c.b16 %v1544, %v1536
    %v1705 = vpack.c.b16 %v1545, %v1537
    %v1706 = vpack.c.b16 %v1554, %v1546
    %v1707 = vpack.c.b16 %v1555, %v1547
    %v1708 = vpack.c.b16 %v1556, %v1548
    %v1709 = vpack.c.b16 %v1557, %v1549
    %v1710 = vpack.c.b16 %v1558, %v1550
    %v1711 = vpack.c.b16 %v1559, %v1551
    %v1712 = vpack.c.b16 %v1560, %v1552
    %v1713 = vpack.c.b16 %v1561, %v1553
    %v1714 = vpack.c.b16 %v1570, %v1562
    %v1715 = vpack.c.b16 %v1571, %v1563
    %v1716 = vpack.c.b16 %v1572, %v1564
    %v1717 = vpack.c.b16 %v1573, %v1565
    %v1718 = vpack.c.b16 %v1574, %v1566
    %v1719 = vpack.c.b16 %v1575, %v1567
    %v1720 = vpack.c.b16 %v1576, %v1568
    %v1721 = vpack.c.b16 %v1577, %v1569
    %v1722 = vpack.c.b16 %v1586, %v1578
    %v1723 = vpack.c.b16 %v1587, %v1579
    %v1724 = vpack.c.b16 %v1588, %v1580
    %v1725 = vpack.c.b16 %v1589, %v1581
    %v1726 = vpack.c.b16 %v1590, %v1582
    %v1727 = vpack.c.b16 %v1591, %v1583
    %v1728 = vpack.c.b16 %v1592, %v1584
    %v1729 = vpack.c.b16 %v1593, %v1585
    %v1730 = vpack.c.b16 %v1602, %v1594
    %v1731 = vpack.c.b16 %v1603, %v1595
    %v1732 = vpack.c.b16 %v1604, %v1596
    %v1733 = vpack.c.b16 %v1605, %v1597
    %v1734 = vpack.c.b16 %v1606, %v1598
    %v1735 = vpack.c.b16 %v1607, %v1599
    %v1736 = vpack.c.b16 %v1608, %v1600
    %v1737 = vpack.c.b16 %v1609, %v1601
    %1866 = vmatpush.bf16.msra.mxu0 %v1666
    %1867 = vmatpush.bf16.msra.mxu0 %v1658
    %1868 = vmatpush.bf16.msra.mxu0 %v1650
    %1869 = vmatpush.bf16.msra.mxu0 %v1642
    %1870 = vmatpush.bf16.msra.mxu0 %v1634
    %1871 = vmatpush.bf16.msra.mxu0 %v1626
    %1872 = vmatpush.bf16.msra.mxu0 %v1618
    %1873 = vmatpush.bf16.msra.mxu0 %v1610
    %1874 = vmatmul.bf16.gmra.mxu0 %v1222
    %v1875 = vpop.f32.mrf.mxu0
    %v1876 = vadd.f32 %v1025, %v1875
    %v1877 = vpop.f32.mrf.mxu0
    %1878 = vdwg.mxu0
    %1879 = vmatpush.bf16.msra.mxu0 %v1730
    %1880 = vmatpush.bf16.msra.mxu0 %v1722
    %1881 = vmatpush.bf16.msra.mxu0 %v1714
    %1882 = vmatpush.bf16.msra.mxu0 %v1706
    %1883 = vmatpush.bf16.msra.mxu0 %v1698
    %1884 = vmatpush.bf16.msra.mxu0 %v1690
    %1885 = vmatpush.bf16.msra.mxu0 %v1682
    %1886 = vmatpush.bf16.msra.mxu0 %v1674
    %1887 = vmatmul.bf16.gmra.mxu0 %v1223
    %v1888 = vpop.f32.mrf.mxu0
    %v1889 = vadd.f32 %v1876, %v1888
    %v1890 = vpop.f32.mrf.mxu0
    %1891 = vdwg.mxu0
    %1892 = vmatpush.bf16.msra.mxu0 %v1667
    %1893 = vmatpush.bf16.msra.mxu0 %v1659
    %1894 = vmatpush.bf16.msra.mxu0 %v1651
    %1895 = vmatpush.bf16.msra.mxu0 %v1643
    %1896 = vmatpush.bf16.msra.mxu0 %v1635
    %1897 = vmatpush.bf16.msra.mxu0 %v1627
    %1898 = vmatpush.bf16.msra.mxu0 %v1619
    %1899 = vmatpush.bf16.msra.mxu0 %v1611
    %1900 = vmatmul.bf16.gmra.mxu0 %v1222
    %v1901 = vpop.f32.mrf.mxu0
    %v1902 = vadd.f32 %v1051, %v1901
    %v1903 = vpop.f32.mrf.mxu0
    %1904 = vdwg.mxu0
    %1905 = vmatpush.bf16.msra.mxu0 %v1731
    %1906 = vmatpush.bf16.msra.mxu0 %v1723
    %1907 = vmatpush.bf16.msra.mxu0 %v1715
    %1908 = vmatpush.bf16.msra.mxu0 %v1707
    %1909 = vmatpush.bf16.msra.mxu0 %v1699
    %1910 = vmatpush.bf16.msra.mxu0 %v1691
    %1911 = vmatpush.bf16.msra.mxu0 %v1683
    %1912 = vmatpush.bf16.msra.mxu0 %v1675
    %1913 = vmatmul.bf16.gmra.mxu0 %v1223
    %v1914 = vpop.f32.mrf.mxu0
    %v1915 = vadd.f32 %v1902, %v1914
    %v1916 = vpop.f32.mrf.mxu0
    %1917 = vdwg.mxu0
    %1918 = vmatpush.bf16.msra.mxu0 %v1668
    %1919 = vmatpush.bf16.msra.mxu0 %v1660
    %1920 = vmatpush.bf16.msra.mxu0 %v1652
    %1921 = vmatpush.bf16.msra.mxu0 %v1644
    %1922 = vmatpush.bf16.msra.mxu0 %v1636
    %1923 = vmatpush.bf16.msra.mxu0 %v1628
    %1924 = vmatpush.bf16.msra.mxu0 %v1620
    %1925 = vmatpush.bf16.msra.mxu0 %v1612
    %1926 = vmatmul.bf16.gmra.mxu0 %v1222
    %v1927 = vpop.f32.mrf.mxu0
    %v1928 = vadd.f32 %v1077, %v1927
    %v1929 = vpop.f32.mrf.mxu0
    %1930 = vdwg.mxu0
    %1931 = vmatpush.bf16.msra.mxu0 %v1732
    %1932 = vmatpush.bf16.msra.mxu0 %v1724
    %1933 = vmatpush.bf16.msra.mxu0 %v1716
    %1934 = vmatpush.bf16.msra.mxu0 %v1708
    %1935 = vmatpush.bf16.msra.mxu0 %v1700
    %1936 = vmatpush.bf16.msra.mxu0 %v1692
    %1937 = vmatpush.bf16.msra.mxu0 %v1684
    %1938 = vmatpush.bf16.msra.mxu0 %v1676
    %1939 = vmatmul.bf16.gmra.mxu0 %v1223
    %v1940 = vpop.f32.mrf.mxu0
    %v1941 = vadd.f32 %v1928, %v1940
    %v1942 = vpop.f32.mrf.mxu0
    %1943 = vdwg.mxu0
    %1944 = vmatpush.bf16.msra.mxu0 %v1669
    %1945 = vmatpush.bf16.msra.mxu0 %v1661
    %1946 = vmatpush.bf16.msra.mxu0 %v1653
    %1947 = vmatpush.bf16.msra.mxu0 %v1645
    %1948 = vmatpush.bf16.msra.mxu0 %v1637
    %1949 = vmatpush.bf16.msra.mxu0 %v1629
    %1950 = vmatpush.bf16.msra.mxu0 %v1621
    %1951 = vmatpush.bf16.msra.mxu0 %v1613
    %1952 = vmatmul.bf16.gmra.mxu0 %v1222
    %v1953 = vpop.f32.mrf.mxu0
    %v1954 = vadd.f32 %v1103, %v1953
    %v1955 = vpop.f32.mrf.mxu0
    %1956 = vdwg.mxu0
    %1957 = vmatpush.bf16.msra.mxu0 %v1733
    %1958 = vmatpush.bf16.msra.mxu0 %v1725
    %1959 = vmatpush.bf16.msra.mxu0 %v1717
    %1960 = vmatpush.bf16.msra.mxu0 %v1709
    %1961 = vmatpush.bf16.msra.mxu0 %v1701
    %1962 = vmatpush.bf16.msra.mxu0 %v1693
    %1963 = vmatpush.bf16.msra.mxu0 %v1685
    %1964 = vmatpush.bf16.msra.mxu0 %v1677
    %1965 = vmatmul.bf16.gmra.mxu0 %v1223
    %v1966 = vpop.f32.mrf.mxu0
    %v1967 = vadd.f32 %v1954, %v1966
    %v1968 = vpop.f32.mrf.mxu0
    %1969 = vdwg.mxu0
    %1970 = vmatpush.bf16.msra.mxu0 %v1670
    %1971 = vmatpush.bf16.msra.mxu0 %v1662
    %1972 = vmatpush.bf16.msra.mxu0 %v1654
    %1973 = vmatpush.bf16.msra.mxu0 %v1646
    %1974 = vmatpush.bf16.msra.mxu0 %v1638
    %1975 = vmatpush.bf16.msra.mxu0 %v1630
    %1976 = vmatpush.bf16.msra.mxu0 %v1622
    %1977 = vmatpush.bf16.msra.mxu0 %v1614
    %1978 = vmatmul.bf16.gmra.mxu0 %v1222
    %v1979 = vpop.f32.mrf.mxu0
    %v1980 = vadd.f32 %v1129, %v1979
    %v1981 = vpop.f32.mrf.mxu0
    %1982 = vdwg.mxu0
    %1983 = vmatpush.bf16.msra.mxu0 %v1734
    %1984 = vmatpush.bf16.msra.mxu0 %v1726
    %1985 = vmatpush.bf16.msra.mxu0 %v1718
    %1986 = vmatpush.bf16.msra.mxu0 %v1710
    %1987 = vmatpush.bf16.msra.mxu0 %v1702
    %1988 = vmatpush.bf16.msra.mxu0 %v1694
    %1989 = vmatpush.bf16.msra.mxu0 %v1686
    %1990 = vmatpush.bf16.msra.mxu0 %v1678
    %1991 = vmatmul.bf16.gmra.mxu0 %v1223
    %v1992 = vpop.f32.mrf.mxu0
    %v1993 = vadd.f32 %v1980, %v1992
    %v1994 = vpop.f32.mrf.mxu0
    %1995 = vdwg.mxu0
    %1996 = vmatpush.bf16.msra.mxu0 %v1671
    %1997 = vmatpush.bf16.msra.mxu0 %v1663
    %1998 = vmatpush.bf16.msra.mxu0 %v1655
    %1999 = vmatpush.bf16.msra.mxu0 %v1647
    %2000 = vmatpush.bf16.msra.mxu0 %v1639
    %2001 = vmatpush.bf16.msra.mxu0 %v1631
    %2002 = vmatpush.bf16.msra.mxu0 %v1623
    %2003 = vmatpush.bf16.msra.mxu0 %v1615
    %2004 = vmatmul.bf16.gmra.mxu0 %v1222
    %v2005 = vpop.f32.mrf.mxu0
    %v2006 = vadd.f32 %v1155, %v2005
    %v2007 = vpop.f32.mrf.mxu0
    %2008 = vdwg.mxu0
    %2009 = vmatpush.bf16.msra.mxu0 %v1735
    %2010 = vmatpush.bf16.msra.mxu0 %v1727
    %2011 = vmatpush.bf16.msra.mxu0 %v1719
    %2012 = vmatpush.bf16.msra.mxu0 %v1711
    %2013 = vmatpush.bf16.msra.mxu0 %v1703
    %2014 = vmatpush.bf16.msra.mxu0 %v1695
    %2015 = vmatpush.bf16.msra.mxu0 %v1687
    %2016 = vmatpush.bf16.msra.mxu0 %v1679
    %2017 = vmatmul.bf16.gmra.mxu0 %v1223
    %v2018 = vpop.f32.mrf.mxu0
    %v2019 = vadd.f32 %v2006, %v2018
    %v2020 = vpop.f32.mrf.mxu0
    %2021 = vdwg.mxu0
    %2022 = vmatpush.bf16.msra.mxu0 %v1672
    %2023 = vmatpush.bf16.msra.mxu0 %v1664
    %2024 = vmatpush.bf16.msra.mxu0 %v1656
    %2025 = vmatpush.bf16.msra.mxu0 %v1648
    %2026 = vmatpush.bf16.msra.mxu0 %v1640
    %2027 = vmatpush.bf16.msra.mxu0 %v1632
    %2028 = vmatpush.bf16.msra.mxu0 %v1624
    %2029 = vmatpush.bf16.msra.mxu0 %v1616
    %2030 = vmatmul.bf16.gmra.mxu0 %v1222
    %v2031 = vpop.f32.mrf.mxu0
    %v2032 = vadd.f32 %v1181, %v2031
    %v2033 = vpop.f32.mrf.mxu0
    %2034 = vdwg.mxu0
    %2035 = vmatpush.bf16.msra.mxu0 %v1736
    %2036 = vmatpush.bf16.msra.mxu0 %v1728
    %2037 = vmatpush.bf16.msra.mxu0 %v1720
    %2038 = vmatpush.bf16.msra.mxu0 %v1712
    %2039 = vmatpush.bf16.msra.mxu0 %v1704
    %2040 = vmatpush.bf16.msra.mxu0 %v1696
    %2041 = vmatpush.bf16.msra.mxu0 %v1688
    %2042 = vmatpush.bf16.msra.mxu0 %v1680
    %2043 = vmatmul.bf16.gmra.mxu0 %v1223
    %v2044 = vpop.f32.mrf.mxu0
    %v2045 = vadd.f32 %v2032, %v2044
    %v2046 = vpop.f32.mrf.mxu0
    %2047 = vdwg.mxu0
    %2048 = vmatpush.bf16.msra.mxu0 %v1673
    %2049 = vmatpush.bf16.msra.mxu0 %v1665
    %2050 = vmatpush.bf16.msra.mxu0 %v1657
    %2051 = vmatpush.bf16.msra.mxu0 %v1649
    %2052 = vmatpush.bf16.msra.mxu0 %v1641
    %2053 = vmatpush.bf16.msra.mxu0 %v1633
    %2054 = vmatpush.bf16.msra.mxu0 %v1625
    %2055 = vmatpush.bf16.msra.mxu0 %v1617
    %2056 = vmatmul.bf16.gmra.mxu0 %v1222
    %v2057 = vpop.f32.mrf.mxu0
    %v2058 = vadd.f32 %v1207, %v2057
    %v2059 = vpop.f32.mrf.mxu0
    %2060 = vdwg.mxu0
    %2061 = vmatpush.bf16.msra.mxu0 %v1737
    %2062 = vmatpush.bf16.msra.mxu0 %v1729
    %2063 = vmatpush.bf16.msra.mxu0 %v1721
    %2064 = vmatpush.bf16.msra.mxu0 %v1713
    %2065 = vmatpush.bf16.msra.mxu0 %v1705
    %2066 = vmatpush.bf16.msra.mxu0 %v1697
    %2067 = vmatpush.bf16.msra.mxu0 %v1689
    %2068 = vmatpush.bf16.msra.mxu0 %v1681
    %2069 = vmatmul.bf16.gmra.mxu0 %v1223
    %v2070 = vpop.f32.mrf.mxu0
    %v2071 = vadd.f32 %v2058, %v2070
    %v2072 = vpop.f32.mrf.mxu0
    %2073 = vdwg.mxu0
    %v2074 = vld [vmem:[%s3] sm:$0xff]
    %v2076 = vperm.slane %v2074, 0
    %v2077 = vperm.slane %v2074, 1
    %v2078 = vperm.slane %v2074, 2
    %v2079 = vperm.slane %v2074, 3
    %v2080 = vperm.slane %v2074, 4
    %v2081 = vperm.slane %v2074, 5
    %v2082 = vperm.slane %v2074, 6
    %v2083 = vperm.slane %v2074, 7
    %v2092 = vadd.f32 %v1889, %v2076
    %v2093 = vadd.f32 %v1915, %v2077
    %v2094 = vadd.f32 %v1941, %v2078
    %v2095 = vadd.f32 %v1967, %v2079
    %v2096 = vadd.f32 %v1993, %v2080
    %v2097 = vadd.f32 %v2019, %v2081
    %v2098 = vadd.f32 %v2045, %v2082
    %v2099 = vadd.f32 %v2071, %v2083
    %v2108 = vrot.slane %v2093, 6
    %v2109 = vrot.slane %v2094, 4
    %v2110 = vrot.slane %v2095, 2
    %v2111 = vrot.slane %v2097, 6
    %v2112 = vrot.slane %v2098, 4
    %v2113 = vrot.slane %v2099, 2
    %vm2114 = vcmask 1041408
    %v2115 = vsel %vm2114, %v2092, %v2108
    %vm2116 = vcmask 1045508
    %v2117 = vsel %vm2116, %v2109, %v2110
    %vm2118 = vcmask 1043456
    %v2119 = vsel %vm2118, %v2115, %v2117
    %v2120 = vsel %vm2114, %v2096, %v2111
    %v2121 = vsel %vm2116, %v2112, %v2113
    %v2122 = vsel %vm2118, %v2120, %v2121
    %2125 = vst [vmem:[#allocation2] sm:$0xff] %v2119
    %2126 = vst [vmem:[#allocation2 + $0x8] sm:$0xff] %v2122
    // Predicated region
    $region18: #{_lambda_.25} parent=1 // pred_check
      _
    $region19: #{_lambda_.25} parent=1 // pred_check_branch
      %2128 = sbr.rel (0) target = $region21
    $region20: #{_lambda_.25} parent=1 // pred_region
      %2130 = vsyncadd [#allocation3], 0
      %s2132 = sshll.u32 [#allocation2], 4
      %s2133 = int_to_ptr.vmem [resolvable:$true] %s2132
      %s2134 = sshll.u32 %s4, 4
      %s2135 = int_to_ptr.hbm [resolvable:$true] %s2134
      %2137 = dma.vmem_to_hbm [thread:$0]  %s2133, 256, %s2135, [#allocation3]
    $region21: #{_lambda_.25} parent=1 // pred_fallthru
      _
    // Predicated region
    $region22: #{_lambda_.25} parent=1 // pred_check
      _
    $region23: #{_lambda_.25} parent=1 // pred_check_branch
      %2139 = sbr.rel (0) target = $region25
    $region24: #{_lambda_.25} parent=1 // pred_region
      %2141 = dma.done [#allocation3], 256
    $region25: #{_lambda_.25} parent=1 // pred_fallthru
      _
    %2142 = vsyncpa [#allocation3], 1

</llo_original>
